<compile_context>
chip_gen: v5e
topology: v5e:2x2
jax: 0.10.0
libtpu: 0.0.40
codegen_flags: <defaults>
</compile_context>

<pallas_src>
import numpy as np
import jax
import jax.numpy as jnp
from jax.experimental import pallas as pl
from jax.experimental.pallas import tpu as pltpu


# ----------------------------------------------------------------------------
# Layer-1 kernel (channel-major, lane-dense):
#   per image, per pool group g:  y_g = relu( (Wt @ Pt_g) * s + b )
#   pooled = 0.25 * sum_g y_g
#   Wt: (Cout, K) bf16   Pt_g: (K, Mo) bf16   s,b: (Cout, 1) f32
#   out per image: (Cout, Mo) bf16
# ----------------------------------------------------------------------------
def _conv_pool_cmajor_kernel(p_ref, w_ref, s_ref, b_ref, o_ref):
    wt = w_ref[...]
    s = s_ref[...]
    b = b_ref[...]
    b_tile = o_ref.shape[0]
    for img in range(b_tile):            # static Python loop == fully unrolled
        acc = None
        for g in range(4):               # 2x2 cosine-pool taps
            y = jnp.dot(wt, p_ref[img, g], preferred_element_type=jnp.float32)
            y = jnp.maximum(y * s + b, 0.0)
            acc = y if acc is None else acc + y
        o_ref[img] = (0.25 * acc).astype(o_ref.dtype)   # single terminal cast


def conv_pool_cmajor(patches_t, w_t, scale, bias, b_tile):
    # patches_t: (N, 4, K, Mo) bf16 ; w_t: (Cout, K) ; scale/bias: (Cout, 1)
    n, _, k, mo = patches_t.shape
    cout = w_t.shape[0]
    assert n % b_tile == 0
    return pl.pallas_call(
        _conv_pool_cmajor_kernel,
        out_shape=jax.ShapeDtypeStruct((n, cout, mo), jnp.bfloat16),
        grid=(n // b_tile,),
        in_specs=[
            pl.BlockSpec((b_tile, 4, k, mo), lambda i: (i, 0, 0, 0)),
            pl.BlockSpec((cout, k), lambda i: (0, 0)),     # resident weights
            pl.BlockSpec((cout, 1), lambda i: (0, 0)),     # folded BN scale
            pl.BlockSpec((cout, 1), lambda i: (0, 0)),     # folded BN bias
        ],
        out_specs=pl.BlockSpec((b_tile, cout, mo), lambda i: (i, 0, 0)),
        compiler_params=pltpu.CompilerParams(dimension_semantics=("parallel",)),
    )(patches_t, w_t, scale, bias)


# ----------------------------------------------------------------------------
# Layer-2 kernel (channel-last; K=288 is already lane-dense):
#   per image, per pool group g:  y_g = relu( (P_g @ W) * s + b )
#   pooled = 0.25 * sum_g y_g
# ----------------------------------------------------------------------------
def _conv_pool_clast_kernel(p_ref, w_ref, s_ref, b_ref, o_ref):
    w = w_ref[...]
    s = s_ref[...]
    b = b_ref[...]
    b_tile = o_ref.shape[0]
    for img in range(b_tile):
        acc = None
        for g in range(4):
            y = jnp.dot(p_ref[img, g], w, preferred_element_type=jnp.float32)
            y = jnp.maximum(y * s + b, 0.0)
            acc = y if acc is None else acc + y
        o_ref[img] = (0.25 * acc).astype(o_ref.dtype)


def conv_pool_clast(patches, w, scale, bias, b_tile):
    # patches: (N, 4, Mo, K) bf16 ; w: (K, Cout) ; scale/bias: (1, Cout)
    n, _, mo, k = patches.shape
    cout = w.shape[1]
    assert n % b_tile == 0
    return pl.pallas_call(
        _conv_pool_clast_kernel,
        out_shape=jax.ShapeDtypeStruct((n, mo, cout), jnp.bfloat16),
        grid=(n // b_tile,),
        in_specs=[
            pl.BlockSpec((b_tile, 4, mo, k), lambda i: (i, 0, 0, 0)),
            pl.BlockSpec((k, cout), lambda i: (0, 0)),
            pl.BlockSpec((1, cout), lambda i: (0, 0)),
            pl.BlockSpec((1, cout), lambda i: (0, 0)),
        ],
        out_specs=pl.BlockSpec((b_tile, mo, cout), lambda i: (i, 0, 0)),
        compiler_params=pltpu.CompilerParams(dimension_semantics=("parallel",)),
    )(patches, w, scale, bias)


# ----------------------------------------------------------------------------
# Fused FC stack: logits = ((x @ W1 + b1) @ W2 + b2) @ W3 + b3
# (Dropout2d is identity in eval mode.)  Intermediates stay in VMEM/vregs.
# ----------------------------------------------------------------------------
def _fc_stack_kernel(x_ref, w1_ref, b1_ref, w2_ref, b2_ref, w3_ref, b3_ref, o_ref):
    h = jnp.dot(x_ref[...], w1_ref[...], preferred_element_type=jnp.float32)
    h = h + b1_ref[...]
    # TODO(synk): Dropout2d(0.25) identity (inference).
    h = jnp.dot(h.astype(jnp.bfloat16), w2_ref[...],
                preferred_element_type=jnp.float32) + b2_ref[...]
    h = jnp.dot(h.astype(jnp.bfloat16), w3_ref[...],
                preferred_element_type=jnp.float32) + b3_ref[...]
    o_ref[...] = h.astype(o_ref.dtype)


def fc_stack(x, w1, b1, w2, b2, w3, b3, tm_max=512):
    m, d_in = x.shape
    d1, d2, d3 = w1.shape[1], w2.shape[1], w3.shape[1]
    tm = m if m <= tm_max else tm_max
    return pl.pallas_call(
        _fc_stack_kernel,
        out_shape=jax.ShapeDtypeStruct((m, d3), jnp.float32),
        grid=(pl.cdiv(m, tm),),
        in_specs=[
            pl.BlockSpec((tm, d_in), lambda i: (i, 0)),
            pl.BlockSpec((d_in, d1), lambda i: (0, 0)),
            pl.BlockSpec((1, d1), lambda i: (0, 0)),
            pl.BlockSpec((d1, d2), lambda i: (0, 0)),
            pl.BlockSpec((1, d2), lambda i: (0, 0)),
            pl.BlockSpec((d2, d3), lambda i: (0, 0)),
            pl.BlockSpec((1, d3), lambda i: (0, 0)),
        ],
        out_specs=pl.BlockSpec((tm, d3), lambda i: (i, 0)),
        compiler_params=pltpu.CompilerParams(dimension_semantics=("parallel",)),
    )(x, w1, b1, w2, b2, w3, b3)


# ----------------------------------------------------------------------------
# Host glue: pool-grouped im2col (plain JAX, cheap at these shapes).
# patches[n, 2a+b, h*Wo+w, (di*3+dj)*C + c] = x[n, 2h+a+di, 2w+b+dj, c]
# so each group g holds the patches of the (a,b) tap of a 2x2/stride-2 pool.
# ----------------------------------------------------------------------------
def im2col_pool_grouped(x, ksize=3):
    n, h, w, c = x.shape
    hc, wc = h - ksize + 1, w - ksize + 1      # conv output size
    ho, wo = hc // 2, wc // 2                  # pooled output size
    groups = []
    for a in range(2):
        for b in range(2):
            taps = []
            for di in range(ksize):
                for dj in range(ksize):
                    taps.append(
                        x[:, a + di:a + di + 2 * ho:2, b + dj:b + dj + 2 * wo:2, :])
            g = jnp.stack(taps, axis=3).reshape(n, ho * wo, ksize * ksize * c)
            groups.append(g)
    return jnp.stack(groups, axis=1)           # (N, 4, Ho*Wo, k*k*C)


# ----------------------------------------------------------------------------
# Deterministic synthetic parameters (torch-equivalent layout):
#   conv weights as (kh, kw, Cin, Cout); fc weights as (in, out) where fc1's
#   "in" rows are in torch's flatten order (C, H, W).
# ----------------------------------------------------------------------------
def init_params(key):
    ks = jax.random.split(key, 12)
    p = {}
    p["w1"] = 0.10 * jax.random.normal(ks[0], (3, 3, 1, 32), jnp.float32)
    p["b1"] = 0.01 * jax.random.normal(ks[1], (32,), jnp.float32)
    p["bn1_gamma"] = 1.0 + 0.1 * jax.random.normal(ks[2], (32,), jnp.float32)
    p["bn1_beta"] = 0.1 * jax.random.normal(ks[3], (32,), jnp.float32)
    p["bn1_mean"] = jnp.zeros((32,), jnp.float32)
    p["bn1_var"] = jnp.ones((32,), jnp.float32)

    p["w2"] = 0.05 * jax.random.normal(ks[4], (3, 3, 32, 64), jnp.float32)
    p["b2"] = 0.01 * jax.random.normal(ks[5], (64,), jnp.float32)
    p["bn2_gamma"] = 1.0 + 0.1 * jax.random.normal(ks[6], (64,), jnp.float32)
    p["bn2_beta"] = 0.1 * jax.random.normal(ks[7], (64,), jnp.float32)
    p["bn2_mean"] = jnp.zeros((64,), jnp.float32)
    p["bn2_var"] = jnp.ones((64,), jnp.float32)

    p["fc1_w"] = 0.02 * jax.random.normal(ks[8], (64 * 6 * 6, 600), jnp.float32)
    p["fc1_b"] = jnp.zeros((600,), jnp.float32)
    p["fc2_w"] = 0.05 * jax.random.normal(ks[9], (600, 120), jnp.float32)
    p["fc2_b"] = jnp.zeros((120,), jnp.float32)
    p["fc3_w"] = 0.10 * jax.random.normal(ks[10], (120, 10), jnp.float32)
    p["fc3_b"] = jnp.zeros((10,), jnp.float32)
    return p


# ----------------------------------------------------------------------------
# One-time parameter prep: fold BN, cast matmul weights to bf16, transpose
# conv1's weight for the lane-dense formulation, permute fc1 rows from torch's
# (C,H,W) flatten order to our (H,W,C) order (kills the runtime transpose).
# ----------------------------------------------------------------------------
def prepare_params(params):
    eps = 1e-5
    prep = {}

    s1 = params["bn1_gamma"] / jnp.sqrt(params["bn1_var"] + eps)
    bb1 = params["bn1_beta"] + (params["b1"] - params["bn1_mean"]) * s1
    prep["s1"] = s1.reshape(32, 1).astype(jnp.float32)
    prep["bb1"] = bb1.reshape(32, 1).astype(jnp.float32)
    prep["w1t"] = params["w1"].reshape(9, 32).T.astype(jnp.bfloat16)   # (32, 9)

    s2 = params["bn2_gamma"] / jnp.sqrt(params["bn2_var"] + eps)
    bb2 = params["bn2_beta"] + (params["b2"] - params["bn2_mean"]) * s2
    prep["s2"] = s2.reshape(1, 64).astype(jnp.float32)
    prep["bb2"] = bb2.reshape(1, 64).astype(jnp.float32)
    prep["w2"] = params["w2"].reshape(9 * 32, 64).astype(jnp.bfloat16)

    # fc1 row permutation: HWC-flattened activation row (h*6+w)*64 + c must
    # multiply torch's CHW .view() row c*36 + h*6 + w.
    perm = np.array([c * 36 + h * 6 + w
                     for h in range(6) for w in range(6) for c in range(64)],
                    dtype=np.int32)
    prep["fc1_w"] = jnp.asarray(params["fc1_w"])[perm].astype(jnp.bfloat16)
    prep["fc1_b"] = params["fc1_b"].reshape(1, 600).astype(jnp.float32)
    prep["fc2_w"] = params["fc2_w"].astype(jnp.bfloat16)
    prep["fc2_b"] = params["fc2_b"].reshape(1, 120).astype(jnp.float32)
    prep["fc3_w"] = params["fc3_w"].astype(jnp.bfloat16)
    prep["fc3_b"] = params["fc3_b"].reshape(1, 10).astype(jnp.float32)
    return prep


# ----------------------------------------------------------------------------
# Forward pass (mirrors CosinePoolFashionCNN.forward).
# ----------------------------------------------------------------------------
def forward(prep, x_nchw, b_tile_max=8):
    n = x_nchw.shape[0]
    b_tile = min(b_tile_max, n)
    n_pad = ((n + b_tile - 1) // b_tile) * b_tile

    x = jnp.transpose(x_nchw, (0, 2, 3, 1)).astype(jnp.bfloat16)      # NHWC
    if n_pad != n:
        x = jnp.pad(x, ((0, n_pad - n), (0, 0), (0, 0), (0, 0)))
    x = jnp.pad(x, ((0, 0), (1, 1), (1, 1), (0, 0)))                  # conv1 pad=1

    # layer1: Conv(1,32,3,pad=1)+BN+ReLU+CosinePool2d(14); transposed patches
    # (Np, 4, 9, 196) -> channel-major activations (Np, 32, 196)
    p1 = jnp.swapaxes(im2col_pool_grouped(x, 3), -1, -2)
    a1 = conv_pool_cmajor(p1, prep["w1t"], prep["s1"], prep["bb1"], b_tile)
    a1 = jnp.transpose(a1.reshape(n_pad, 32, 14, 14), (0, 2, 3, 1))   # NHWC

    # layer2: Conv(32,64,3)+BN+ReLU+CosinePool2d(6) -> (Np, 36, 64)
    p2 = im2col_pool_grouped(a1, 3)                                   # (Np,4,36,288)
    a2 = conv_pool_clast(p2, prep["w2"], prep["s2"], prep["bb2"], b_tile)

    # Flatten in (H,W,C) order (free reshape); fc1_w rows pre-permuted to match
    # torch's (C,H,W) .view(N,-1) semantics.
    flat = a2.reshape(n_pad, 6 * 6 * 64)                              # (Np, 2304)

    logits = fc_stack(flat, prep["fc1_w"], prep["fc1_b"],
                      prep["fc2_w"], prep["fc2_b"],
                      prep["fc3_w"], prep["fc3_b"])                   # (Np, 10) f32
    return logits[:n]


if __name__ == "__main__":
    key = jax.random.PRNGKey(0)
    k_param, k_x = jax.random.split(key)
    params = init_params(k_param)
    prep = prepare_params(params)

    # FashionMNIST-shaped input (NCHW), batch=2; 28x28 is required by fc1 (64*6*6).
    x = jax.random.normal(k_x, (2, 1, 28, 28), jnp.float32)

    logits = jax.jit(forward)(prep, x)
    jax.block_until_ready(logits)
    assert logits.shape == (2, 10), logits.shape
    assert logits.dtype == jnp.float32
    assert bool(jnp.all(jnp.isfinite(logits)))
    print("KERNEL_OK")
</pallas_src>

<mosaic_0001>
module attributes {stable_mosaic.version = 11 : i64} {
  func.func @_conv_pool_cmajor_kernel(%arg0: i32, %arg1: memref<2x4x9x196xbf16, #tpu.memory_space<vmem>>, %arg2: memref<32x9xbf16, #tpu.memory_space<vmem>>, %arg3: memref<32x1xf32, #tpu.memory_space<vmem>>, %arg4: memref<32x1xf32, #tpu.memory_space<vmem>>, %arg5: memref<2x32x196xbf16, #tpu.memory_space<vmem>>) attributes {dimension_semantics = [#tpu.dimension_semantics<parallel>], iteration_bounds = array<i64: 1>, scalar_prefetch = 0 : i64, scratch_operands = 0 : i64, tpu.core_type = #tpu.core_type<tc>, window_params = [{transform_indices = @transform_0, window_bounds = array<i64: 2, 4, 9, 196>}, {pipeline_mode = #tpu.pipeline_mode<synchronous>, transform_indices = @transform_1, window_bounds = array<i64: 32, 9>}, {pipeline_mode = #tpu.pipeline_mode<synchronous>, transform_indices = @transform_2, window_bounds = array<i64: 32, 1>}, {pipeline_mode = #tpu.pipeline_mode<synchronous>, transform_indices = @transform_3, window_bounds = array<i64: 32, 1>}, {transform_indices = @transform_4, window_bounds = array<i64: 2, 32, 196>}]} {
    %c0 = arith.constant 0 : index
    %c0_0 = arith.constant 0 : index
    %0 = vector.load %arg2[%c0, %c0_0] : memref<32x9xbf16, #tpu.memory_space<vmem>>, vector<32x9xbf16>
    %c0_1 = arith.constant 0 : index
    %c0_2 = arith.constant 0 : index
    %1 = vector.load %arg3[%c0_1, %c0_2] : memref<32x1xf32, #tpu.memory_space<vmem>>, vector<32x1xf32>
    %c0_3 = arith.constant 0 : index
    %c0_4 = arith.constant 0 : index
    %2 = vector.load %arg4[%c0_3, %c0_4] : memref<32x1xf32, #tpu.memory_space<vmem>>, vector<32x1xf32>
    %c0_5 = arith.constant 0 : index
    %c0_6 = arith.constant 0 : index
    %c0_7 = arith.constant 0 : index
    %c0_8 = arith.constant 0 : index
    %3 = vector.load %arg1[%c0_5, %c0_6, %c0_7, %c0_8] : memref<2x4x9x196xbf16, #tpu.memory_space<vmem>>, vector<1x1x9x196xbf16>
    %4 = vector.shape_cast %3 : vector<1x1x9x196xbf16> to vector<9x196xbf16>
    %cst = arith.constant dense<0.000000e+00> : vector<32x196xf32>
    %5 = tpu.matmul %0, %4, %cst {dimension_numbers = #tpu.dot_dimension_numbers<[1], [0], [0], [1], [0, 0, 1, 1], [], []>} : vector<32x9xbf16>, vector<9x196xbf16>, vector<32x196xf32> -> vector<32x196xf32>
    %6 = vector.broadcast %1 : vector<32x1xf32> to vector<32x196xf32>
    %7 = arith.mulf %5, %6 : vector<32x196xf32>
    %8 = vector.broadcast %2 : vector<32x1xf32> to vector<32x196xf32>
    %9 = arith.addf %7, %8 : vector<32x196xf32>
    %cst_9 = arith.constant 0.000000e+00 : f32
    %10 = vector.broadcast %cst_9 : f32 to vector<32x196xf32>
    %11 = arith.maximumf %9, %10 : vector<32x196xf32>
    %c0_10 = arith.constant 0 : index
    %c1 = arith.constant 1 : index
    %c0_11 = arith.constant 0 : index
    %c0_12 = arith.constant 0 : index
    %12 = vector.load %arg1[%c0_10, %c1, %c0_11, %c0_12] : memref<2x4x9x196xbf16, #tpu.memory_space<vmem>>, vector<1x1x9x196xbf16>
    %13 = vector.shape_cast %12 : vector<1x1x9x196xbf16> to vector<9x196xbf16>
    %cst_13 = arith.constant dense<0.000000e+00> : vector<32x196xf32>
    %14 = tpu.matmul %0, %13, %cst_13 {dimension_numbers = #tpu.dot_dimension_numbers<[1], [0], [0], [1], [0, 0, 1, 1], [], []>} : vector<32x9xbf16>, vector<9x196xbf16>, vector<32x196xf32> -> vector<32x196xf32>
    %15 = vector.broadcast %1 : vector<32x1xf32> to vector<32x196xf32>
    %16 = arith.mulf %14, %15 : vector<32x196xf32>
    %17 = vector.broadcast %2 : vector<32x1xf32> to vector<32x196xf32>
    %18 = arith.addf %16, %17 : vector<32x196xf32>
    %cst_14 = arith.constant 0.000000e+00 : f32
    %19 = vector.broadcast %cst_14 : f32 to vector<32x196xf32>
    %20 = arith.maximumf %18, %19 : vector<32x196xf32>
    %21 = arith.addf %11, %20 : vector<32x196xf32>
    %c0_15 = arith.constant 0 : index
    %c2 = arith.constant 2 : index
    %c0_16 = arith.constant 0 : index
    %c0_17 = arith.constant 0 : index
    %22 = vector.load %arg1[%c0_15, %c2, %c0_16, %c0_17] : memref<2x4x9x196xbf16, #tpu.memory_space<vmem>>, vector<1x1x9x196xbf16>
    %23 = vector.shape_cast %22 : vector<1x1x9x196xbf16> to vector<9x196xbf16>
    %cst_18 = arith.constant dense<0.000000e+00> : vector<32x196xf32>
    %24 = tpu.matmul %0, %23, %cst_18 {dimension_numbers = #tpu.dot_dimension_numbers<[1], [0], [0], [1], [0, 0, 1, 1], [], []>} : vector<32x9xbf16>, vector<9x196xbf16>, vector<32x196xf32> -> vector<32x196xf32>
    %25 = vector.broadcast %1 : vector<32x1xf32> to vector<32x196xf32>
    %26 = arith.mulf %24, %25 : vector<32x196xf32>
    %27 = vector.broadcast %2 : vector<32x1xf32> to vector<32x196xf32>
    %28 = arith.addf %26, %27 : vector<32x196xf32>
    %cst_19 = arith.constant 0.000000e+00 : f32
    %29 = vector.broadcast %cst_19 : f32 to vector<32x196xf32>
    %30 = arith.maximumf %28, %29 : vector<32x196xf32>
    %31 = arith.addf %21, %30 : vector<32x196xf32>
    %c0_20 = arith.constant 0 : index
    %c3 = arith.constant 3 : index
    %c0_21 = arith.constant 0 : index
    %c0_22 = arith.constant 0 : index
    %32 = vector.load %arg1[%c0_20, %c3, %c0_21, %c0_22] : memref<2x4x9x196xbf16, #tpu.memory_space<vmem>>, vector<1x1x9x196xbf16>
    %33 = vector.shape_cast %32 : vector<1x1x9x196xbf16> to vector<9x196xbf16>
    %cst_23 = arith.constant dense<0.000000e+00> : vector<32x196xf32>
    %34 = tpu.matmul %0, %33, %cst_23 {dimension_numbers = #tpu.dot_dimension_numbers<[1], [0], [0], [1], [0, 0, 1, 1], [], []>} : vector<32x9xbf16>, vector<9x196xbf16>, vector<32x196xf32> -> vector<32x196xf32>
    %35 = vector.broadcast %1 : vector<32x1xf32> to vector<32x196xf32>
    %36 = arith.mulf %34, %35 : vector<32x196xf32>
    %37 = vector.broadcast %2 : vector<32x1xf32> to vector<32x196xf32>
    %38 = arith.addf %36, %37 : vector<32x196xf32>
    %cst_24 = arith.constant 0.000000e+00 : f32
    %39 = vector.broadcast %cst_24 : f32 to vector<32x196xf32>
    %40 = arith.maximumf %38, %39 : vector<32x196xf32>
    %41 = arith.addf %31, %40 : vector<32x196xf32>
    %cst_25 = arith.constant 2.500000e-01 : f32
    %42 = vector.broadcast %cst_25 : f32 to vector<32x196xf32>
    %43 = arith.mulf %42, %41 : vector<32x196xf32>
    %44 = arith.truncf %43 : vector<32x196xf32> to vector<32x196xbf16>
    %c0_26 = arith.constant 0 : index
    %c0_27 = arith.constant 0 : index
    %c0_28 = arith.constant 0 : index
    %45 = vector.load %arg5[%c0_26, %c0_27, %c0_28] : memref<2x32x196xbf16, #tpu.memory_space<vmem>>, vector<1x32x196xbf16>
    %46 = vector.shape_cast %45 : vector<1x32x196xbf16> to vector<32x196xbf16>
    %47 = vector.shape_cast %44 : vector<32x196xbf16> to vector<1x32x196xbf16>
    tpu.vector_store %arg5[%c0_26, %c0_27, %c0_28], %47 {strides = array<i32>} : memref<2x32x196xbf16, #tpu.memory_space<vmem>>, vector<1x32x196xbf16>,
    %c1_29 = arith.constant 1 : index
    %c0_30 = arith.constant 0 : index
    %c0_31 = arith.constant 0 : index
    %c0_32 = arith.constant 0 : index
    %48 = vector.load %arg1[%c1_29, %c0_30, %c0_31, %c0_32] : memref<2x4x9x196xbf16, #tpu.memory_space<vmem>>, vector<1x1x9x196xbf16>
    %49 = vector.shape_cast %48 : vector<1x1x9x196xbf16> to vector<9x196xbf16>
    %cst_33 = arith.constant dense<0.000000e+00> : vector<32x196xf32>
    %50 = tpu.matmul %0, %49, %cst_33 {dimension_numbers = #tpu.dot_dimension_numbers<[1], [0], [0], [1], [0, 0, 1, 1], [], []>} : vector<32x9xbf16>, vector<9x196xbf16>, vector<32x196xf32> -> vector<32x196xf32>
    %51 = vector.broadcast %1 : vector<32x1xf32> to vector<32x196xf32>
    %52 = arith.mulf %50, %51 : vector<32x196xf32>
    %53 = vector.broadcast %2 : vector<32x1xf32> to vector<32x196xf32>
    %54 = arith.addf %52, %53 : vector<32x196xf32>
    %cst_34 = arith.constant 0.000000e+00 : f32
    %55 = vector.broadcast %cst_34 : f32 to vector<32x196xf32>
    %56 = arith.maximumf %54, %55 : vector<32x196xf32>
    %c1_35 = arith.constant 1 : index
    %c1_36 = arith.constant 1 : index
    %c0_37 = arith.constant 0 : index
    %c0_38 = arith.constant 0 : index
    %57 = vector.load %arg1[%c1_35, %c1_36, %c0_37, %c0_38] : memref<2x4x9x196xbf16, #tpu.memory_space<vmem>>, vector<1x1x9x196xbf16>
    %58 = vector.shape_cast %57 : vector<1x1x9x196xbf16> to vector<9x196xbf16>
    %cst_39 = arith.constant dense<0.000000e+00> : vector<32x196xf32>
    %59 = tpu.matmul %0, %58, %cst_39 {dimension_numbers = #tpu.dot_dimension_numbers<[1], [0], [0], [1], [0, 0, 1, 1], [], []>} : vector<32x9xbf16>, vector<9x196xbf16>, vector<32x196xf32> -> vector<32x196xf32>
    %60 = vector.broadcast %1 : vector<32x1xf32> to vector<32x196xf32>
    %61 = arith.mulf %59, %60 : vector<32x196xf32>
    %62 = vector.broadcast %2 : vector<32x1xf32> to vector<32x196xf32>
    %63 = arith.addf %61, %62 : vector<32x196xf32>
    %cst_40 = arith.constant 0.000000e+00 : f32
    %64 = vector.broadcast %cst_40 : f32 to vector<32x196xf32>
    %65 = arith.maximumf %63, %64 : vector<32x196xf32>
    %66 = arith.addf %56, %65 : vector<32x196xf32>
    %c1_41 = arith.constant 1 : index
    %c2_42 = arith.constant 2 : index
    %c0_43 = arith.constant 0 : index
    %c0_44 = arith.constant 0 : index
    %67 = vector.load %arg1[%c1_41, %c2_42, %c0_43, %c0_44] : memref<2x4x9x196xbf16, #tpu.memory_space<vmem>>, vector<1x1x9x196xbf16>
    %68 = vector.shape_cast %67 : vector<1x1x9x196xbf16> to vector<9x196xbf16>
    %cst_45 = arith.constant dense<0.000000e+00> : vector<32x196xf32>
    %69 = tpu.matmul %0, %68, %cst_45 {dimension_numbers = #tpu.dot_dimension_numbers<[1], [0], [0], [1], [0, 0, 1, 1], [], []>} : vector<32x9xbf16>, vector<9x196xbf16>, vector<32x196xf32> -> vector<32x196xf32>
    %70 = vector.broadcast %1 : vector<32x1xf32> to vector<32x196xf32>
    %71 = arith.mulf %69, %70 : vector<32x196xf32>
    %72 = vector.broadcast %2 : vector<32x1xf32> to vector<32x196xf32>
    %73 = arith.addf %71, %72 : vector<32x196xf32>
    %cst_46 = arith.constant 0.000000e+00 : f32
    %74 = vector.broadcast %cst_46 : f32 to vector<32x196xf32>
    %75 = arith.maximumf %73, %74 : vector<32x196xf32>
    %76 = arith.addf %66, %75 : vector<32x196xf32>
    %c1_47 = arith.constant 1 : index
    %c3_48 = arith.constant 3 : index
    %c0_49 = arith.constant 0 : index
    %c0_50 = arith.constant 0 : index
    %77 = vector.load %arg1[%c1_47, %c3_48, %c0_49, %c0_50] : memref<2x4x9x196xbf16, #tpu.memory_space<vmem>>, vector<1x1x9x196xbf16>
    %78 = vector.shape_cast %77 : vector<1x1x9x196xbf16> to vector<9x196xbf16>
    %cst_51 = arith.constant dense<0.000000e+00> : vector<32x196xf32>
    %79 = tpu.matmul %0, %78, %cst_51 {dimension_numbers = #tpu.dot_dimension_numbers<[1], [0], [0], [1], [0, 0, 1, 1], [], []>} : vector<32x9xbf16>, vector<9x196xbf16>, vector<32x196xf32> -> vector<32x196xf32>
    %80 = vector.broadcast %1 : vector<32x1xf32> to vector<32x196xf32>
    %81 = arith.mulf %79, %80 : vector<32x196xf32>
    %82 = vector.broadcast %2 : vector<32x1xf32> to vector<32x196xf32>
    %83 = arith.addf %81, %82 : vector<32x196xf32>
    %cst_52 = arith.constant 0.000000e+00 : f32
    %84 = vector.broadcast %cst_52 : f32 to vector<32x196xf32>
    %85 = arith.maximumf %83, %84 : vector<32x196xf32>
    %86 = arith.addf %76, %85 : vector<32x196xf32>
    %cst_53 = arith.constant 2.500000e-01 : f32
    %87 = vector.broadcast %cst_53 : f32 to vector<32x196xf32>
    %88 = arith.mulf %87, %86 : vector<32x196xf32>
    %89 = arith.truncf %88 : vector<32x196xf32> to vector<32x196xbf16>
    %c1_54 = arith.constant 1 : index
    %c0_55 = arith.constant 0 : index
    %c0_56 = arith.constant 0 : index
    %90 = vector.load %arg5[%c1_54, %c0_55, %c0_56] : memref<2x32x196xbf16, #tpu.memory_space<vmem>>, vector<1x32x196xbf16>
    %91 = vector.shape_cast %90 : vector<1x32x196xbf16> to vector<32x196xbf16>
    %92 = vector.shape_cast %89 : vector<32x196xbf16> to vector<1x32x196xbf16>
    tpu.vector_store %arg5[%c1_54, %c0_55, %c0_56], %92 {strides = array<i32>} : memref<2x32x196xbf16, #tpu.memory_space<vmem>>, vector<1x32x196xbf16>,
    return
  }
  func.func @transform_0(%arg0: i32) -> (i32, i32, i32, i32) {
    %c0_i32 = arith.constant 0 : i32
    %c0_i32_0 = arith.constant 0 : i32
    %c0_i32_1 = arith.constant 0 : i32
    %c0_i32_2 = arith.constant 0 : i32
    return %arg0, %c0_i32, %c0_i32_0, %c0_i32_1 : i32, i32, i32, i32
  }
  func.func @transform_1(%arg0: i32) -> (i32, i32) {
    %c0_i32 = arith.constant 0 : i32
    %c0_i32_0 = arith.constant 0 : i32
    %c0_i32_1 = arith.constant 0 : i32
    return %c0_i32, %c0_i32_0 : i32, i32
  }
  func.func @transform_2(%arg0: i32) -> (i32, i32) {
    %c0_i32 = arith.constant 0 : i32
    %c0_i32_0 = arith.constant 0 : i32
    %c0_i32_1 = arith.constant 0 : i32
    return %c0_i32, %c0_i32_0 : i32, i32
  }
  func.func @transform_3(%arg0: i32) -> (i32, i32) {
    %c0_i32 = arith.constant 0 : i32
    %c0_i32_0 = arith.constant 0 : i32
    %c0_i32_1 = arith.constant 0 : i32
    return %c0_i32, %c0_i32_0 : i32, i32
  }
  func.func @transform_4(%arg0: i32) -> (i32, i32, i32) {
    %c0_i32 = arith.constant 0 : i32
    %c0_i32_0 = arith.constant 0 : i32
    %c0_i32_1 = arith.constant 0 : i32
    return %arg0, %c0_i32, %c0_i32_0 : i32, i32, i32
  }
}

module attributes {stable_mosaic.version = 11 : i64} {
  func.func @_conv_pool_clast_kernel(%arg0: i32, %arg1: memref<2x4x36x288xbf16, #tpu.memory_space<vmem>>, %arg2: memref<288x64xbf16, #tpu.memory_space<vmem>>, %arg3: memref<1x64xf32, #tpu.memory_space<vmem>>, %arg4: memref<1x64xf32, #tpu.memory_space<vmem>>, %arg5: memref<2x36x64xbf16, #tpu.memory_space<vmem>>) attributes {dimension_semantics = [#tpu.dimension_semantics<parallel>], iteration_bounds = array<i64: 1>, scalar_prefetch = 0 : i64, scratch_operands = 0 : i64, tpu.core_type = #tpu.core_type<tc>, window_params = [{transform_indices = @transform_0, window_bounds = array<i64: 2, 4, 36, 288>}, {pipeline_mode = #tpu.pipeline_mode<synchronous>, transform_indices = @transform_1, window_bounds = array<i64: 288, 64>}, {pipeline_mode = #tpu.pipeline_mode<synchronous>, transform_indices = @transform_2, window_bounds = array<i64: 1, 64>}, {pipeline_mode = #tpu.pipeline_mode<synchronous>, transform_indices = @transform_3, window_bounds = array<i64: 1, 64>}, {transform_indices = @transform_4, window_bounds = array<i64: 2, 36, 64>}]} {
    %c0 = arith.constant 0 : index
    %c0_0 = arith.constant 0 : index
    %0 = vector.load %arg2[%c0, %c0_0] : memref<288x64xbf16, #tpu.memory_space<vmem>>, vector<288x64xbf16>
    %c0_1 = arith.constant 0 : index
    %c0_2 = arith.constant 0 : index
    %1 = vector.load %arg3[%c0_1, %c0_2] : memref<1x64xf32, #tpu.memory_space<vmem>>, vector<1x64xf32>
    %c0_3 = arith.constant 0 : index
    %c0_4 = arith.constant 0 : index
    %2 = vector.load %arg4[%c0_3, %c0_4] : memref<1x64xf32, #tpu.memory_space<vmem>>, vector<1x64xf32>
    %c0_5 = arith.constant 0 : index
    %c0_6 = arith.constant 0 : index
    %c0_7 = arith.constant 0 : index
    %c0_8 = arith.constant 0 : index
    %3 = vector.load %arg1[%c0_5, %c0_6, %c0_7, %c0_8] : memref<2x4x36x288xbf16, #tpu.memory_space<vmem>>, vector<1x1x36x288xbf16>
    %4 = vector.shape_cast %3 : vector<1x1x36x288xbf16> to vector<36x288xbf16>
    %cst = arith.constant dense<0.000000e+00> : vector<36x64xf32>
    %5 = tpu.matmul %4, %0, %cst {dimension_numbers = #tpu.dot_dimension_numbers<[1], [0], [0], [1], [0, 0, 1, 1], [], []>} : vector<36x288xbf16>, vector<288x64xbf16>, vector<36x64xf32> -> vector<36x64xf32>
    %6 = vector.broadcast %1 : vector<1x64xf32> to vector<36x64xf32>
    %7 = arith.mulf %5, %6 : vector<36x64xf32>
    %8 = vector.broadcast %2 : vector<1x64xf32> to vector<36x64xf32>
    %9 = arith.addf %7, %8 : vector<36x64xf32>
    %cst_9 = arith.constant 0.000000e+00 : f32
    %10 = vector.broadcast %cst_9 : f32 to vector<36x64xf32>
    %11 = arith.maximumf %9, %10 : vector<36x64xf32>
    %c0_10 = arith.constant 0 : index
    %c1 = arith.constant 1 : index
    %c0_11 = arith.constant 0 : index
    %c0_12 = arith.constant 0 : index
    %12 = vector.load %arg1[%c0_10, %c1, %c0_11, %c0_12] : memref<2x4x36x288xbf16, #tpu.memory_space<vmem>>, vector<1x1x36x288xbf16>
    %13 = vector.shape_cast %12 : vector<1x1x36x288xbf16> to vector<36x288xbf16>
    %cst_13 = arith.constant dense<0.000000e+00> : vector<36x64xf32>
    %14 = tpu.matmul %13, %0, %cst_13 {dimension_numbers = #tpu.dot_dimension_numbers<[1], [0], [0], [1], [0, 0, 1, 1], [], []>} : vector<36x288xbf16>, vector<288x64xbf16>, vector<36x64xf32> -> vector<36x64xf32>
    %15 = vector.broadcast %1 : vector<1x64xf32> to vector<36x64xf32>
    %16 = arith.mulf %14, %15 : vector<36x64xf32>
    %17 = vector.broadcast %2 : vector<1x64xf32> to vector<36x64xf32>
    %18 = arith.addf %16, %17 : vector<36x64xf32>
    %cst_14 = arith.constant 0.000000e+00 : f32
    %19 = vector.broadcast %cst_14 : f32 to vector<36x64xf32>
    %20 = arith.maximumf %18, %19 : vector<36x64xf32>
    %21 = arith.addf %11, %20 : vector<36x64xf32>
    %c0_15 = arith.constant 0 : index
    %c2 = arith.constant 2 : index
    %c0_16 = arith.constant 0 : index
    %c0_17 = arith.constant 0 : index
    %22 = vector.load %arg1[%c0_15, %c2, %c0_16, %c0_17] : memref<2x4x36x288xbf16, #tpu.memory_space<vmem>>, vector<1x1x36x288xbf16>
    %23 = vector.shape_cast %22 : vector<1x1x36x288xbf16> to vector<36x288xbf16>
    %cst_18 = arith.constant dense<0.000000e+00> : vector<36x64xf32>
    %24 = tpu.matmul %23, %0, %cst_18 {dimension_numbers = #tpu.dot_dimension_numbers<[1], [0], [0], [1], [0, 0, 1, 1], [], []>} : vector<36x288xbf16>, vector<288x64xbf16>, vector<36x64xf32> -> vector<36x64xf32>
    %25 = vector.broadcast %1 : vector<1x64xf32> to vector<36x64xf32>
    %26 = arith.mulf %24, %25 : vector<36x64xf32>
    %27 = vector.broadcast %2 : vector<1x64xf32> to vector<36x64xf32>
    %28 = arith.addf %26, %27 : vector<36x64xf32>
    %cst_19 = arith.constant 0.000000e+00 : f32
    %29 = vector.broadcast %cst_19 : f32 to vector<36x64xf32>
    %30 = arith.maximumf %28, %29 : vector<36x64xf32>
    %31 = arith.addf %21, %30 : vector<36x64xf32>
    %c0_20 = arith.constant 0 : index
    %c3 = arith.constant 3 : index
    %c0_21 = arith.constant 0 : index
    %c0_22 = arith.constant 0 : index
    %32 = vector.load %arg1[%c0_20, %c3, %c0_21, %c0_22] : memref<2x4x36x288xbf16, #tpu.memory_space<vmem>>, vector<1x1x36x288xbf16>
    %33 = vector.shape_cast %32 : vector<1x1x36x288xbf16> to vector<36x288xbf16>
    %cst_23 = arith.constant dense<0.000000e+00> : vector<36x64xf32>
    %34 = tpu.matmul %33, %0, %cst_23 {dimension_numbers = #tpu.dot_dimension_numbers<[1], [0], [0], [1], [0, 0, 1, 1], [], []>} : vector<36x288xbf16>, vector<288x64xbf16>, vector<36x64xf32> -> vector<36x64xf32>
    %35 = vector.broadcast %1 : vector<1x64xf32> to vector<36x64xf32>
    %36 = arith.mulf %34, %35 : vector<36x64xf32>
    %37 = vector.broadcast %2 : vector<1x64xf32> to vector<36x64xf32>
    %38 = arith.addf %36, %37 : vector<36x64xf32>
    %cst_24 = arith.constant 0.000000e+00 : f32
    %39 = vector.broadcast %cst_24 : f32 to vector<36x64xf32>
    %40 = arith.maximumf %38, %39 : vector<36x64xf32>
    %41 = arith.addf %31, %40 : vector<36x64xf32>
    %cst_25 = arith.constant 2.500000e-01 : f32
    %42 = vector.broadcast %cst_25 : f32 to vector<36x64xf32>
    %43 = arith.mulf %42, %41 : vector<36x64xf32>
    %44 = arith.truncf %43 : vector<36x64xf32> to vector<36x64xbf16>
    %c0_26 = arith.constant 0 : index
    %c0_27 = arith.constant 0 : index
    %c0_28 = arith.constant 0 : index
    %45 = vector.load %arg5[%c0_26, %c0_27, %c0_28] : memref<2x36x64xbf16, #tpu.memory_space<vmem>>, vector<1x36x64xbf16>
    %46 = vector.shape_cast %45 : vector<1x36x64xbf16> to vector<36x64xbf16>
    %47 = vector.shape_cast %44 : vector<36x64xbf16> to vector<1x36x64xbf16>
    tpu.vector_store %arg5[%c0_26, %c0_27, %c0_28], %47 {strides = array<i32>} : memref<2x36x64xbf16, #tpu.memory_space<vmem>>, vector<1x36x64xbf16>,
    %c1_29 = arith.constant 1 : index
    %c0_30 = arith.constant 0 : index
    %c0_31 = arith.constant 0 : index
    %c0_32 = arith.constant 0 : index
    %48 = vector.load %arg1[%c1_29, %c0_30, %c0_31, %c0_32] : memref<2x4x36x288xbf16, #tpu.memory_space<vmem>>, vector<1x1x36x288xbf16>
    %49 = vector.shape_cast %48 : vector<1x1x36x288xbf16> to vector<36x288xbf16>
    %cst_33 = arith.constant dense<0.000000e+00> : vector<36x64xf32>
    %50 = tpu.matmul %49, %0, %cst_33 {dimension_numbers = #tpu.dot_dimension_numbers<[1], [0], [0], [1], [0, 0, 1, 1], [], []>} : vector<36x288xbf16>, vector<288x64xbf16>, vector<36x64xf32> -> vector<36x64xf32>
    %51 = vector.broadcast %1 : vector<1x64xf32> to vector<36x64xf32>
    %52 = arith.mulf %50, %51 : vector<36x64xf32>
    %53 = vector.broadcast %2 : vector<1x64xf32> to vector<36x64xf32>
    %54 = arith.addf %52, %53 : vector<36x64xf32>
    %cst_34 = arith.constant 0.000000e+00 : f32
    %55 = vector.broadcast %cst_34 : f32 to vector<36x64xf32>
    %56 = arith.maximumf %54, %55 : vector<36x64xf32>
    %c1_35 = arith.constant 1 : index
    %c1_36 = arith.constant 1 : index
    %c0_37 = arith.constant 0 : index
    %c0_38 = arith.constant 0 : index
    %57 = vector.load %arg1[%c1_35, %c1_36, %c0_37, %c0_38] : memref<2x4x36x288xbf16, #tpu.memory_space<vmem>>, vector<1x1x36x288xbf16>
    %58 = vector.shape_cast %57 : vector<1x1x36x288xbf16> to vector<36x288xbf16>
    %cst_39 = arith.constant dense<0.000000e+00> : vector<36x64xf32>
    %59 = tpu.matmul %58, %0, %cst_39 {dimension_numbers = #tpu.dot_dimension_numbers<[1], [0], [0], [1], [0, 0, 1, 1], [], []>} : vector<36x288xbf16>, vector<288x64xbf16>, vector<36x64xf32> -> vector<36x64xf32>
    %60 = vector.broadcast %1 : vector<1x64xf32> to vector<36x64xf32>
    %61 = arith.mulf %59, %60 : vector<36x64xf32>
    %62 = vector.broadcast %2 : vector<1x64xf32> to vector<36x64xf32>
    %63 = arith.addf %61, %62 : vector<36x64xf32>
    %cst_40 = arith.constant 0.000000e+00 : f32
    %64 = vector.broadcast %cst_40 : f32 to vector<36x64xf32>
    %65 = arith.maximumf %63, %64 : vector<36x64xf32>
    %66 = arith.addf %56, %65 : vector<36x64xf32>
    %c1_41 = arith.constant 1 : index
    %c2_42 = arith.constant 2 : index
    %c0_43 = arith.constant 0 : index
    %c0_44 = arith.constant 0 : index
    %67 = vector.load %arg1[%c1_41, %c2_42, %c0_43, %c0_44] : memref<2x4x36x288xbf16, #tpu.memory_space<vmem>>, vector<1x1x36x288xbf16>
    %68 = vector.shape_cast %67 : vector<1x1x36x288xbf16> to vector<36x288xbf16>
    %cst_45 = arith.constant dense<0.000000e+00> : vector<36x64xf32>
    %69 = tpu.matmul %68, %0, %cst_45 {dimension_numbers = #tpu.dot_dimension_numbers<[1], [0], [0], [1], [0, 0, 1, 1], [], []>} : vector<36x288xbf16>, vector<288x64xbf16>, vector<36x64xf32> -> vector<36x64xf32>
    %70 = vector.broadcast %1 : vector<1x64xf32> to vector<36x64xf32>
    %71 = arith.mulf %69, %70 : vector<36x64xf32>
    %72 = vector.broadcast %2 : vector<1x64xf32> to vector<36x64xf32>
    %73 = arith.addf %71, %72 : vector<36x64xf32>
    %cst_46 = arith.constant 0.000000e+00 : f32
    %74 = vector.broadcast %cst_46 : f32 to vector<36x64xf32>
    %75 = arith.maximumf %73, %74 : vector<36x64xf32>
    %76 = arith.addf %66, %75 : vector<36x64xf32>
    %c1_47 = arith.constant 1 : index
    %c3_48 = arith.constant 3 : index
    %c0_49 = arith.constant 0 : index
    %c0_50 = arith.constant 0 : index
    %77 = vector.load %arg1[%c1_47, %c3_48, %c0_49, %c0_50] : memref<2x4x36x288xbf16, #tpu.memory_space<vmem>>, vector<1x1x36x288xbf16>
    %78 = vector.shape_cast %77 : vector<1x1x36x288xbf16> to vector<36x288xbf16>
    %cst_51 = arith.constant dense<0.000000e+00> : vector<36x64xf32>
    %79 = tpu.matmul %78, %0, %cst_51 {dimension_numbers = #tpu.dot_dimension_numbers<[1], [0], [0], [1], [0, 0, 1, 1], [], []>} : vector<36x288xbf16>, vector<288x64xbf16>, vector<36x64xf32> -> vector<36x64xf32>
    %80 = vector.broadcast %1 : vector<1x64xf32> to vector<36x64xf32>
    %81 = arith.mulf %79, %80 : vector<36x64xf32>
    %82 = vector.broadcast %2 : vector<1x64xf32> to vector<36x64xf32>
    %83 = arith.addf %81, %82 : vector<36x64xf32>
    %cst_52 = arith.constant 0.000000e+00 : f32
    %84 = vector.broadcast %cst_52 : f32 to vector<36x64xf32>
    %85 = arith.maximumf %83, %84 : vector<36x64xf32>
    %86 = arith.addf %76, %85 : vector<36x64xf32>
    %cst_53 = arith.constant 2.500000e-01 : f32
    %87 = vector.broadcast %cst_53 : f32 to vector<36x64xf32>
    %88 = arith.mulf %87, %86 : vector<36x64xf32>
    %89 = arith.truncf %88 : vector<36x64xf32> to vector<36x64xbf16>
    %c1_54 = arith.constant 1 : index
    %c0_55 = arith.constant 0 : index
    %c0_56 = arith.constant 0 : index
    %90 = vector.load %arg5[%c1_54, %c0_55, %c0_56] : memref<2x36x64xbf16, #tpu.memory_space<vmem>>, vector<1x36x64xbf16>
    %91 = vector.shape_cast %90 : vector<1x36x64xbf16> to vector<36x64xbf16>
    %92 = vector.shape_cast %89 : vector<36x64xbf16> to vector<1x36x64xbf16>
    tpu.vector_store %arg5[%c1_54, %c0_55, %c0_56], %92 {strides = array<i32>} : memref<2x36x64xbf16, #tpu.memory_space<vmem>>, vector<1x36x64xbf16>,
    return
  }
  func.func @transform_0(%arg0: i32) -> (i32, i32, i32, i32) {
    %c0_i32 = arith.constant 0 : i32
    %c0_i32_0 = arith.constant 0 : i32
    %c0_i32_1 = arith.constant 0 : i32
    %c0_i32_2 = arith.constant 0 : i32
    return %arg0, %c0_i32, %c0_i32_0, %c0_i32_1 : i32, i32, i32, i32
  }
  func.func @transform_1(%arg0: i32) -> (i32, i32) {
    %c0_i32 = arith.constant 0 : i32
    %c0_i32_0 = arith.constant 0 : i32
    %c0_i32_1 = arith.constant 0 : i32
    return %c0_i32, %c0_i32_0 : i32, i32
  }
  func.func @transform_2(%arg0: i32) -> (i32, i32) {
    %c0_i32 = arith.constant 0 : i32
    %c0_i32_0 = arith.constant 0 : i32
    %c0_i32_1 = arith.constant 0 : i32
    return %c0_i32, %c0_i32_0 : i32, i32
  }
  func.func @transform_3(%arg0: i32) -> (i32, i32) {
    %c0_i32 = arith.constant 0 : i32
    %c0_i32_0 = arith.constant 0 : i32
    %c0_i32_1 = arith.constant 0 : i32
    return %c0_i32, %c0_i32_0 : i32, i32
  }
  func.func @transform_4(%arg0: i32) -> (i32, i32, i32) {
    %c0_i32 = arith.constant 0 : i32
    %c0_i32_0 = arith.constant 0 : i32
    %c0_i32_1 = arith.constant 0 : i32
    return %arg0, %c0_i32, %c0_i32_0 : i32, i32, i32
  }
}

module attributes {stable_mosaic.version = 11 : i64} {
  func.func @_fc_stack_kernel(%arg0: i32, %arg1: memref<2x2304xbf16, #tpu.memory_space<vmem>>, %arg2: memref<2304x600xbf16, #tpu.memory_space<vmem>>, %arg3: memref<1x600xf32, #tpu.memory_space<vmem>>, %arg4: memref<600x120xbf16, #tpu.memory_space<vmem>>, %arg5: memref<1x120xf32, #tpu.memory_space<vmem>>, %arg6: memref<120x10xbf16, #tpu.memory_space<vmem>>, %arg7: memref<1x10xf32, #tpu.memory_space<vmem>>, %arg8: memref<2x10xf32, #tpu.memory_space<vmem>>) attributes {dimension_semantics = [#tpu.dimension_semantics<parallel>], iteration_bounds = array<i64: 1>, scalar_prefetch = 0 : i64, scratch_operands = 0 : i64, tpu.core_type = #tpu.core_type<tc>, window_params = [{transform_indices = @transform_0, window_bounds = array<i64: 2, 2304>}, {pipeline_mode = #tpu.pipeline_mode<synchronous>, transform_indices = @transform_1, window_bounds = array<i64: 2304, 600>}, {pipeline_mode = #tpu.pipeline_mode<synchronous>, transform_indices = @transform_2, window_bounds = array<i64: 1, 600>}, {pipeline_mode = #tpu.pipeline_mode<synchronous>, transform_indices = @transform_3, window_bounds = array<i64: 600, 120>}, {pipeline_mode = #tpu.pipeline_mode<synchronous>, transform_indices = @transform_4, window_bounds = array<i64: 1, 120>}, {pipeline_mode = #tpu.pipeline_mode<synchronous>, transform_indices = @transform_5, window_bounds = array<i64: 120, 10>}, {pipeline_mode = #tpu.pipeline_mode<synchronous>, transform_indices = @transform_6, window_bounds = array<i64: 1, 10>}, {transform_indices = @transform_7, window_bounds = array<i64: 2, 10>}]} {
    %c0 = arith.constant 0 : index
    %c0_0 = arith.constant 0 : index
    %0 = vector.load %arg1[%c0, %c0_0] : memref<2x2304xbf16, #tpu.memory_space<vmem>>, vector<2x2304xbf16>
    %c0_1 = arith.constant 0 : index
    %c0_2 = arith.constant 0 : index
    %1 = vector.load %arg2[%c0_1, %c0_2] : memref<2304x600xbf16, #tpu.memory_space<vmem>>, vector<2304x600xbf16>
    %cst = arith.constant dense<0.000000e+00> : vector<2x600xf32>
    %2 = tpu.matmul %0, %1, %cst {dimension_numbers = #tpu.dot_dimension_numbers<[1], [0], [0], [1], [0, 0, 1, 1], [], []>} : vector<2x2304xbf16>, vector<2304x600xbf16>, vector<2x600xf32> -> vector<2x600xf32>
    %c0_3 = arith.constant 0 : index
    %c0_4 = arith.constant 0 : index
    %3 = vector.load %arg3[%c0_3, %c0_4] : memref<1x600xf32, #tpu.memory_space<vmem>>, vector<1x600xf32>
    %4 = vector.broadcast %3 : vector<1x600xf32> to vector<2x600xf32>
    %5 = arith.addf %2, %4 : vector<2x600xf32>
    %6 = arith.truncf %5 : vector<2x600xf32> to vector<2x600xbf16>
    %c0_5 = arith.constant 0 : index
    %c0_6 = arith.constant 0 : index
    %7 = vector.load %arg4[%c0_5, %c0_6] : memref<600x120xbf16, #tpu.memory_space<vmem>>, vector<600x120xbf16>
    %cst_7 = arith.constant dense<0.000000e+00> : vector<2x120xf32>
    %8 = tpu.matmul %6, %7, %cst_7 {dimension_numbers = #tpu.dot_dimension_numbers<[1], [0], [0], [1], [0, 0, 1, 1], [], []>} : vector<2x600xbf16>, vector<600x120xbf16>, vector<2x120xf32> -> vector<2x120xf32>
    %c0_8 = arith.constant 0 : index
    %c0_9 = arith.constant 0 : index
    %9 = vector.load %arg5[%c0_8, %c0_9] : memref<1x120xf32, #tpu.memory_space<vmem>>, vector<1x120xf32>
    %10 = vector.broadcast %9 : vector<1x120xf32> to vector<2x120xf32>
    %11 = arith.addf %8, %10 : vector<2x120xf32>
    %12 = arith.truncf %11 : vector<2x120xf32> to vector<2x120xbf16>
    %c0_10 = arith.constant 0 : index
    %c0_11 = arith.constant 0 : index
    %13 = vector.load %arg6[%c0_10, %c0_11] : memref<120x10xbf16, #tpu.memory_space<vmem>>, vector<120x10xbf16>
    %cst_12 = arith.constant dense<0.000000e+00> : vector<2x10xf32>
    %14 = tpu.matmul %12, %13, %cst_12 {dimension_numbers = #tpu.dot_dimension_numbers<[1], [0], [0], [1], [0, 0, 1, 1], [], []>} : vector<2x120xbf16>, vector<120x10xbf16>, vector<2x10xf32> -> vector<2x10xf32>
    %c0_13 = arith.constant 0 : index
    %c0_14 = arith.constant 0 : index
    %15 = vector.load %arg7[%c0_13, %c0_14] : memref<1x10xf32, #tpu.memory_space<vmem>>, vector<1x10xf32>
    %16 = vector.broadcast %15 : vector<1x10xf32> to vector<2x10xf32>
    %17 = arith.addf %14, %16 : vector<2x10xf32>
    %c0_15 = arith.constant 0 : index
    %c0_16 = arith.constant 0 : index
    %18 = vector.load %arg8[%c0_15, %c0_16] : memref<2x10xf32, #tpu.memory_space<vmem>>, vector<2x10xf32>
    tpu.vector_store %arg8[%c0_15, %c0_16], %17 {strides = array<i32>} : memref<2x10xf32, #tpu.memory_space<vmem>>, vector<2x10xf32>,
    return
  }
  func.func @transform_0(%arg0: i32) -> (i32, i32) {
    %c0_i32 = arith.constant 0 : i32
    %c0_i32_0 = arith.constant 0 : i32
    return %arg0, %c0_i32 : i32, i32
  }
  func.func @transform_1(%arg0: i32) -> (i32, i32) {
    %c0_i32 = arith.constant 0 : i32
    %c0_i32_0 = arith.constant 0 : i32
    %c0_i32_1 = arith.constant 0 : i32
    return %c0_i32, %c0_i32_0 : i32, i32
  }
  func.func @transform_2(%arg0: i32) -> (i32, i32) {
    %c0_i32 = arith.constant 0 : i32
    %c0_i32_0 = arith.constant 0 : i32
    %c0_i32_1 = arith.constant 0 : i32
    return %c0_i32, %c0_i32_0 : i32, i32
  }
  func.func @transform_3(%arg0: i32) -> (i32, i32) {
    %c0_i32 = arith.constant 0 : i32
    %c0_i32_0 = arith.constant 0 : i32
    %c0_i32_1 = arith.constant 0 : i32
    return %c0_i32, %c0_i32_0 : i32, i32
  }
  func.func @transform_4(%arg0: i32) -> (i32, i32) {
    %c0_i32 = arith.constant 0 : i32
    %c0_i32_0 = arith.constant 0 : i32
    %c0_i32_1 = arith.constant 0 : i32
    return %c0_i32, %c0_i32_0 : i32, i32
  }
  func.func @transform_5(%arg0: i32) -> (i32, i32) {
    %c0_i32 = arith.constant 0 : i32
    %c0_i32_0 = arith.constant 0 : i32
    %c0_i32_1 = arith.constant 0 : i32
    return %c0_i32, %c0_i32_0 : i32, i32
  }
  func.func @transform_6(%arg0: i32) -> (i32, i32) {
    %c0_i32 = arith.constant 0 : i32
    %c0_i32_0 = arith.constant 0 : i32
    %c0_i32_1 = arith.constant 0 : i32
    return %c0_i32, %c0_i32_0 : i32, i32
  }
  func.func @transform_7(%arg0: i32) -> (i32, i32) {
    %c0_i32 = arith.constant 0 : i32
    %c0_i32_0 = arith.constant 0 : i32
    return %arg0, %c0_i32 : i32, i32
  }
}

</mosaic_0001>

<llo_original>
// kernel: forward.3
$region0: #{forward.3}
  #allocation0 [shape = 'u32[]', space=smem, size = 0x4, offset = 0x4, fixed_abs, tag = 'smem constant byte address 0x4 - core index']
  #allocation1 [shape = 'u32[72,128]{1,0:T(1,128)}', space=vmem, size = 0x9000, scoped, tag = 'internal scratch']
  %s0 = inlined_call_operand.vmem [shape: bf16[2,4,9,196], index: 0, kind: input, shape index: {}]
  %s1 = inlined_call_operand.vmem [shape: bf16[32,9], index: 1, kind: input, shape index: {}]
  %s2 = inlined_call_operand.vmem [shape: f32[32,1], index: 2, kind: input, shape index: {}]
  %s3 = inlined_call_operand.vmem [shape: f32[32,1], index: 3, kind: input, shape index: {}]
  %s4 = inlined_call_operand.vmem [shape: bf16[2,32,196], index: 4, kind: output, shape index: {}]
  %s5 = sld [smem:[#allocation0]]
  $region26: #{forward.3} parent=0
    _
  %s7 = ssub.s32 1, %s5
  %s8 = scalar_select 0, %s7, %s5
  // Predicated region
  $region2: #{forward.3} parent=0 // pred_check
    _
  $region3: #{forward.3} parent=0 // pred_check_branch
    %10 = sbr.rel (0) target = $region5
  $region4: #{forward.3} parent=0 // pred_region
    _
  $region5: #{forward.3} parent=0 // pred_fallthru
    _
  // Predicated region
  $region6: #{forward.3} parent=0 // pred_check
    _
  $region7: #{forward.3} parent=0 // pred_check_branch
    %12 = sbr.rel (0) target = $region9
  $region8: #{forward.3} parent=0 // pred_region
    _
  $region9: #{forward.3} parent=0 // pred_fallthru
    _
  // Predicated region
  $region10: #{forward.3} parent=0 // pred_check
    _
  $region11: #{forward.3} parent=0 // pred_check_branch
    %14 = sbr.rel (0) target = $region13
  $region12: #{forward.3} parent=0 // pred_region
    _
  $region13: #{forward.3} parent=0 // pred_fallthru
    _
  // Predicated region
  $region14: #{forward.3} parent=0 // pred_check
    _
  $region15: #{forward.3} parent=0 // pred_check_branch
    %16 = sbr.rel (0) target = $region17
  $region16: #{forward.3} parent=0 // pred_region
    _
  $region17: #{forward.3} parent=0 // pred_fallthru
    _
  %v18 = vld [vmem:[%s1] sm:$0xf]
  %v19 = vld [vmem:[%s1 + $0x4] sm:$0xf]
  %v20 = vld [vmem:[%s1 + $0x8] sm:$0xf]
  %v21 = vld [vmem:[%s1 + $0xc] sm:$0xf]
  %v22 = vld [vmem:[%s2] sm:$0xff]
  %v23 = vld [vmem:[%s2 + $0x8] sm:$0xff]
  %v24 = vld [vmem:[%s2 + $0x10] sm:$0xff]
  %v25 = vld [vmem:[%s2 + $0x18] sm:$0xff]
  %v26 = vld [vmem:[%s3] sm:$0xff]
  %v27 = vld [vmem:[%s3 + $0x8] sm:$0xff]
  %v28 = vld [vmem:[%s3 + $0x10] sm:$0xff]
  %v29 = vld [vmem:[%s3 + $0x18] sm:$0xff]
  %v30 = vld [vmem:[%s0] sm:$0xff]
  %v31 = vld [vmem:[%s0 + $0x8] sm:$0x11]
  %v36 = vunpack.c.l.b16 %v18
  %v37 = vunpack.c.l.b16 %v19
  %v38 = vunpack.c.l.b16 %v20
  %v39 = vunpack.c.l.b16 %v21
  %v40 = vpack.c.b16 %v37, %v36
  %v41 = vpack.c.b16 %v39, %v38
  %v44 = vunpack.c.l.b16 %v30
  %v45 = vunpack.c.h.b16 %v30
  %v46 = vunpack.c.l.b16 %v31
  %v47 = vunpack.c.h.b16 %v31
  %v48 = vpack.c.b16 %v46, %v44
  %v49 = vpack.c.b16 %v47, %v45
  %vm50 = vcmask 72704
  %v52 = vsel %vm50, %v40, 0
  %v55 = vsel %vm50, %v41, 0
  %vm57 = vcmask 1043456
  %vm58 = vcmask 1044480
  %v59 = vsel %vm57, 4294967295, 65535
  %v60 = vsel %vm58, %v59, 0
  %v62 = vand.u32 %v48, %v60
  %v65 = vand.u32 %v49, %v60
  %67 = vmatpush.bf16.msra.mxu0 0
  %68 = vmatpush.bf16.msra.mxu0 0
  %69 = vmatpush.bf16.msra.mxu0 0
  %70 = vmatpush.bf16.msra.mxu0 0
  %71 = vmatpush.bf16.msra.mxu0 0
  %72 = vmatpush.bf16.msra.mxu0 0
  %73 = vmatpush.bf16.msra.mxu0 0
  %74 = vmatpush.bf16.msra.mxu0 %v62
  %75 = vmatmul.bf16.gmra.mxu0 %v52
  %v76 = vpop.f32.mrf.mxu0
  %v77 = vadd.f32 0.0, %v76
  %v78 = vpop.f32.mrf.mxu0
  %v79 = vadd.f32 0.0, %v78
  %80 = vmatmul.bf16.gmra.mxu0 %v55
  %v81 = vpop.f32.mrf.mxu0
  %v82 = vadd.f32 0.0, %v81
  %v83 = vpop.f32.mrf.mxu0
  %v84 = vadd.f32 0.0, %v83
  %85 = vdwg.mxu0
  %86 = vmatpush.bf16.msra.mxu0 0
  %87 = vmatpush.bf16.msra.mxu0 0
  %88 = vmatpush.bf16.msra.mxu0 0
  %89 = vmatpush.bf16.msra.mxu0 0
  %90 = vmatpush.bf16.msra.mxu0 0
  %91 = vmatpush.bf16.msra.mxu0 0
  %92 = vmatpush.bf16.msra.mxu0 0
  %93 = vmatpush.bf16.msra.mxu0 %v65
  %94 = vmatmul.bf16.gmra.mxu0 %v52
  %v95 = vpop.f32.mrf.mxu0
  %v96 = vadd.f32 0.0, %v95
  %v97 = vpop.f32.mrf.mxu0
  %v98 = vadd.f32 0.0, %v97
  %99 = vmatmul.bf16.gmra.mxu0 %v55
  %v100 = vpop.f32.mrf.mxu0
  %v101 = vadd.f32 0.0, %v100
  %v102 = vpop.f32.mrf.mxu0
  %v103 = vadd.f32 0.0, %v102
  %104 = vdwg.mxu0
  %106 = vset.pattern.permute.xlu0 0
  %107 = vperm.xlu0 %106, %v22
  %v108 = vpop.permute.xlu0 %107
  %111 = vset.pattern.permute.xlu0 0
  %112 = vperm.xlu0 %111, %v23
  %v113 = vpop.permute.xlu0 %112
  %116 = vset.pattern.permute.xlu0 0
  %117 = vperm.xlu0 %116, %v24
  %v118 = vpop.permute.xlu0 %117
  %121 = vset.pattern.permute.xlu0 0
  %122 = vperm.xlu0 %121, %v25
  %v123 = vpop.permute.xlu0 %122
  %v125 = vmul.f32 %v77, %v108
  %v126 = vmul.f32 %v96, %v108
  %v127 = vmul.f32 %v79, %v113
  %v128 = vmul.f32 %v98, %v113
  %v129 = vmul.f32 %v82, %v118
  %v130 = vmul.f32 %v101, %v118
  %v131 = vmul.f32 %v84, %v123
  %v132 = vmul.f32 %v103, %v123
  %134 = vset.pattern.permute.xlu0 0
  %135 = vperm.xlu0 %134, %v26
  %v136 = vpop.permute.xlu0 %135
  %139 = vset.pattern.permute.xlu0 0
  %140 = vperm.xlu0 %139, %v27
  %v141 = vpop.permute.xlu0 %140
  %144 = vset.pattern.permute.xlu0 0
  %145 = vperm.xlu0 %144, %v28
  %v146 = vpop.permute.xlu0 %145
  %149 = vset.pattern.permute.xlu0 0
  %150 = vperm.xlu0 %149, %v29
  %v151 = vpop.permute.xlu0 %150
  %v153 = vadd.f32 %v125, %v136
  %v154 = vadd.f32 %v126, %v136
  %v155 = vadd.f32 %v127, %v141
  %v156 = vadd.f32 %v128, %v141
  %v157 = vadd.f32 %v129, %v146
  %v158 = vadd.f32 %v130, %v146
  %v159 = vadd.f32 %v131, %v151
  %v160 = vadd.f32 %v132, %v151
  %v161 = vmax.f32 %v153, 0.0
  %v162 = vmax.f32 %v154, 0.0
  %v163 = vmax.f32 %v155, 0.0
  %v164 = vmax.f32 %v156, 0.0
  %v165 = vmax.f32 %v157, 0.0
  %v166 = vmax.f32 %v158, 0.0
  %v167 = vmax.f32 %v159, 0.0
  %v168 = vmax.f32 %v160, 0.0
  %s169 = scalar_lea.vmem %s0, 16
  %v170 = vld [vmem:[%s169] sm:$0xff]
  %v171 = vld [vmem:[%s169 + $0x8] sm:$0x11]
  %v174 = vunpack.c.l.b16 %v170
  %v175 = vunpack.c.h.b16 %v170
  %v176 = vunpack.c.l.b16 %v171
  %v177 = vunpack.c.h.b16 %v171
  %v178 = vpack.c.b16 %v176, %v174
  %v179 = vpack.c.b16 %v177, %v175
  %v181 = vand.u32 %v178, %v60
  %v184 = vand.u32 %v179, %v60
  %186 = vmatpush.bf16.msra.mxu0 0
  %187 = vmatpush.bf16.msra.mxu0 0
  %188 = vmatpush.bf16.msra.mxu0 0
  %189 = vmatpush.bf16.msra.mxu0 0
  %190 = vmatpush.bf16.msra.mxu0 0
  %191 = vmatpush.bf16.msra.mxu0 0
  %192 = vmatpush.bf16.msra.mxu0 0
  %193 = vmatpush.bf16.msra.mxu0 %v181
  %194 = vmatmul.bf16.gmra.mxu0 %v52
  %v195 = vpop.f32.mrf.mxu0
  %v196 = vadd.f32 0.0, %v195
  %v197 = vpop.f32.mrf.mxu0
  %v198 = vadd.f32 0.0, %v197
  %199 = vmatmul.bf16.gmra.mxu0 %v55
  %v200 = vpop.f32.mrf.mxu0
  %v201 = vadd.f32 0.0, %v200
  %v202 = vpop.f32.mrf.mxu0
  %v203 = vadd.f32 0.0, %v202
  %204 = vdwg.mxu0
  %205 = vmatpush.bf16.msra.mxu0 0
  %206 = vmatpush.bf16.msra.mxu0 0
  %207 = vmatpush.bf16.msra.mxu0 0
  %208 = vmatpush.bf16.msra.mxu0 0
  %209 = vmatpush.bf16.msra.mxu0 0
  %210 = vmatpush.bf16.msra.mxu0 0
  %211 = vmatpush.bf16.msra.mxu0 0
  %212 = vmatpush.bf16.msra.mxu0 %v184
  %213 = vmatmul.bf16.gmra.mxu0 %v52
  %v214 = vpop.f32.mrf.mxu0
  %v215 = vadd.f32 0.0, %v214
  %v216 = vpop.f32.mrf.mxu0
  %v217 = vadd.f32 0.0, %v216
  %218 = vmatmul.bf16.gmra.mxu0 %v55
  %v219 = vpop.f32.mrf.mxu0
  %v220 = vadd.f32 0.0, %v219
  %v221 = vpop.f32.mrf.mxu0
  %v222 = vadd.f32 0.0, %v221
  %223 = vdwg.mxu0
  %v224 = vmul.f32 %v196, %v108
  %v225 = vmul.f32 %v215, %v108
  %v226 = vmul.f32 %v198, %v113
  %v227 = vmul.f32 %v217, %v113
  %v228 = vmul.f32 %v201, %v118
  %v229 = vmul.f32 %v220, %v118
  %v230 = vmul.f32 %v203, %v123
  %v231 = vmul.f32 %v222, %v123
  %v232 = vadd.f32 %v224, %v136
  %v233 = vadd.f32 %v225, %v136
  %v234 = vadd.f32 %v226, %v141
  %v235 = vadd.f32 %v227, %v141
  %v236 = vadd.f32 %v228, %v146
  %v237 = vadd.f32 %v229, %v146
  %v238 = vadd.f32 %v230, %v151
  %v239 = vadd.f32 %v231, %v151
  %v240 = vmax.f32 %v232, 0.0
  %v241 = vmax.f32 %v233, 0.0
  %v242 = vmax.f32 %v234, 0.0
  %v243 = vmax.f32 %v235, 0.0
  %v244 = vmax.f32 %v236, 0.0
  %v245 = vmax.f32 %v237, 0.0
  %v246 = vmax.f32 %v238, 0.0
  %v247 = vmax.f32 %v239, 0.0
  %v248 = vadd.f32 %v161, %v240
  %v249 = vadd.f32 %v162, %v241
  %v250 = vadd.f32 %v163, %v242
  %v251 = vadd.f32 %v164, %v243
  %v252 = vadd.f32 %v165, %v244
  %v253 = vadd.f32 %v166, %v245
  %v254 = vadd.f32 %v167, %v246
  %v255 = vadd.f32 %v168, %v247
  %s256 = scalar_lea.vmem %s0, 32
  %v257 = vld [vmem:[%s256] sm:$0xff]
  %v258 = vld [vmem:[%s256 + $0x8] sm:$0x11]
  %v261 = vunpack.c.l.b16 %v257
  %v262 = vunpack.c.h.b16 %v257
  %v263 = vunpack.c.l.b16 %v258
  %v264 = vunpack.c.h.b16 %v258
  %v265 = vpack.c.b16 %v263, %v261
  %v266 = vpack.c.b16 %v264, %v262
  %v268 = vand.u32 %v265, %v60
  %v271 = vand.u32 %v266, %v60
  %273 = vmatpush.bf16.msra.mxu0 0
  %274 = vmatpush.bf16.msra.mxu0 0
  %275 = vmatpush.bf16.msra.mxu0 0
  %276 = vmatpush.bf16.msra.mxu0 0
  %277 = vmatpush.bf16.msra.mxu0 0
  %278 = vmatpush.bf16.msra.mxu0 0
  %279 = vmatpush.bf16.msra.mxu0 0
  %280 = vmatpush.bf16.msra.mxu0 %v268
  %281 = vmatmul.bf16.gmra.mxu0 %v52
  %v282 = vpop.f32.mrf.mxu0
  %v283 = vadd.f32 0.0, %v282
  %v284 = vpop.f32.mrf.mxu0
  %v285 = vadd.f32 0.0, %v284
  %286 = vmatmul.bf16.gmra.mxu0 %v55
  %v287 = vpop.f32.mrf.mxu0
  %v288 = vadd.f32 0.0, %v287
  %v289 = vpop.f32.mrf.mxu0
  %v290 = vadd.f32 0.0, %v289
  %291 = vdwg.mxu0
  %292 = vmatpush.bf16.msra.mxu0 0
  %293 = vmatpush.bf16.msra.mxu0 0
  %294 = vmatpush.bf16.msra.mxu0 0
  %295 = vmatpush.bf16.msra.mxu0 0
  %296 = vmatpush.bf16.msra.mxu0 0
  %297 = vmatpush.bf16.msra.mxu0 0
  %298 = vmatpush.bf16.msra.mxu0 0
  %299 = vmatpush.bf16.msra.mxu0 %v271
  %300 = vmatmul.bf16.gmra.mxu0 %v52
  %v301 = vpop.f32.mrf.mxu0
  %v302 = vadd.f32 0.0, %v301
  %v303 = vpop.f32.mrf.mxu0
  %v304 = vadd.f32 0.0, %v303
  %305 = vmatmul.bf16.gmra.mxu0 %v55
  %v306 = vpop.f32.mrf.mxu0
  %v307 = vadd.f32 0.0, %v306
  %v308 = vpop.f32.mrf.mxu0
  %v309 = vadd.f32 0.0, %v308
  %310 = vdwg.mxu0
  %v311 = vmul.f32 %v283, %v108
  %v312 = vmul.f32 %v302, %v108
  %v313 = vmul.f32 %v285, %v113
  %v314 = vmul.f32 %v304, %v113
  %v315 = vmul.f32 %v288, %v118
  %v316 = vmul.f32 %v307, %v118
  %v317 = vmul.f32 %v290, %v123
  %v318 = vmul.f32 %v309, %v123
  %v319 = vadd.f32 %v311, %v136
  %v320 = vadd.f32 %v312, %v136
  %v321 = vadd.f32 %v313, %v141
  %v322 = vadd.f32 %v314, %v141
  %v323 = vadd.f32 %v315, %v146
  %v324 = vadd.f32 %v316, %v146
  %v325 = vadd.f32 %v317, %v151
  %v326 = vadd.f32 %v318, %v151
  %v327 = vmax.f32 %v319, 0.0
  %v328 = vmax.f32 %v320, 0.0
  %v329 = vmax.f32 %v321, 0.0
  %v330 = vmax.f32 %v322, 0.0
  %v331 = vmax.f32 %v323, 0.0
  %v332 = vmax.f32 %v324, 0.0
  %v333 = vmax.f32 %v325, 0.0
  %v334 = vmax.f32 %v326, 0.0
  %v335 = vadd.f32 %v248, %v327
  %v336 = vadd.f32 %v249, %v328
  %v337 = vadd.f32 %v250, %v329
  %v338 = vadd.f32 %v251, %v330
  %v339 = vadd.f32 %v252, %v331
  %v340 = vadd.f32 %v253, %v332
  %v341 = vadd.f32 %v254, %v333
  %v342 = vadd.f32 %v255, %v334
  %s343 = scalar_lea.vmem %s0, 48
  %v344 = vld [vmem:[%s343] sm:$0xff]
  %v345 = vld [vmem:[%s343 + $0x8] sm:$0x11]
  %v348 = vunpack.c.l.b16 %v344
  %v349 = vunpack.c.h.b16 %v344
  %v350 = vunpack.c.l.b16 %v345
  %v351 = vunpack.c.h.b16 %v345
  %v352 = vpack.c.b16 %v350, %v348
  %v353 = vpack.c.b16 %v351, %v349
  %v355 = vand.u32 %v352, %v60
  %v358 = vand.u32 %v353, %v60
  %360 = vmatpush.bf16.msra.mxu0 0
  %361 = vmatpush.bf16.msra.mxu0 0
  %362 = vmatpush.bf16.msra.mxu0 0
  %363 = vmatpush.bf16.msra.mxu0 0
  %364 = vmatpush.bf16.msra.mxu0 0
  %365 = vmatpush.bf16.msra.mxu0 0
  %366 = vmatpush.bf16.msra.mxu0 0
  %367 = vmatpush.bf16.msra.mxu0 %v355
  %368 = vmatmul.bf16.gmra.mxu0 %v52
  %v369 = vpop.f32.mrf.mxu0
  %v370 = vadd.f32 0.0, %v369
  %v371 = vpop.f32.mrf.mxu0
  %v372 = vadd.f32 0.0, %v371
  %373 = vmatmul.bf16.gmra.mxu0 %v55
  %v374 = vpop.f32.mrf.mxu0
  %v375 = vadd.f32 0.0, %v374
  %v376 = vpop.f32.mrf.mxu0
  %v377 = vadd.f32 0.0, %v376
  %378 = vdwg.mxu0
  %379 = vmatpush.bf16.msra.mxu0 0
  %380 = vmatpush.bf16.msra.mxu0 0
  %381 = vmatpush.bf16.msra.mxu0 0
  %382 = vmatpush.bf16.msra.mxu0 0
  %383 = vmatpush.bf16.msra.mxu0 0
  %384 = vmatpush.bf16.msra.mxu0 0
  %385 = vmatpush.bf16.msra.mxu0 0
  %386 = vmatpush.bf16.msra.mxu0 %v358
  %387 = vmatmul.bf16.gmra.mxu0 %v52
  %v388 = vpop.f32.mrf.mxu0
  %v389 = vadd.f32 0.0, %v388
  %v390 = vpop.f32.mrf.mxu0
  %v391 = vadd.f32 0.0, %v390
  %392 = vmatmul.bf16.gmra.mxu0 %v55
  %v393 = vpop.f32.mrf.mxu0
  %v394 = vadd.f32 0.0, %v393
  %v395 = vpop.f32.mrf.mxu0
  %v396 = vadd.f32 0.0, %v395
  %397 = vdwg.mxu0
  %v398 = vmul.f32 %v370, %v108
  %v399 = vmul.f32 %v389, %v108
  %v400 = vmul.f32 %v372, %v113
  %v401 = vmul.f32 %v391, %v113
  %v402 = vmul.f32 %v375, %v118
  %v403 = vmul.f32 %v394, %v118
  %v404 = vmul.f32 %v377, %v123
  %v405 = vmul.f32 %v396, %v123
  %v406 = vadd.f32 %v398, %v136
  %v407 = vadd.f32 %v399, %v136
  %v408 = vadd.f32 %v400, %v141
  %v409 = vadd.f32 %v401, %v141
  %v410 = vadd.f32 %v402, %v146
  %v411 = vadd.f32 %v403, %v146
  %v412 = vadd.f32 %v404, %v151
  %v413 = vadd.f32 %v405, %v151
  %v414 = vmax.f32 %v406, 0.0
  %v415 = vmax.f32 %v407, 0.0
  %v416 = vmax.f32 %v408, 0.0
  %v417 = vmax.f32 %v409, 0.0
  %v418 = vmax.f32 %v410, 0.0
  %v419 = vmax.f32 %v411, 0.0
  %v420 = vmax.f32 %v412, 0.0
  %v421 = vmax.f32 %v413, 0.0
  %v422 = vadd.f32 %v335, %v414
  %v423 = vadd.f32 %v336, %v415
  %v424 = vadd.f32 %v337, %v416
  %v425 = vadd.f32 %v338, %v417
  %v426 = vadd.f32 %v339, %v418
  %v427 = vadd.f32 %v340, %v419
  %v428 = vadd.f32 %v341, %v420
  %v429 = vadd.f32 %v342, %v421
  %v430 = vmul.f32 %v422, 0.25
  %v431 = vmul.f32 %v423, 0.25
  %v432 = vmul.f32 %v424, 0.25
  %v433 = vmul.f32 %v425, 0.25
  %v434 = vmul.f32 %v426, 0.25
  %v435 = vmul.f32 %v427, 0.25
  %v436 = vmul.f32 %v428, 0.25
  %v437 = vmul.f32 %v429, 0.25
  %v438 = vpack.c.bf16 %v431, %v430
  %v439 = vpack.c.bf16 %v433, %v432
  %v440 = vpack.c.bf16 %v435, %v434
  %v441 = vpack.c.bf16 %v437, %v436
  %vm442 = vcmask 556036
  %vm443 = vmor %vm442, %vm57
  %444 = vst.msk [vmem:[%s4] sm:$0xff] %vm443, %v438
  %445 = vst.msk [vmem:[%s4 + $0x8] sm:$0xff] %vm443, %v439
  %446 = vst.msk [vmem:[%s4 + $0x10] sm:$0xff] %vm443, %v440
  %447 = vst.msk [vmem:[%s4 + $0x18] sm:$0xff] %vm443, %v441
  %s448 = scalar_lea.vmem %s0, 64
  %v449 = vld [vmem:[%s448] sm:$0xff]
  %v450 = vld [vmem:[%s448 + $0x8] sm:$0x11]
  %v453 = vunpack.c.l.b16 %v449
  %v454 = vunpack.c.h.b16 %v449
  %v455 = vunpack.c.l.b16 %v450
  %v456 = vunpack.c.h.b16 %v450
  %v457 = vpack.c.b16 %v455, %v453
  %v458 = vpack.c.b16 %v456, %v454
  %v460 = vand.u32 %v457, %v60
  %v463 = vand.u32 %v458, %v60
  %465 = vmatpush.bf16.msra.mxu0 0
  %466 = vmatpush.bf16.msra.mxu0 0
  %467 = vmatpush.bf16.msra.mxu0 0
  %468 = vmatpush.bf16.msra.mxu0 0
  %469 = vmatpush.bf16.msra.mxu0 0
  %470 = vmatpush.bf16.msra.mxu0 0
  %471 = vmatpush.bf16.msra.mxu0 0
  %472 = vmatpush.bf16.msra.mxu0 %v460
  %473 = vmatmul.bf16.gmra.mxu0 %v52
  %v474 = vpop.f32.mrf.mxu0
  %v475 = vadd.f32 0.0, %v474
  %v476 = vpop.f32.mrf.mxu0
  %v477 = vadd.f32 0.0, %v476
  %478 = vmatmul.bf16.gmra.mxu0 %v55
  %v479 = vpop.f32.mrf.mxu0
  %v480 = vadd.f32 0.0, %v479
  %v481 = vpop.f32.mrf.mxu0
  %v482 = vadd.f32 0.0, %v481
  %483 = vdwg.mxu0
  %484 = vmatpush.bf16.msra.mxu0 0
  %485 = vmatpush.bf16.msra.mxu0 0
  %486 = vmatpush.bf16.msra.mxu0 0
  %487 = vmatpush.bf16.msra.mxu0 0
  %488 = vmatpush.bf16.msra.mxu0 0
  %489 = vmatpush.bf16.msra.mxu0 0
  %490 = vmatpush.bf16.msra.mxu0 0
  %491 = vmatpush.bf16.msra.mxu0 %v463
  %492 = vmatmul.bf16.gmra.mxu0 %v52
  %v493 = vpop.f32.mrf.mxu0
  %v494 = vadd.f32 0.0, %v493
  %v495 = vpop.f32.mrf.mxu0
  %v496 = vadd.f32 0.0, %v495
  %497 = vmatmul.bf16.gmra.mxu0 %v55
  %v498 = vpop.f32.mrf.mxu0
  %v499 = vadd.f32 0.0, %v498
  %v500 = vpop.f32.mrf.mxu0
  %v501 = vadd.f32 0.0, %v500
  %502 = vdwg.mxu0
  %v503 = vmul.f32 %v475, %v108
  %v504 = vmul.f32 %v494, %v108
  %v505 = vmul.f32 %v477, %v113
  %v506 = vmul.f32 %v496, %v113
  %v507 = vmul.f32 %v480, %v118
  %v508 = vmul.f32 %v499, %v118
  %v509 = vmul.f32 %v482, %v123
  %v510 = vmul.f32 %v501, %v123
  %v511 = vadd.f32 %v503, %v136
  %v512 = vadd.f32 %v504, %v136
  %v513 = vadd.f32 %v505, %v141
  %v514 = vadd.f32 %v506, %v141
  %v515 = vadd.f32 %v507, %v146
  %v516 = vadd.f32 %v508, %v146
  %v517 = vadd.f32 %v509, %v151
  %v518 = vadd.f32 %v510, %v151
  %v519 = vmax.f32 %v511, 0.0
  %v520 = vmax.f32 %v512, 0.0
  %v521 = vmax.f32 %v513, 0.0
  %v522 = vmax.f32 %v514, 0.0
  %v523 = vmax.f32 %v515, 0.0
  %v524 = vmax.f32 %v516, 0.0
  %v525 = vmax.f32 %v517, 0.0
  %v526 = vmax.f32 %v518, 0.0
  %s527 = scalar_lea.vmem %s0, 80
  %v528 = vld [vmem:[%s527] sm:$0xff]
  %v529 = vld [vmem:[%s527 + $0x8] sm:$0x11]
  %v532 = vunpack.c.l.b16 %v528
  %v533 = vunpack.c.h.b16 %v528
  %v534 = vunpack.c.l.b16 %v529
  %v535 = vunpack.c.h.b16 %v529
  %v536 = vpack.c.b16 %v534, %v532
  %v537 = vpack.c.b16 %v535, %v533
  %v539 = vand.u32 %v536, %v60
  %v542 = vand.u32 %v537, %v60
  %544 = vmatpush.bf16.msra.mxu0 0
  %545 = vmatpush.bf16.msra.mxu0 0
  %546 = vmatpush.bf16.msra.mxu0 0
  %547 = vmatpush.bf16.msra.mxu0 0
  %548 = vmatpush.bf16.msra.mxu0 0
  %549 = vmatpush.bf16.msra.mxu0 0
  %550 = vmatpush.bf16.msra.mxu0 0
  %551 = vmatpush.bf16.msra.mxu0 %v539
  %552 = vmatmul.bf16.gmra.mxu0 %v52
  %v553 = vpop.f32.mrf.mxu0
  %v554 = vadd.f32 0.0, %v553
  %v555 = vpop.f32.mrf.mxu0
  %v556 = vadd.f32 0.0, %v555
  %557 = vmatmul.bf16.gmra.mxu0 %v55
  %v558 = vpop.f32.mrf.mxu0
  %v559 = vadd.f32 0.0, %v558
  %v560 = vpop.f32.mrf.mxu0
  %v561 = vadd.f32 0.0, %v560
  %562 = vdwg.mxu0
  %563 = vmatpush.bf16.msra.mxu0 0
  %564 = vmatpush.bf16.msra.mxu0 0
  %565 = vmatpush.bf16.msra.mxu0 0
  %566 = vmatpush.bf16.msra.mxu0 0
  %567 = vmatpush.bf16.msra.mxu0 0
  %568 = vmatpush.bf16.msra.mxu0 0
  %569 = vmatpush.bf16.msra.mxu0 0
  %570 = vmatpush.bf16.msra.mxu0 %v542
  %571 = vmatmul.bf16.gmra.mxu0 %v52
  %v572 = vpop.f32.mrf.mxu0
  %v573 = vadd.f32 0.0, %v572
  %v574 = vpop.f32.mrf.mxu0
  %v575 = vadd.f32 0.0, %v574
  %576 = vmatmul.bf16.gmra.mxu0 %v55
  %v577 = vpop.f32.mrf.mxu0
  %v578 = vadd.f32 0.0, %v577
  %v579 = vpop.f32.mrf.mxu0
  %v580 = vadd.f32 0.0, %v579
  %581 = vdwg.mxu0
  %v582 = vmul.f32 %v554, %v108
  %v583 = vmul.f32 %v573, %v108
  %v584 = vmul.f32 %v556, %v113
  %v585 = vmul.f32 %v575, %v113
  %v586 = vmul.f32 %v559, %v118
  %v587 = vmul.f32 %v578, %v118
  %v588 = vmul.f32 %v561, %v123
  %v589 = vmul.f32 %v580, %v123
  %v590 = vadd.f32 %v582, %v136
  %v591 = vadd.f32 %v583, %v136
  %v592 = vadd.f32 %v584, %v141
  %v593 = vadd.f32 %v585, %v141
  %v594 = vadd.f32 %v586, %v146
  %v595 = vadd.f32 %v587, %v146
  %v596 = vadd.f32 %v588, %v151
  %v597 = vadd.f32 %v589, %v151
  %v598 = vmax.f32 %v590, 0.0
  %v599 = vmax.f32 %v591, 0.0
  %v600 = vmax.f32 %v592, 0.0
  %v601 = vmax.f32 %v593, 0.0
  %v602 = vmax.f32 %v594, 0.0
  %v603 = vmax.f32 %v595, 0.0
  %v604 = vmax.f32 %v596, 0.0
  %v605 = vmax.f32 %v597, 0.0
  %v606 = vadd.f32 %v519, %v598
  %v607 = vadd.f32 %v520, %v599
  %v608 = vadd.f32 %v521, %v600
  %v609 = vadd.f32 %v522, %v601
  %v610 = vadd.f32 %v523, %v602
  %v611 = vadd.f32 %v524, %v603
  %v612 = vadd.f32 %v525, %v604
  %v613 = vadd.f32 %v526, %v605
  %s614 = scalar_lea.vmem %s0, 96
  %v615 = vld [vmem:[%s614] sm:$0xff]
  %v616 = vld [vmem:[%s614 + $0x8] sm:$0x11]
  %v619 = vunpack.c.l.b16 %v615
  %v620 = vunpack.c.h.b16 %v615
  %v621 = vunpack.c.l.b16 %v616
  %v622 = vunpack.c.h.b16 %v616
  %v623 = vpack.c.b16 %v621, %v619
  %v624 = vpack.c.b16 %v622, %v620
  %v626 = vand.u32 %v623, %v60
  %v629 = vand.u32 %v624, %v60
  %631 = vmatpush.bf16.msra.mxu0 0
  %632 = vmatpush.bf16.msra.mxu0 0
  %633 = vmatpush.bf16.msra.mxu0 0
  %634 = vmatpush.bf16.msra.mxu0 0
  %635 = vmatpush.bf16.msra.mxu0 0
  %636 = vmatpush.bf16.msra.mxu0 0
  %637 = vmatpush.bf16.msra.mxu0 0
  %638 = vmatpush.bf16.msra.mxu0 %v626
  %639 = vmatmul.bf16.gmra.mxu0 %v52
  %v640 = vpop.f32.mrf.mxu0
  %v641 = vadd.f32 0.0, %v640
  %v642 = vpop.f32.mrf.mxu0
  %v643 = vadd.f32 0.0, %v642
  %644 = vmatmul.bf16.gmra.mxu0 %v55
  %v645 = vpop.f32.mrf.mxu0
  %v646 = vadd.f32 0.0, %v645
  %v647 = vpop.f32.mrf.mxu0
  %v648 = vadd.f32 0.0, %v647
  %649 = vdwg.mxu0
  %650 = vmatpush.bf16.msra.mxu0 0
  %651 = vmatpush.bf16.msra.mxu0 0
  %652 = vmatpush.bf16.msra.mxu0 0
  %653 = vmatpush.bf16.msra.mxu0 0
  %654 = vmatpush.bf16.msra.mxu0 0
  %655 = vmatpush.bf16.msra.mxu0 0
  %656 = vmatpush.bf16.msra.mxu0 0
  %657 = vmatpush.bf16.msra.mxu0 %v629
  %658 = vmatmul.bf16.gmra.mxu0 %v52
  %v659 = vpop.f32.mrf.mxu0
  %v660 = vadd.f32 0.0, %v659
  %v661 = vpop.f32.mrf.mxu0
  %v662 = vadd.f32 0.0, %v661
  %663 = vmatmul.bf16.gmra.mxu0 %v55
  %v664 = vpop.f32.mrf.mxu0
  %v665 = vadd.f32 0.0, %v664
  %v666 = vpop.f32.mrf.mxu0
  %v667 = vadd.f32 0.0, %v666
  %668 = vdwg.mxu0
  %v669 = vmul.f32 %v641, %v108
  %v670 = vmul.f32 %v660, %v108
  %v671 = vmul.f32 %v643, %v113
  %v672 = vmul.f32 %v662, %v113
  %v673 = vmul.f32 %v646, %v118
  %v674 = vmul.f32 %v665, %v118
  %v675 = vmul.f32 %v648, %v123
  %v676 = vmul.f32 %v667, %v123
  %v677 = vadd.f32 %v669, %v136
  %v678 = vadd.f32 %v670, %v136
  %v679 = vadd.f32 %v671, %v141
  %v680 = vadd.f32 %v672, %v141
  %v681 = vadd.f32 %v673, %v146
  %v682 = vadd.f32 %v674, %v146
  %v683 = vadd.f32 %v675, %v151
  %v684 = vadd.f32 %v676, %v151
  %v685 = vmax.f32 %v677, 0.0
  %v686 = vmax.f32 %v678, 0.0
  %v687 = vmax.f32 %v679, 0.0
  %v688 = vmax.f32 %v680, 0.0
  %v689 = vmax.f32 %v681, 0.0
  %v690 = vmax.f32 %v682, 0.0
  %v691 = vmax.f32 %v683, 0.0
  %v692 = vmax.f32 %v684, 0.0
  %v693 = vadd.f32 %v606, %v685
  %v694 = vadd.f32 %v607, %v686
  %v695 = vadd.f32 %v608, %v687
  %v696 = vadd.f32 %v609, %v688
  %v697 = vadd.f32 %v610, %v689
  %v698 = vadd.f32 %v611, %v690
  %v699 = vadd.f32 %v612, %v691
  %v700 = vadd.f32 %v613, %v692
  %s701 = scalar_lea.vmem %s0, 112
  %v702 = vld [vmem:[%s701] sm:$0xff]
  %v703 = vld [vmem:[%s701 + $0x8] sm:$0x11]
  %v706 = vunpack.c.l.b16 %v702
  %v707 = vunpack.c.h.b16 %v702
  %v708 = vunpack.c.l.b16 %v703
  %v709 = vunpack.c.h.b16 %v703
  %v710 = vpack.c.b16 %v708, %v706
  %v711 = vpack.c.b16 %v709, %v707
  %v713 = vand.u32 %v710, %v60
  %v716 = vand.u32 %v711, %v60
  %718 = vmatpush.bf16.msra.mxu0 0
  %719 = vmatpush.bf16.msra.mxu0 0
  %720 = vmatpush.bf16.msra.mxu0 0
  %721 = vmatpush.bf16.msra.mxu0 0
  %722 = vmatpush.bf16.msra.mxu0 0
  %723 = vmatpush.bf16.msra.mxu0 0
  %724 = vmatpush.bf16.msra.mxu0 0
  %725 = vmatpush.bf16.msra.mxu0 %v713
  %726 = vmatmul.bf16.gmra.mxu0 %v52
  %v727 = vpop.f32.mrf.mxu0
  %v728 = vadd.f32 0.0, %v727
  %v729 = vpop.f32.mrf.mxu0
  %v730 = vadd.f32 0.0, %v729
  %731 = vmatmul.bf16.gmra.mxu0 %v55
  %v732 = vpop.f32.mrf.mxu0
  %v733 = vadd.f32 0.0, %v732
  %v734 = vpop.f32.mrf.mxu0
  %v735 = vadd.f32 0.0, %v734
  %736 = vdwg.mxu0
  %737 = vmatpush.bf16.msra.mxu0 0
  %738 = vmatpush.bf16.msra.mxu0 0
  %739 = vmatpush.bf16.msra.mxu0 0
  %740 = vmatpush.bf16.msra.mxu0 0
  %741 = vmatpush.bf16.msra.mxu0 0
  %742 = vmatpush.bf16.msra.mxu0 0
  %743 = vmatpush.bf16.msra.mxu0 0
  %744 = vmatpush.bf16.msra.mxu0 %v716
  %745 = vmatmul.bf16.gmra.mxu0 %v52
  %v746 = vpop.f32.mrf.mxu0
  %v747 = vadd.f32 0.0, %v746
  %v748 = vpop.f32.mrf.mxu0
  %v749 = vadd.f32 0.0, %v748
  %750 = vmatmul.bf16.gmra.mxu0 %v55
  %v751 = vpop.f32.mrf.mxu0
  %v752 = vadd.f32 0.0, %v751
  %v753 = vpop.f32.mrf.mxu0
  %v754 = vadd.f32 0.0, %v753
  %755 = vdwg.mxu0
  %v756 = vmul.f32 %v728, %v108
  %v757 = vmul.f32 %v747, %v108
  %v758 = vmul.f32 %v730, %v113
  %v759 = vmul.f32 %v749, %v113
  %v760 = vmul.f32 %v733, %v118
  %v761 = vmul.f32 %v752, %v118
  %v762 = vmul.f32 %v735, %v123
  %v763 = vmul.f32 %v754, %v123
  %v764 = vadd.f32 %v756, %v136
  %v765 = vadd.f32 %v757, %v136
  %v766 = vadd.f32 %v758, %v141
  %v767 = vadd.f32 %v759, %v141
  %v768 = vadd.f32 %v760, %v146
  %v769 = vadd.f32 %v761, %v146
  %v770 = vadd.f32 %v762, %v151
  %v771 = vadd.f32 %v763, %v151
  %v772 = vmax.f32 %v764, 0.0
  %v773 = vmax.f32 %v765, 0.0
  %v774 = vmax.f32 %v766, 0.0
  %v775 = vmax.f32 %v767, 0.0
  %v776 = vmax.f32 %v768, 0.0
  %v777 = vmax.f32 %v769, 0.0
  %v778 = vmax.f32 %v770, 0.0
  %v779 = vmax.f32 %v771, 0.0
  %v780 = vadd.f32 %v693, %v772
  %v781 = vadd.f32 %v694, %v773
  %v782 = vadd.f32 %v695, %v774
  %v783 = vadd.f32 %v696, %v775
  %v784 = vadd.f32 %v697, %v776
  %v785 = vadd.f32 %v698, %v777
  %v786 = vadd.f32 %v699, %v778
  %v787 = vadd.f32 %v700, %v779
  %v788 = vmul.f32 %v780, 0.25
  %v789 = vmul.f32 %v781, 0.25
  %v790 = vmul.f32 %v782, 0.25
  %v791 = vmul.f32 %v783, 0.25
  %v792 = vmul.f32 %v784, 0.25
  %v793 = vmul.f32 %v785, 0.25
  %v794 = vmul.f32 %v786, 0.25
  %v795 = vmul.f32 %v787, 0.25
  %v796 = vpack.c.bf16 %v789, %v788
  %v797 = vpack.c.bf16 %v791, %v790
  %v798 = vpack.c.bf16 %v793, %v792
  %v799 = vpack.c.bf16 %v795, %v794
  %s800 = scalar_lea.vmem %s4, 32
  %801 = vst.msk [vmem:[%s800] sm:$0xff] %vm443, %v796
  %802 = vst.msk [vmem:[%s800 + $0x8] sm:$0xff] %vm443, %v797
  %803 = vst.msk [vmem:[%s800 + $0x10] sm:$0xff] %vm443, %v798
  %804 = vst.msk [vmem:[%s800 + $0x18] sm:$0xff] %vm443, %v799
  // Predicated region
  $region18: #{forward.3} parent=0 // pred_check
    _
  $region19: #{forward.3} parent=0 // pred_check_branch
    %806 = sbr.rel (0) target = $region21
  $region20: #{forward.3} parent=0 // pred_region
    _
  $region21: #{forward.3} parent=0 // pred_fallthru
    _
  // Predicated region
  $region22: #{forward.3} parent=0 // pred_check
    _
  $region23: #{forward.3} parent=0 // pred_check_branch
    %808 = sbr.rel (0) target = $region25
  $region24: #{forward.3} parent=0 // pred_region
    _
  $region25: #{forward.3} parent=0 // pred_fallthru
    _

// kernel: forward.4
$region0: #{forward.4}
  #allocation0 [shape = 'u32[]', space=smem, size = 0x4, offset = 0x4, fixed_abs, tag = 'smem constant byte address 0x4 - core index']
  #allocation1 [shape = 'u32[72,128]{1,0:T(1,128)}', space=vmem, size = 0x9000, scoped, tag = 'internal scratch']
  %s0 = inlined_call_operand.vmem [shape: bf16[2,4,36,288], index: 0, kind: input, shape index: {}]
  %s1 = inlined_call_operand.vmem [shape: bf16[288,64], index: 1, kind: input, shape index: {}]
  %s2 = inlined_call_operand.vmem [shape: f32[1,64], index: 2, kind: input, shape index: {}]
  %s3 = inlined_call_operand.vmem [shape: f32[1,64], index: 3, kind: input, shape index: {}]
  %s4 = inlined_call_operand.vmem [shape: bf16[2,36,64], index: 4, kind: output, shape index: {}]
  %s5 = sld [smem:[#allocation0]]
  $region26: #{forward.4} parent=0
    _
  %s7 = ssub.s32 1, %s5
  %s8 = scalar_select 0, %s7, %s5
  // Predicated region
  $region2: #{forward.4} parent=0 // pred_check
    _
  $region3: #{forward.4} parent=0 // pred_check_branch
    %10 = sbr.rel (0) target = $region5
  $region4: #{forward.4} parent=0 // pred_region
    _
  $region5: #{forward.4} parent=0 // pred_fallthru
    _
  // Predicated region
  $region6: #{forward.4} parent=0 // pred_check
    _
  $region7: #{forward.4} parent=0 // pred_check_branch
    %12 = sbr.rel (0) target = $region9
  $region8: #{forward.4} parent=0 // pred_region
    _
  $region9: #{forward.4} parent=0 // pred_fallthru
    _
  // Predicated region
  $region10: #{forward.4} parent=0 // pred_check
    _
  $region11: #{forward.4} parent=0 // pred_check_branch
    %14 = sbr.rel (0) target = $region13
  $region12: #{forward.4} parent=0 // pred_region
    _
  $region13: #{forward.4} parent=0 // pred_fallthru
    _
  // Predicated region
  $region14: #{forward.4} parent=0 // pred_check
    _
  $region15: #{forward.4} parent=0 // pred_check_branch
    %16 = sbr.rel (0) target = $region17
  $region16: #{forward.4} parent=0 // pred_region
    _
  $region17: #{forward.4} parent=0 // pred_fallthru
    _
  %v18 = vld [vmem:[%s1] sm:$0xf]
  %v19 = vld [vmem:[%s1 + $0x4] sm:$0xf]
  %v20 = vld [vmem:[%s1 + $0x8] sm:$0xf]
  %v21 = vld [vmem:[%s1 + $0xc] sm:$0xf]
  %v22 = vld [vmem:[%s1 + $0x10] sm:$0xf]
  %v23 = vld [vmem:[%s1 + $0x14] sm:$0xf]
  %v24 = vld [vmem:[%s1 + $0x18] sm:$0xf]
  %v25 = vld [vmem:[%s1 + $0x1c] sm:$0xf]
  %v26 = vld [vmem:[%s1 + $0x20] sm:$0xf]
  %v27 = vld [vmem:[%s1 + $0x24] sm:$0xf]
  %v28 = vld [vmem:[%s1 + $0x28] sm:$0xf]
  %v29 = vld [vmem:[%s1 + $0x2c] sm:$0xf]
  %v30 = vld [vmem:[%s1 + $0x30] sm:$0xf]
  %v31 = vld [vmem:[%s1 + $0x34] sm:$0xf]
  %v32 = vld [vmem:[%s1 + $0x38] sm:$0xf]
  %v33 = vld [vmem:[%s1 + $0x3c] sm:$0xf]
  %v34 = vld [vmem:[%s1 + $0x40] sm:$0xf]
  %v35 = vld [vmem:[%s1 + $0x44] sm:$0xf]
  %v36 = vld [vmem:[%s1 + $0x48] sm:$0xf]
  %v37 = vld [vmem:[%s1 + $0x4c] sm:$0xf]
  %v38 = vld [vmem:[%s1 + $0x50] sm:$0xf]
  %v39 = vld [vmem:[%s1 + $0x54] sm:$0xf]
  %v40 = vld [vmem:[%s1 + $0x58] sm:$0xf]
  %v41 = vld [vmem:[%s1 + $0x5c] sm:$0xf]
  %v42 = vld [vmem:[%s1 + $0x60] sm:$0xf]
  %v43 = vld [vmem:[%s1 + $0x64] sm:$0xf]
  %v44 = vld [vmem:[%s1 + $0x68] sm:$0xf]
  %v45 = vld [vmem:[%s1 + $0x6c] sm:$0xf]
  %v46 = vld [vmem:[%s1 + $0x70] sm:$0xf]
  %v47 = vld [vmem:[%s1 + $0x74] sm:$0xf]
  %v48 = vld [vmem:[%s1 + $0x78] sm:$0xf]
  %v49 = vld [vmem:[%s1 + $0x7c] sm:$0xf]
  %v50 = vld [vmem:[%s1 + $0x80] sm:$0xf]
  %v51 = vld [vmem:[%s1 + $0x84] sm:$0xf]
  %v52 = vld [vmem:[%s1 + $0x88] sm:$0xf]
  %v53 = vld [vmem:[%s1 + $0x8c] sm:$0xf]
  %v54 = vld [vmem:[%s2] sm:$0x1]
  %v55 = vld [vmem:[%s3] sm:$0x1]
  %v56 = vld [vmem:[%s0] sm:$0xff]
  %v57 = vld [vmem:[%s0 + $0x8] sm:$0xf]
  %v58 = vld [vmem:[%s0 + $0xc] sm:$0xff]
  %v59 = vld [vmem:[%s0 + $0x14] sm:$0xf]
  %v60 = vld [vmem:[%s0 + $0x18] sm:$0xff]
  %v61 = vld [vmem:[%s0 + $0x20] sm:$0xf]
  %v62 = vld [vmem:[%s0 + $0x24] sm:$0xff]
  %v63 = vld [vmem:[%s0 + $0x2c] sm:$0xf]
  %v64 = vld [vmem:[%s0 + $0x30] sm:$0x33]
  %v65 = vld [vmem:[%s0 + $0x38] sm:$0x3]
  %v76 = vunpack.c.l.b16 %v56
  %v77 = vunpack.c.h.b16 %v56
  %v78 = vunpack.c.l.b16 %v57
  %v79 = vunpack.c.l.b16 %v58
  %v80 = vunpack.c.h.b16 %v58
  %v81 = vunpack.c.l.b16 %v59
  %v82 = vunpack.c.l.b16 %v60
  %v83 = vunpack.c.h.b16 %v60
  %v84 = vunpack.c.l.b16 %v61
  %v85 = vunpack.c.l.b16 %v62
  %v86 = vunpack.c.h.b16 %v62
  %v87 = vunpack.c.l.b16 %v63
  %v88 = vunpack.c.l.b16 %v64
  %v89 = vunpack.c.h.b16 %v64
  %v90 = vunpack.c.l.b16 %v65
  %v91 = vpack.c.b16 %v79, %v76
  %v92 = vpack.c.b16 %v80, %v77
  %v93 = vpack.c.b16 %v81, %v78
  %v94 = vpack.c.b16 %v85, %v82
  %v95 = vpack.c.b16 %v86, %v83
  %v96 = vpack.c.b16 %v87, %v84
  %v97 = vpack.c.b16 %v88, %v88
  %v98 = vpack.c.b16 %v89, %v89
  %v99 = vpack.c.b16 %v90, %v90
  %v142 = vunpack.c.l.b16 %v18
  %v143 = vunpack.c.l.b16 %v19
  %v144 = vunpack.c.l.b16 %v20
  %v145 = vunpack.c.l.b16 %v21
  %v146 = vunpack.c.l.b16 %v22
  %v147 = vunpack.c.l.b16 %v23
  %v148 = vunpack.c.l.b16 %v24
  %v149 = vunpack.c.l.b16 %v25
  %v150 = vunpack.c.l.b16 %v26
  %v151 = vunpack.c.l.b16 %v27
  %v152 = vunpack.c.l.b16 %v28
  %v153 = vunpack.c.l.b16 %v29
  %v154 = vunpack.c.l.b16 %v30
  %v155 = vunpack.c.l.b16 %v31
  %v156 = vunpack.c.l.b16 %v32
  %v157 = vunpack.c.l.b16 %v33
  %v158 = vunpack.c.l.b16 %v34
  %v159 = vunpack.c.l.b16 %v35
  %v160 = vunpack.c.l.b16 %v36
  %v161 = vunpack.c.l.b16 %v37
  %v162 = vunpack.c.l.b16 %v38
  %v163 = vunpack.c.l.b16 %v39
  %v164 = vunpack.c.l.b16 %v40
  %v165 = vunpack.c.l.b16 %v41
  %v166 = vunpack.c.l.b16 %v42
  %v167 = vunpack.c.l.b16 %v43
  %v168 = vunpack.c.l.b16 %v44
  %v169 = vunpack.c.l.b16 %v45
  %v170 = vunpack.c.l.b16 %v46
  %v171 = vunpack.c.l.b16 %v47
  %v172 = vunpack.c.l.b16 %v48
  %v173 = vunpack.c.l.b16 %v49
  %v174 = vunpack.c.l.b16 %v50
  %v175 = vunpack.c.l.b16 %v51
  %v176 = vunpack.c.l.b16 %v52
  %v177 = vunpack.c.l.b16 %v53
  %v178 = vpack.c.b16 %v143, %v142
  %v179 = vpack.c.b16 %v145, %v144
  %v180 = vpack.c.b16 %v147, %v146
  %v181 = vpack.c.b16 %v149, %v148
  %v182 = vpack.c.b16 %v151, %v150
  %v183 = vpack.c.b16 %v153, %v152
  %v184 = vpack.c.b16 %v155, %v154
  %v185 = vpack.c.b16 %v157, %v156
  %v186 = vpack.c.b16 %v159, %v158
  %v187 = vpack.c.b16 %v161, %v160
  %v188 = vpack.c.b16 %v163, %v162
  %v189 = vpack.c.b16 %v165, %v164
  %v190 = vpack.c.b16 %v167, %v166
  %v191 = vpack.c.b16 %v169, %v168
  %v192 = vpack.c.b16 %v171, %v170
  %v193 = vpack.c.b16 %v173, %v172
  %v194 = vpack.c.b16 %v175, %v174
  %v195 = vpack.c.b16 %v177, %v176
  %vm214 = vcmask 261120
  %v216 = vsel %vm214, %v93, 0
  %v219 = vsel %vm214, %v96, 0
  %v222 = vsel %vm214, %v99, 0
  %224 = vmatpush.bf16.msra.mxu0 %v185
  %225 = vmatpush.bf16.msra.mxu0 %v184
  %226 = vmatpush.bf16.msra.mxu0 %v183
  %227 = vmatpush.bf16.msra.mxu0 %v182
  %228 = vmatpush.bf16.msra.mxu0 %v181
  %229 = vmatpush.bf16.msra.mxu0 %v180
  %230 = vmatpush.bf16.msra.mxu0 %v179
  %231 = vmatpush.bf16.msra.mxu0 %v178
  %232 = vmatmul.bf16.gmra.mxu0 %v91
  %v233 = vpop.f32.mrf.mxu0
  %v234 = vadd.f32 0.0, %v233
  %v235 = vpop.f32.mrf.mxu0
  %v236 = vadd.f32 0.0, %v235
  %237 = vmatmul.bf16.gmra.mxu0 %v94
  %v238 = vpop.f32.mrf.mxu0
  %v239 = vadd.f32 0.0, %v238
  %v240 = vpop.f32.mrf.mxu0
  %v241 = vadd.f32 0.0, %v240
  %242 = vmatmul.bf16.gmra.mxu0 %v97
  %v243 = vpop.f32.mrf.mxu0
  %v244 = vadd.f32 0.0, %v243
  %v245 = vpop.f32.mrf.mxu0
  %246 = vdwg.mxu0
  %247 = vmatpush.bf16.msra.mxu0 %v193
  %248 = vmatpush.bf16.msra.mxu0 %v192
  %249 = vmatpush.bf16.msra.mxu0 %v191
  %250 = vmatpush.bf16.msra.mxu0 %v190
  %251 = vmatpush.bf16.msra.mxu0 %v189
  %252 = vmatpush.bf16.msra.mxu0 %v188
  %253 = vmatpush.bf16.msra.mxu0 %v187
  %254 = vmatpush.bf16.msra.mxu0 %v186
  %255 = vmatmul.bf16.gmra.mxu0 %v92
  %v256 = vpop.f32.mrf.mxu0
  %v257 = vadd.f32 %v234, %v256
  %v258 = vpop.f32.mrf.mxu0
  %v259 = vadd.f32 %v236, %v258
  %260 = vmatmul.bf16.gmra.mxu0 %v95
  %v261 = vpop.f32.mrf.mxu0
  %v262 = vadd.f32 %v239, %v261
  %v263 = vpop.f32.mrf.mxu0
  %v264 = vadd.f32 %v241, %v263
  %265 = vmatmul.bf16.gmra.mxu0 %v98
  %v266 = vpop.f32.mrf.mxu0
  %v267 = vadd.f32 %v244, %v266
  %v268 = vpop.f32.mrf.mxu0
  %269 = vdwg.mxu0
  %270 = vmatpush.bf16.msra.mxu0 0
  %271 = vmatpush.bf16.msra.mxu0 0
  %272 = vmatpush.bf16.msra.mxu0 0
  %273 = vmatpush.bf16.msra.mxu0 0
  %274 = vmatpush.bf16.msra.mxu0 0
  %275 = vmatpush.bf16.msra.mxu0 0
  %276 = vmatpush.bf16.msra.mxu0 %v195
  %277 = vmatpush.bf16.msra.mxu0 %v194
  %278 = vmatmul.bf16.gmra.mxu0 %v216
  %v279 = vpop.f32.mrf.mxu0
  %v280 = vadd.f32 %v257, %v279
  %v281 = vpop.f32.mrf.mxu0
  %v282 = vadd.f32 %v259, %v281
  %283 = vmatmul.bf16.gmra.mxu0 %v219
  %v284 = vpop.f32.mrf.mxu0
  %v285 = vadd.f32 %v262, %v284
  %v286 = vpop.f32.mrf.mxu0
  %v287 = vadd.f32 %v264, %v286
  %288 = vmatmul.bf16.gmra.mxu0 %v222
  %v289 = vpop.f32.mrf.mxu0
  %v290 = vadd.f32 %v267, %v289
  %v291 = vpop.f32.mrf.mxu0
  %292 = vdwg.mxu0
  %v294 = vperm.slane %v54, 0
  %v296 = vmul.f32 %v280, %v294
  %v297 = vmul.f32 %v282, %v294
  %v298 = vmul.f32 %v285, %v294
  %v299 = vmul.f32 %v287, %v294
  %v300 = vmul.f32 %v290, %v294
  %v302 = vperm.slane %v55, 0
  %v304 = vadd.f32 %v296, %v302
  %v305 = vadd.f32 %v297, %v302
  %v306 = vadd.f32 %v298, %v302
  %v307 = vadd.f32 %v299, %v302
  %v308 = vadd.f32 %v300, %v302
  %v309 = vmax.f32 %v304, 0.0
  %v310 = vmax.f32 %v305, 0.0
  %v311 = vmax.f32 %v306, 0.0
  %v312 = vmax.f32 %v307, 0.0
  %v313 = vmax.f32 %v308, 0.0
  %s314 = scalar_lea.vmem %s0, 60
  %v315 = vld [vmem:[%s314] sm:$0xff]
  %v316 = vld [vmem:[%s314 + $0x8] sm:$0xf]
  %v317 = vld [vmem:[%s314 + $0xc] sm:$0xff]
  %v318 = vld [vmem:[%s314 + $0x14] sm:$0xf]
  %v319 = vld [vmem:[%s314 + $0x18] sm:$0xff]
  %v320 = vld [vmem:[%s314 + $0x20] sm:$0xf]
  %v321 = vld [vmem:[%s314 + $0x24] sm:$0xff]
  %v322 = vld [vmem:[%s314 + $0x2c] sm:$0xf]
  %v323 = vld [vmem:[%s314 + $0x30] sm:$0x33]
  %v324 = vld [vmem:[%s314 + $0x38] sm:$0x3]
  %v335 = vunpack.c.l.b16 %v315
  %v336 = vunpack.c.h.b16 %v315
  %v337 = vunpack.c.l.b16 %v316
  %v338 = vunpack.c.l.b16 %v317
  %v339 = vunpack.c.h.b16 %v317
  %v340 = vunpack.c.l.b16 %v318
  %v341 = vunpack.c.l.b16 %v319
  %v342 = vunpack.c.h.b16 %v319
  %v343 = vunpack.c.l.b16 %v320
  %v344 = vunpack.c.l.b16 %v321
  %v345 = vunpack.c.h.b16 %v321
  %v346 = vunpack.c.l.b16 %v322
  %v347 = vunpack.c.l.b16 %v323
  %v348 = vunpack.c.h.b16 %v323
  %v349 = vunpack.c.l.b16 %v324
  %v350 = vpack.c.b16 %v338, %v335
  %v351 = vpack.c.b16 %v339, %v336
  %v352 = vpack.c.b16 %v340, %v337
  %v353 = vpack.c.b16 %v344, %v341
  %v354 = vpack.c.b16 %v345, %v342
  %v355 = vpack.c.b16 %v346, %v343
  %v356 = vpack.c.b16 %v347, %v347
  %v357 = vpack.c.b16 %v348, %v348
  %v358 = vpack.c.b16 %v349, %v349
  %v366 = vsel %vm214, %v352, 0
  %v369 = vsel %vm214, %v355, 0
  %v372 = vsel %vm214, %v358, 0
  %374 = vmatpush.bf16.msra.mxu0 %v185
  %375 = vmatpush.bf16.msra.mxu0 %v184
  %376 = vmatpush.bf16.msra.mxu0 %v183
  %377 = vmatpush.bf16.msra.mxu0 %v182
  %378 = vmatpush.bf16.msra.mxu0 %v181
  %379 = vmatpush.bf16.msra.mxu0 %v180
  %380 = vmatpush.bf16.msra.mxu0 %v179
  %381 = vmatpush.bf16.msra.mxu0 %v178
  %382 = vmatmul.bf16.gmra.mxu0 %v350
  %v383 = vpop.f32.mrf.mxu0
  %v384 = vadd.f32 0.0, %v383
  %v385 = vpop.f32.mrf.mxu0
  %v386 = vadd.f32 0.0, %v385
  %387 = vmatmul.bf16.gmra.mxu0 %v353
  %v388 = vpop.f32.mrf.mxu0
  %v389 = vadd.f32 0.0, %v388
  %v390 = vpop.f32.mrf.mxu0
  %v391 = vadd.f32 0.0, %v390
  %392 = vmatmul.bf16.gmra.mxu0 %v356
  %v393 = vpop.f32.mrf.mxu0
  %v394 = vadd.f32 0.0, %v393
  %v395 = vpop.f32.mrf.mxu0
  %396 = vdwg.mxu0
  %397 = vmatpush.bf16.msra.mxu0 %v193
  %398 = vmatpush.bf16.msra.mxu0 %v192
  %399 = vmatpush.bf16.msra.mxu0 %v191
  %400 = vmatpush.bf16.msra.mxu0 %v190
  %401 = vmatpush.bf16.msra.mxu0 %v189
  %402 = vmatpush.bf16.msra.mxu0 %v188
  %403 = vmatpush.bf16.msra.mxu0 %v187
  %404 = vmatpush.bf16.msra.mxu0 %v186
  %405 = vmatmul.bf16.gmra.mxu0 %v351
  %v406 = vpop.f32.mrf.mxu0
  %v407 = vadd.f32 %v384, %v406
  %v408 = vpop.f32.mrf.mxu0
  %v409 = vadd.f32 %v386, %v408
  %410 = vmatmul.bf16.gmra.mxu0 %v354
  %v411 = vpop.f32.mrf.mxu0
  %v412 = vadd.f32 %v389, %v411
  %v413 = vpop.f32.mrf.mxu0
  %v414 = vadd.f32 %v391, %v413
  %415 = vmatmul.bf16.gmra.mxu0 %v357
  %v416 = vpop.f32.mrf.mxu0
  %v417 = vadd.f32 %v394, %v416
  %v418 = vpop.f32.mrf.mxu0
  %419 = vdwg.mxu0
  %420 = vmatpush.bf16.msra.mxu0 0
  %421 = vmatpush.bf16.msra.mxu0 0
  %422 = vmatpush.bf16.msra.mxu0 0
  %423 = vmatpush.bf16.msra.mxu0 0
  %424 = vmatpush.bf16.msra.mxu0 0
  %425 = vmatpush.bf16.msra.mxu0 0
  %426 = vmatpush.bf16.msra.mxu0 %v195
  %427 = vmatpush.bf16.msra.mxu0 %v194
  %428 = vmatmul.bf16.gmra.mxu0 %v366
  %v429 = vpop.f32.mrf.mxu0
  %v430 = vadd.f32 %v407, %v429
  %v431 = vpop.f32.mrf.mxu0
  %v432 = vadd.f32 %v409, %v431
  %433 = vmatmul.bf16.gmra.mxu0 %v369
  %v434 = vpop.f32.mrf.mxu0
  %v435 = vadd.f32 %v412, %v434
  %v436 = vpop.f32.mrf.mxu0
  %v437 = vadd.f32 %v414, %v436
  %438 = vmatmul.bf16.gmra.mxu0 %v372
  %v439 = vpop.f32.mrf.mxu0
  %v440 = vadd.f32 %v417, %v439
  %v441 = vpop.f32.mrf.mxu0
  %442 = vdwg.mxu0
  %v443 = vmul.f32 %v430, %v294
  %v444 = vmul.f32 %v432, %v294
  %v445 = vmul.f32 %v435, %v294
  %v446 = vmul.f32 %v437, %v294
  %v447 = vmul.f32 %v440, %v294
  %v448 = vadd.f32 %v443, %v302
  %v449 = vadd.f32 %v444, %v302
  %v450 = vadd.f32 %v445, %v302
  %v451 = vadd.f32 %v446, %v302
  %v452 = vadd.f32 %v447, %v302
  %v453 = vmax.f32 %v448, 0.0
  %v454 = vmax.f32 %v449, 0.0
  %v455 = vmax.f32 %v450, 0.0
  %v456 = vmax.f32 %v451, 0.0
  %v457 = vmax.f32 %v452, 0.0
  %v458 = vadd.f32 %v309, %v453
  %v459 = vadd.f32 %v310, %v454
  %v460 = vadd.f32 %v311, %v455
  %v461 = vadd.f32 %v312, %v456
  %v462 = vadd.f32 %v313, %v457
  %s463 = scalar_lea.vmem %s0, 120
  %v464 = vld [vmem:[%s463] sm:$0xff]
  %v465 = vld [vmem:[%s463 + $0x8] sm:$0xf]
  %v466 = vld [vmem:[%s463 + $0xc] sm:$0xff]
  %v467 = vld [vmem:[%s463 + $0x14] sm:$0xf]
  %v468 = vld [vmem:[%s463 + $0x18] sm:$0xff]
  %v469 = vld [vmem:[%s463 + $0x20] sm:$0xf]
  %v470 = vld [vmem:[%s463 + $0x24] sm:$0xff]
  %v471 = vld [vmem:[%s463 + $0x2c] sm:$0xf]
  %v472 = vld [vmem:[%s463 + $0x30] sm:$0x33]
  %v473 = vld [vmem:[%s463 + $0x38] sm:$0x3]
  %v484 = vunpack.c.l.b16 %v464
  %v485 = vunpack.c.h.b16 %v464
  %v486 = vunpack.c.l.b16 %v465
  %v487 = vunpack.c.l.b16 %v466
  %v488 = vunpack.c.h.b16 %v466
  %v489 = vunpack.c.l.b16 %v467
  %v490 = vunpack.c.l.b16 %v468
  %v491 = vunpack.c.h.b16 %v468
  %v492 = vunpack.c.l.b16 %v469
  %v493 = vunpack.c.l.b16 %v470
  %v494 = vunpack.c.h.b16 %v470
  %v495 = vunpack.c.l.b16 %v471
  %v496 = vunpack.c.l.b16 %v472
  %v497 = vunpack.c.h.b16 %v472
  %v498 = vunpack.c.l.b16 %v473
  %v499 = vpack.c.b16 %v487, %v484
  %v500 = vpack.c.b16 %v488, %v485
  %v501 = vpack.c.b16 %v489, %v486
  %v502 = vpack.c.b16 %v493, %v490
  %v503 = vpack.c.b16 %v494, %v491
  %v504 = vpack.c.b16 %v495, %v492
  %v505 = vpack.c.b16 %v496, %v496
  %v506 = vpack.c.b16 %v497, %v497
  %v507 = vpack.c.b16 %v498, %v498
  %v515 = vsel %vm214, %v501, 0
  %v518 = vsel %vm214, %v504, 0
  %v521 = vsel %vm214, %v507, 0
  %523 = vmatpush.bf16.msra.mxu0 %v185
  %524 = vmatpush.bf16.msra.mxu0 %v184
  %525 = vmatpush.bf16.msra.mxu0 %v183
  %526 = vmatpush.bf16.msra.mxu0 %v182
  %527 = vmatpush.bf16.msra.mxu0 %v181
  %528 = vmatpush.bf16.msra.mxu0 %v180
  %529 = vmatpush.bf16.msra.mxu0 %v179
  %530 = vmatpush.bf16.msra.mxu0 %v178
  %531 = vmatmul.bf16.gmra.mxu0 %v499
  %v532 = vpop.f32.mrf.mxu0
  %v533 = vadd.f32 0.0, %v532
  %v534 = vpop.f32.mrf.mxu0
  %v535 = vadd.f32 0.0, %v534
  %536 = vmatmul.bf16.gmra.mxu0 %v502
  %v537 = vpop.f32.mrf.mxu0
  %v538 = vadd.f32 0.0, %v537
  %v539 = vpop.f32.mrf.mxu0
  %v540 = vadd.f32 0.0, %v539
  %541 = vmatmul.bf16.gmra.mxu0 %v505
  %v542 = vpop.f32.mrf.mxu0
  %v543 = vadd.f32 0.0, %v542
  %v544 = vpop.f32.mrf.mxu0
  %545 = vdwg.mxu0
  %546 = vmatpush.bf16.msra.mxu0 %v193
  %547 = vmatpush.bf16.msra.mxu0 %v192
  %548 = vmatpush.bf16.msra.mxu0 %v191
  %549 = vmatpush.bf16.msra.mxu0 %v190
  %550 = vmatpush.bf16.msra.mxu0 %v189
  %551 = vmatpush.bf16.msra.mxu0 %v188
  %552 = vmatpush.bf16.msra.mxu0 %v187
  %553 = vmatpush.bf16.msra.mxu0 %v186
  %554 = vmatmul.bf16.gmra.mxu0 %v500
  %v555 = vpop.f32.mrf.mxu0
  %v556 = vadd.f32 %v533, %v555
  %v557 = vpop.f32.mrf.mxu0
  %v558 = vadd.f32 %v535, %v557
  %559 = vmatmul.bf16.gmra.mxu0 %v503
  %v560 = vpop.f32.mrf.mxu0
  %v561 = vadd.f32 %v538, %v560
  %v562 = vpop.f32.mrf.mxu0
  %v563 = vadd.f32 %v540, %v562
  %564 = vmatmul.bf16.gmra.mxu0 %v506
  %v565 = vpop.f32.mrf.mxu0
  %v566 = vadd.f32 %v543, %v565
  %v567 = vpop.f32.mrf.mxu0
  %568 = vdwg.mxu0
  %569 = vmatpush.bf16.msra.mxu0 0
  %570 = vmatpush.bf16.msra.mxu0 0
  %571 = vmatpush.bf16.msra.mxu0 0
  %572 = vmatpush.bf16.msra.mxu0 0
  %573 = vmatpush.bf16.msra.mxu0 0
  %574 = vmatpush.bf16.msra.mxu0 0
  %575 = vmatpush.bf16.msra.mxu0 %v195
  %576 = vmatpush.bf16.msra.mxu0 %v194
  %577 = vmatmul.bf16.gmra.mxu0 %v515
  %v578 = vpop.f32.mrf.mxu0
  %v579 = vadd.f32 %v556, %v578
  %v580 = vpop.f32.mrf.mxu0
  %v581 = vadd.f32 %v558, %v580
  %582 = vmatmul.bf16.gmra.mxu0 %v518
  %v583 = vpop.f32.mrf.mxu0
  %v584 = vadd.f32 %v561, %v583
  %v585 = vpop.f32.mrf.mxu0
  %v586 = vadd.f32 %v563, %v585
  %587 = vmatmul.bf16.gmra.mxu0 %v521
  %v588 = vpop.f32.mrf.mxu0
  %v589 = vadd.f32 %v566, %v588
  %v590 = vpop.f32.mrf.mxu0
  %591 = vdwg.mxu0
  %v592 = vmul.f32 %v579, %v294
  %v593 = vmul.f32 %v581, %v294
  %v594 = vmul.f32 %v584, %v294
  %v595 = vmul.f32 %v586, %v294
  %v596 = vmul.f32 %v589, %v294
  %v597 = vadd.f32 %v592, %v302
  %v598 = vadd.f32 %v593, %v302
  %v599 = vadd.f32 %v594, %v302
  %v600 = vadd.f32 %v595, %v302
  %v601 = vadd.f32 %v596, %v302
  %v602 = vmax.f32 %v597, 0.0
  %v603 = vmax.f32 %v598, 0.0
  %v604 = vmax.f32 %v599, 0.0
  %v605 = vmax.f32 %v600, 0.0
  %v606 = vmax.f32 %v601, 0.0
  %v607 = vadd.f32 %v458, %v602
  %v608 = vadd.f32 %v459, %v603
  %v609 = vadd.f32 %v460, %v604
  %v610 = vadd.f32 %v461, %v605
  %v611 = vadd.f32 %v462, %v606
  %s612 = scalar_lea.vmem %s0, 180
  %v613 = vld [vmem:[%s612] sm:$0xff]
  %v614 = vld [vmem:[%s612 + $0x8] sm:$0xf]
  %v615 = vld [vmem:[%s612 + $0xc] sm:$0xff]
  %v616 = vld [vmem:[%s612 + $0x14] sm:$0xf]
  %v617 = vld [vmem:[%s612 + $0x18] sm:$0xff]
  %v618 = vld [vmem:[%s612 + $0x20] sm:$0xf]
  %v619 = vld [vmem:[%s612 + $0x24] sm:$0xff]
  %v620 = vld [vmem:[%s612 + $0x2c] sm:$0xf]
  %v621 = vld [vmem:[%s612 + $0x30] sm:$0x33]
  %v622 = vld [vmem:[%s612 + $0x38] sm:$0x3]
  %v633 = vunpack.c.l.b16 %v613
  %v634 = vunpack.c.h.b16 %v613
  %v635 = vunpack.c.l.b16 %v614
  %v636 = vunpack.c.l.b16 %v615
  %v637 = vunpack.c.h.b16 %v615
  %v638 = vunpack.c.l.b16 %v616
  %v639 = vunpack.c.l.b16 %v617
  %v640 = vunpack.c.h.b16 %v617
  %v641 = vunpack.c.l.b16 %v618
  %v642 = vunpack.c.l.b16 %v619
  %v643 = vunpack.c.h.b16 %v619
  %v644 = vunpack.c.l.b16 %v620
  %v645 = vunpack.c.l.b16 %v621
  %v646 = vunpack.c.h.b16 %v621
  %v647 = vunpack.c.l.b16 %v622
  %v648 = vpack.c.b16 %v636, %v633
  %v649 = vpack.c.b16 %v637, %v634
  %v650 = vpack.c.b16 %v638, %v635
  %v651 = vpack.c.b16 %v642, %v639
  %v652 = vpack.c.b16 %v643, %v640
  %v653 = vpack.c.b16 %v644, %v641
  %v654 = vpack.c.b16 %v645, %v645
  %v655 = vpack.c.b16 %v646, %v646
  %v656 = vpack.c.b16 %v647, %v647
  %v664 = vsel %vm214, %v650, 0
  %v667 = vsel %vm214, %v653, 0
  %v670 = vsel %vm214, %v656, 0
  %672 = vmatpush.bf16.msra.mxu0 %v185
  %673 = vmatpush.bf16.msra.mxu0 %v184
  %674 = vmatpush.bf16.msra.mxu0 %v183
  %675 = vmatpush.bf16.msra.mxu0 %v182
  %676 = vmatpush.bf16.msra.mxu0 %v181
  %677 = vmatpush.bf16.msra.mxu0 %v180
  %678 = vmatpush.bf16.msra.mxu0 %v179
  %679 = vmatpush.bf16.msra.mxu0 %v178
  %680 = vmatmul.bf16.gmra.mxu0 %v648
  %v681 = vpop.f32.mrf.mxu0
  %v682 = vadd.f32 0.0, %v681
  %v683 = vpop.f32.mrf.mxu0
  %v684 = vadd.f32 0.0, %v683
  %685 = vmatmul.bf16.gmra.mxu0 %v651
  %v686 = vpop.f32.mrf.mxu0
  %v687 = vadd.f32 0.0, %v686
  %v688 = vpop.f32.mrf.mxu0
  %v689 = vadd.f32 0.0, %v688
  %690 = vmatmul.bf16.gmra.mxu0 %v654
  %v691 = vpop.f32.mrf.mxu0
  %v692 = vadd.f32 0.0, %v691
  %v693 = vpop.f32.mrf.mxu0
  %694 = vdwg.mxu0
  %695 = vmatpush.bf16.msra.mxu0 %v193
  %696 = vmatpush.bf16.msra.mxu0 %v192
  %697 = vmatpush.bf16.msra.mxu0 %v191
  %698 = vmatpush.bf16.msra.mxu0 %v190
  %699 = vmatpush.bf16.msra.mxu0 %v189
  %700 = vmatpush.bf16.msra.mxu0 %v188
  %701 = vmatpush.bf16.msra.mxu0 %v187
  %702 = vmatpush.bf16.msra.mxu0 %v186
  %703 = vmatmul.bf16.gmra.mxu0 %v649
  %v704 = vpop.f32.mrf.mxu0
  %v705 = vadd.f32 %v682, %v704
  %v706 = vpop.f32.mrf.mxu0
  %v707 = vadd.f32 %v684, %v706
  %708 = vmatmul.bf16.gmra.mxu0 %v652
  %v709 = vpop.f32.mrf.mxu0
  %v710 = vadd.f32 %v687, %v709
  %v711 = vpop.f32.mrf.mxu0
  %v712 = vadd.f32 %v689, %v711
  %713 = vmatmul.bf16.gmra.mxu0 %v655
  %v714 = vpop.f32.mrf.mxu0
  %v715 = vadd.f32 %v692, %v714
  %v716 = vpop.f32.mrf.mxu0
  %717 = vdwg.mxu0
  %718 = vmatpush.bf16.msra.mxu0 0
  %719 = vmatpush.bf16.msra.mxu0 0
  %720 = vmatpush.bf16.msra.mxu0 0
  %721 = vmatpush.bf16.msra.mxu0 0
  %722 = vmatpush.bf16.msra.mxu0 0
  %723 = vmatpush.bf16.msra.mxu0 0
  %724 = vmatpush.bf16.msra.mxu0 %v195
  %725 = vmatpush.bf16.msra.mxu0 %v194
  %726 = vmatmul.bf16.gmra.mxu0 %v664
  %v727 = vpop.f32.mrf.mxu0
  %v728 = vadd.f32 %v705, %v727
  %v729 = vpop.f32.mrf.mxu0
  %v730 = vadd.f32 %v707, %v729
  %731 = vmatmul.bf16.gmra.mxu0 %v667
  %v732 = vpop.f32.mrf.mxu0
  %v733 = vadd.f32 %v710, %v732
  %v734 = vpop.f32.mrf.mxu0
  %v735 = vadd.f32 %v712, %v734
  %736 = vmatmul.bf16.gmra.mxu0 %v670
  %v737 = vpop.f32.mrf.mxu0
  %v738 = vadd.f32 %v715, %v737
  %v739 = vpop.f32.mrf.mxu0
  %740 = vdwg.mxu0
  %v741 = vmul.f32 %v728, %v294
  %v742 = vmul.f32 %v730, %v294
  %v743 = vmul.f32 %v733, %v294
  %v744 = vmul.f32 %v735, %v294
  %v745 = vmul.f32 %v738, %v294
  %v746 = vadd.f32 %v741, %v302
  %v747 = vadd.f32 %v742, %v302
  %v748 = vadd.f32 %v743, %v302
  %v749 = vadd.f32 %v744, %v302
  %v750 = vadd.f32 %v745, %v302
  %v751 = vmax.f32 %v746, 0.0
  %v752 = vmax.f32 %v747, 0.0
  %v753 = vmax.f32 %v748, 0.0
  %v754 = vmax.f32 %v749, 0.0
  %v755 = vmax.f32 %v750, 0.0
  %v756 = vadd.f32 %v607, %v751
  %v757 = vadd.f32 %v608, %v752
  %v758 = vadd.f32 %v609, %v753
  %v759 = vadd.f32 %v610, %v754
  %v760 = vadd.f32 %v611, %v755
  %v761 = vmul.f32 %v756, 0.25
  %v762 = vmul.f32 %v757, 0.25
  %v763 = vmul.f32 %v758, 0.25
  %v764 = vmul.f32 %v759, 0.25
  %v765 = vmul.f32 %v760, 0.25
  %v766 = vpack.c.bf16 %v761, %v761
  %v767 = vpack.c.bf16 %v762, %v762
  %v768 = vpack.c.bf16 %v763, %v763
  %v769 = vpack.c.bf16 %v764, %v764
  %v770 = vpack.c.bf16 %v765, %v765
  %vm771 = vcmask 519168
  %772 = vst.msk [vmem:[%s4] sm:$0xf] %vm771, %v766
  %773 = vst.msk [vmem:[%s4 + $0x4] sm:$0xf] %vm771, %v767
  %774 = vst.msk [vmem:[%s4 + $0x8] sm:$0xf] %vm771, %v768
  %775 = vst.msk [vmem:[%s4 + $0xc] sm:$0xf] %vm771, %v769
  %vm776 = vcmask 517120
  %777 = vst.msk [vmem:[%s4 + $0x10] sm:$0x3] %vm776, %v770
  %s778 = scalar_lea.vmem %s0, 240
  %v779 = vld [vmem:[%s778] sm:$0xff]
  %v780 = vld [vmem:[%s778 + $0x8] sm:$0xf]
  %v781 = vld [vmem:[%s778 + $0xc] sm:$0xff]
  %v782 = vld [vmem:[%s778 + $0x14] sm:$0xf]
  %v783 = vld [vmem:[%s778 + $0x18] sm:$0xff]
  %v784 = vld [vmem:[%s778 + $0x20] sm:$0xf]
  %v785 = vld [vmem:[%s778 + $0x24] sm:$0xff]
  %v786 = vld [vmem:[%s778 + $0x2c] sm:$0xf]
  %v787 = vld [vmem:[%s778 + $0x30] sm:$0x33]
  %v788 = vld [vmem:[%s778 + $0x38] sm:$0x3]
  %v799 = vunpack.c.l.b16 %v779
  %v800 = vunpack.c.h.b16 %v779
  %v801 = vunpack.c.l.b16 %v780
  %v802 = vunpack.c.l.b16 %v781
  %v803 = vunpack.c.h.b16 %v781
  %v804 = vunpack.c.l.b16 %v782
  %v805 = vunpack.c.l.b16 %v783
  %v806 = vunpack.c.h.b16 %v783
  %v807 = vunpack.c.l.b16 %v784
  %v808 = vunpack.c.l.b16 %v785
  %v809 = vunpack.c.h.b16 %v785
  %v810 = vunpack.c.l.b16 %v786
  %v811 = vunpack.c.l.b16 %v787
  %v812 = vunpack.c.h.b16 %v787
  %v813 = vunpack.c.l.b16 %v788
  %v814 = vpack.c.b16 %v802, %v799
  %v815 = vpack.c.b16 %v803, %v800
  %v816 = vpack.c.b16 %v804, %v801
  %v817 = vpack.c.b16 %v808, %v805
  %v818 = vpack.c.b16 %v809, %v806
  %v819 = vpack.c.b16 %v810, %v807
  %v820 = vpack.c.b16 %v811, %v811
  %v821 = vpack.c.b16 %v812, %v812
  %v822 = vpack.c.b16 %v813, %v813
  %v830 = vsel %vm214, %v816, 0
  %v833 = vsel %vm214, %v819, 0
  %v836 = vsel %vm214, %v822, 0
  %838 = vmatpush.bf16.msra.mxu0 %v185
  %839 = vmatpush.bf16.msra.mxu0 %v184
  %840 = vmatpush.bf16.msra.mxu0 %v183
  %841 = vmatpush.bf16.msra.mxu0 %v182
  %842 = vmatpush.bf16.msra.mxu0 %v181
  %843 = vmatpush.bf16.msra.mxu0 %v180
  %844 = vmatpush.bf16.msra.mxu0 %v179
  %845 = vmatpush.bf16.msra.mxu0 %v178
  %846 = vmatmul.bf16.gmra.mxu0 %v814
  %v847 = vpop.f32.mrf.mxu0
  %v848 = vadd.f32 0.0, %v847
  %v849 = vpop.f32.mrf.mxu0
  %v850 = vadd.f32 0.0, %v849
  %851 = vmatmul.bf16.gmra.mxu0 %v817
  %v852 = vpop.f32.mrf.mxu0
  %v853 = vadd.f32 0.0, %v852
  %v854 = vpop.f32.mrf.mxu0
  %v855 = vadd.f32 0.0, %v854
  %856 = vmatmul.bf16.gmra.mxu0 %v820
  %v857 = vpop.f32.mrf.mxu0
  %v858 = vadd.f32 0.0, %v857
  %v859 = vpop.f32.mrf.mxu0
  %860 = vdwg.mxu0
  %861 = vmatpush.bf16.msra.mxu0 %v193
  %862 = vmatpush.bf16.msra.mxu0 %v192
  %863 = vmatpush.bf16.msra.mxu0 %v191
  %864 = vmatpush.bf16.msra.mxu0 %v190
  %865 = vmatpush.bf16.msra.mxu0 %v189
  %866 = vmatpush.bf16.msra.mxu0 %v188
  %867 = vmatpush.bf16.msra.mxu0 %v187
  %868 = vmatpush.bf16.msra.mxu0 %v186
  %869 = vmatmul.bf16.gmra.mxu0 %v815
  %v870 = vpop.f32.mrf.mxu0
  %v871 = vadd.f32 %v848, %v870
  %v872 = vpop.f32.mrf.mxu0
  %v873 = vadd.f32 %v850, %v872
  %874 = vmatmul.bf16.gmra.mxu0 %v818
  %v875 = vpop.f32.mrf.mxu0
  %v876 = vadd.f32 %v853, %v875
  %v877 = vpop.f32.mrf.mxu0
  %v878 = vadd.f32 %v855, %v877
  %879 = vmatmul.bf16.gmra.mxu0 %v821
  %v880 = vpop.f32.mrf.mxu0
  %v881 = vadd.f32 %v858, %v880
  %v882 = vpop.f32.mrf.mxu0
  %883 = vdwg.mxu0
  %884 = vmatpush.bf16.msra.mxu0 0
  %885 = vmatpush.bf16.msra.mxu0 0
  %886 = vmatpush.bf16.msra.mxu0 0
  %887 = vmatpush.bf16.msra.mxu0 0
  %888 = vmatpush.bf16.msra.mxu0 0
  %889 = vmatpush.bf16.msra.mxu0 0
  %890 = vmatpush.bf16.msra.mxu0 %v195
  %891 = vmatpush.bf16.msra.mxu0 %v194
  %892 = vmatmul.bf16.gmra.mxu0 %v830
  %v893 = vpop.f32.mrf.mxu0
  %v894 = vadd.f32 %v871, %v893
  %v895 = vpop.f32.mrf.mxu0
  %v896 = vadd.f32 %v873, %v895
  %897 = vmatmul.bf16.gmra.mxu0 %v833
  %v898 = vpop.f32.mrf.mxu0
  %v899 = vadd.f32 %v876, %v898
  %v900 = vpop.f32.mrf.mxu0
  %v901 = vadd.f32 %v878, %v900
  %902 = vmatmul.bf16.gmra.mxu0 %v836
  %v903 = vpop.f32.mrf.mxu0
  %v904 = vadd.f32 %v881, %v903
  %v905 = vpop.f32.mrf.mxu0
  %906 = vdwg.mxu0
  %v907 = vmul.f32 %v894, %v294
  %v908 = vmul.f32 %v896, %v294
  %v909 = vmul.f32 %v899, %v294
  %v910 = vmul.f32 %v901, %v294
  %v911 = vmul.f32 %v904, %v294
  %v912 = vadd.f32 %v907, %v302
  %v913 = vadd.f32 %v908, %v302
  %v914 = vadd.f32 %v909, %v302
  %v915 = vadd.f32 %v910, %v302
  %v916 = vadd.f32 %v911, %v302
  %v917 = vmax.f32 %v912, 0.0
  %v918 = vmax.f32 %v913, 0.0
  %v919 = vmax.f32 %v914, 0.0
  %v920 = vmax.f32 %v915, 0.0
  %v921 = vmax.f32 %v916, 0.0
  %s922 = scalar_lea.vmem %s0, 300
  %v923 = vld [vmem:[%s922] sm:$0xff]
  %v924 = vld [vmem:[%s922 + $0x8] sm:$0xf]
  %v925 = vld [vmem:[%s922 + $0xc] sm:$0xff]
  %v926 = vld [vmem:[%s922 + $0x14] sm:$0xf]
  %v927 = vld [vmem:[%s922 + $0x18] sm:$0xff]
  %v928 = vld [vmem:[%s922 + $0x20] sm:$0xf]
  %v929 = vld [vmem:[%s922 + $0x24] sm:$0xff]
  %v930 = vld [vmem:[%s922 + $0x2c] sm:$0xf]
  %v931 = vld [vmem:[%s922 + $0x30] sm:$0x33]
  %v932 = vld [vmem:[%s922 + $0x38] sm:$0x3]
  %v943 = vunpack.c.l.b16 %v923
  %v944 = vunpack.c.h.b16 %v923
  %v945 = vunpack.c.l.b16 %v924
  %v946 = vunpack.c.l.b16 %v925
  %v947 = vunpack.c.h.b16 %v925
  %v948 = vunpack.c.l.b16 %v926
  %v949 = vunpack.c.l.b16 %v927
  %v950 = vunpack.c.h.b16 %v927
  %v951 = vunpack.c.l.b16 %v928
  %v952 = vunpack.c.l.b16 %v929
  %v953 = vunpack.c.h.b16 %v929
  %v954 = vunpack.c.l.b16 %v930
  %v955 = vunpack.c.l.b16 %v931
  %v956 = vunpack.c.h.b16 %v931
  %v957 = vunpack.c.l.b16 %v932
  %v958 = vpack.c.b16 %v946, %v943
  %v959 = vpack.c.b16 %v947, %v944
  %v960 = vpack.c.b16 %v948, %v945
  %v961 = vpack.c.b16 %v952, %v949
  %v962 = vpack.c.b16 %v953, %v950
  %v963 = vpack.c.b16 %v954, %v951
  %v964 = vpack.c.b16 %v955, %v955
  %v965 = vpack.c.b16 %v956, %v956
  %v966 = vpack.c.b16 %v957, %v957
  %v974 = vsel %vm214, %v960, 0
  %v977 = vsel %vm214, %v963, 0
  %v980 = vsel %vm214, %v966, 0
  %982 = vmatpush.bf16.msra.mxu0 %v185
  %983 = vmatpush.bf16.msra.mxu0 %v184
  %984 = vmatpush.bf16.msra.mxu0 %v183
  %985 = vmatpush.bf16.msra.mxu0 %v182
  %986 = vmatpush.bf16.msra.mxu0 %v181
  %987 = vmatpush.bf16.msra.mxu0 %v180
  %988 = vmatpush.bf16.msra.mxu0 %v179
  %989 = vmatpush.bf16.msra.mxu0 %v178
  %990 = vmatmul.bf16.gmra.mxu0 %v958
  %v991 = vpop.f32.mrf.mxu0
  %v992 = vadd.f32 0.0, %v991
  %v993 = vpop.f32.mrf.mxu0
  %v994 = vadd.f32 0.0, %v993
  %995 = vmatmul.bf16.gmra.mxu0 %v961
  %v996 = vpop.f32.mrf.mxu0
  %v997 = vadd.f32 0.0, %v996
  %v998 = vpop.f32.mrf.mxu0
  %v999 = vadd.f32 0.0, %v998
  %1000 = vmatmul.bf16.gmra.mxu0 %v964
  %v1001 = vpop.f32.mrf.mxu0
  %v1002 = vadd.f32 0.0, %v1001
  %v1003 = vpop.f32.mrf.mxu0
  %1004 = vdwg.mxu0
  %1005 = vmatpush.bf16.msra.mxu0 %v193
  %1006 = vmatpush.bf16.msra.mxu0 %v192
  %1007 = vmatpush.bf16.msra.mxu0 %v191
  %1008 = vmatpush.bf16.msra.mxu0 %v190
  %1009 = vmatpush.bf16.msra.mxu0 %v189
  %1010 = vmatpush.bf16.msra.mxu0 %v188
  %1011 = vmatpush.bf16.msra.mxu0 %v187
  %1012 = vmatpush.bf16.msra.mxu0 %v186
  %1013 = vmatmul.bf16.gmra.mxu0 %v959
  %v1014 = vpop.f32.mrf.mxu0
  %v1015 = vadd.f32 %v992, %v1014
  %v1016 = vpop.f32.mrf.mxu0
  %v1017 = vadd.f32 %v994, %v1016
  %1018 = vmatmul.bf16.gmra.mxu0 %v962
  %v1019 = vpop.f32.mrf.mxu0
  %v1020 = vadd.f32 %v997, %v1019
  %v1021 = vpop.f32.mrf.mxu0
  %v1022 = vadd.f32 %v999, %v1021
  %1023 = vmatmul.bf16.gmra.mxu0 %v965
  %v1024 = vpop.f32.mrf.mxu0
  %v1025 = vadd.f32 %v1002, %v1024
  %v1026 = vpop.f32.mrf.mxu0
  %1027 = vdwg.mxu0
  %1028 = vmatpush.bf16.msra.mxu0 0
  %1029 = vmatpush.bf16.msra.mxu0 0
  %1030 = vmatpush.bf16.msra.mxu0 0
  %1031 = vmatpush.bf16.msra.mxu0 0
  %1032 = vmatpush.bf16.msra.mxu0 0
  %1033 = vmatpush.bf16.msra.mxu0 0
  %1034 = vmatpush.bf16.msra.mxu0 %v195
  %1035 = vmatpush.bf16.msra.mxu0 %v194
  %1036 = vmatmul.bf16.gmra.mxu0 %v974
  %v1037 = vpop.f32.mrf.mxu0
  %v1038 = vadd.f32 %v1015, %v1037
  %v1039 = vpop.f32.mrf.mxu0
  %v1040 = vadd.f32 %v1017, %v1039
  %1041 = vmatmul.bf16.gmra.mxu0 %v977
  %v1042 = vpop.f32.mrf.mxu0
  %v1043 = vadd.f32 %v1020, %v1042
  %v1044 = vpop.f32.mrf.mxu0
  %v1045 = vadd.f32 %v1022, %v1044
  %1046 = vmatmul.bf16.gmra.mxu0 %v980
  %v1047 = vpop.f32.mrf.mxu0
  %v1048 = vadd.f32 %v1025, %v1047
  %v1049 = vpop.f32.mrf.mxu0
  %1050 = vdwg.mxu0
  %v1051 = vmul.f32 %v1038, %v294
  %v1052 = vmul.f32 %v1040, %v294
  %v1053 = vmul.f32 %v1043, %v294
  %v1054 = vmul.f32 %v1045, %v294
  %v1055 = vmul.f32 %v1048, %v294
  %v1056 = vadd.f32 %v1051, %v302
  %v1057 = vadd.f32 %v1052, %v302
  %v1058 = vadd.f32 %v1053, %v302
  %v1059 = vadd.f32 %v1054, %v302
  %v1060 = vadd.f32 %v1055, %v302
  %v1061 = vmax.f32 %v1056, 0.0
  %v1062 = vmax.f32 %v1057, 0.0
  %v1063 = vmax.f32 %v1058, 0.0
  %v1064 = vmax.f32 %v1059, 0.0
  %v1065 = vmax.f32 %v1060, 0.0
  %v1066 = vadd.f32 %v917, %v1061
  %v1067 = vadd.f32 %v918, %v1062
  %v1068 = vadd.f32 %v919, %v1063
  %v1069 = vadd.f32 %v920, %v1064
  %v1070 = vadd.f32 %v921, %v1065
  %s1071 = scalar_lea.vmem %s0, 360
  %v1072 = vld [vmem:[%s1071] sm:$0xff]
  %v1073 = vld [vmem:[%s1071 + $0x8] sm:$0xf]
  %v1074 = vld [vmem:[%s1071 + $0xc] sm:$0xff]
  %v1075 = vld [vmem:[%s1071 + $0x14] sm:$0xf]
  %v1076 = vld [vmem:[%s1071 + $0x18] sm:$0xff]
  %v1077 = vld [vmem:[%s1071 + $0x20] sm:$0xf]
  %v1078 = vld [vmem:[%s1071 + $0x24] sm:$0xff]
  %v1079 = vld [vmem:[%s1071 + $0x2c] sm:$0xf]
  %v1080 = vld [vmem:[%s1071 + $0x30] sm:$0x33]
  %v1081 = vld [vmem:[%s1071 + $0x38] sm:$0x3]
  %v1092 = vunpack.c.l.b16 %v1072
  %v1093 = vunpack.c.h.b16 %v1072
  %v1094 = vunpack.c.l.b16 %v1073
  %v1095 = vunpack.c.l.b16 %v1074
  %v1096 = vunpack.c.h.b16 %v1074
  %v1097 = vunpack.c.l.b16 %v1075
  %v1098 = vunpack.c.l.b16 %v1076
  %v1099 = vunpack.c.h.b16 %v1076
  %v1100 = vunpack.c.l.b16 %v1077
  %v1101 = vunpack.c.l.b16 %v1078
  %v1102 = vunpack.c.h.b16 %v1078
  %v1103 = vunpack.c.l.b16 %v1079
  %v1104 = vunpack.c.l.b16 %v1080
  %v1105 = vunpack.c.h.b16 %v1080
  %v1106 = vunpack.c.l.b16 %v1081
  %v1107 = vpack.c.b16 %v1095, %v1092
  %v1108 = vpack.c.b16 %v1096, %v1093
  %v1109 = vpack.c.b16 %v1097, %v1094
  %v1110 = vpack.c.b16 %v1101, %v1098
  %v1111 = vpack.c.b16 %v1102, %v1099
  %v1112 = vpack.c.b16 %v1103, %v1100
  %v1113 = vpack.c.b16 %v1104, %v1104
  %v1114 = vpack.c.b16 %v1105, %v1105
  %v1115 = vpack.c.b16 %v1106, %v1106
  %v1123 = vsel %vm214, %v1109, 0
  %v1126 = vsel %vm214, %v1112, 0
  %v1129 = vsel %vm214, %v1115, 0
  %1131 = vmatpush.bf16.msra.mxu0 %v185
  %1132 = vmatpush.bf16.msra.mxu0 %v184
  %1133 = vmatpush.bf16.msra.mxu0 %v183
  %1134 = vmatpush.bf16.msra.mxu0 %v182
  %1135 = vmatpush.bf16.msra.mxu0 %v181
  %1136 = vmatpush.bf16.msra.mxu0 %v180
  %1137 = vmatpush.bf16.msra.mxu0 %v179
  %1138 = vmatpush.bf16.msra.mxu0 %v178
  %1139 = vmatmul.bf16.gmra.mxu0 %v1107
  %v1140 = vpop.f32.mrf.mxu0
  %v1141 = vadd.f32 0.0, %v1140
  %v1142 = vpop.f32.mrf.mxu0
  %v1143 = vadd.f32 0.0, %v1142
  %1144 = vmatmul.bf16.gmra.mxu0 %v1110
  %v1145 = vpop.f32.mrf.mxu0
  %v1146 = vadd.f32 0.0, %v1145
  %v1147 = vpop.f32.mrf.mxu0
  %v1148 = vadd.f32 0.0, %v1147
  %1149 = vmatmul.bf16.gmra.mxu0 %v1113
  %v1150 = vpop.f32.mrf.mxu0
  %v1151 = vadd.f32 0.0, %v1150
  %v1152 = vpop.f32.mrf.mxu0
  %1153 = vdwg.mxu0
  %1154 = vmatpush.bf16.msra.mxu0 %v193
  %1155 = vmatpush.bf16.msra.mxu0 %v192
  %1156 = vmatpush.bf16.msra.mxu0 %v191
  %1157 = vmatpush.bf16.msra.mxu0 %v190
  %1158 = vmatpush.bf16.msra.mxu0 %v189
  %1159 = vmatpush.bf16.msra.mxu0 %v188
  %1160 = vmatpush.bf16.msra.mxu0 %v187
  %1161 = vmatpush.bf16.msra.mxu0 %v186
  %1162 = vmatmul.bf16.gmra.mxu0 %v1108
  %v1163 = vpop.f32.mrf.mxu0
  %v1164 = vadd.f32 %v1141, %v1163
  %v1165 = vpop.f32.mrf.mxu0
  %v1166 = vadd.f32 %v1143, %v1165
  %1167 = vmatmul.bf16.gmra.mxu0 %v1111
  %v1168 = vpop.f32.mrf.mxu0
  %v1169 = vadd.f32 %v1146, %v1168
  %v1170 = vpop.f32.mrf.mxu0
  %v1171 = vadd.f32 %v1148, %v1170
  %1172 = vmatmul.bf16.gmra.mxu0 %v1114
  %v1173 = vpop.f32.mrf.mxu0
  %v1174 = vadd.f32 %v1151, %v1173
  %v1175 = vpop.f32.mrf.mxu0
  %1176 = vdwg.mxu0
  %1177 = vmatpush.bf16.msra.mxu0 0
  %1178 = vmatpush.bf16.msra.mxu0 0
  %1179 = vmatpush.bf16.msra.mxu0 0
  %1180 = vmatpush.bf16.msra.mxu0 0
  %1181 = vmatpush.bf16.msra.mxu0 0
  %1182 = vmatpush.bf16.msra.mxu0 0
  %1183 = vmatpush.bf16.msra.mxu0 %v195
  %1184 = vmatpush.bf16.msra.mxu0 %v194
  %1185 = vmatmul.bf16.gmra.mxu0 %v1123
  %v1186 = vpop.f32.mrf.mxu0
  %v1187 = vadd.f32 %v1164, %v1186
  %v1188 = vpop.f32.mrf.mxu0
  %v1189 = vadd.f32 %v1166, %v1188
  %1190 = vmatmul.bf16.gmra.mxu0 %v1126
  %v1191 = vpop.f32.mrf.mxu0
  %v1192 = vadd.f32 %v1169, %v1191
  %v1193 = vpop.f32.mrf.mxu0
  %v1194 = vadd.f32 %v1171, %v1193
  %1195 = vmatmul.bf16.gmra.mxu0 %v1129
  %v1196 = vpop.f32.mrf.mxu0
  %v1197 = vadd.f32 %v1174, %v1196
  %v1198 = vpop.f32.mrf.mxu0
  %1199 = vdwg.mxu0
  %v1200 = vmul.f32 %v1187, %v294
  %v1201 = vmul.f32 %v1189, %v294
  %v1202 = vmul.f32 %v1192, %v294
  %v1203 = vmul.f32 %v1194, %v294
  %v1204 = vmul.f32 %v1197, %v294
  %v1205 = vadd.f32 %v1200, %v302
  %v1206 = vadd.f32 %v1201, %v302
  %v1207 = vadd.f32 %v1202, %v302
  %v1208 = vadd.f32 %v1203, %v302
  %v1209 = vadd.f32 %v1204, %v302
  %v1210 = vmax.f32 %v1205, 0.0
  %v1211 = vmax.f32 %v1206, 0.0
  %v1212 = vmax.f32 %v1207, 0.0
  %v1213 = vmax.f32 %v1208, 0.0
  %v1214 = vmax.f32 %v1209, 0.0
  %v1215 = vadd.f32 %v1066, %v1210
  %v1216 = vadd.f32 %v1067, %v1211
  %v1217 = vadd.f32 %v1068, %v1212
  %v1218 = vadd.f32 %v1069, %v1213
  %v1219 = vadd.f32 %v1070, %v1214
  %s1220 = scalar_lea.vmem %s0, 420
  %v1221 = vld [vmem:[%s1220] sm:$0xff]
  %v1222 = vld [vmem:[%s1220 + $0x8] sm:$0xf]
  %v1223 = vld [vmem:[%s1220 + $0xc] sm:$0xff]
  %v1224 = vld [vmem:[%s1220 + $0x14] sm:$0xf]
  %v1225 = vld [vmem:[%s1220 + $0x18] sm:$0xff]
  %v1226 = vld [vmem:[%s1220 + $0x20] sm:$0xf]
  %v1227 = vld [vmem:[%s1220 + $0x24] sm:$0xff]
  %v1228 = vld [vmem:[%s1220 + $0x2c] sm:$0xf]
  %v1229 = vld [vmem:[%s1220 + $0x30] sm:$0x33]
  %v1230 = vld [vmem:[%s1220 + $0x38] sm:$0x3]
  %v1241 = vunpack.c.l.b16 %v1221
  %v1242 = vunpack.c.h.b16 %v1221
  %v1243 = vunpack.c.l.b16 %v1222
  %v1244 = vunpack.c.l.b16 %v1223
  %v1245 = vunpack.c.h.b16 %v1223
  %v1246 = vunpack.c.l.b16 %v1224
  %v1247 = vunpack.c.l.b16 %v1225
  %v1248 = vunpack.c.h.b16 %v1225
  %v1249 = vunpack.c.l.b16 %v1226
  %v1250 = vunpack.c.l.b16 %v1227
  %v1251 = vunpack.c.h.b16 %v1227
  %v1252 = vunpack.c.l.b16 %v1228
  %v1253 = vunpack.c.l.b16 %v1229
  %v1254 = vunpack.c.h.b16 %v1229
  %v1255 = vunpack.c.l.b16 %v1230
  %v1256 = vpack.c.b16 %v1244, %v1241
  %v1257 = vpack.c.b16 %v1245, %v1242
  %v1258 = vpack.c.b16 %v1246, %v1243
  %v1259 = vpack.c.b16 %v1250, %v1247
  %v1260 = vpack.c.b16 %v1251, %v1248
  %v1261 = vpack.c.b16 %v1252, %v1249
  %v1262 = vpack.c.b16 %v1253, %v1253
  %v1263 = vpack.c.b16 %v1254, %v1254
  %v1264 = vpack.c.b16 %v1255, %v1255
  %v1272 = vsel %vm214, %v1258, 0
  %v1275 = vsel %vm214, %v1261, 0
  %v1278 = vsel %vm214, %v1264, 0
  %1280 = vmatpush.bf16.msra.mxu0 %v185
  %1281 = vmatpush.bf16.msra.mxu0 %v184
  %1282 = vmatpush.bf16.msra.mxu0 %v183
  %1283 = vmatpush.bf16.msra.mxu0 %v182
  %1284 = vmatpush.bf16.msra.mxu0 %v181
  %1285 = vmatpush.bf16.msra.mxu0 %v180
  %1286 = vmatpush.bf16.msra.mxu0 %v179
  %1287 = vmatpush.bf16.msra.mxu0 %v178
  %1288 = vmatmul.bf16.gmra.mxu0 %v1256
  %v1289 = vpop.f32.mrf.mxu0
  %v1290 = vadd.f32 0.0, %v1289
  %v1291 = vpop.f32.mrf.mxu0
  %v1292 = vadd.f32 0.0, %v1291
  %1293 = vmatmul.bf16.gmra.mxu0 %v1259
  %v1294 = vpop.f32.mrf.mxu0
  %v1295 = vadd.f32 0.0, %v1294
  %v1296 = vpop.f32.mrf.mxu0
  %v1297 = vadd.f32 0.0, %v1296
  %1298 = vmatmul.bf16.gmra.mxu0 %v1262
  %v1299 = vpop.f32.mrf.mxu0
  %v1300 = vadd.f32 0.0, %v1299
  %v1301 = vpop.f32.mrf.mxu0
  %1302 = vdwg.mxu0
  %1303 = vmatpush.bf16.msra.mxu0 %v193
  %1304 = vmatpush.bf16.msra.mxu0 %v192
  %1305 = vmatpush.bf16.msra.mxu0 %v191
  %1306 = vmatpush.bf16.msra.mxu0 %v190
  %1307 = vmatpush.bf16.msra.mxu0 %v189
  %1308 = vmatpush.bf16.msra.mxu0 %v188
  %1309 = vmatpush.bf16.msra.mxu0 %v187
  %1310 = vmatpush.bf16.msra.mxu0 %v186
  %1311 = vmatmul.bf16.gmra.mxu0 %v1257
  %v1312 = vpop.f32.mrf.mxu0
  %v1313 = vadd.f32 %v1290, %v1312
  %v1314 = vpop.f32.mrf.mxu0
  %v1315 = vadd.f32 %v1292, %v1314
  %1316 = vmatmul.bf16.gmra.mxu0 %v1260
  %v1317 = vpop.f32.mrf.mxu0
  %v1318 = vadd.f32 %v1295, %v1317
  %v1319 = vpop.f32.mrf.mxu0
  %v1320 = vadd.f32 %v1297, %v1319
  %1321 = vmatmul.bf16.gmra.mxu0 %v1263
  %v1322 = vpop.f32.mrf.mxu0
  %v1323 = vadd.f32 %v1300, %v1322
  %v1324 = vpop.f32.mrf.mxu0
  %1325 = vdwg.mxu0
  %1326 = vmatpush.bf16.msra.mxu0 0
  %1327 = vmatpush.bf16.msra.mxu0 0
  %1328 = vmatpush.bf16.msra.mxu0 0
  %1329 = vmatpush.bf16.msra.mxu0 0
  %1330 = vmatpush.bf16.msra.mxu0 0
  %1331 = vmatpush.bf16.msra.mxu0 0
  %1332 = vmatpush.bf16.msra.mxu0 %v195
  %1333 = vmatpush.bf16.msra.mxu0 %v194
  %1334 = vmatmul.bf16.gmra.mxu0 %v1272
  %v1335 = vpop.f32.mrf.mxu0
  %v1336 = vadd.f32 %v1313, %v1335
  %v1337 = vpop.f32.mrf.mxu0
  %v1338 = vadd.f32 %v1315, %v1337
  %1339 = vmatmul.bf16.gmra.mxu0 %v1275
  %v1340 = vpop.f32.mrf.mxu0
  %v1341 = vadd.f32 %v1318, %v1340
  %v1342 = vpop.f32.mrf.mxu0
  %v1343 = vadd.f32 %v1320, %v1342
  %1344 = vmatmul.bf16.gmra.mxu0 %v1278
  %v1345 = vpop.f32.mrf.mxu0
  %v1346 = vadd.f32 %v1323, %v1345
  %v1347 = vpop.f32.mrf.mxu0
  %1348 = vdwg.mxu0
  %v1349 = vmul.f32 %v1336, %v294
  %v1350 = vmul.f32 %v1338, %v294
  %v1351 = vmul.f32 %v1341, %v294
  %v1352 = vmul.f32 %v1343, %v294
  %v1353 = vmul.f32 %v1346, %v294
  %v1354 = vadd.f32 %v1349, %v302
  %v1355 = vadd.f32 %v1350, %v302
  %v1356 = vadd.f32 %v1351, %v302
  %v1357 = vadd.f32 %v1352, %v302
  %v1358 = vadd.f32 %v1353, %v302
  %v1359 = vmax.f32 %v1354, 0.0
  %v1360 = vmax.f32 %v1355, 0.0
  %v1361 = vmax.f32 %v1356, 0.0
  %v1362 = vmax.f32 %v1357, 0.0
  %v1363 = vmax.f32 %v1358, 0.0
  %v1364 = vadd.f32 %v1215, %v1359
  %v1365 = vadd.f32 %v1216, %v1360
  %v1366 = vadd.f32 %v1217, %v1361
  %v1367 = vadd.f32 %v1218, %v1362
  %v1368 = vadd.f32 %v1219, %v1363
  %v1369 = vmul.f32 %v1364, 0.25
  %v1370 = vmul.f32 %v1365, 0.25
  %v1371 = vmul.f32 %v1366, 0.25
  %v1372 = vmul.f32 %v1367, 0.25
  %v1373 = vmul.f32 %v1368, 0.25
  %v1374 = vpack.c.bf16 %v1369, %v1369
  %v1375 = vpack.c.bf16 %v1370, %v1370
  %v1376 = vpack.c.bf16 %v1371, %v1371
  %v1377 = vpack.c.bf16 %v1372, %v1372
  %v1378 = vpack.c.bf16 %v1373, %v1373
  %s1379 = scalar_lea.vmem %s4, 20
  %1380 = vst.msk [vmem:[%s1379] sm:$0xf] %vm771, %v1374
  %1381 = vst.msk [vmem:[%s1379 + $0x4] sm:$0xf] %vm771, %v1375
  %1382 = vst.msk [vmem:[%s1379 + $0x8] sm:$0xf] %vm771, %v1376
  %1383 = vst.msk [vmem:[%s1379 + $0xc] sm:$0xf] %vm771, %v1377
  %1384 = vst.msk [vmem:[%s1379 + $0x10] sm:$0x3] %vm776, %v1378
  // Predicated region
  $region18: #{forward.4} parent=0 // pred_check
    _
  $region19: #{forward.4} parent=0 // pred_check_branch
    %1386 = sbr.rel (0) target = $region21
  $region20: #{forward.4} parent=0 // pred_region
    _
  $region21: #{forward.4} parent=0 // pred_fallthru
    _
  // Predicated region
  $region22: #{forward.4} parent=0 // pred_check
    _
  $region23: #{forward.4} parent=0 // pred_check_branch
    %1388 = sbr.rel (0) target = $region25
  $region24: #{forward.4} parent=0 // pred_region
    _
  $region25: #{forward.4} parent=0 // pred_fallthru
    _

// kernel: forward.5
$region0: #{forward.5}
  #allocation0 [shape = 'u32[]', space=smem, size = 0x4, offset = 0x4, fixed_abs, tag = 'smem constant byte address 0x4 - core index']
  #allocation1 [shape = 'u32[72,128]{1,0:T(1,128)}', space=vmem, size = 0x9000, scoped, tag = 'internal scratch']
  %s0 = inlined_call_operand.vmem [shape: bf16[2,2304], index: 0, kind: input, shape index: {}]
  %s1 = inlined_call_operand.vmem [shape: bf16[2304,600], index: 1, kind: input, shape index: {}]
  %s2 = inlined_call_operand.vmem [shape: f32[1,600], index: 2, kind: input, shape index: {}]
  %s3 = inlined_call_operand.vmem [shape: bf16[600,120], index: 3, kind: input, shape index: {}]
  %s4 = inlined_call_operand.vmem [shape: f32[1,120], index: 4, kind: input, shape index: {}]
  %s5 = inlined_call_operand.vmem [shape: bf16[120,10], index: 5, kind: input, shape index: {}]
  %s6 = inlined_call_operand.vmem [shape: f32[1,10], index: 6, kind: input, shape index: {}]
  %s7 = inlined_call_operand.hbm [shape: f32[2,10], index: 7, kind: output, shape index: {}]
  %s8 = sld [smem:[#allocation0]]
  $region38: #{forward.5} parent=0
    _
  %s10 = ssub.s32 1, %s8
  %s11 = scalar_select 0, %s10, %s8
  $region1: #{forward.5} parent=0
    #allocation2 [shape = 'u8[1024]{0}', space=vmem, size = 0x400, scoped, tag = 'output window, operand 0, single buffered']
    #allocation3 [shape = 's32[1]{0}', space=sflag, size = 0x4, scoped, tag = 'scoped memory for forward.5']
    %12 = vsyncpa [#allocation3], 0
    // Predicated region
    $region2: #{forward.5} parent=1 // pred_check
      _
    $region3: #{forward.5} parent=1 // pred_check_branch
      %14 = sbr.rel (0) target = $region5
    $region4: #{forward.5} parent=1 // pred_region
      _
    $region5: #{forward.5} parent=1 // pred_fallthru
      _
    // Predicated region
    $region6: #{forward.5} parent=1 // pred_check
      _
    $region7: #{forward.5} parent=1 // pred_check_branch
      %16 = sbr.rel (0) target = $region9
    $region8: #{forward.5} parent=1 // pred_region
      _
    $region9: #{forward.5} parent=1 // pred_fallthru
      _
    // Predicated region
    $region10: #{forward.5} parent=1 // pred_check
      _
    $region11: #{forward.5} parent=1 // pred_check_branch
      %18 = sbr.rel (0) target = $region13
    $region12: #{forward.5} parent=1 // pred_region
      _
    $region13: #{forward.5} parent=1 // pred_fallthru
      _
    // Predicated region
    $region14: #{forward.5} parent=1 // pred_check
      _
    $region15: #{forward.5} parent=1 // pred_check_branch
      %20 = sbr.rel (0) target = $region17
    $region16: #{forward.5} parent=1 // pred_region
      _
    $region17: #{forward.5} parent=1 // pred_fallthru
      _
    // Predicated region
    $region18: #{forward.5} parent=1 // pred_check
      _
    $region19: #{forward.5} parent=1 // pred_check_branch
      %22 = sbr.rel (0) target = $region21
    $region20: #{forward.5} parent=1 // pred_region
      _
    $region21: #{forward.5} parent=1 // pred_fallthru
      _
    // Predicated region
    $region22: #{forward.5} parent=1 // pred_check
      _
    $region23: #{forward.5} parent=1 // pred_check_branch
      %24 = sbr.rel (0) target = $region25
    $region24: #{forward.5} parent=1 // pred_region
      _
    $region25: #{forward.5} parent=1 // pred_fallthru
      _
    // Predicated region
    $region26: #{forward.5} parent=1 // pred_check
      _
    $region27: #{forward.5} parent=1 // pred_check_branch
      %26 = sbr.rel (0) target = $region29
    $region28: #{forward.5} parent=1 // pred_region
      _
    $region29: #{forward.5} parent=1 // pred_fallthru
      _
    %v28 = vld [vmem:[%s0] sm:$0xff]
    %v29 = vld [vmem:[%s0 + $0x8] sm:$0xff]
    %v30 = vld [vmem:[%s0 + $0x10] sm:$0x3]
    %v31 = vld [vmem:[%s1] sm:$0xff]
    %v32 = vld [vmem:[%s1 + $0x8] sm:$0xff]
    %v33 = vld [vmem:[%s1 + $0x10] sm:$0xf]
    %v34 = vld [vmem:[%s1 + $0x14] sm:$0xff]
    %v35 = vld [vmem:[%s1 + $0x1c] sm:$0xff]
    %v36 = vld [vmem:[%s1 + $0x24] sm:$0xf]
    %v37 = vld [vmem:[%s1 + $0x28] sm:$0xff]
    %v38 = vld [vmem:[%s1 + $0x30] sm:$0xff]
    %v39 = vld [vmem:[%s1 + $0x38] sm:$0xf]
    %v40 = vld [vmem:[%s1 + $0x3c] sm:$0xff]
    %v41 = vld [vmem:[%s1 + $0x44] sm:$0xff]
    %v42 = vld [vmem:[%s1 + $0x4c] sm:$0xf]
    %v43 = vld [vmem:[%s1 + $0x50] sm:$0xff]
    %v44 = vld [vmem:[%s1 + $0x58] sm:$0xff]
    %v45 = vld [vmem:[%s1 + $0x60] sm:$0xf]
    %v46 = vld [vmem:[%s1 + $0x64] sm:$0xff]
    %v47 = vld [vmem:[%s1 + $0x6c] sm:$0xff]
    %v48 = vld [vmem:[%s1 + $0x74] sm:$0xf]
    %v49 = vld [vmem:[%s1 + $0x78] sm:$0xff]
    %v50 = vld [vmem:[%s1 + $0x80] sm:$0xff]
    %v51 = vld [vmem:[%s1 + $0x88] sm:$0xf]
    %v52 = vld [vmem:[%s1 + $0x8c] sm:$0xff]
    %v53 = vld [vmem:[%s1 + $0x94] sm:$0xff]
    %v54 = vld [vmem:[%s1 + $0x9c] sm:$0xf]
    %v55 = vld [vmem:[%s1 + $0xa0] sm:$0xff]
    %v56 = vld [vmem:[%s1 + $0xa8] sm:$0xff]
    %v57 = vld [vmem:[%s1 + $0xb0] sm:$0xf]
    %v58 = vld [vmem:[%s1 + $0xb4] sm:$0xff]
    %v59 = vld [vmem:[%s1 + $0xbc] sm:$0xff]
    %v60 = vld [vmem:[%s1 + $0xc4] sm:$0xf]
    %v61 = vld [vmem:[%s1 + $0xc8] sm:$0xff]
    %v62 = vld [vmem:[%s1 + $0xd0] sm:$0xff]
    %v63 = vld [vmem:[%s1 + $0xd8] sm:$0xf]
    %v64 = vld [vmem:[%s1 + $0xdc] sm:$0xff]
    %v65 = vld [vmem:[%s1 + $0xe4] sm:$0xff]
    %v66 = vld [vmem:[%s1 + $0xec] sm:$0xf]
    %v67 = vld [vmem:[%s1 + $0xf0] sm:$0xff]
    %v68 = vld [vmem:[%s1 + $0xf8] sm:$0xff]
    %v69 = vld [vmem:[%s1 + $0x100] sm:$0xf]
    %v70 = vld [vmem:[%s1 + $0x104] sm:$0xff]
    %v71 = vld [vmem:[%s1 + $0x10c] sm:$0xff]
    %v72 = vld [vmem:[%s1 + $0x114] sm:$0xf]
    %v73 = vld [vmem:[%s1 + $0x118] sm:$0xff]
    %v74 = vld [vmem:[%s1 + $0x120] sm:$0xff]
    %v75 = vld [vmem:[%s1 + $0x128] sm:$0xf]
    %v76 = vld [vmem:[%s1 + $0x12c] sm:$0xff]
    %v77 = vld [vmem:[%s1 + $0x134] sm:$0xff]
    %v78 = vld [vmem:[%s1 + $0x13c] sm:$0xf]
    %v79 = vld [vmem:[%s1 + $0x140] sm:$0xff]
    %v80 = vld [vmem:[%s1 + $0x148] sm:$0xff]
    %v81 = vld [vmem:[%s1 + $0x150] sm:$0xf]
    %v82 = vld [vmem:[%s1 + $0x154] sm:$0xff]
    %v83 = vld [vmem:[%s1 + $0x15c] sm:$0xff]
    %v84 = vld [vmem:[%s1 + $0x164] sm:$0xf]
    %v85 = vld [vmem:[%s1 + $0x168] sm:$0xff]
    %v86 = vld [vmem:[%s1 + $0x170] sm:$0xff]
    %v87 = vld [vmem:[%s1 + $0x178] sm:$0xf]
    %v88 = vld [vmem:[%s1 + $0x17c] sm:$0xff]
    %v89 = vld [vmem:[%s1 + $0x184] sm:$0xff]
    %v90 = vld [vmem:[%s1 + $0x18c] sm:$0xf]
    %v91 = vld [vmem:[%s1 + $0x190] sm:$0xff]
    %v92 = vld [vmem:[%s1 + $0x198] sm:$0xff]
    %v93 = vld [vmem:[%s1 + $0x1a0] sm:$0xf]
    %v94 = vld [vmem:[%s1 + $0x1a4] sm:$0xff]
    %v95 = vld [vmem:[%s1 + $0x1ac] sm:$0xff]
    %v96 = vld [vmem:[%s1 + $0x1b4] sm:$0xf]
    %v97 = vld [vmem:[%s1 + $0x1b8] sm:$0xff]
    %v98 = vld [vmem:[%s1 + $0x1c0] sm:$0xff]
    %v99 = vld [vmem:[%s1 + $0x1c8] sm:$0xf]
    %v100 = vld [vmem:[%s1 + $0x1cc] sm:$0xff]
    %v101 = vld [vmem:[%s1 + $0x1d4] sm:$0xff]
    %v102 = vld [vmem:[%s1 + $0x1dc] sm:$0xf]
    %v103 = vld [vmem:[%s1 + $0x1e0] sm:$0xff]
    %v104 = vld [vmem:[%s1 + $0x1e8] sm:$0xff]
    %v105 = vld [vmem:[%s1 + $0x1f0] sm:$0xf]
    %v106 = vld [vmem:[%s1 + $0x1f4] sm:$0xff]
    %v107 = vld [vmem:[%s1 + $0x1fc] sm:$0xff]
    %v108 = vld [vmem:[%s1 + $0x204] sm:$0xf]
    %v109 = vld [vmem:[%s1 + $0x208] sm:$0xff]
    %v110 = vld [vmem:[%s1 + $0x210] sm:$0xff]
    %v111 = vld [vmem:[%s1 + $0x218] sm:$0xf]
    %v112 = vld [vmem:[%s1 + $0x21c] sm:$0xff]
    %v113 = vld [vmem:[%s1 + $0x224] sm:$0xff]
    %v114 = vld [vmem:[%s1 + $0x22c] sm:$0xf]
    %v115 = vld [vmem:[%s1 + $0x230] sm:$0xff]
    %v116 = vld [vmem:[%s1 + $0x238] sm:$0xff]
    %v117 = vld [vmem:[%s1 + $0x240] sm:$0xf]
    %v118 = vld [vmem:[%s1 + $0x244] sm:$0xff]
    %v119 = vld [vmem:[%s1 + $0x24c] sm:$0xff]
    %v120 = vld [vmem:[%s1 + $0x254] sm:$0xf]
    %v121 = vld [vmem:[%s1 + $0x258] sm:$0xff]
    %v122 = vld [vmem:[%s1 + $0x260] sm:$0xff]
    %v123 = vld [vmem:[%s1 + $0x268] sm:$0xf]
    %v124 = vld [vmem:[%s1 + $0x26c] sm:$0xff]
    %v125 = vld [vmem:[%s1 + $0x274] sm:$0xff]
    %v126 = vld [vmem:[%s1 + $0x27c] sm:$0xf]
    %v127 = vld [vmem:[%s1 + $0x280] sm:$0xff]
    %v128 = vld [vmem:[%s1 + $0x288] sm:$0xff]
    %v129 = vld [vmem:[%s1 + $0x290] sm:$0xf]
    %v130 = vld [vmem:[%s1 + $0x294] sm:$0xff]
    %v131 = vld [vmem:[%s1 + $0x29c] sm:$0xff]
    %v132 = vld [vmem:[%s1 + $0x2a4] sm:$0xf]
    %v133 = vld [vmem:[%s1 + $0x2a8] sm:$0xff]
    %v134 = vld [vmem:[%s1 + $0x2b0] sm:$0xff]
    %v135 = vld [vmem:[%s1 + $0x2b8] sm:$0xf]
    %v136 = vld [vmem:[%s1 + $0x2bc] sm:$0xff]
    %v137 = vld [vmem:[%s1 + $0x2c4] sm:$0xff]
    %v138 = vld [vmem:[%s1 + $0x2cc] sm:$0xf]
    %v139 = vld [vmem:[%s1 + $0x2d0] sm:$0xff]
    %v140 = vld [vmem:[%s1 + $0x2d8] sm:$0xff]
    %v141 = vld [vmem:[%s1 + $0x2e0] sm:$0xf]
    %v142 = vld [vmem:[%s1 + $0x2e4] sm:$0xff]
    %v143 = vld [vmem:[%s1 + $0x2ec] sm:$0xff]
    %v144 = vld [vmem:[%s1 + $0x2f4] sm:$0xf]
    %v145 = vld [vmem:[%s1 + $0x2f8] sm:$0xff]
    %v146 = vld [vmem:[%s1 + $0x300] sm:$0xff]
    %v147 = vld [vmem:[%s1 + $0x308] sm:$0xf]
    %v148 = vld [vmem:[%s1 + $0x30c] sm:$0xff]
    %v149 = vld [vmem:[%s1 + $0x314] sm:$0xff]
    %v150 = vld [vmem:[%s1 + $0x31c] sm:$0xf]
    %v151 = vld [vmem:[%s1 + $0x320] sm:$0xff]
    %v152 = vld [vmem:[%s1 + $0x328] sm:$0xff]
    %v153 = vld [vmem:[%s1 + $0x330] sm:$0xf]
    %v154 = vld [vmem:[%s1 + $0x334] sm:$0xff]
    %v155 = vld [vmem:[%s1 + $0x33c] sm:$0xff]
    %v156 = vld [vmem:[%s1 + $0x344] sm:$0xf]
    %v157 = vld [vmem:[%s1 + $0x348] sm:$0xff]
    %v158 = vld [vmem:[%s1 + $0x350] sm:$0xff]
    %v159 = vld [vmem:[%s1 + $0x358] sm:$0xf]
    %v160 = vld [vmem:[%s1 + $0x35c] sm:$0xff]
    %v161 = vld [vmem:[%s1 + $0x364] sm:$0xff]
    %v162 = vld [vmem:[%s1 + $0x36c] sm:$0xf]
    %v163 = vld [vmem:[%s1 + $0x370] sm:$0xff]
    %v164 = vld [vmem:[%s1 + $0x378] sm:$0xff]
    %v165 = vld [vmem:[%s1 + $0x380] sm:$0xf]
    %v166 = vld [vmem:[%s1 + $0x384] sm:$0xff]
    %v167 = vld [vmem:[%s1 + $0x38c] sm:$0xff]
    %v168 = vld [vmem:[%s1 + $0x394] sm:$0xf]
    %v169 = vld [vmem:[%s1 + $0x398] sm:$0xff]
    %v170 = vld [vmem:[%s1 + $0x3a0] sm:$0xff]
    %v171 = vld [vmem:[%s1 + $0x3a8] sm:$0xf]
    %v172 = vld [vmem:[%s1 + $0x3ac] sm:$0xff]
    %v173 = vld [vmem:[%s1 + $0x3b4] sm:$0xff]
    %v174 = vld [vmem:[%s1 + $0x3bc] sm:$0xf]
    %v175 = vld [vmem:[%s1 + $0x3c0] sm:$0xff]
    %v176 = vld [vmem:[%s1 + $0x3c8] sm:$0xff]
    %v177 = vld [vmem:[%s1 + $0x3d0] sm:$0xf]
    %v178 = vld [vmem:[%s1 + $0x3d4] sm:$0xff]
    %v179 = vld [vmem:[%s1 + $0x3dc] sm:$0xff]
    %v180 = vld [vmem:[%s1 + $0x3e4] sm:$0xf]
    %v181 = vld [vmem:[%s1 + $0x3e8] sm:$0xff]
    %v182 = vld [vmem:[%s1 + $0x3f0] sm:$0xff]
    %v183 = vld [vmem:[%s1 + $0x3f8] sm:$0xf]
    %v184 = vld [vmem:[%s1 + $0x3fc] sm:$0xff]
    %v185 = vld [vmem:[%s1 + $0x404] sm:$0xff]
    %v186 = vld [vmem:[%s1 + $0x40c] sm:$0xf]
    %v187 = vld [vmem:[%s1 + $0x410] sm:$0xff]
    %v188 = vld [vmem:[%s1 + $0x418] sm:$0xff]
    %v189 = vld [vmem:[%s1 + $0x420] sm:$0xf]
    %v190 = vld [vmem:[%s1 + $0x424] sm:$0xff]
    %v191 = vld [vmem:[%s1 + $0x42c] sm:$0xff]
    %v192 = vld [vmem:[%s1 + $0x434] sm:$0xf]
    %v193 = vld [vmem:[%s1 + $0x438] sm:$0xff]
    %v194 = vld [vmem:[%s1 + $0x440] sm:$0xff]
    %v195 = vld [vmem:[%s1 + $0x448] sm:$0xf]
    %v196 = vld [vmem:[%s1 + $0x44c] sm:$0xff]
    %v197 = vld [vmem:[%s1 + $0x454] sm:$0xff]
    %v198 = vld [vmem:[%s1 + $0x45c] sm:$0xf]
    %v199 = vld [vmem:[%s1 + $0x460] sm:$0xff]
    %v200 = vld [vmem:[%s1 + $0x468] sm:$0xff]
    %v201 = vld [vmem:[%s1 + $0x470] sm:$0xf]
    %v202 = vld [vmem:[%s1 + $0x474] sm:$0xff]
    %v203 = vld [vmem:[%s1 + $0x47c] sm:$0xff]
    %v204 = vld [vmem:[%s1 + $0x484] sm:$0xf]
    %v205 = vld [vmem:[%s1 + $0x488] sm:$0xff]
    %v206 = vld [vmem:[%s1 + $0x490] sm:$0xff]
    %v207 = vld [vmem:[%s1 + $0x498] sm:$0xf]
    %v208 = vld [vmem:[%s1 + $0x49c] sm:$0xff]
    %v209 = vld [vmem:[%s1 + $0x4a4] sm:$0xff]
    %v210 = vld [vmem:[%s1 + $0x4ac] sm:$0xf]
    %v211 = vld [vmem:[%s1 + $0x4b0] sm:$0xff]
    %v212 = vld [vmem:[%s1 + $0x4b8] sm:$0xff]
    %v213 = vld [vmem:[%s1 + $0x4c0] sm:$0xf]
    %v214 = vld [vmem:[%s1 + $0x4c4] sm:$0xff]
    %v215 = vld [vmem:[%s1 + $0x4cc] sm:$0xff]
    %v216 = vld [vmem:[%s1 + $0x4d4] sm:$0xf]
    %v217 = vld [vmem:[%s1 + $0x4d8] sm:$0xff]
    %v218 = vld [vmem:[%s1 + $0x4e0] sm:$0xff]
    %v219 = vld [vmem:[%s1 + $0x4e8] sm:$0xf]
    %v220 = vld [vmem:[%s1 + $0x4ec] sm:$0xff]
    %v221 = vld [vmem:[%s1 + $0x4f4] sm:$0xff]
    %v222 = vld [vmem:[%s1 + $0x4fc] sm:$0xf]
    %v223 = vld [vmem:[%s1 + $0x500] sm:$0xff]
    %v224 = vld [vmem:[%s1 + $0x508] sm:$0xff]
    %v225 = vld [vmem:[%s1 + $0x510] sm:$0xf]
    %v226 = vld [vmem:[%s1 + $0x514] sm:$0xff]
    %v227 = vld [vmem:[%s1 + $0x51c] sm:$0xff]
    %v228 = vld [vmem:[%s1 + $0x524] sm:$0xf]
    %v229 = vld [vmem:[%s1 + $0x528] sm:$0xff]
    %v230 = vld [vmem:[%s1 + $0x530] sm:$0xff]
    %v231 = vld [vmem:[%s1 + $0x538] sm:$0xf]
    %v232 = vld [vmem:[%s1 + $0x53c] sm:$0xff]
    %v233 = vld [vmem:[%s1 + $0x544] sm:$0xff]
    %v234 = vld [vmem:[%s1 + $0x54c] sm:$0xf]
    %v235 = vld [vmem:[%s1 + $0x550] sm:$0xff]
    %v236 = vld [vmem:[%s1 + $0x558] sm:$0xff]
    %v237 = vld [vmem:[%s1 + $0x560] sm:$0xf]
    %v238 = vld [vmem:[%s1 + $0x564] sm:$0xff]
    %v239 = vld [vmem:[%s1 + $0x56c] sm:$0xff]
    %v240 = vld [vmem:[%s1 + $0x574] sm:$0xf]
    %v241 = vld [vmem:[%s1 + $0x578] sm:$0xff]
    %v242 = vld [vmem:[%s1 + $0x580] sm:$0xff]
    %v243 = vld [vmem:[%s1 + $0x588] sm:$0xf]
    %v244 = vld [vmem:[%s1 + $0x58c] sm:$0xff]
    %v245 = vld [vmem:[%s1 + $0x594] sm:$0xff]
    %v246 = vld [vmem:[%s1 + $0x59c] sm:$0xf]
    %v247 = vld [vmem:[%s1 + $0x5a0] sm:$0xff]
    %v248 = vld [vmem:[%s1 + $0x5a8] sm:$0xff]
    %v249 = vld [vmem:[%s1 + $0x5b0] sm:$0xf]
    %v250 = vld [vmem:[%s1 + $0x5b4] sm:$0xff]
    %v251 = vld [vmem:[%s1 + $0x5bc] sm:$0xff]
    %v252 = vld [vmem:[%s1 + $0x5c4] sm:$0xf]
    %v253 = vld [vmem:[%s1 + $0x5c8] sm:$0xff]
    %v254 = vld [vmem:[%s1 + $0x5d0] sm:$0xff]
    %v255 = vld [vmem:[%s1 + $0x5d8] sm:$0xf]
    %v256 = vld [vmem:[%s1 + $0x5dc] sm:$0xff]
    %v257 = vld [vmem:[%s1 + $0x5e4] sm:$0xff]
    %v258 = vld [vmem:[%s1 + $0x5ec] sm:$0xf]
    %v259 = vld [vmem:[%s1 + $0x5f0] sm:$0xff]
    %v260 = vld [vmem:[%s1 + $0x5f8] sm:$0xff]
    %v261 = vld [vmem:[%s1 + $0x600] sm:$0xf]
    %v262 = vld [vmem:[%s1 + $0x604] sm:$0xff]
    %v263 = vld [vmem:[%s1 + $0x60c] sm:$0xff]
    %v264 = vld [vmem:[%s1 + $0x614] sm:$0xf]
    %v265 = vld [vmem:[%s1 + $0x618] sm:$0xff]
    %v266 = vld [vmem:[%s1 + $0x620] sm:$0xff]
    %v267 = vld [vmem:[%s1 + $0x628] sm:$0xf]
    %v268 = vld [vmem:[%s1 + $0x62c] sm:$0xff]
    %v269 = vld [vmem:[%s1 + $0x634] sm:$0xff]
    %v270 = vld [vmem:[%s1 + $0x63c] sm:$0xf]
    %v271 = vld [vmem:[%s1 + $0x640] sm:$0xff]
    %v272 = vld [vmem:[%s1 + $0x648] sm:$0xff]
    %v273 = vld [vmem:[%s1 + $0x650] sm:$0xf]
    %v274 = vld [vmem:[%s1 + $0x654] sm:$0xff]
    %v275 = vld [vmem:[%s1 + $0x65c] sm:$0xff]
    %v276 = vld [vmem:[%s1 + $0x664] sm:$0xf]
    %v277 = vld [vmem:[%s1 + $0x668] sm:$0xff]
    %v278 = vld [vmem:[%s1 + $0x670] sm:$0xff]
    %v279 = vld [vmem:[%s1 + $0x678] sm:$0xf]
    %v280 = vld [vmem:[%s1 + $0x67c] sm:$0xff]
    %v281 = vld [vmem:[%s1 + $0x684] sm:$0xff]
    %v282 = vld [vmem:[%s1 + $0x68c] sm:$0xf]
    %v283 = vld [vmem:[%s1 + $0x690] sm:$0xff]
    %v284 = vld [vmem:[%s1 + $0x698] sm:$0xff]
    %v285 = vld [vmem:[%s1 + $0x6a0] sm:$0xf]
    %v286 = vld [vmem:[%s1 + $0x6a4] sm:$0xff]
    %v287 = vld [vmem:[%s1 + $0x6ac] sm:$0xff]
    %v288 = vld [vmem:[%s1 + $0x6b4] sm:$0xf]
    %v289 = vld [vmem:[%s1 + $0x6b8] sm:$0xff]
    %v290 = vld [vmem:[%s1 + $0x6c0] sm:$0xff]
    %v291 = vld [vmem:[%s1 + $0x6c8] sm:$0xf]
    %v292 = vld [vmem:[%s1 + $0x6cc] sm:$0xff]
    %v293 = vld [vmem:[%s1 + $0x6d4] sm:$0xff]
    %v294 = vld [vmem:[%s1 + $0x6dc] sm:$0xf]
    %v295 = vld [vmem:[%s1 + $0x6e0] sm:$0xff]
    %v296 = vld [vmem:[%s1 + $0x6e8] sm:$0xff]
    %v297 = vld [vmem:[%s1 + $0x6f0] sm:$0xf]
    %v298 = vld [vmem:[%s1 + $0x6f4] sm:$0xff]
    %v299 = vld [vmem:[%s1 + $0x6fc] sm:$0xff]
    %v300 = vld [vmem:[%s1 + $0x704] sm:$0xf]
    %v301 = vld [vmem:[%s1 + $0x708] sm:$0xff]
    %v302 = vld [vmem:[%s1 + $0x710] sm:$0xff]
    %v303 = vld [vmem:[%s1 + $0x718] sm:$0xf]
    %v304 = vld [vmem:[%s1 + $0x71c] sm:$0xff]
    %v305 = vld [vmem:[%s1 + $0x724] sm:$0xff]
    %v306 = vld [vmem:[%s1 + $0x72c] sm:$0xf]
    %v307 = vld [vmem:[%s1 + $0x730] sm:$0xff]
    %v308 = vld [vmem:[%s1 + $0x738] sm:$0xff]
    %v309 = vld [vmem:[%s1 + $0x740] sm:$0xf]
    %v310 = vld [vmem:[%s1 + $0x744] sm:$0xff]
    %v311 = vld [vmem:[%s1 + $0x74c] sm:$0xff]
    %v312 = vld [vmem:[%s1 + $0x754] sm:$0xf]
    %v313 = vld [vmem:[%s1 + $0x758] sm:$0xff]
    %v314 = vld [vmem:[%s1 + $0x760] sm:$0xff]
    %v315 = vld [vmem:[%s1 + $0x768] sm:$0xf]
    %v316 = vld [vmem:[%s1 + $0x76c] sm:$0xff]
    %v317 = vld [vmem:[%s1 + $0x774] sm:$0xff]
    %v318 = vld [vmem:[%s1 + $0x77c] sm:$0xf]
    %v319 = vld [vmem:[%s1 + $0x780] sm:$0xff]
    %v320 = vld [vmem:[%s1 + $0x788] sm:$0xff]
    %v321 = vld [vmem:[%s1 + $0x790] sm:$0xf]
    %v322 = vld [vmem:[%s1 + $0x794] sm:$0xff]
    %v323 = vld [vmem:[%s1 + $0x79c] sm:$0xff]
    %v324 = vld [vmem:[%s1 + $0x7a4] sm:$0xf]
    %v325 = vld [vmem:[%s1 + $0x7a8] sm:$0xff]
    %v326 = vld [vmem:[%s1 + $0x7b0] sm:$0xff]
    %v327 = vld [vmem:[%s1 + $0x7b8] sm:$0xf]
    %v328 = vld [vmem:[%s1 + $0x7bc] sm:$0xff]
    %v329 = vld [vmem:[%s1 + $0x7c4] sm:$0xff]
    %v330 = vld [vmem:[%s1 + $0x7cc] sm:$0xf]
    %v331 = vld [vmem:[%s1 + $0x7d0] sm:$0xff]
    %v332 = vld [vmem:[%s1 + $0x7d8] sm:$0xff]
    %v333 = vld [vmem:[%s1 + $0x7e0] sm:$0xf]
    %v334 = vld [vmem:[%s1 + $0x7e4] sm:$0xff]
    %v335 = vld [vmem:[%s1 + $0x7ec] sm:$0xff]
    %v336 = vld [vmem:[%s1 + $0x7f4] sm:$0xf]
    %v337 = vld [vmem:[%s1 + $0x7f8] sm:$0xff]
    %v338 = vld [vmem:[%s1 + $0x800] sm:$0xff]
    %v339 = vld [vmem:[%s1 + $0x808] sm:$0xf]
    %v340 = vld [vmem:[%s1 + $0x80c] sm:$0xff]
    %v341 = vld [vmem:[%s1 + $0x814] sm:$0xff]
    %v342 = vld [vmem:[%s1 + $0x81c] sm:$0xf]
    %v343 = vld [vmem:[%s1 + $0x820] sm:$0xff]
    %v344 = vld [vmem:[%s1 + $0x828] sm:$0xff]
    %v345 = vld [vmem:[%s1 + $0x830] sm:$0xf]
    %v346 = vld [vmem:[%s1 + $0x834] sm:$0xff]
    %v347 = vld [vmem:[%s1 + $0x83c] sm:$0xff]
    %v348 = vld [vmem:[%s1 + $0x844] sm:$0xf]
    %v349 = vld [vmem:[%s1 + $0x848] sm:$0xff]
    %v350 = vld [vmem:[%s1 + $0x850] sm:$0xff]
    %v351 = vld [vmem:[%s1 + $0x858] sm:$0xf]
    %v352 = vld [vmem:[%s1 + $0x85c] sm:$0xff]
    %v353 = vld [vmem:[%s1 + $0x864] sm:$0xff]
    %v354 = vld [vmem:[%s1 + $0x86c] sm:$0xf]
    %v355 = vld [vmem:[%s1 + $0x870] sm:$0xff]
    %v356 = vld [vmem:[%s1 + $0x878] sm:$0xff]
    %v357 = vld [vmem:[%s1 + $0x880] sm:$0xf]
    %v358 = vld [vmem:[%s1 + $0x884] sm:$0xff]
    %v359 = vld [vmem:[%s1 + $0x88c] sm:$0xff]
    %v360 = vld [vmem:[%s1 + $0x894] sm:$0xf]
    %v361 = vld [vmem:[%s1 + $0x898] sm:$0xff]
    %v362 = vld [vmem:[%s1 + $0x8a0] sm:$0xff]
    %v363 = vld [vmem:[%s1 + $0x8a8] sm:$0xf]
    %v364 = vld [vmem:[%s1 + $0x8ac] sm:$0xff]
    %v365 = vld [vmem:[%s1 + $0x8b4] sm:$0xff]
    %v366 = vld [vmem:[%s1 + $0x8bc] sm:$0xf]
    %v367 = vld [vmem:[%s1 + $0x8c0] sm:$0xff]
    %v368 = vld [vmem:[%s1 + $0x8c8] sm:$0xff]
    %v369 = vld [vmem:[%s1 + $0x8d0] sm:$0xf]
    %v370 = vld [vmem:[%s1 + $0x8d4] sm:$0xff]
    %v371 = vld [vmem:[%s1 + $0x8dc] sm:$0xff]
    %v372 = vld [vmem:[%s1 + $0x8e4] sm:$0xf]
    %v373 = vld [vmem:[%s1 + $0x8e8] sm:$0xff]
    %v374 = vld [vmem:[%s1 + $0x8f0] sm:$0xff]
    %v375 = vld [vmem:[%s1 + $0x8f8] sm:$0xf]
    %v376 = vld [vmem:[%s1 + $0x8fc] sm:$0xff]
    %v377 = vld [vmem:[%s1 + $0x904] sm:$0xff]
    %v378 = vld [vmem:[%s1 + $0x90c] sm:$0xf]
    %v379 = vld [vmem:[%s1 + $0x910] sm:$0xff]
    %v380 = vld [vmem:[%s1 + $0x918] sm:$0xff]
    %v381 = vld [vmem:[%s1 + $0x920] sm:$0xf]
    %v382 = vld [vmem:[%s1 + $0x924] sm:$0xff]
    %v383 = vld [vmem:[%s1 + $0x92c] sm:$0xff]
    %v384 = vld [vmem:[%s1 + $0x934] sm:$0xf]
    %v385 = vld [vmem:[%s1 + $0x938] sm:$0xff]
    %v386 = vld [vmem:[%s1 + $0x940] sm:$0xff]
    %v387 = vld [vmem:[%s1 + $0x948] sm:$0xf]
    %v388 = vld [vmem:[%s1 + $0x94c] sm:$0xff]
    %v389 = vld [vmem:[%s1 + $0x954] sm:$0xff]
    %v390 = vld [vmem:[%s1 + $0x95c] sm:$0xf]
    %v391 = vld [vmem:[%s1 + $0x960] sm:$0xff]
    %v392 = vld [vmem:[%s1 + $0x968] sm:$0xff]
    %v393 = vld [vmem:[%s1 + $0x970] sm:$0xf]
    %v394 = vld [vmem:[%s1 + $0x974] sm:$0xff]
    %v395 = vld [vmem:[%s1 + $0x97c] sm:$0xff]
    %v396 = vld [vmem:[%s1 + $0x984] sm:$0xf]
    %v397 = vld [vmem:[%s1 + $0x988] sm:$0xff]
    %v398 = vld [vmem:[%s1 + $0x990] sm:$0xff]
    %v399 = vld [vmem:[%s1 + $0x998] sm:$0xf]
    %v400 = vld [vmem:[%s1 + $0x99c] sm:$0xff]
    %v401 = vld [vmem:[%s1 + $0x9a4] sm:$0xff]
    %v402 = vld [vmem:[%s1 + $0x9ac] sm:$0xf]
    %v403 = vld [vmem:[%s1 + $0x9b0] sm:$0xff]
    %v404 = vld [vmem:[%s1 + $0x9b8] sm:$0xff]
    %v405 = vld [vmem:[%s1 + $0x9c0] sm:$0xf]
    %v406 = vld [vmem:[%s1 + $0x9c4] sm:$0xff]
    %v407 = vld [vmem:[%s1 + $0x9cc] sm:$0xff]
    %v408 = vld [vmem:[%s1 + $0x9d4] sm:$0xf]
    %v409 = vld [vmem:[%s1 + $0x9d8] sm:$0xff]
    %v410 = vld [vmem:[%s1 + $0x9e0] sm:$0xff]
    %v411 = vld [vmem:[%s1 + $0x9e8] sm:$0xf]
    %v412 = vld [vmem:[%s1 + $0x9ec] sm:$0xff]
    %v413 = vld [vmem:[%s1 + $0x9f4] sm:$0xff]
    %v414 = vld [vmem:[%s1 + $0x9fc] sm:$0xf]
    %v415 = vld [vmem:[%s1 + $0xa00] sm:$0xff]
    %v416 = vld [vmem:[%s1 + $0xa08] sm:$0xff]
    %v417 = vld [vmem:[%s1 + $0xa10] sm:$0xf]
    %v418 = vld [vmem:[%s1 + $0xa14] sm:$0xff]
    %v419 = vld [vmem:[%s1 + $0xa1c] sm:$0xff]
    %v420 = vld [vmem:[%s1 + $0xa24] sm:$0xf]
    %v421 = vld [vmem:[%s1 + $0xa28] sm:$0xff]
    %v422 = vld [vmem:[%s1 + $0xa30] sm:$0xff]
    %v423 = vld [vmem:[%s1 + $0xa38] sm:$0xf]
    %v424 = vld [vmem:[%s1 + $0xa3c] sm:$0xff]
    %v425 = vld [vmem:[%s1 + $0xa44] sm:$0xff]
    %v426 = vld [vmem:[%s1 + $0xa4c] sm:$0xf]
    %v427 = vld [vmem:[%s1 + $0xa50] sm:$0xff]
    %v428 = vld [vmem:[%s1 + $0xa58] sm:$0xff]
    %v429 = vld [vmem:[%s1 + $0xa60] sm:$0xf]
    %v430 = vld [vmem:[%s1 + $0xa64] sm:$0xff]
    %v431 = vld [vmem:[%s1 + $0xa6c] sm:$0xff]
    %v432 = vld [vmem:[%s1 + $0xa74] sm:$0xf]
    %v433 = vld [vmem:[%s1 + $0xa78] sm:$0xff]
    %v434 = vld [vmem:[%s1 + $0xa80] sm:$0xff]
    %v435 = vld [vmem:[%s1 + $0xa88] sm:$0xf]
    %v436 = vld [vmem:[%s1 + $0xa8c] sm:$0xff]
    %v437 = vld [vmem:[%s1 + $0xa94] sm:$0xff]
    %v438 = vld [vmem:[%s1 + $0xa9c] sm:$0xf]
    %v439 = vld [vmem:[%s1 + $0xaa0] sm:$0xff]
    %v440 = vld [vmem:[%s1 + $0xaa8] sm:$0xff]
    %v441 = vld [vmem:[%s1 + $0xab0] sm:$0xf]
    %v442 = vld [vmem:[%s1 + $0xab4] sm:$0xff]
    %v443 = vld [vmem:[%s1 + $0xabc] sm:$0xff]
    %v444 = vld [vmem:[%s1 + $0xac4] sm:$0xf]
    %v445 = vld [vmem:[%s1 + $0xac8] sm:$0xff]
    %v446 = vld [vmem:[%s1 + $0xad0] sm:$0xff]
    %v447 = vld [vmem:[%s1 + $0xad8] sm:$0xf]
    %v448 = vld [vmem:[%s1 + $0xadc] sm:$0xff]
    %v449 = vld [vmem:[%s1 + $0xae4] sm:$0xff]
    %v450 = vld [vmem:[%s1 + $0xaec] sm:$0xf]
    %v451 = vld [vmem:[%s1 + $0xaf0] sm:$0xff]
    %v452 = vld [vmem:[%s1 + $0xaf8] sm:$0xff]
    %v453 = vld [vmem:[%s1 + $0xb00] sm:$0xf]
    %v454 = vld [vmem:[%s1 + $0xb04] sm:$0xff]
    %v455 = vld [vmem:[%s1 + $0xb0c] sm:$0xff]
    %v456 = vld [vmem:[%s1 + $0xb14] sm:$0xf]
    %v457 = vld [vmem:[%s1 + $0xb18] sm:$0xff]
    %v458 = vld [vmem:[%s1 + $0xb20] sm:$0xff]
    %v459 = vld [vmem:[%s1 + $0xb28] sm:$0xf]
    %v460 = vld [vmem:[%s1 + $0xb2c] sm:$0xff]
    %v461 = vld [vmem:[%s1 + $0xb34] sm:$0xff]
    %v462 = vld [vmem:[%s1 + $0xb3c] sm:$0xf]
    %v463 = vld [vmem:[%s1 + $0xb40] sm:$0xff]
    %v464 = vld [vmem:[%s1 + $0xb48] sm:$0xff]
    %v465 = vld [vmem:[%s1 + $0xb50] sm:$0xf]
    %v466 = vld [vmem:[%s1 + $0xb54] sm:$0xff]
    %v467 = vld [vmem:[%s1 + $0xb5c] sm:$0xff]
    %v468 = vld [vmem:[%s1 + $0xb64] sm:$0xf]
    %v469 = vld [vmem:[%s1 + $0xb68] sm:$0xff]
    %v470 = vld [vmem:[%s1 + $0xb70] sm:$0xff]
    %v471 = vld [vmem:[%s1 + $0xb78] sm:$0xf]
    %v472 = vld [vmem:[%s1 + $0xb7c] sm:$0xff]
    %v473 = vld [vmem:[%s1 + $0xb84] sm:$0xff]
    %v474 = vld [vmem:[%s1 + $0xb8c] sm:$0xf]
    %v475 = vld [vmem:[%s1 + $0xb90] sm:$0xff]
    %v476 = vld [vmem:[%s1 + $0xb98] sm:$0xff]
    %v477 = vld [vmem:[%s1 + $0xba0] sm:$0xf]
    %v478 = vld [vmem:[%s1 + $0xba4] sm:$0xff]
    %v479 = vld [vmem:[%s1 + $0xbac] sm:$0xff]
    %v480 = vld [vmem:[%s1 + $0xbb4] sm:$0xf]
    %v481 = vld [vmem:[%s1 + $0xbb8] sm:$0xff]
    %v482 = vld [vmem:[%s1 + $0xbc0] sm:$0xff]
    %v483 = vld [vmem:[%s1 + $0xbc8] sm:$0xf]
    %v484 = vld [vmem:[%s1 + $0xbcc] sm:$0xff]
    %v485 = vld [vmem:[%s1 + $0xbd4] sm:$0xff]
    %v486 = vld [vmem:[%s1 + $0xbdc] sm:$0xf]
    %v487 = vld [vmem:[%s1 + $0xbe0] sm:$0xff]
    %v488 = vld [vmem:[%s1 + $0xbe8] sm:$0xff]
    %v489 = vld [vmem:[%s1 + $0xbf0] sm:$0xf]
    %v490 = vld [vmem:[%s1 + $0xbf4] sm:$0xff]
    %v491 = vld [vmem:[%s1 + $0xbfc] sm:$0xff]
    %v492 = vld [vmem:[%s1 + $0xc04] sm:$0xf]
    %v493 = vld [vmem:[%s1 + $0xc08] sm:$0xff]
    %v494 = vld [vmem:[%s1 + $0xc10] sm:$0xff]
    %v495 = vld [vmem:[%s1 + $0xc18] sm:$0xf]
    %v496 = vld [vmem:[%s1 + $0xc1c] sm:$0xff]
    %v497 = vld [vmem:[%s1 + $0xc24] sm:$0xff]
    %v498 = vld [vmem:[%s1 + $0xc2c] sm:$0xf]
    %v499 = vld [vmem:[%s1 + $0xc30] sm:$0xff]
    %v500 = vld [vmem:[%s1 + $0xc38] sm:$0xff]
    %v501 = vld [vmem:[%s1 + $0xc40] sm:$0xf]
    %v502 = vld [vmem:[%s1 + $0xc44] sm:$0xff]
    %v503 = vld [vmem:[%s1 + $0xc4c] sm:$0xff]
    %v504 = vld [vmem:[%s1 + $0xc54] sm:$0xf]
    %v505 = vld [vmem:[%s1 + $0xc58] sm:$0xff]
    %v506 = vld [vmem:[%s1 + $0xc60] sm:$0xff]
    %v507 = vld [vmem:[%s1 + $0xc68] sm:$0xf]
    %v508 = vld [vmem:[%s1 + $0xc6c] sm:$0xff]
    %v509 = vld [vmem:[%s1 + $0xc74] sm:$0xff]
    %v510 = vld [vmem:[%s1 + $0xc7c] sm:$0xf]
    %v511 = vld [vmem:[%s1 + $0xc80] sm:$0xff]
    %v512 = vld [vmem:[%s1 + $0xc88] sm:$0xff]
    %v513 = vld [vmem:[%s1 + $0xc90] sm:$0xf]
    %v514 = vld [vmem:[%s1 + $0xc94] sm:$0xff]
    %v515 = vld [vmem:[%s1 + $0xc9c] sm:$0xff]
    %v516 = vld [vmem:[%s1 + $0xca4] sm:$0xf]
    %v517 = vld [vmem:[%s1 + $0xca8] sm:$0xff]
    %v518 = vld [vmem:[%s1 + $0xcb0] sm:$0xff]
    %v519 = vld [vmem:[%s1 + $0xcb8] sm:$0xf]
    %v520 = vld [vmem:[%s1 + $0xcbc] sm:$0xff]
    %v521 = vld [vmem:[%s1 + $0xcc4] sm:$0xff]
    %v522 = vld [vmem:[%s1 + $0xccc] sm:$0xf]
    %v523 = vld [vmem:[%s1 + $0xcd0] sm:$0xff]
    %v524 = vld [vmem:[%s1 + $0xcd8] sm:$0xff]
    %v525 = vld [vmem:[%s1 + $0xce0] sm:$0xf]
    %v526 = vld [vmem:[%s1 + $0xce4] sm:$0xff]
    %v527 = vld [vmem:[%s1 + $0xcec] sm:$0xff]
    %v528 = vld [vmem:[%s1 + $0xcf4] sm:$0xf]
    %v529 = vld [vmem:[%s1 + $0xcf8] sm:$0xff]
    %v530 = vld [vmem:[%s1 + $0xd00] sm:$0xff]
    %v531 = vld [vmem:[%s1 + $0xd08] sm:$0xf]
    %v532 = vld [vmem:[%s1 + $0xd0c] sm:$0xff]
    %v533 = vld [vmem:[%s1 + $0xd14] sm:$0xff]
    %v534 = vld [vmem:[%s1 + $0xd1c] sm:$0xf]
    %v535 = vld [vmem:[%s1 + $0xd20] sm:$0xff]
    %v536 = vld [vmem:[%s1 + $0xd28] sm:$0xff]
    %v537 = vld [vmem:[%s1 + $0xd30] sm:$0xf]
    %v538 = vld [vmem:[%s1 + $0xd34] sm:$0xff]
    %v539 = vld [vmem:[%s1 + $0xd3c] sm:$0xff]
    %v540 = vld [vmem:[%s1 + $0xd44] sm:$0xf]
    %v541 = vld [vmem:[%s1 + $0xd48] sm:$0xff]
    %v542 = vld [vmem:[%s1 + $0xd50] sm:$0xff]
    %v543 = vld [vmem:[%s1 + $0xd58] sm:$0xf]
    %v544 = vld [vmem:[%s1 + $0xd5c] sm:$0xff]
    %v545 = vld [vmem:[%s1 + $0xd64] sm:$0xff]
    %v546 = vld [vmem:[%s1 + $0xd6c] sm:$0xf]
    %v547 = vld [vmem:[%s1 + $0xd70] sm:$0xff]
    %v548 = vld [vmem:[%s1 + $0xd78] sm:$0xff]
    %v549 = vld [vmem:[%s1 + $0xd80] sm:$0xf]
    %v550 = vld [vmem:[%s1 + $0xd84] sm:$0xff]
    %v551 = vld [vmem:[%s1 + $0xd8c] sm:$0xff]
    %v552 = vld [vmem:[%s1 + $0xd94] sm:$0xf]
    %v553 = vld [vmem:[%s1 + $0xd98] sm:$0xff]
    %v554 = vld [vmem:[%s1 + $0xda0] sm:$0xff]
    %v555 = vld [vmem:[%s1 + $0xda8] sm:$0xf]
    %v556 = vld [vmem:[%s1 + $0xdac] sm:$0xff]
    %v557 = vld [vmem:[%s1 + $0xdb4] sm:$0xff]
    %v558 = vld [vmem:[%s1 + $0xdbc] sm:$0xf]
    %v559 = vld [vmem:[%s1 + $0xdc0] sm:$0xff]
    %v560 = vld [vmem:[%s1 + $0xdc8] sm:$0xff]
    %v561 = vld [vmem:[%s1 + $0xdd0] sm:$0xf]
    %v562 = vld [vmem:[%s1 + $0xdd4] sm:$0xff]
    %v563 = vld [vmem:[%s1 + $0xddc] sm:$0xff]
    %v564 = vld [vmem:[%s1 + $0xde4] sm:$0xf]
    %v565 = vld [vmem:[%s1 + $0xde8] sm:$0xff]
    %v566 = vld [vmem:[%s1 + $0xdf0] sm:$0xff]
    %v567 = vld [vmem:[%s1 + $0xdf8] sm:$0xf]
    %v568 = vld [vmem:[%s1 + $0xdfc] sm:$0xff]
    %v569 = vld [vmem:[%s1 + $0xe04] sm:$0xff]
    %v570 = vld [vmem:[%s1 + $0xe0c] sm:$0xf]
    %v571 = vld [vmem:[%s1 + $0xe10] sm:$0xff]
    %v572 = vld [vmem:[%s1 + $0xe18] sm:$0xff]
    %v573 = vld [vmem:[%s1 + $0xe20] sm:$0xf]
    %v574 = vld [vmem:[%s1 + $0xe24] sm:$0xff]
    %v575 = vld [vmem:[%s1 + $0xe2c] sm:$0xff]
    %v576 = vld [vmem:[%s1 + $0xe34] sm:$0xf]
    %v577 = vld [vmem:[%s1 + $0xe38] sm:$0xff]
    %v578 = vld [vmem:[%s1 + $0xe40] sm:$0xff]
    %v579 = vld [vmem:[%s1 + $0xe48] sm:$0xf]
    %v580 = vld [vmem:[%s1 + $0xe4c] sm:$0xff]
    %v581 = vld [vmem:[%s1 + $0xe54] sm:$0xff]
    %v582 = vld [vmem:[%s1 + $0xe5c] sm:$0xf]
    %v583 = vld [vmem:[%s1 + $0xe60] sm:$0xff]
    %v584 = vld [vmem:[%s1 + $0xe68] sm:$0xff]
    %v585 = vld [vmem:[%s1 + $0xe70] sm:$0xf]
    %v586 = vld [vmem:[%s1 + $0xe74] sm:$0xff]
    %v587 = vld [vmem:[%s1 + $0xe7c] sm:$0xff]
    %v588 = vld [vmem:[%s1 + $0xe84] sm:$0xf]
    %v589 = vld [vmem:[%s1 + $0xe88] sm:$0xff]
    %v590 = vld [vmem:[%s1 + $0xe90] sm:$0xff]
    %v591 = vld [vmem:[%s1 + $0xe98] sm:$0xf]
    %v592 = vld [vmem:[%s1 + $0xe9c] sm:$0xff]
    %v593 = vld [vmem:[%s1 + $0xea4] sm:$0xff]
    %v594 = vld [vmem:[%s1 + $0xeac] sm:$0xf]
    %v595 = vld [vmem:[%s1 + $0xeb0] sm:$0xff]
    %v596 = vld [vmem:[%s1 + $0xeb8] sm:$0xff]
    %v597 = vld [vmem:[%s1 + $0xec0] sm:$0xf]
    %v598 = vld [vmem:[%s1 + $0xec4] sm:$0xff]
    %v599 = vld [vmem:[%s1 + $0xecc] sm:$0xff]
    %v600 = vld [vmem:[%s1 + $0xed4] sm:$0xf]
    %v601 = vld [vmem:[%s1 + $0xed8] sm:$0xff]
    %v602 = vld [vmem:[%s1 + $0xee0] sm:$0xff]
    %v603 = vld [vmem:[%s1 + $0xee8] sm:$0xf]
    %v604 = vld [vmem:[%s1 + $0xeec] sm:$0xff]
    %v605 = vld [vmem:[%s1 + $0xef4] sm:$0xff]
    %v606 = vld [vmem:[%s1 + $0xefc] sm:$0xf]
    %v607 = vld [vmem:[%s1 + $0xf00] sm:$0xff]
    %v608 = vld [vmem:[%s1 + $0xf08] sm:$0xff]
    %v609 = vld [vmem:[%s1 + $0xf10] sm:$0xf]
    %v610 = vld [vmem:[%s1 + $0xf14] sm:$0xff]
    %v611 = vld [vmem:[%s1 + $0xf1c] sm:$0xff]
    %v612 = vld [vmem:[%s1 + $0xf24] sm:$0xf]
    %v613 = vld [vmem:[%s1 + $0xf28] sm:$0xff]
    %v614 = vld [vmem:[%s1 + $0xf30] sm:$0xff]
    %v615 = vld [vmem:[%s1 + $0xf38] sm:$0xf]
    %v616 = vld [vmem:[%s1 + $0xf3c] sm:$0xff]
    %v617 = vld [vmem:[%s1 + $0xf44] sm:$0xff]
    %v618 = vld [vmem:[%s1 + $0xf4c] sm:$0xf]
    %v619 = vld [vmem:[%s1 + $0xf50] sm:$0xff]
    %v620 = vld [vmem:[%s1 + $0xf58] sm:$0xff]
    %v621 = vld [vmem:[%s1 + $0xf60] sm:$0xf]
    %v622 = vld [vmem:[%s1 + $0xf64] sm:$0xff]
    %v623 = vld [vmem:[%s1 + $0xf6c] sm:$0xff]
    %v624 = vld [vmem:[%s1 + $0xf74] sm:$0xf]
    %v625 = vld [vmem:[%s1 + $0xf78] sm:$0xff]
    %v626 = vld [vmem:[%s1 + $0xf80] sm:$0xff]
    %v627 = vld [vmem:[%s1 + $0xf88] sm:$0xf]
    %v628 = vld [vmem:[%s1 + $0xf8c] sm:$0xff]
    %v629 = vld [vmem:[%s1 + $0xf94] sm:$0xff]
    %v630 = vld [vmem:[%s1 + $0xf9c] sm:$0xf]
    %v631 = vld [vmem:[%s1 + $0xfa0] sm:$0xff]
    %v632 = vld [vmem:[%s1 + $0xfa8] sm:$0xff]
    %v633 = vld [vmem:[%s1 + $0xfb0] sm:$0xf]
    %v634 = vld [vmem:[%s1 + $0xfb4] sm:$0xff]
    %v635 = vld [vmem:[%s1 + $0xfbc] sm:$0xff]
    %v636 = vld [vmem:[%s1 + $0xfc4] sm:$0xf]
    %v637 = vld [vmem:[%s1 + $0xfc8] sm:$0xff]
    %v638 = vld [vmem:[%s1 + $0xfd0] sm:$0xff]
    %v639 = vld [vmem:[%s1 + $0xfd8] sm:$0xf]
    %v640 = vld [vmem:[%s1 + $0xfdc] sm:$0xff]
    %v641 = vld [vmem:[%s1 + $0xfe4] sm:$0xff]
    %v642 = vld [vmem:[%s1 + $0xfec] sm:$0xf]
    %v643 = vld [vmem:[%s1 + $0xff0] sm:$0xff]
    %v644 = vld [vmem:[%s1 + $0xff8] sm:$0xff]
    %v645 = vld [vmem:[%s1 + $0x1000] sm:$0xf]
    %v646 = vld [vmem:[%s1 + $0x1004] sm:$0xff]
    %v647 = vld [vmem:[%s1 + $0x100c] sm:$0xff]
    %v648 = vld [vmem:[%s1 + $0x1014] sm:$0xf]
    %v649 = vld [vmem:[%s1 + $0x1018] sm:$0xff]
    %v650 = vld [vmem:[%s1 + $0x1020] sm:$0xff]
    %v651 = vld [vmem:[%s1 + $0x1028] sm:$0xf]
    %v652 = vld [vmem:[%s1 + $0x102c] sm:$0xff]
    %v653 = vld [vmem:[%s1 + $0x1034] sm:$0xff]
    %v654 = vld [vmem:[%s1 + $0x103c] sm:$0xf]
    %v655 = vld [vmem:[%s1 + $0x1040] sm:$0xff]
    %v656 = vld [vmem:[%s1 + $0x1048] sm:$0xff]
    %v657 = vld [vmem:[%s1 + $0x1050] sm:$0xf]
    %v658 = vld [vmem:[%s1 + $0x1054] sm:$0xff]
    %v659 = vld [vmem:[%s1 + $0x105c] sm:$0xff]
    %v660 = vld [vmem:[%s1 + $0x1064] sm:$0xf]
    %v661 = vld [vmem:[%s1 + $0x1068] sm:$0xff]
    %v662 = vld [vmem:[%s1 + $0x1070] sm:$0xff]
    %v663 = vld [vmem:[%s1 + $0x1078] sm:$0xf]
    %v664 = vld [vmem:[%s1 + $0x107c] sm:$0xff]
    %v665 = vld [vmem:[%s1 + $0x1084] sm:$0xff]
    %v666 = vld [vmem:[%s1 + $0x108c] sm:$0xf]
    %v667 = vld [vmem:[%s1 + $0x1090] sm:$0xff]
    %v668 = vld [vmem:[%s1 + $0x1098] sm:$0xff]
    %v669 = vld [vmem:[%s1 + $0x10a0] sm:$0xf]
    %v670 = vld [vmem:[%s1 + $0x10a4] sm:$0xff]
    %v671 = vld [vmem:[%s1 + $0x10ac] sm:$0xff]
    %v672 = vld [vmem:[%s1 + $0x10b4] sm:$0xf]
    %v673 = vld [vmem:[%s1 + $0x10b8] sm:$0xff]
    %v674 = vld [vmem:[%s1 + $0x10c0] sm:$0xff]
    %v675 = vld [vmem:[%s1 + $0x10c8] sm:$0xf]
    %v676 = vld [vmem:[%s1 + $0x10cc] sm:$0xff]
    %v677 = vld [vmem:[%s1 + $0x10d4] sm:$0xff]
    %v678 = vld [vmem:[%s1 + $0x10dc] sm:$0xf]
    %v679 = vld [vmem:[%s1 + $0x10e0] sm:$0xff]
    %v680 = vld [vmem:[%s1 + $0x10e8] sm:$0xff]
    %v681 = vld [vmem:[%s1 + $0x10f0] sm:$0xf]
    %v682 = vld [vmem:[%s1 + $0x10f4] sm:$0xff]
    %v683 = vld [vmem:[%s1 + $0x10fc] sm:$0xff]
    %v684 = vld [vmem:[%s1 + $0x1104] sm:$0xf]
    %v685 = vld [vmem:[%s1 + $0x1108] sm:$0xff]
    %v686 = vld [vmem:[%s1 + $0x1110] sm:$0xff]
    %v687 = vld [vmem:[%s1 + $0x1118] sm:$0xf]
    %v688 = vld [vmem:[%s1 + $0x111c] sm:$0xff]
    %v689 = vld [vmem:[%s1 + $0x1124] sm:$0xff]
    %v690 = vld [vmem:[%s1 + $0x112c] sm:$0xf]
    %v691 = vld [vmem:[%s1 + $0x1130] sm:$0xff]
    %v692 = vld [vmem:[%s1 + $0x1138] sm:$0xff]
    %v693 = vld [vmem:[%s1 + $0x1140] sm:$0xf]
    %v694 = vld [vmem:[%s1 + $0x1144] sm:$0xff]
    %v695 = vld [vmem:[%s1 + $0x114c] sm:$0xff]
    %v696 = vld [vmem:[%s1 + $0x1154] sm:$0xf]
    %v697 = vld [vmem:[%s1 + $0x1158] sm:$0xff]
    %v698 = vld [vmem:[%s1 + $0x1160] sm:$0xff]
    %v699 = vld [vmem:[%s1 + $0x1168] sm:$0xf]
    %v700 = vld [vmem:[%s1 + $0x116c] sm:$0xff]
    %v701 = vld [vmem:[%s1 + $0x1174] sm:$0xff]
    %v702 = vld [vmem:[%s1 + $0x117c] sm:$0xf]
    %v703 = vld [vmem:[%s1 + $0x1180] sm:$0xff]
    %v704 = vld [vmem:[%s1 + $0x1188] sm:$0xff]
    %v705 = vld [vmem:[%s1 + $0x1190] sm:$0xf]
    %v706 = vld [vmem:[%s1 + $0x1194] sm:$0xff]
    %v707 = vld [vmem:[%s1 + $0x119c] sm:$0xff]
    %v708 = vld [vmem:[%s1 + $0x11a4] sm:$0xf]
    %v709 = vld [vmem:[%s1 + $0x11a8] sm:$0xff]
    %v710 = vld [vmem:[%s1 + $0x11b0] sm:$0xff]
    %v711 = vld [vmem:[%s1 + $0x11b8] sm:$0xf]
    %v712 = vld [vmem:[%s1 + $0x11bc] sm:$0xff]
    %v713 = vld [vmem:[%s1 + $0x11c4] sm:$0xff]
    %v714 = vld [vmem:[%s1 + $0x11cc] sm:$0xf]
    %v715 = vld [vmem:[%s1 + $0x11d0] sm:$0xff]
    %v716 = vld [vmem:[%s1 + $0x11d8] sm:$0xff]
    %v717 = vld [vmem:[%s1 + $0x11e0] sm:$0xf]
    %v718 = vld [vmem:[%s1 + $0x11e4] sm:$0xff]
    %v719 = vld [vmem:[%s1 + $0x11ec] sm:$0xff]
    %v720 = vld [vmem:[%s1 + $0x11f4] sm:$0xf]
    %v721 = vld [vmem:[%s1 + $0x11f8] sm:$0xff]
    %v722 = vld [vmem:[%s1 + $0x1200] sm:$0xff]
    %v723 = vld [vmem:[%s1 + $0x1208] sm:$0xf]
    %v724 = vld [vmem:[%s1 + $0x120c] sm:$0xff]
    %v725 = vld [vmem:[%s1 + $0x1214] sm:$0xff]
    %v726 = vld [vmem:[%s1 + $0x121c] sm:$0xf]
    %v727 = vld [vmem:[%s1 + $0x1220] sm:$0xff]
    %v728 = vld [vmem:[%s1 + $0x1228] sm:$0xff]
    %v729 = vld [vmem:[%s1 + $0x1230] sm:$0xf]
    %v730 = vld [vmem:[%s1 + $0x1234] sm:$0xff]
    %v731 = vld [vmem:[%s1 + $0x123c] sm:$0xff]
    %v732 = vld [vmem:[%s1 + $0x1244] sm:$0xf]
    %v733 = vld [vmem:[%s1 + $0x1248] sm:$0xff]
    %v734 = vld [vmem:[%s1 + $0x1250] sm:$0xff]
    %v735 = vld [vmem:[%s1 + $0x1258] sm:$0xf]
    %v736 = vld [vmem:[%s1 + $0x125c] sm:$0xff]
    %v737 = vld [vmem:[%s1 + $0x1264] sm:$0xff]
    %v738 = vld [vmem:[%s1 + $0x126c] sm:$0xf]
    %v739 = vld [vmem:[%s1 + $0x1270] sm:$0xff]
    %v740 = vld [vmem:[%s1 + $0x1278] sm:$0xff]
    %v741 = vld [vmem:[%s1 + $0x1280] sm:$0xf]
    %v742 = vld [vmem:[%s1 + $0x1284] sm:$0xff]
    %v743 = vld [vmem:[%s1 + $0x128c] sm:$0xff]
    %v744 = vld [vmem:[%s1 + $0x1294] sm:$0xf]
    %v745 = vld [vmem:[%s1 + $0x1298] sm:$0xff]
    %v746 = vld [vmem:[%s1 + $0x12a0] sm:$0xff]
    %v747 = vld [vmem:[%s1 + $0x12a8] sm:$0xf]
    %v748 = vld [vmem:[%s1 + $0x12ac] sm:$0xff]
    %v749 = vld [vmem:[%s1 + $0x12b4] sm:$0xff]
    %v750 = vld [vmem:[%s1 + $0x12bc] sm:$0xf]
    %v751 = vld [vmem:[%s1 + $0x12c0] sm:$0xff]
    %v752 = vld [vmem:[%s1 + $0x12c8] sm:$0xff]
    %v753 = vld [vmem:[%s1 + $0x12d0] sm:$0xf]
    %v754 = vld [vmem:[%s1 + $0x12d4] sm:$0xff]
    %v755 = vld [vmem:[%s1 + $0x12dc] sm:$0xff]
    %v756 = vld [vmem:[%s1 + $0x12e4] sm:$0xf]
    %v757 = vld [vmem:[%s1 + $0x12e8] sm:$0xff]
    %v758 = vld [vmem:[%s1 + $0x12f0] sm:$0xff]
    %v759 = vld [vmem:[%s1 + $0x12f8] sm:$0xf]
    %v760 = vld [vmem:[%s1 + $0x12fc] sm:$0xff]
    %v761 = vld [vmem:[%s1 + $0x1304] sm:$0xff]
    %v762 = vld [vmem:[%s1 + $0x130c] sm:$0xf]
    %v763 = vld [vmem:[%s1 + $0x1310] sm:$0xff]
    %v764 = vld [vmem:[%s1 + $0x1318] sm:$0xff]
    %v765 = vld [vmem:[%s1 + $0x1320] sm:$0xf]
    %v766 = vld [vmem:[%s1 + $0x1324] sm:$0xff]
    %v767 = vld [vmem:[%s1 + $0x132c] sm:$0xff]
    %v768 = vld [vmem:[%s1 + $0x1334] sm:$0xf]
    %v769 = vld [vmem:[%s1 + $0x1338] sm:$0xff]
    %v770 = vld [vmem:[%s1 + $0x1340] sm:$0xff]
    %v771 = vld [vmem:[%s1 + $0x1348] sm:$0xf]
    %v772 = vld [vmem:[%s1 + $0x134c] sm:$0xff]
    %v773 = vld [vmem:[%s1 + $0x1354] sm:$0xff]
    %v774 = vld [vmem:[%s1 + $0x135c] sm:$0xf]
    %v775 = vld [vmem:[%s1 + $0x1360] sm:$0xff]
    %v776 = vld [vmem:[%s1 + $0x1368] sm:$0xff]
    %v777 = vld [vmem:[%s1 + $0x1370] sm:$0xf]
    %v778 = vld [vmem:[%s1 + $0x1374] sm:$0xff]
    %v779 = vld [vmem:[%s1 + $0x137c] sm:$0xff]
    %v780 = vld [vmem:[%s1 + $0x1384] sm:$0xf]
    %v781 = vld [vmem:[%s1 + $0x1388] sm:$0xff]
    %v782 = vld [vmem:[%s1 + $0x1390] sm:$0xff]
    %v783 = vld [vmem:[%s1 + $0x1398] sm:$0xf]
    %v784 = vld [vmem:[%s1 + $0x139c] sm:$0xff]
    %v785 = vld [vmem:[%s1 + $0x13a4] sm:$0xff]
    %v786 = vld [vmem:[%s1 + $0x13ac] sm:$0xf]
    %v787 = vld [vmem:[%s1 + $0x13b0] sm:$0xff]
    %v788 = vld [vmem:[%s1 + $0x13b8] sm:$0xff]
    %v789 = vld [vmem:[%s1 + $0x13c0] sm:$0xf]
    %v790 = vld [vmem:[%s1 + $0x13c4] sm:$0xff]
    %v791 = vld [vmem:[%s1 + $0x13cc] sm:$0xff]
    %v792 = vld [vmem:[%s1 + $0x13d4] sm:$0xf]
    %v793 = vld [vmem:[%s1 + $0x13d8] sm:$0xff]
    %v794 = vld [vmem:[%s1 + $0x13e0] sm:$0xff]
    %v795 = vld [vmem:[%s1 + $0x13e8] sm:$0xf]
    %v796 = vld [vmem:[%s1 + $0x13ec] sm:$0xff]
    %v797 = vld [vmem:[%s1 + $0x13f4] sm:$0xff]
    %v798 = vld [vmem:[%s1 + $0x13fc] sm:$0xf]
    %v799 = vld [vmem:[%s1 + $0x1400] sm:$0xff]
    %v800 = vld [vmem:[%s1 + $0x1408] sm:$0xff]
    %v801 = vld [vmem:[%s1 + $0x1410] sm:$0xf]
    %v802 = vld [vmem:[%s1 + $0x1414] sm:$0xff]
    %v803 = vld [vmem:[%s1 + $0x141c] sm:$0xff]
    %v804 = vld [vmem:[%s1 + $0x1424] sm:$0xf]
    %v805 = vld [vmem:[%s1 + $0x1428] sm:$0xff]
    %v806 = vld [vmem:[%s1 + $0x1430] sm:$0xff]
    %v807 = vld [vmem:[%s1 + $0x1438] sm:$0xf]
    %v808 = vld [vmem:[%s1 + $0x143c] sm:$0xff]
    %v809 = vld [vmem:[%s1 + $0x1444] sm:$0xff]
    %v810 = vld [vmem:[%s1 + $0x144c] sm:$0xf]
    %v811 = vld [vmem:[%s1 + $0x1450] sm:$0xff]
    %v812 = vld [vmem:[%s1 + $0x1458] sm:$0xff]
    %v813 = vld [vmem:[%s1 + $0x1460] sm:$0xf]
    %v814 = vld [vmem:[%s1 + $0x1464] sm:$0xff]
    %v815 = vld [vmem:[%s1 + $0x146c] sm:$0xff]
    %v816 = vld [vmem:[%s1 + $0x1474] sm:$0xf]
    %v817 = vld [vmem:[%s1 + $0x1478] sm:$0xff]
    %v818 = vld [vmem:[%s1 + $0x1480] sm:$0xff]
    %v819 = vld [vmem:[%s1 + $0x1488] sm:$0xf]
    %v820 = vld [vmem:[%s1 + $0x148c] sm:$0xff]
    %v821 = vld [vmem:[%s1 + $0x1494] sm:$0xff]
    %v822 = vld [vmem:[%s1 + $0x149c] sm:$0xf]
    %v823 = vld [vmem:[%s1 + $0x14a0] sm:$0xff]
    %v824 = vld [vmem:[%s1 + $0x14a8] sm:$0xff]
    %v825 = vld [vmem:[%s1 + $0x14b0] sm:$0xf]
    %v826 = vld [vmem:[%s1 + $0x14b4] sm:$0xff]
    %v827 = vld [vmem:[%s1 + $0x14bc] sm:$0xff]
    %v828 = vld [vmem:[%s1 + $0x14c4] sm:$0xf]
    %v829 = vld [vmem:[%s1 + $0x14c8] sm:$0xff]
    %v830 = vld [vmem:[%s1 + $0x14d0] sm:$0xff]
    %v831 = vld [vmem:[%s1 + $0x14d8] sm:$0xf]
    %v832 = vld [vmem:[%s1 + $0x14dc] sm:$0xff]
    %v833 = vld [vmem:[%s1 + $0x14e4] sm:$0xff]
    %v834 = vld [vmem:[%s1 + $0x14ec] sm:$0xf]
    %v835 = vld [vmem:[%s1 + $0x14f0] sm:$0xff]
    %v836 = vld [vmem:[%s1 + $0x14f8] sm:$0xff]
    %v837 = vld [vmem:[%s1 + $0x1500] sm:$0xf]
    %v838 = vld [vmem:[%s1 + $0x1504] sm:$0xff]
    %v839 = vld [vmem:[%s1 + $0x150c] sm:$0xff]
    %v840 = vld [vmem:[%s1 + $0x1514] sm:$0xf]
    %v841 = vld [vmem:[%s1 + $0x1518] sm:$0xff]
    %v842 = vld [vmem:[%s1 + $0x1520] sm:$0xff]
    %v843 = vld [vmem:[%s1 + $0x1528] sm:$0xf]
    %v844 = vld [vmem:[%s1 + $0x152c] sm:$0xff]
    %v845 = vld [vmem:[%s1 + $0x1534] sm:$0xff]
    %v846 = vld [vmem:[%s1 + $0x153c] sm:$0xf]
    %v847 = vld [vmem:[%s1 + $0x1540] sm:$0xff]
    %v848 = vld [vmem:[%s1 + $0x1548] sm:$0xff]
    %v849 = vld [vmem:[%s1 + $0x1550] sm:$0xf]
    %v850 = vld [vmem:[%s1 + $0x1554] sm:$0xff]
    %v851 = vld [vmem:[%s1 + $0x155c] sm:$0xff]
    %v852 = vld [vmem:[%s1 + $0x1564] sm:$0xf]
    %v853 = vld [vmem:[%s1 + $0x1568] sm:$0xff]
    %v854 = vld [vmem:[%s1 + $0x1570] sm:$0xff]
    %v855 = vld [vmem:[%s1 + $0x1578] sm:$0xf]
    %v856 = vld [vmem:[%s1 + $0x157c] sm:$0xff]
    %v857 = vld [vmem:[%s1 + $0x1584] sm:$0xff]
    %v858 = vld [vmem:[%s1 + $0x158c] sm:$0xf]
    %v859 = vld [vmem:[%s1 + $0x1590] sm:$0xff]
    %v860 = vld [vmem:[%s1 + $0x1598] sm:$0xff]
    %v861 = vld [vmem:[%s1 + $0x15a0] sm:$0xf]
    %v862 = vld [vmem:[%s1 + $0x15a4] sm:$0xff]
    %v863 = vld [vmem:[%s1 + $0x15ac] sm:$0xff]
    %v864 = vld [vmem:[%s1 + $0x15b4] sm:$0xf]
    %v865 = vld [vmem:[%s1 + $0x15b8] sm:$0xff]
    %v866 = vld [vmem:[%s1 + $0x15c0] sm:$0xff]
    %v867 = vld [vmem:[%s1 + $0x15c8] sm:$0xf]
    %v868 = vld [vmem:[%s1 + $0x15cc] sm:$0xff]
    %v869 = vld [vmem:[%s1 + $0x15d4] sm:$0xff]
    %v870 = vld [vmem:[%s1 + $0x15dc] sm:$0xf]
    %v871 = vld [vmem:[%s1 + $0x15e0] sm:$0xff]
    %v872 = vld [vmem:[%s1 + $0x15e8] sm:$0xff]
    %v873 = vld [vmem:[%s1 + $0x15f0] sm:$0xf]
    %v874 = vld [vmem:[%s1 + $0x15f4] sm:$0xff]
    %v875 = vld [vmem:[%s1 + $0x15fc] sm:$0xff]
    %v876 = vld [vmem:[%s1 + $0x1604] sm:$0xf]
    %v877 = vld [vmem:[%s1 + $0x1608] sm:$0xff]
    %v878 = vld [vmem:[%s1 + $0x1610] sm:$0xff]
    %v879 = vld [vmem:[%s1 + $0x1618] sm:$0xf]
    %v880 = vld [vmem:[%s1 + $0x161c] sm:$0xff]
    %v881 = vld [vmem:[%s1 + $0x1624] sm:$0xff]
    %v882 = vld [vmem:[%s1 + $0x162c] sm:$0xf]
    %v883 = vld [vmem:[%s1 + $0x1630] sm:$0xff]
    %v884 = vld [vmem:[%s1 + $0x1638] sm:$0xff]
    %v885 = vld [vmem:[%s1 + $0x1640] sm:$0xf]
    %v886 = vld [vmem:[%s1 + $0x1644] sm:$0xff]
    %v887 = vld [vmem:[%s1 + $0x164c] sm:$0xff]
    %v888 = vld [vmem:[%s1 + $0x1654] sm:$0xf]
    %v889 = vld [vmem:[%s1 + $0x1658] sm:$0xff]
    %v890 = vld [vmem:[%s1 + $0x1660] sm:$0xff]
    %v891 = vld [vmem:[%s1 + $0x1668] sm:$0xf]
    %v892 = vld [vmem:[%s1 + $0x166c] sm:$0xff]
    %v893 = vld [vmem:[%s1 + $0x1674] sm:$0xff]
    %v894 = vld [vmem:[%s1 + $0x167c] sm:$0xf]
    %v895 = vld [vmem:[%s2] sm:$0x1f]
    %v897 = vperm.slane %v895, 0
    %v898 = vperm.slane %v895, 1
    %v899 = vperm.slane %v895, 2
    %v900 = vperm.slane %v895, 3
    %v901 = vperm.slane %v895, 4
    %908 = vst [vmem:[#allocation1] ss:$9 sm:$0xff] %v28
    %v909 = vld [vmem:[#allocation1] sm:$0xff]
    %v910 = vld [vmem:[#allocation1 + $0x9] sm:$0xff]
    %v911 = vld [vmem:[#allocation1 + $0x12] sm:$0xff]
    %v912 = vld [vmem:[#allocation1 + $0x1b] sm:$0xff]
    %v913 = vld [vmem:[#allocation1 + $0x24] sm:$0xff]
    %v914 = vld [vmem:[#allocation1 + $0x2d] sm:$0xff]
    %v915 = vld [vmem:[#allocation1 + $0x36] sm:$0xff]
    %v916 = vld [vmem:[#allocation1 + $0x3f] sm:$0xff]
    %918 = vst [vmem:[#allocation1] ss:$9 sm:$0xff] %v29
    %v919 = vld [vmem:[#allocation1] sm:$0xff]
    %v920 = vld [vmem:[#allocation1 + $0x9] sm:$0xff]
    %v921 = vld [vmem:[#allocation1 + $0x12] sm:$0xff]
    %v922 = vld [vmem:[#allocation1 + $0x1b] sm:$0xff]
    %v923 = vld [vmem:[#allocation1 + $0x24] sm:$0xff]
    %v924 = vld [vmem:[#allocation1 + $0x2d] sm:$0xff]
    %v925 = vld [vmem:[#allocation1 + $0x36] sm:$0xff]
    %v926 = vld [vmem:[#allocation1 + $0x3f] sm:$0xff]
    %928 = vst [vmem:[#allocation1] ss:$9 sm:$0xff] %v30
    %v929 = vld [vmem:[#allocation1] sm:$0xff]
    %v930 = vld [vmem:[#allocation1 + $0x9] sm:$0xff]
    %v1813 = vunpack.c.l.b16 %v31
    %v1814 = vunpack.c.h.b16 %v31
    %v1815 = vunpack.c.l.b16 %v32
    %v1816 = vunpack.c.h.b16 %v32
    %v1817 = vunpack.c.l.b16 %v33
    %v1818 = vunpack.c.l.b16 %v34
    %v1819 = vunpack.c.h.b16 %v34
    %v1820 = vunpack.c.l.b16 %v35
    %v1821 = vunpack.c.h.b16 %v35
    %v1822 = vunpack.c.l.b16 %v36
    %v1823 = vunpack.c.l.b16 %v37
    %v1824 = vunpack.c.h.b16 %v37
    %v1825 = vunpack.c.l.b16 %v38
    %v1826 = vunpack.c.h.b16 %v38
    %v1827 = vunpack.c.l.b16 %v39
    %v1828 = vunpack.c.l.b16 %v40
    %v1829 = vunpack.c.h.b16 %v40
    %v1830 = vunpack.c.l.b16 %v41
    %v1831 = vunpack.c.h.b16 %v41
    %v1832 = vunpack.c.l.b16 %v42
    %v1833 = vunpack.c.l.b16 %v43
    %v1834 = vunpack.c.h.b16 %v43
    %v1835 = vunpack.c.l.b16 %v44
    %v1836 = vunpack.c.h.b16 %v44
    %v1837 = vunpack.c.l.b16 %v45
    %v1838 = vunpack.c.l.b16 %v46
    %v1839 = vunpack.c.h.b16 %v46
    %v1840 = vunpack.c.l.b16 %v47
    %v1841 = vunpack.c.h.b16 %v47
    %v1842 = vunpack.c.l.b16 %v48
    %v1843 = vunpack.c.l.b16 %v49
    %v1844 = vunpack.c.h.b16 %v49
    %v1845 = vunpack.c.l.b16 %v50
    %v1846 = vunpack.c.h.b16 %v50
    %v1847 = vunpack.c.l.b16 %v51
    %v1848 = vunpack.c.l.b16 %v52
    %v1849 = vunpack.c.h.b16 %v52
    %v1850 = vunpack.c.l.b16 %v53
    %v1851 = vunpack.c.h.b16 %v53
    %v1852 = vunpack.c.l.b16 %v54
    %v1853 = vunpack.c.l.b16 %v55
    %v1854 = vunpack.c.h.b16 %v55
    %v1855 = vunpack.c.l.b16 %v56
    %v1856 = vunpack.c.h.b16 %v56
    %v1857 = vunpack.c.l.b16 %v57
    %v1858 = vunpack.c.l.b16 %v58
    %v1859 = vunpack.c.h.b16 %v58
    %v1860 = vunpack.c.l.b16 %v59
    %v1861 = vunpack.c.h.b16 %v59
    %v1862 = vunpack.c.l.b16 %v60
    %v1863 = vunpack.c.l.b16 %v61
    %v1864 = vunpack.c.h.b16 %v61
    %v1865 = vunpack.c.l.b16 %v62
    %v1866 = vunpack.c.h.b16 %v62
    %v1867 = vunpack.c.l.b16 %v63
    %v1868 = vunpack.c.l.b16 %v64
    %v1869 = vunpack.c.h.b16 %v64
    %v1870 = vunpack.c.l.b16 %v65
    %v1871 = vunpack.c.h.b16 %v65
    %v1872 = vunpack.c.l.b16 %v66
    %v1873 = vunpack.c.l.b16 %v67
    %v1874 = vunpack.c.h.b16 %v67
    %v1875 = vunpack.c.l.b16 %v68
    %v1876 = vunpack.c.h.b16 %v68
    %v1877 = vunpack.c.l.b16 %v69
    %v1878 = vunpack.c.l.b16 %v70
    %v1879 = vunpack.c.h.b16 %v70
    %v1880 = vunpack.c.l.b16 %v71
    %v1881 = vunpack.c.h.b16 %v71
    %v1882 = vunpack.c.l.b16 %v72
    %v1883 = vunpack.c.l.b16 %v73
    %v1884 = vunpack.c.h.b16 %v73
    %v1885 = vunpack.c.l.b16 %v74
    %v1886 = vunpack.c.h.b16 %v74
    %v1887 = vunpack.c.l.b16 %v75
    %v1888 = vunpack.c.l.b16 %v76
    %v1889 = vunpack.c.h.b16 %v76
    %v1890 = vunpack.c.l.b16 %v77
    %v1891 = vunpack.c.h.b16 %v77
    %v1892 = vunpack.c.l.b16 %v78
    %v1893 = vunpack.c.l.b16 %v79
    %v1894 = vunpack.c.h.b16 %v79
    %v1895 = vunpack.c.l.b16 %v80
    %v1896 = vunpack.c.h.b16 %v80
    %v1897 = vunpack.c.l.b16 %v81
    %v1898 = vunpack.c.l.b16 %v82
    %v1899 = vunpack.c.h.b16 %v82
    %v1900 = vunpack.c.l.b16 %v83
    %v1901 = vunpack.c.h.b16 %v83
    %v1902 = vunpack.c.l.b16 %v84
    %v1903 = vunpack.c.l.b16 %v85
    %v1904 = vunpack.c.h.b16 %v85
    %v1905 = vunpack.c.l.b16 %v86
    %v1906 = vunpack.c.h.b16 %v86
    %v1907 = vunpack.c.l.b16 %v87
    %v1908 = vunpack.c.l.b16 %v88
    %v1909 = vunpack.c.h.b16 %v88
    %v1910 = vunpack.c.l.b16 %v89
    %v1911 = vunpack.c.h.b16 %v89
    %v1912 = vunpack.c.l.b16 %v90
    %v1913 = vunpack.c.l.b16 %v91
    %v1914 = vunpack.c.h.b16 %v91
    %v1915 = vunpack.c.l.b16 %v92
    %v1916 = vunpack.c.h.b16 %v92
    %v1917 = vunpack.c.l.b16 %v93
    %v1918 = vunpack.c.l.b16 %v94
    %v1919 = vunpack.c.h.b16 %v94
    %v1920 = vunpack.c.l.b16 %v95
    %v1921 = vunpack.c.h.b16 %v95
    %v1922 = vunpack.c.l.b16 %v96
    %v1923 = vunpack.c.l.b16 %v97
    %v1924 = vunpack.c.h.b16 %v97
    %v1925 = vunpack.c.l.b16 %v98
    %v1926 = vunpack.c.h.b16 %v98
    %v1927 = vunpack.c.l.b16 %v99
    %v1928 = vunpack.c.l.b16 %v100
    %v1929 = vunpack.c.h.b16 %v100
    %v1930 = vunpack.c.l.b16 %v101
    %v1931 = vunpack.c.h.b16 %v101
    %v1932 = vunpack.c.l.b16 %v102
    %v1933 = vunpack.c.l.b16 %v103
    %v1934 = vunpack.c.h.b16 %v103
    %v1935 = vunpack.c.l.b16 %v104
    %v1936 = vunpack.c.h.b16 %v104
    %v1937 = vunpack.c.l.b16 %v105
    %v1938 = vunpack.c.l.b16 %v106
    %v1939 = vunpack.c.h.b16 %v106
    %v1940 = vunpack.c.l.b16 %v107
    %v1941 = vunpack.c.h.b16 %v107
    %v1942 = vunpack.c.l.b16 %v108
    %v1943 = vunpack.c.l.b16 %v109
    %v1944 = vunpack.c.h.b16 %v109
    %v1945 = vunpack.c.l.b16 %v110
    %v1946 = vunpack.c.h.b16 %v110
    %v1947 = vunpack.c.l.b16 %v111
    %v1948 = vunpack.c.l.b16 %v112
    %v1949 = vunpack.c.h.b16 %v112
    %v1950 = vunpack.c.l.b16 %v113
    %v1951 = vunpack.c.h.b16 %v113
    %v1952 = vunpack.c.l.b16 %v114
    %v1953 = vunpack.c.l.b16 %v115
    %v1954 = vunpack.c.h.b16 %v115
    %v1955 = vunpack.c.l.b16 %v116
    %v1956 = vunpack.c.h.b16 %v116
    %v1957 = vunpack.c.l.b16 %v117
    %v1958 = vunpack.c.l.b16 %v118
    %v1959 = vunpack.c.h.b16 %v118
    %v1960 = vunpack.c.l.b16 %v119
    %v1961 = vunpack.c.h.b16 %v119
    %v1962 = vunpack.c.l.b16 %v120
    %v1963 = vunpack.c.l.b16 %v121
    %v1964 = vunpack.c.h.b16 %v121
    %v1965 = vunpack.c.l.b16 %v122
    %v1966 = vunpack.c.h.b16 %v122
    %v1967 = vunpack.c.l.b16 %v123
    %v1968 = vunpack.c.l.b16 %v124
    %v1969 = vunpack.c.h.b16 %v124
    %v1970 = vunpack.c.l.b16 %v125
    %v1971 = vunpack.c.h.b16 %v125
    %v1972 = vunpack.c.l.b16 %v126
    %v1973 = vunpack.c.l.b16 %v127
    %v1974 = vunpack.c.h.b16 %v127
    %v1975 = vunpack.c.l.b16 %v128
    %v1976 = vunpack.c.h.b16 %v128
    %v1977 = vunpack.c.l.b16 %v129
    %v1978 = vunpack.c.l.b16 %v130
    %v1979 = vunpack.c.h.b16 %v130
    %v1980 = vunpack.c.l.b16 %v131
    %v1981 = vunpack.c.h.b16 %v131
    %v1982 = vunpack.c.l.b16 %v132
    %v1983 = vunpack.c.l.b16 %v133
    %v1984 = vunpack.c.h.b16 %v133
    %v1985 = vunpack.c.l.b16 %v134
    %v1986 = vunpack.c.h.b16 %v134
    %v1987 = vunpack.c.l.b16 %v135
    %v1988 = vunpack.c.l.b16 %v136
    %v1989 = vunpack.c.h.b16 %v136
    %v1990 = vunpack.c.l.b16 %v137
    %v1991 = vunpack.c.h.b16 %v137
    %v1992 = vunpack.c.l.b16 %v138
    %v1993 = vunpack.c.l.b16 %v139
    %v1994 = vunpack.c.h.b16 %v139
    %v1995 = vunpack.c.l.b16 %v140
    %v1996 = vunpack.c.h.b16 %v140
    %v1997 = vunpack.c.l.b16 %v141
    %v1998 = vunpack.c.l.b16 %v142
    %v1999 = vunpack.c.h.b16 %v142
    %v2000 = vunpack.c.l.b16 %v143
    %v2001 = vunpack.c.h.b16 %v143
    %v2002 = vunpack.c.l.b16 %v144
    %v2003 = vunpack.c.l.b16 %v145
    %v2004 = vunpack.c.h.b16 %v145
    %v2005 = vunpack.c.l.b16 %v146
    %v2006 = vunpack.c.h.b16 %v146
    %v2007 = vunpack.c.l.b16 %v147
    %v2008 = vunpack.c.l.b16 %v148
    %v2009 = vunpack.c.h.b16 %v148
    %v2010 = vunpack.c.l.b16 %v149
    %v2011 = vunpack.c.h.b16 %v149
    %v2012 = vunpack.c.l.b16 %v150
    %v2013 = vunpack.c.l.b16 %v151
    %v2014 = vunpack.c.h.b16 %v151
    %v2015 = vunpack.c.l.b16 %v152
    %v2016 = vunpack.c.h.b16 %v152
    %v2017 = vunpack.c.l.b16 %v153
    %v2018 = vunpack.c.l.b16 %v154
    %v2019 = vunpack.c.h.b16 %v154
    %v2020 = vunpack.c.l.b16 %v155
    %v2021 = vunpack.c.h.b16 %v155
    %v2022 = vunpack.c.l.b16 %v156
    %v2023 = vunpack.c.l.b16 %v157
    %v2024 = vunpack.c.h.b16 %v157
    %v2025 = vunpack.c.l.b16 %v158
    %v2026 = vunpack.c.h.b16 %v158
    %v2027 = vunpack.c.l.b16 %v159
    %v2028 = vunpack.c.l.b16 %v160
    %v2029 = vunpack.c.h.b16 %v160
    %v2030 = vunpack.c.l.b16 %v161
    %v2031 = vunpack.c.h.b16 %v161
    %v2032 = vunpack.c.l.b16 %v162
    %v2033 = vunpack.c.l.b16 %v163
    %v2034 = vunpack.c.h.b16 %v163
    %v2035 = vunpack.c.l.b16 %v164
    %v2036 = vunpack.c.h.b16 %v164
    %v2037 = vunpack.c.l.b16 %v165
    %v2038 = vunpack.c.l.b16 %v166
    %v2039 = vunpack.c.h.b16 %v166
    %v2040 = vunpack.c.l.b16 %v167
    %v2041 = vunpack.c.h.b16 %v167
    %v2042 = vunpack.c.l.b16 %v168
    %v2043 = vunpack.c.l.b16 %v169
    %v2044 = vunpack.c.h.b16 %v169
    %v2045 = vunpack.c.l.b16 %v170
    %v2046 = vunpack.c.h.b16 %v170
    %v2047 = vunpack.c.l.b16 %v171
    %v2048 = vunpack.c.l.b16 %v172
    %v2049 = vunpack.c.h.b16 %v172
    %v2050 = vunpack.c.l.b16 %v173
    %v2051 = vunpack.c.h.b16 %v173
    %v2052 = vunpack.c.l.b16 %v174
    %v2053 = vunpack.c.l.b16 %v175
    %v2054 = vunpack.c.h.b16 %v175
    %v2055 = vunpack.c.l.b16 %v176
    %v2056 = vunpack.c.h.b16 %v176
    %v2057 = vunpack.c.l.b16 %v177
    %v2058 = vunpack.c.l.b16 %v178
    %v2059 = vunpack.c.h.b16 %v178
    %v2060 = vunpack.c.l.b16 %v179
    %v2061 = vunpack.c.h.b16 %v179
    %v2062 = vunpack.c.l.b16 %v180
    %v2063 = vunpack.c.l.b16 %v181
    %v2064 = vunpack.c.h.b16 %v181
    %v2065 = vunpack.c.l.b16 %v182
    %v2066 = vunpack.c.h.b16 %v182
    %v2067 = vunpack.c.l.b16 %v183
    %v2068 = vunpack.c.l.b16 %v184
    %v2069 = vunpack.c.h.b16 %v184
    %v2070 = vunpack.c.l.b16 %v185
    %v2071 = vunpack.c.h.b16 %v185
    %v2072 = vunpack.c.l.b16 %v186
    %v2073 = vunpack.c.l.b16 %v187
    %v2074 = vunpack.c.h.b16 %v187
    %v2075 = vunpack.c.l.b16 %v188
    %v2076 = vunpack.c.h.b16 %v188
    %v2077 = vunpack.c.l.b16 %v189
    %v2078 = vunpack.c.l.b16 %v190
    %v2079 = vunpack.c.h.b16 %v190
    %v2080 = vunpack.c.l.b16 %v191
    %v2081 = vunpack.c.h.b16 %v191
    %v2082 = vunpack.c.l.b16 %v192
    %v2083 = vunpack.c.l.b16 %v193
    %v2084 = vunpack.c.h.b16 %v193
    %v2085 = vunpack.c.l.b16 %v194
    %v2086 = vunpack.c.h.b16 %v194
    %v2087 = vunpack.c.l.b16 %v195
    %v2088 = vunpack.c.l.b16 %v196
    %v2089 = vunpack.c.h.b16 %v196
    %v2090 = vunpack.c.l.b16 %v197
    %v2091 = vunpack.c.h.b16 %v197
    %v2092 = vunpack.c.l.b16 %v198
    %v2093 = vunpack.c.l.b16 %v199
    %v2094 = vunpack.c.h.b16 %v199
    %v2095 = vunpack.c.l.b16 %v200
    %v2096 = vunpack.c.h.b16 %v200
    %v2097 = vunpack.c.l.b16 %v201
    %v2098 = vunpack.c.l.b16 %v202
    %v2099 = vunpack.c.h.b16 %v202
    %v2100 = vunpack.c.l.b16 %v203
    %v2101 = vunpack.c.h.b16 %v203
    %v2102 = vunpack.c.l.b16 %v204
    %v2103 = vunpack.c.l.b16 %v205
    %v2104 = vunpack.c.h.b16 %v205
    %v2105 = vunpack.c.l.b16 %v206
    %v2106 = vunpack.c.h.b16 %v206
    %v2107 = vunpack.c.l.b16 %v207
    %v2108 = vunpack.c.l.b16 %v208
    %v2109 = vunpack.c.h.b16 %v208
    %v2110 = vunpack.c.l.b16 %v209
    %v2111 = vunpack.c.h.b16 %v209
    %v2112 = vunpack.c.l.b16 %v210
    %v2113 = vunpack.c.l.b16 %v211
    %v2114 = vunpack.c.h.b16 %v211
    %v2115 = vunpack.c.l.b16 %v212
    %v2116 = vunpack.c.h.b16 %v212
    %v2117 = vunpack.c.l.b16 %v213
    %v2118 = vunpack.c.l.b16 %v214
    %v2119 = vunpack.c.h.b16 %v214
    %v2120 = vunpack.c.l.b16 %v215
    %v2121 = vunpack.c.h.b16 %v215
    %v2122 = vunpack.c.l.b16 %v216
    %v2123 = vunpack.c.l.b16 %v217
    %v2124 = vunpack.c.h.b16 %v217
    %v2125 = vunpack.c.l.b16 %v218
    %v2126 = vunpack.c.h.b16 %v218
    %v2127 = vunpack.c.l.b16 %v219
    %v2128 = vunpack.c.l.b16 %v220
    %v2129 = vunpack.c.h.b16 %v220
    %v2130 = vunpack.c.l.b16 %v221
    %v2131 = vunpack.c.h.b16 %v221
    %v2132 = vunpack.c.l.b16 %v222
    %v2133 = vunpack.c.l.b16 %v223
    %v2134 = vunpack.c.h.b16 %v223
    %v2135 = vunpack.c.l.b16 %v224
    %v2136 = vunpack.c.h.b16 %v224
    %v2137 = vunpack.c.l.b16 %v225
    %v2138 = vunpack.c.l.b16 %v226
    %v2139 = vunpack.c.h.b16 %v226
    %v2140 = vunpack.c.l.b16 %v227
    %v2141 = vunpack.c.h.b16 %v227
    %v2142 = vunpack.c.l.b16 %v228
    %v2143 = vunpack.c.l.b16 %v229
    %v2144 = vunpack.c.h.b16 %v229
    %v2145 = vunpack.c.l.b16 %v230
    %v2146 = vunpack.c.h.b16 %v230
    %v2147 = vunpack.c.l.b16 %v231
    %v2148 = vunpack.c.l.b16 %v232
    %v2149 = vunpack.c.h.b16 %v232
    %v2150 = vunpack.c.l.b16 %v233
    %v2151 = vunpack.c.h.b16 %v233
    %v2152 = vunpack.c.l.b16 %v234
    %v2153 = vunpack.c.l.b16 %v235
    %v2154 = vunpack.c.h.b16 %v235
    %v2155 = vunpack.c.l.b16 %v236
    %v2156 = vunpack.c.h.b16 %v236
    %v2157 = vunpack.c.l.b16 %v237
    %v2158 = vunpack.c.l.b16 %v238
    %v2159 = vunpack.c.h.b16 %v238
    %v2160 = vunpack.c.l.b16 %v239
    %v2161 = vunpack.c.h.b16 %v239
    %v2162 = vunpack.c.l.b16 %v240
    %v2163 = vunpack.c.l.b16 %v241
    %v2164 = vunpack.c.h.b16 %v241
    %v2165 = vunpack.c.l.b16 %v242
    %v2166 = vunpack.c.h.b16 %v242
    %v2167 = vunpack.c.l.b16 %v243
    %v2168 = vunpack.c.l.b16 %v244
    %v2169 = vunpack.c.h.b16 %v244
    %v2170 = vunpack.c.l.b16 %v245
    %v2171 = vunpack.c.h.b16 %v245
    %v2172 = vunpack.c.l.b16 %v246
    %v2173 = vunpack.c.l.b16 %v247
    %v2174 = vunpack.c.h.b16 %v247
    %v2175 = vunpack.c.l.b16 %v248
    %v2176 = vunpack.c.h.b16 %v248
    %v2177 = vunpack.c.l.b16 %v249
    %v2178 = vunpack.c.l.b16 %v250
    %v2179 = vunpack.c.h.b16 %v250
    %v2180 = vunpack.c.l.b16 %v251
    %v2181 = vunpack.c.h.b16 %v251
    %v2182 = vunpack.c.l.b16 %v252
    %v2183 = vunpack.c.l.b16 %v253
    %v2184 = vunpack.c.h.b16 %v253
    %v2185 = vunpack.c.l.b16 %v254
    %v2186 = vunpack.c.h.b16 %v254
    %v2187 = vunpack.c.l.b16 %v255
    %v2188 = vunpack.c.l.b16 %v256
    %v2189 = vunpack.c.h.b16 %v256
    %v2190 = vunpack.c.l.b16 %v257
    %v2191 = vunpack.c.h.b16 %v257
    %v2192 = vunpack.c.l.b16 %v258
    %v2193 = vunpack.c.l.b16 %v259
    %v2194 = vunpack.c.h.b16 %v259
    %v2195 = vunpack.c.l.b16 %v260
    %v2196 = vunpack.c.h.b16 %v260
    %v2197 = vunpack.c.l.b16 %v261
    %v2198 = vunpack.c.l.b16 %v262
    %v2199 = vunpack.c.h.b16 %v262
    %v2200 = vunpack.c.l.b16 %v263
    %v2201 = vunpack.c.h.b16 %v263
    %v2202 = vunpack.c.l.b16 %v264
    %v2203 = vunpack.c.l.b16 %v265
    %v2204 = vunpack.c.h.b16 %v265
    %v2205 = vunpack.c.l.b16 %v266
    %v2206 = vunpack.c.h.b16 %v266
    %v2207 = vunpack.c.l.b16 %v267
    %v2208 = vunpack.c.l.b16 %v268
    %v2209 = vunpack.c.h.b16 %v268
    %v2210 = vunpack.c.l.b16 %v269
    %v2211 = vunpack.c.h.b16 %v269
    %v2212 = vunpack.c.l.b16 %v270
    %v2213 = vunpack.c.l.b16 %v271
    %v2214 = vunpack.c.h.b16 %v271
    %v2215 = vunpack.c.l.b16 %v272
    %v2216 = vunpack.c.h.b16 %v272
    %v2217 = vunpack.c.l.b16 %v273
    %v2218 = vunpack.c.l.b16 %v274
    %v2219 = vunpack.c.h.b16 %v274
    %v2220 = vunpack.c.l.b16 %v275
    %v2221 = vunpack.c.h.b16 %v275
    %v2222 = vunpack.c.l.b16 %v276
    %v2223 = vunpack.c.l.b16 %v277
    %v2224 = vunpack.c.h.b16 %v277
    %v2225 = vunpack.c.l.b16 %v278
    %v2226 = vunpack.c.h.b16 %v278
    %v2227 = vunpack.c.l.b16 %v279
    %v2228 = vunpack.c.l.b16 %v280
    %v2229 = vunpack.c.h.b16 %v280
    %v2230 = vunpack.c.l.b16 %v281
    %v2231 = vunpack.c.h.b16 %v281
    %v2232 = vunpack.c.l.b16 %v282
    %v2233 = vunpack.c.l.b16 %v283
    %v2234 = vunpack.c.h.b16 %v283
    %v2235 = vunpack.c.l.b16 %v284
    %v2236 = vunpack.c.h.b16 %v284
    %v2237 = vunpack.c.l.b16 %v285
    %v2238 = vunpack.c.l.b16 %v286
    %v2239 = vunpack.c.h.b16 %v286
    %v2240 = vunpack.c.l.b16 %v287
    %v2241 = vunpack.c.h.b16 %v287
    %v2242 = vunpack.c.l.b16 %v288
    %v2243 = vunpack.c.l.b16 %v289
    %v2244 = vunpack.c.h.b16 %v289
    %v2245 = vunpack.c.l.b16 %v290
    %v2246 = vunpack.c.h.b16 %v290
    %v2247 = vunpack.c.l.b16 %v291
    %v2248 = vunpack.c.l.b16 %v292
    %v2249 = vunpack.c.h.b16 %v292
    %v2250 = vunpack.c.l.b16 %v293
    %v2251 = vunpack.c.h.b16 %v293
    %v2252 = vunpack.c.l.b16 %v294
    %v2253 = vunpack.c.l.b16 %v295
    %v2254 = vunpack.c.h.b16 %v295
    %v2255 = vunpack.c.l.b16 %v296
    %v2256 = vunpack.c.h.b16 %v296
    %v2257 = vunpack.c.l.b16 %v297
    %v2258 = vunpack.c.l.b16 %v298
    %v2259 = vunpack.c.h.b16 %v298
    %v2260 = vunpack.c.l.b16 %v299
    %v2261 = vunpack.c.h.b16 %v299
    %v2262 = vunpack.c.l.b16 %v300
    %v2263 = vunpack.c.l.b16 %v301
    %v2264 = vunpack.c.h.b16 %v301
    %v2265 = vunpack.c.l.b16 %v302
    %v2266 = vunpack.c.h.b16 %v302
    %v2267 = vunpack.c.l.b16 %v303
    %v2268 = vunpack.c.l.b16 %v304
    %v2269 = vunpack.c.h.b16 %v304
    %v2270 = vunpack.c.l.b16 %v305
    %v2271 = vunpack.c.h.b16 %v305
    %v2272 = vunpack.c.l.b16 %v306
    %v2273 = vunpack.c.l.b16 %v307
    %v2274 = vunpack.c.h.b16 %v307
    %v2275 = vunpack.c.l.b16 %v308
    %v2276 = vunpack.c.h.b16 %v308
    %v2277 = vunpack.c.l.b16 %v309
    %v2278 = vunpack.c.l.b16 %v310
    %v2279 = vunpack.c.h.b16 %v310
    %v2280 = vunpack.c.l.b16 %v311
    %v2281 = vunpack.c.h.b16 %v311
    %v2282 = vunpack.c.l.b16 %v312
    %v2283 = vunpack.c.l.b16 %v313
    %v2284 = vunpack.c.h.b16 %v313
    %v2285 = vunpack.c.l.b16 %v314
    %v2286 = vunpack.c.h.b16 %v314
    %v2287 = vunpack.c.l.b16 %v315
    %v2288 = vunpack.c.l.b16 %v316
    %v2289 = vunpack.c.h.b16 %v316
    %v2290 = vunpack.c.l.b16 %v317
    %v2291 = vunpack.c.h.b16 %v317
    %v2292 = vunpack.c.l.b16 %v318
    %v2293 = vunpack.c.l.b16 %v319
    %v2294 = vunpack.c.h.b16 %v319
    %v2295 = vunpack.c.l.b16 %v320
    %v2296 = vunpack.c.h.b16 %v320
    %v2297 = vunpack.c.l.b16 %v321
    %v2298 = vunpack.c.l.b16 %v322
    %v2299 = vunpack.c.h.b16 %v322
    %v2300 = vunpack.c.l.b16 %v323
    %v2301 = vunpack.c.h.b16 %v323
    %v2302 = vunpack.c.l.b16 %v324
    %v2303 = vunpack.c.l.b16 %v325
    %v2304 = vunpack.c.h.b16 %v325
    %v2305 = vunpack.c.l.b16 %v326
    %v2306 = vunpack.c.h.b16 %v326
    %v2307 = vunpack.c.l.b16 %v327
    %v2308 = vunpack.c.l.b16 %v328
    %v2309 = vunpack.c.h.b16 %v328
    %v2310 = vunpack.c.l.b16 %v329
    %v2311 = vunpack.c.h.b16 %v329
    %v2312 = vunpack.c.l.b16 %v330
    %v2313 = vunpack.c.l.b16 %v331
    %v2314 = vunpack.c.h.b16 %v331
    %v2315 = vunpack.c.l.b16 %v332
    %v2316 = vunpack.c.h.b16 %v332
    %v2317 = vunpack.c.l.b16 %v333
    %v2318 = vunpack.c.l.b16 %v334
    %v2319 = vunpack.c.h.b16 %v334
    %v2320 = vunpack.c.l.b16 %v335
    %v2321 = vunpack.c.h.b16 %v335
    %v2322 = vunpack.c.l.b16 %v336
    %v2323 = vunpack.c.l.b16 %v337
    %v2324 = vunpack.c.h.b16 %v337
    %v2325 = vunpack.c.l.b16 %v338
    %v2326 = vunpack.c.h.b16 %v338
    %v2327 = vunpack.c.l.b16 %v339
    %v2328 = vunpack.c.l.b16 %v340
    %v2329 = vunpack.c.h.b16 %v340
    %v2330 = vunpack.c.l.b16 %v341
    %v2331 = vunpack.c.h.b16 %v341
    %v2332 = vunpack.c.l.b16 %v342
    %v2333 = vunpack.c.l.b16 %v343
    %v2334 = vunpack.c.h.b16 %v343
    %v2335 = vunpack.c.l.b16 %v344
    %v2336 = vunpack.c.h.b16 %v344
    %v2337 = vunpack.c.l.b16 %v345
    %v2338 = vunpack.c.l.b16 %v346
    %v2339 = vunpack.c.h.b16 %v346
    %v2340 = vunpack.c.l.b16 %v347
    %v2341 = vunpack.c.h.b16 %v347
    %v2342 = vunpack.c.l.b16 %v348
    %v2343 = vunpack.c.l.b16 %v349
    %v2344 = vunpack.c.h.b16 %v349
    %v2345 = vunpack.c.l.b16 %v350
    %v2346 = vunpack.c.h.b16 %v350
    %v2347 = vunpack.c.l.b16 %v351
    %v2348 = vunpack.c.l.b16 %v352
    %v2349 = vunpack.c.h.b16 %v352
    %v2350 = vunpack.c.l.b16 %v353
    %v2351 = vunpack.c.h.b16 %v353
    %v2352 = vunpack.c.l.b16 %v354
    %v2353 = vunpack.c.l.b16 %v355
    %v2354 = vunpack.c.h.b16 %v355
    %v2355 = vunpack.c.l.b16 %v356
    %v2356 = vunpack.c.h.b16 %v356
    %v2357 = vunpack.c.l.b16 %v357
    %v2358 = vunpack.c.l.b16 %v358
    %v2359 = vunpack.c.h.b16 %v358
    %v2360 = vunpack.c.l.b16 %v359
    %v2361 = vunpack.c.h.b16 %v359
    %v2362 = vunpack.c.l.b16 %v360
    %v2363 = vunpack.c.l.b16 %v361
    %v2364 = vunpack.c.h.b16 %v361
    %v2365 = vunpack.c.l.b16 %v362
    %v2366 = vunpack.c.h.b16 %v362
    %v2367 = vunpack.c.l.b16 %v363
    %v2368 = vunpack.c.l.b16 %v364
    %v2369 = vunpack.c.h.b16 %v364
    %v2370 = vunpack.c.l.b16 %v365
    %v2371 = vunpack.c.h.b16 %v365
    %v2372 = vunpack.c.l.b16 %v366
    %v2373 = vunpack.c.l.b16 %v367
    %v2374 = vunpack.c.h.b16 %v367
    %v2375 = vunpack.c.l.b16 %v368
    %v2376 = vunpack.c.h.b16 %v368
    %v2377 = vunpack.c.l.b16 %v369
    %v2378 = vunpack.c.l.b16 %v370
    %v2379 = vunpack.c.h.b16 %v370
    %v2380 = vunpack.c.l.b16 %v371
    %v2381 = vunpack.c.h.b16 %v371
    %v2382 = vunpack.c.l.b16 %v372
    %v2383 = vunpack.c.l.b16 %v373
    %v2384 = vunpack.c.h.b16 %v373
    %v2385 = vunpack.c.l.b16 %v374
    %v2386 = vunpack.c.h.b16 %v374
    %v2387 = vunpack.c.l.b16 %v375
    %v2388 = vunpack.c.l.b16 %v376
    %v2389 = vunpack.c.h.b16 %v376
    %v2390 = vunpack.c.l.b16 %v377
    %v2391 = vunpack.c.h.b16 %v377
    %v2392 = vunpack.c.l.b16 %v378
    %v2393 = vunpack.c.l.b16 %v379
    %v2394 = vunpack.c.h.b16 %v379
    %v2395 = vunpack.c.l.b16 %v380
    %v2396 = vunpack.c.h.b16 %v380
    %v2397 = vunpack.c.l.b16 %v381
    %v2398 = vunpack.c.l.b16 %v382
    %v2399 = vunpack.c.h.b16 %v382
    %v2400 = vunpack.c.l.b16 %v383
    %v2401 = vunpack.c.h.b16 %v383
    %v2402 = vunpack.c.l.b16 %v384
    %v2403 = vunpack.c.l.b16 %v385
    %v2404 = vunpack.c.h.b16 %v385
    %v2405 = vunpack.c.l.b16 %v386
    %v2406 = vunpack.c.h.b16 %v386
    %v2407 = vunpack.c.l.b16 %v387
    %v2408 = vunpack.c.l.b16 %v388
    %v2409 = vunpack.c.h.b16 %v388
    %v2410 = vunpack.c.l.b16 %v389
    %v2411 = vunpack.c.h.b16 %v389
    %v2412 = vunpack.c.l.b16 %v390
    %v2413 = vunpack.c.l.b16 %v391
    %v2414 = vunpack.c.h.b16 %v391
    %v2415 = vunpack.c.l.b16 %v392
    %v2416 = vunpack.c.h.b16 %v392
    %v2417 = vunpack.c.l.b16 %v393
    %v2418 = vunpack.c.l.b16 %v394
    %v2419 = vunpack.c.h.b16 %v394
    %v2420 = vunpack.c.l.b16 %v395
    %v2421 = vunpack.c.h.b16 %v395
    %v2422 = vunpack.c.l.b16 %v396
    %v2423 = vunpack.c.l.b16 %v397
    %v2424 = vunpack.c.h.b16 %v397
    %v2425 = vunpack.c.l.b16 %v398
    %v2426 = vunpack.c.h.b16 %v398
    %v2427 = vunpack.c.l.b16 %v399
    %v2428 = vunpack.c.l.b16 %v400
    %v2429 = vunpack.c.h.b16 %v400
    %v2430 = vunpack.c.l.b16 %v401
    %v2431 = vunpack.c.h.b16 %v401
    %v2432 = vunpack.c.l.b16 %v402
    %v2433 = vunpack.c.l.b16 %v403
    %v2434 = vunpack.c.h.b16 %v403
    %v2435 = vunpack.c.l.b16 %v404
    %v2436 = vunpack.c.h.b16 %v404
    %v2437 = vunpack.c.l.b16 %v405
    %v2438 = vunpack.c.l.b16 %v406
    %v2439 = vunpack.c.h.b16 %v406
    %v2440 = vunpack.c.l.b16 %v407
    %v2441 = vunpack.c.h.b16 %v407
    %v2442 = vunpack.c.l.b16 %v408
    %v2443 = vunpack.c.l.b16 %v409
    %v2444 = vunpack.c.h.b16 %v409
    %v2445 = vunpack.c.l.b16 %v410
    %v2446 = vunpack.c.h.b16 %v410
    %v2447 = vunpack.c.l.b16 %v411
    %v2448 = vunpack.c.l.b16 %v412
    %v2449 = vunpack.c.h.b16 %v412
    %v2450 = vunpack.c.l.b16 %v413
    %v2451 = vunpack.c.h.b16 %v413
    %v2452 = vunpack.c.l.b16 %v414
    %v2453 = vunpack.c.l.b16 %v415
    %v2454 = vunpack.c.h.b16 %v415
    %v2455 = vunpack.c.l.b16 %v416
    %v2456 = vunpack.c.h.b16 %v416
    %v2457 = vunpack.c.l.b16 %v417
    %v2458 = vunpack.c.l.b16 %v418
    %v2459 = vunpack.c.h.b16 %v418
    %v2460 = vunpack.c.l.b16 %v419
    %v2461 = vunpack.c.h.b16 %v419
    %v2462 = vunpack.c.l.b16 %v420
    %v2463 = vunpack.c.l.b16 %v421
    %v2464 = vunpack.c.h.b16 %v421
    %v2465 = vunpack.c.l.b16 %v422
    %v2466 = vunpack.c.h.b16 %v422
    %v2467 = vunpack.c.l.b16 %v423
    %v2468 = vunpack.c.l.b16 %v424
    %v2469 = vunpack.c.h.b16 %v424
    %v2470 = vunpack.c.l.b16 %v425
    %v2471 = vunpack.c.h.b16 %v425
    %v2472 = vunpack.c.l.b16 %v426
    %v2473 = vunpack.c.l.b16 %v427
    %v2474 = vunpack.c.h.b16 %v427
    %v2475 = vunpack.c.l.b16 %v428
    %v2476 = vunpack.c.h.b16 %v428
    %v2477 = vunpack.c.l.b16 %v429
    %v2478 = vunpack.c.l.b16 %v430
    %v2479 = vunpack.c.h.b16 %v430
    %v2480 = vunpack.c.l.b16 %v431
    %v2481 = vunpack.c.h.b16 %v431
    %v2482 = vunpack.c.l.b16 %v432
    %v2483 = vunpack.c.l.b16 %v433
    %v2484 = vunpack.c.h.b16 %v433
    %v2485 = vunpack.c.l.b16 %v434
    %v2486 = vunpack.c.h.b16 %v434
    %v2487 = vunpack.c.l.b16 %v435
    %v2488 = vunpack.c.l.b16 %v436
    %v2489 = vunpack.c.h.b16 %v436
    %v2490 = vunpack.c.l.b16 %v437
    %v2491 = vunpack.c.h.b16 %v437
    %v2492 = vunpack.c.l.b16 %v438
    %v2493 = vunpack.c.l.b16 %v439
    %v2494 = vunpack.c.h.b16 %v439
    %v2495 = vunpack.c.l.b16 %v440
    %v2496 = vunpack.c.h.b16 %v440
    %v2497 = vunpack.c.l.b16 %v441
    %v2498 = vunpack.c.l.b16 %v442
    %v2499 = vunpack.c.h.b16 %v442
    %v2500 = vunpack.c.l.b16 %v443
    %v2501 = vunpack.c.h.b16 %v443
    %v2502 = vunpack.c.l.b16 %v444
    %v2503 = vunpack.c.l.b16 %v445
    %v2504 = vunpack.c.h.b16 %v445
    %v2505 = vunpack.c.l.b16 %v446
    %v2506 = vunpack.c.h.b16 %v446
    %v2507 = vunpack.c.l.b16 %v447
    %v2508 = vunpack.c.l.b16 %v448
    %v2509 = vunpack.c.h.b16 %v448
    %v2510 = vunpack.c.l.b16 %v449
    %v2511 = vunpack.c.h.b16 %v449
    %v2512 = vunpack.c.l.b16 %v450
    %v2513 = vunpack.c.l.b16 %v451
    %v2514 = vunpack.c.h.b16 %v451
    %v2515 = vunpack.c.l.b16 %v452
    %v2516 = vunpack.c.h.b16 %v452
    %v2517 = vunpack.c.l.b16 %v453
    %v2518 = vunpack.c.l.b16 %v454
    %v2519 = vunpack.c.h.b16 %v454
    %v2520 = vunpack.c.l.b16 %v455
    %v2521 = vunpack.c.h.b16 %v455
    %v2522 = vunpack.c.l.b16 %v456
    %v2523 = vunpack.c.l.b16 %v457
    %v2524 = vunpack.c.h.b16 %v457
    %v2525 = vunpack.c.l.b16 %v458
    %v2526 = vunpack.c.h.b16 %v458
    %v2527 = vunpack.c.l.b16 %v459
    %v2528 = vunpack.c.l.b16 %v460
    %v2529 = vunpack.c.h.b16 %v460
    %v2530 = vunpack.c.l.b16 %v461
    %v2531 = vunpack.c.h.b16 %v461
    %v2532 = vunpack.c.l.b16 %v462
    %v2533 = vunpack.c.l.b16 %v463
    %v2534 = vunpack.c.h.b16 %v463
    %v2535 = vunpack.c.l.b16 %v464
    %v2536 = vunpack.c.h.b16 %v464
    %v2537 = vunpack.c.l.b16 %v465
    %v2538 = vunpack.c.l.b16 %v466
    %v2539 = vunpack.c.h.b16 %v466
    %v2540 = vunpack.c.l.b16 %v467
    %v2541 = vunpack.c.h.b16 %v467
    %v2542 = vunpack.c.l.b16 %v468
    %v2543 = vunpack.c.l.b16 %v469
    %v2544 = vunpack.c.h.b16 %v469
    %v2545 = vunpack.c.l.b16 %v470
    %v2546 = vunpack.c.h.b16 %v470
    %v2547 = vunpack.c.l.b16 %v471
    %v2548 = vunpack.c.l.b16 %v472
    %v2549 = vunpack.c.h.b16 %v472
    %v2550 = vunpack.c.l.b16 %v473
    %v2551 = vunpack.c.h.b16 %v473
    %v2552 = vunpack.c.l.b16 %v474
    %v2553 = vunpack.c.l.b16 %v475
    %v2554 = vunpack.c.h.b16 %v475
    %v2555 = vunpack.c.l.b16 %v476
    %v2556 = vunpack.c.h.b16 %v476
    %v2557 = vunpack.c.l.b16 %v477
    %v2558 = vunpack.c.l.b16 %v478
    %v2559 = vunpack.c.h.b16 %v478
    %v2560 = vunpack.c.l.b16 %v479
    %v2561 = vunpack.c.h.b16 %v479
    %v2562 = vunpack.c.l.b16 %v480
    %v2563 = vunpack.c.l.b16 %v481
    %v2564 = vunpack.c.h.b16 %v481
    %v2565 = vunpack.c.l.b16 %v482
    %v2566 = vunpack.c.h.b16 %v482
    %v2567 = vunpack.c.l.b16 %v483
    %v2568 = vunpack.c.l.b16 %v484
    %v2569 = vunpack.c.h.b16 %v484
    %v2570 = vunpack.c.l.b16 %v485
    %v2571 = vunpack.c.h.b16 %v485
    %v2572 = vunpack.c.l.b16 %v486
    %v2573 = vunpack.c.l.b16 %v487
    %v2574 = vunpack.c.h.b16 %v487
    %v2575 = vunpack.c.l.b16 %v488
    %v2576 = vunpack.c.h.b16 %v488
    %v2577 = vunpack.c.l.b16 %v489
    %v2578 = vunpack.c.l.b16 %v490
    %v2579 = vunpack.c.h.b16 %v490
    %v2580 = vunpack.c.l.b16 %v491
    %v2581 = vunpack.c.h.b16 %v491
    %v2582 = vunpack.c.l.b16 %v492
    %v2583 = vunpack.c.l.b16 %v493
    %v2584 = vunpack.c.h.b16 %v493
    %v2585 = vunpack.c.l.b16 %v494
    %v2586 = vunpack.c.h.b16 %v494
    %v2587 = vunpack.c.l.b16 %v495
    %v2588 = vunpack.c.l.b16 %v496
    %v2589 = vunpack.c.h.b16 %v496
    %v2590 = vunpack.c.l.b16 %v497
    %v2591 = vunpack.c.h.b16 %v497
    %v2592 = vunpack.c.l.b16 %v498
    %v2593 = vunpack.c.l.b16 %v499
    %v2594 = vunpack.c.h.b16 %v499
    %v2595 = vunpack.c.l.b16 %v500
    %v2596 = vunpack.c.h.b16 %v500
    %v2597 = vunpack.c.l.b16 %v501
    %v2598 = vunpack.c.l.b16 %v502
    %v2599 = vunpack.c.h.b16 %v502
    %v2600 = vunpack.c.l.b16 %v503
    %v2601 = vunpack.c.h.b16 %v503
    %v2602 = vunpack.c.l.b16 %v504
    %v2603 = vunpack.c.l.b16 %v505
    %v2604 = vunpack.c.h.b16 %v505
    %v2605 = vunpack.c.l.b16 %v506
    %v2606 = vunpack.c.h.b16 %v506
    %v2607 = vunpack.c.l.b16 %v507
    %v2608 = vunpack.c.l.b16 %v508
    %v2609 = vunpack.c.h.b16 %v508
    %v2610 = vunpack.c.l.b16 %v509
    %v2611 = vunpack.c.h.b16 %v509
    %v2612 = vunpack.c.l.b16 %v510
    %v2613 = vunpack.c.l.b16 %v511
    %v2614 = vunpack.c.h.b16 %v511
    %v2615 = vunpack.c.l.b16 %v512
    %v2616 = vunpack.c.h.b16 %v512
    %v2617 = vunpack.c.l.b16 %v513
    %v2618 = vunpack.c.l.b16 %v514
    %v2619 = vunpack.c.h.b16 %v514
    %v2620 = vunpack.c.l.b16 %v515
    %v2621 = vunpack.c.h.b16 %v515
    %v2622 = vunpack.c.l.b16 %v516
    %v2623 = vunpack.c.l.b16 %v517
    %v2624 = vunpack.c.h.b16 %v517
    %v2625 = vunpack.c.l.b16 %v518
    %v2626 = vunpack.c.h.b16 %v518
    %v2627 = vunpack.c.l.b16 %v519
    %v2628 = vunpack.c.l.b16 %v520
    %v2629 = vunpack.c.h.b16 %v520
    %v2630 = vunpack.c.l.b16 %v521
    %v2631 = vunpack.c.h.b16 %v521
    %v2632 = vunpack.c.l.b16 %v522
    %v2633 = vunpack.c.l.b16 %v523
    %v2634 = vunpack.c.h.b16 %v523
    %v2635 = vunpack.c.l.b16 %v524
    %v2636 = vunpack.c.h.b16 %v524
    %v2637 = vunpack.c.l.b16 %v525
    %v2638 = vunpack.c.l.b16 %v526
    %v2639 = vunpack.c.h.b16 %v526
    %v2640 = vunpack.c.l.b16 %v527
    %v2641 = vunpack.c.h.b16 %v527
    %v2642 = vunpack.c.l.b16 %v528
    %v2643 = vunpack.c.l.b16 %v529
    %v2644 = vunpack.c.h.b16 %v529
    %v2645 = vunpack.c.l.b16 %v530
    %v2646 = vunpack.c.h.b16 %v530
    %v2647 = vunpack.c.l.b16 %v531
    %v2648 = vunpack.c.l.b16 %v532
    %v2649 = vunpack.c.h.b16 %v532
    %v2650 = vunpack.c.l.b16 %v533
    %v2651 = vunpack.c.h.b16 %v533
    %v2652 = vunpack.c.l.b16 %v534
    %v2653 = vunpack.c.l.b16 %v535
    %v2654 = vunpack.c.h.b16 %v535
    %v2655 = vunpack.c.l.b16 %v536
    %v2656 = vunpack.c.h.b16 %v536
    %v2657 = vunpack.c.l.b16 %v537
    %v2658 = vunpack.c.l.b16 %v538
    %v2659 = vunpack.c.h.b16 %v538
    %v2660 = vunpack.c.l.b16 %v539
    %v2661 = vunpack.c.h.b16 %v539
    %v2662 = vunpack.c.l.b16 %v540
    %v2663 = vunpack.c.l.b16 %v541
    %v2664 = vunpack.c.h.b16 %v541
    %v2665 = vunpack.c.l.b16 %v542
    %v2666 = vunpack.c.h.b16 %v542
    %v2667 = vunpack.c.l.b16 %v543
    %v2668 = vunpack.c.l.b16 %v544
    %v2669 = vunpack.c.h.b16 %v544
    %v2670 = vunpack.c.l.b16 %v545
    %v2671 = vunpack.c.h.b16 %v545
    %v2672 = vunpack.c.l.b16 %v546
    %v2673 = vunpack.c.l.b16 %v547
    %v2674 = vunpack.c.h.b16 %v547
    %v2675 = vunpack.c.l.b16 %v548
    %v2676 = vunpack.c.h.b16 %v548
    %v2677 = vunpack.c.l.b16 %v549
    %v2678 = vunpack.c.l.b16 %v550
    %v2679 = vunpack.c.h.b16 %v550
    %v2680 = vunpack.c.l.b16 %v551
    %v2681 = vunpack.c.h.b16 %v551
    %v2682 = vunpack.c.l.b16 %v552
    %v2683 = vunpack.c.l.b16 %v553
    %v2684 = vunpack.c.h.b16 %v553
    %v2685 = vunpack.c.l.b16 %v554
    %v2686 = vunpack.c.h.b16 %v554
    %v2687 = vunpack.c.l.b16 %v555
    %v2688 = vunpack.c.l.b16 %v556
    %v2689 = vunpack.c.h.b16 %v556
    %v2690 = vunpack.c.l.b16 %v557
    %v2691 = vunpack.c.h.b16 %v557
    %v2692 = vunpack.c.l.b16 %v558
    %v2693 = vunpack.c.l.b16 %v559
    %v2694 = vunpack.c.h.b16 %v559
    %v2695 = vunpack.c.l.b16 %v560
    %v2696 = vunpack.c.h.b16 %v560
    %v2697 = vunpack.c.l.b16 %v561
    %v2698 = vunpack.c.l.b16 %v562
    %v2699 = vunpack.c.h.b16 %v562
    %v2700 = vunpack.c.l.b16 %v563
    %v2701 = vunpack.c.h.b16 %v563
    %v2702 = vunpack.c.l.b16 %v564
    %v2703 = vunpack.c.l.b16 %v565
    %v2704 = vunpack.c.h.b16 %v565
    %v2705 = vunpack.c.l.b16 %v566
    %v2706 = vunpack.c.h.b16 %v566
    %v2707 = vunpack.c.l.b16 %v567
    %v2708 = vunpack.c.l.b16 %v568
    %v2709 = vunpack.c.h.b16 %v568
    %v2710 = vunpack.c.l.b16 %v569
    %v2711 = vunpack.c.h.b16 %v569
    %v2712 = vunpack.c.l.b16 %v570
    %v2713 = vunpack.c.l.b16 %v571
    %v2714 = vunpack.c.h.b16 %v571
    %v2715 = vunpack.c.l.b16 %v572
    %v2716 = vunpack.c.h.b16 %v572
    %v2717 = vunpack.c.l.b16 %v573
    %v2718 = vunpack.c.l.b16 %v574
    %v2719 = vunpack.c.h.b16 %v574
    %v2720 = vunpack.c.l.b16 %v575
    %v2721 = vunpack.c.h.b16 %v575
    %v2722 = vunpack.c.l.b16 %v576
    %v2723 = vunpack.c.l.b16 %v577
    %v2724 = vunpack.c.h.b16 %v577
    %v2725 = vunpack.c.l.b16 %v578
    %v2726 = vunpack.c.h.b16 %v578
    %v2727 = vunpack.c.l.b16 %v579
    %v2728 = vunpack.c.l.b16 %v580
    %v2729 = vunpack.c.h.b16 %v580
    %v2730 = vunpack.c.l.b16 %v581
    %v2731 = vunpack.c.h.b16 %v581
    %v2732 = vunpack.c.l.b16 %v582
    %v2733 = vunpack.c.l.b16 %v583
    %v2734 = vunpack.c.h.b16 %v583
    %v2735 = vunpack.c.l.b16 %v584
    %v2736 = vunpack.c.h.b16 %v584
    %v2737 = vunpack.c.l.b16 %v585
    %v2738 = vunpack.c.l.b16 %v586
    %v2739 = vunpack.c.h.b16 %v586
    %v2740 = vunpack.c.l.b16 %v587
    %v2741 = vunpack.c.h.b16 %v587
    %v2742 = vunpack.c.l.b16 %v588
    %v2743 = vunpack.c.l.b16 %v589
    %v2744 = vunpack.c.h.b16 %v589
    %v2745 = vunpack.c.l.b16 %v590
    %v2746 = vunpack.c.h.b16 %v590
    %v2747 = vunpack.c.l.b16 %v591
    %v2748 = vunpack.c.l.b16 %v592
    %v2749 = vunpack.c.h.b16 %v592
    %v2750 = vunpack.c.l.b16 %v593
    %v2751 = vunpack.c.h.b16 %v593
    %v2752 = vunpack.c.l.b16 %v594
    %v2753 = vunpack.c.l.b16 %v595
    %v2754 = vunpack.c.h.b16 %v595
    %v2755 = vunpack.c.l.b16 %v596
    %v2756 = vunpack.c.h.b16 %v596
    %v2757 = vunpack.c.l.b16 %v597
    %v2758 = vunpack.c.l.b16 %v598
    %v2759 = vunpack.c.h.b16 %v598
    %v2760 = vunpack.c.l.b16 %v599
    %v2761 = vunpack.c.h.b16 %v599
    %v2762 = vunpack.c.l.b16 %v600
    %v2763 = vunpack.c.l.b16 %v601
    %v2764 = vunpack.c.h.b16 %v601
    %v2765 = vunpack.c.l.b16 %v602
    %v2766 = vunpack.c.h.b16 %v602
    %v2767 = vunpack.c.l.b16 %v603
    %v2768 = vunpack.c.l.b16 %v604
    %v2769 = vunpack.c.h.b16 %v604
    %v2770 = vunpack.c.l.b16 %v605
    %v2771 = vunpack.c.h.b16 %v605
    %v2772 = vunpack.c.l.b16 %v606
    %v2773 = vunpack.c.l.b16 %v607
    %v2774 = vunpack.c.h.b16 %v607
    %v2775 = vunpack.c.l.b16 %v608
    %v2776 = vunpack.c.h.b16 %v608
    %v2777 = vunpack.c.l.b16 %v609
    %v2778 = vunpack.c.l.b16 %v610
    %v2779 = vunpack.c.h.b16 %v610
    %v2780 = vunpack.c.l.b16 %v611
    %v2781 = vunpack.c.h.b16 %v611
    %v2782 = vunpack.c.l.b16 %v612
    %v2783 = vunpack.c.l.b16 %v613
    %v2784 = vunpack.c.h.b16 %v613
    %v2785 = vunpack.c.l.b16 %v614
    %v2786 = vunpack.c.h.b16 %v614
    %v2787 = vunpack.c.l.b16 %v615
    %v2788 = vunpack.c.l.b16 %v616
    %v2789 = vunpack.c.h.b16 %v616
    %v2790 = vunpack.c.l.b16 %v617
    %v2791 = vunpack.c.h.b16 %v617
    %v2792 = vunpack.c.l.b16 %v618
    %v2793 = vunpack.c.l.b16 %v619
    %v2794 = vunpack.c.h.b16 %v619
    %v2795 = vunpack.c.l.b16 %v620
    %v2796 = vunpack.c.h.b16 %v620
    %v2797 = vunpack.c.l.b16 %v621
    %v2798 = vunpack.c.l.b16 %v622
    %v2799 = vunpack.c.h.b16 %v622
    %v2800 = vunpack.c.l.b16 %v623
    %v2801 = vunpack.c.h.b16 %v623
    %v2802 = vunpack.c.l.b16 %v624
    %v2803 = vunpack.c.l.b16 %v625
    %v2804 = vunpack.c.h.b16 %v625
    %v2805 = vunpack.c.l.b16 %v626
    %v2806 = vunpack.c.h.b16 %v626
    %v2807 = vunpack.c.l.b16 %v627
    %v2808 = vunpack.c.l.b16 %v628
    %v2809 = vunpack.c.h.b16 %v628
    %v2810 = vunpack.c.l.b16 %v629
    %v2811 = vunpack.c.h.b16 %v629
    %v2812 = vunpack.c.l.b16 %v630
    %v2813 = vunpack.c.l.b16 %v631
    %v2814 = vunpack.c.h.b16 %v631
    %v2815 = vunpack.c.l.b16 %v632
    %v2816 = vunpack.c.h.b16 %v632
    %v2817 = vunpack.c.l.b16 %v633
    %v2818 = vunpack.c.l.b16 %v634
    %v2819 = vunpack.c.h.b16 %v634
    %v2820 = vunpack.c.l.b16 %v635
    %v2821 = vunpack.c.h.b16 %v635
    %v2822 = vunpack.c.l.b16 %v636
    %v2823 = vunpack.c.l.b16 %v637
    %v2824 = vunpack.c.h.b16 %v637
    %v2825 = vunpack.c.l.b16 %v638
    %v2826 = vunpack.c.h.b16 %v638
    %v2827 = vunpack.c.l.b16 %v639
    %v2828 = vunpack.c.l.b16 %v640
    %v2829 = vunpack.c.h.b16 %v640
    %v2830 = vunpack.c.l.b16 %v641
    %v2831 = vunpack.c.h.b16 %v641
    %v2832 = vunpack.c.l.b16 %v642
    %v2833 = vunpack.c.l.b16 %v643
    %v2834 = vunpack.c.h.b16 %v643
    %v2835 = vunpack.c.l.b16 %v644
    %v2836 = vunpack.c.h.b16 %v644
    %v2837 = vunpack.c.l.b16 %v645
    %v2838 = vunpack.c.l.b16 %v646
    %v2839 = vunpack.c.h.b16 %v646
    %v2840 = vunpack.c.l.b16 %v647
    %v2841 = vunpack.c.h.b16 %v647
    %v2842 = vunpack.c.l.b16 %v648
    %v2843 = vunpack.c.l.b16 %v649
    %v2844 = vunpack.c.h.b16 %v649
    %v2845 = vunpack.c.l.b16 %v650
    %v2846 = vunpack.c.h.b16 %v650
    %v2847 = vunpack.c.l.b16 %v651
    %v2848 = vunpack.c.l.b16 %v652
    %v2849 = vunpack.c.h.b16 %v652
    %v2850 = vunpack.c.l.b16 %v653
    %v2851 = vunpack.c.h.b16 %v653
    %v2852 = vunpack.c.l.b16 %v654
    %v2853 = vunpack.c.l.b16 %v655
    %v2854 = vunpack.c.h.b16 %v655
    %v2855 = vunpack.c.l.b16 %v656
    %v2856 = vunpack.c.h.b16 %v656
    %v2857 = vunpack.c.l.b16 %v657
    %v2858 = vunpack.c.l.b16 %v658
    %v2859 = vunpack.c.h.b16 %v658
    %v2860 = vunpack.c.l.b16 %v659
    %v2861 = vunpack.c.h.b16 %v659
    %v2862 = vunpack.c.l.b16 %v660
    %v2863 = vunpack.c.l.b16 %v661
    %v2864 = vunpack.c.h.b16 %v661
    %v2865 = vunpack.c.l.b16 %v662
    %v2866 = vunpack.c.h.b16 %v662
    %v2867 = vunpack.c.l.b16 %v663
    %v2868 = vunpack.c.l.b16 %v664
    %v2869 = vunpack.c.h.b16 %v664
    %v2870 = vunpack.c.l.b16 %v665
    %v2871 = vunpack.c.h.b16 %v665
    %v2872 = vunpack.c.l.b16 %v666
    %v2873 = vunpack.c.l.b16 %v667
    %v2874 = vunpack.c.h.b16 %v667
    %v2875 = vunpack.c.l.b16 %v668
    %v2876 = vunpack.c.h.b16 %v668
    %v2877 = vunpack.c.l.b16 %v669
    %v2878 = vunpack.c.l.b16 %v670
    %v2879 = vunpack.c.h.b16 %v670
    %v2880 = vunpack.c.l.b16 %v671
    %v2881 = vunpack.c.h.b16 %v671
    %v2882 = vunpack.c.l.b16 %v672
    %v2883 = vunpack.c.l.b16 %v673
    %v2884 = vunpack.c.h.b16 %v673
    %v2885 = vunpack.c.l.b16 %v674
    %v2886 = vunpack.c.h.b16 %v674
    %v2887 = vunpack.c.l.b16 %v675
    %v2888 = vunpack.c.l.b16 %v676
    %v2889 = vunpack.c.h.b16 %v676
    %v2890 = vunpack.c.l.b16 %v677
    %v2891 = vunpack.c.h.b16 %v677
    %v2892 = vunpack.c.l.b16 %v678
    %v2893 = vunpack.c.l.b16 %v679
    %v2894 = vunpack.c.h.b16 %v679
    %v2895 = vunpack.c.l.b16 %v680
    %v2896 = vunpack.c.h.b16 %v680
    %v2897 = vunpack.c.l.b16 %v681
    %v2898 = vunpack.c.l.b16 %v682
    %v2899 = vunpack.c.h.b16 %v682
    %v2900 = vunpack.c.l.b16 %v683
    %v2901 = vunpack.c.h.b16 %v683
    %v2902 = vunpack.c.l.b16 %v684
    %v2903 = vunpack.c.l.b16 %v685
    %v2904 = vunpack.c.h.b16 %v685
    %v2905 = vunpack.c.l.b16 %v686
    %v2906 = vunpack.c.h.b16 %v686
    %v2907 = vunpack.c.l.b16 %v687
    %v2908 = vunpack.c.l.b16 %v688
    %v2909 = vunpack.c.h.b16 %v688
    %v2910 = vunpack.c.l.b16 %v689
    %v2911 = vunpack.c.h.b16 %v689
    %v2912 = vunpack.c.l.b16 %v690
    %v2913 = vunpack.c.l.b16 %v691
    %v2914 = vunpack.c.h.b16 %v691
    %v2915 = vunpack.c.l.b16 %v692
    %v2916 = vunpack.c.h.b16 %v692
    %v2917 = vunpack.c.l.b16 %v693
    %v2918 = vunpack.c.l.b16 %v694
    %v2919 = vunpack.c.h.b16 %v694
    %v2920 = vunpack.c.l.b16 %v695
    %v2921 = vunpack.c.h.b16 %v695
    %v2922 = vunpack.c.l.b16 %v696
    %v2923 = vunpack.c.l.b16 %v697
    %v2924 = vunpack.c.h.b16 %v697
    %v2925 = vunpack.c.l.b16 %v698
    %v2926 = vunpack.c.h.b16 %v698
    %v2927 = vunpack.c.l.b16 %v699
    %v2928 = vunpack.c.l.b16 %v700
    %v2929 = vunpack.c.h.b16 %v700
    %v2930 = vunpack.c.l.b16 %v701
    %v2931 = vunpack.c.h.b16 %v701
    %v2932 = vunpack.c.l.b16 %v702
    %v2933 = vunpack.c.l.b16 %v703
    %v2934 = vunpack.c.h.b16 %v703
    %v2935 = vunpack.c.l.b16 %v704
    %v2936 = vunpack.c.h.b16 %v704
    %v2937 = vunpack.c.l.b16 %v705
    %v2938 = vunpack.c.l.b16 %v706
    %v2939 = vunpack.c.h.b16 %v706
    %v2940 = vunpack.c.l.b16 %v707
    %v2941 = vunpack.c.h.b16 %v707
    %v2942 = vunpack.c.l.b16 %v708
    %v2943 = vunpack.c.l.b16 %v709
    %v2944 = vunpack.c.h.b16 %v709
    %v2945 = vunpack.c.l.b16 %v710
    %v2946 = vunpack.c.h.b16 %v710
    %v2947 = vunpack.c.l.b16 %v711
    %v2948 = vunpack.c.l.b16 %v712
    %v2949 = vunpack.c.h.b16 %v712
    %v2950 = vunpack.c.l.b16 %v713
    %v2951 = vunpack.c.h.b16 %v713
    %v2952 = vunpack.c.l.b16 %v714
    %v2953 = vunpack.c.l.b16 %v715
    %v2954 = vunpack.c.h.b16 %v715
    %v2955 = vunpack.c.l.b16 %v716
    %v2956 = vunpack.c.h.b16 %v716
    %v2957 = vunpack.c.l.b16 %v717
    %v2958 = vunpack.c.l.b16 %v718
    %v2959 = vunpack.c.h.b16 %v718
    %v2960 = vunpack.c.l.b16 %v719
    %v2961 = vunpack.c.h.b16 %v719
    %v2962 = vunpack.c.l.b16 %v720
    %v2963 = vunpack.c.l.b16 %v721
    %v2964 = vunpack.c.h.b16 %v721
    %v2965 = vunpack.c.l.b16 %v722
    %v2966 = vunpack.c.h.b16 %v722
    %v2967 = vunpack.c.l.b16 %v723
    %v2968 = vunpack.c.l.b16 %v724
    %v2969 = vunpack.c.h.b16 %v724
    %v2970 = vunpack.c.l.b16 %v725
    %v2971 = vunpack.c.h.b16 %v725
    %v2972 = vunpack.c.l.b16 %v726
    %v2973 = vunpack.c.l.b16 %v727
    %v2974 = vunpack.c.h.b16 %v727
    %v2975 = vunpack.c.l.b16 %v728
    %v2976 = vunpack.c.h.b16 %v728
    %v2977 = vunpack.c.l.b16 %v729
    %v2978 = vunpack.c.l.b16 %v730
    %v2979 = vunpack.c.h.b16 %v730
    %v2980 = vunpack.c.l.b16 %v731
    %v2981 = vunpack.c.h.b16 %v731
    %v2982 = vunpack.c.l.b16 %v732
    %v2983 = vunpack.c.l.b16 %v733
    %v2984 = vunpack.c.h.b16 %v733
    %v2985 = vunpack.c.l.b16 %v734
    %v2986 = vunpack.c.h.b16 %v734
    %v2987 = vunpack.c.l.b16 %v735
    %v2988 = vunpack.c.l.b16 %v736
    %v2989 = vunpack.c.h.b16 %v736
    %v2990 = vunpack.c.l.b16 %v737
    %v2991 = vunpack.c.h.b16 %v737
    %v2992 = vunpack.c.l.b16 %v738
    %v2993 = vunpack.c.l.b16 %v739
    %v2994 = vunpack.c.h.b16 %v739
    %v2995 = vunpack.c.l.b16 %v740
    %v2996 = vunpack.c.h.b16 %v740
    %v2997 = vunpack.c.l.b16 %v741
    %v2998 = vunpack.c.l.b16 %v742
    %v2999 = vunpack.c.h.b16 %v742
    %v3000 = vunpack.c.l.b16 %v743
    %v3001 = vunpack.c.h.b16 %v743
    %v3002 = vunpack.c.l.b16 %v744
    %v3003 = vunpack.c.l.b16 %v745
    %v3004 = vunpack.c.h.b16 %v745
    %v3005 = vunpack.c.l.b16 %v746
    %v3006 = vunpack.c.h.b16 %v746
    %v3007 = vunpack.c.l.b16 %v747
    %v3008 = vunpack.c.l.b16 %v748
    %v3009 = vunpack.c.h.b16 %v748
    %v3010 = vunpack.c.l.b16 %v749
    %v3011 = vunpack.c.h.b16 %v749
    %v3012 = vunpack.c.l.b16 %v750
    %v3013 = vunpack.c.l.b16 %v751
    %v3014 = vunpack.c.h.b16 %v751
    %v3015 = vunpack.c.l.b16 %v752
    %v3016 = vunpack.c.h.b16 %v752
    %v3017 = vunpack.c.l.b16 %v753
    %v3018 = vunpack.c.l.b16 %v754
    %v3019 = vunpack.c.h.b16 %v754
    %v3020 = vunpack.c.l.b16 %v755
    %v3021 = vunpack.c.h.b16 %v755
    %v3022 = vunpack.c.l.b16 %v756
    %v3023 = vunpack.c.l.b16 %v757
    %v3024 = vunpack.c.h.b16 %v757
    %v3025 = vunpack.c.l.b16 %v758
    %v3026 = vunpack.c.h.b16 %v758
    %v3027 = vunpack.c.l.b16 %v759
    %v3028 = vunpack.c.l.b16 %v760
    %v3029 = vunpack.c.h.b16 %v760
    %v3030 = vunpack.c.l.b16 %v761
    %v3031 = vunpack.c.h.b16 %v761
    %v3032 = vunpack.c.l.b16 %v762
    %v3033 = vunpack.c.l.b16 %v763
    %v3034 = vunpack.c.h.b16 %v763
    %v3035 = vunpack.c.l.b16 %v764
    %v3036 = vunpack.c.h.b16 %v764
    %v3037 = vunpack.c.l.b16 %v765
    %v3038 = vunpack.c.l.b16 %v766
    %v3039 = vunpack.c.h.b16 %v766
    %v3040 = vunpack.c.l.b16 %v767
    %v3041 = vunpack.c.h.b16 %v767
    %v3042 = vunpack.c.l.b16 %v768
    %v3043 = vunpack.c.l.b16 %v769
    %v3044 = vunpack.c.h.b16 %v769
    %v3045 = vunpack.c.l.b16 %v770
    %v3046 = vunpack.c.h.b16 %v770
    %v3047 = vunpack.c.l.b16 %v771
    %v3048 = vunpack.c.l.b16 %v772
    %v3049 = vunpack.c.h.b16 %v772
    %v3050 = vunpack.c.l.b16 %v773
    %v3051 = vunpack.c.h.b16 %v773
    %v3052 = vunpack.c.l.b16 %v774
    %v3053 = vunpack.c.l.b16 %v775
    %v3054 = vunpack.c.h.b16 %v775
    %v3055 = vunpack.c.l.b16 %v776
    %v3056 = vunpack.c.h.b16 %v776
    %v3057 = vunpack.c.l.b16 %v777
    %v3058 = vunpack.c.l.b16 %v778
    %v3059 = vunpack.c.h.b16 %v778
    %v3060 = vunpack.c.l.b16 %v779
    %v3061 = vunpack.c.h.b16 %v779
    %v3062 = vunpack.c.l.b16 %v780
    %v3063 = vunpack.c.l.b16 %v781
    %v3064 = vunpack.c.h.b16 %v781
    %v3065 = vunpack.c.l.b16 %v782
    %v3066 = vunpack.c.h.b16 %v782
    %v3067 = vunpack.c.l.b16 %v783
    %v3068 = vunpack.c.l.b16 %v784
    %v3069 = vunpack.c.h.b16 %v784
    %v3070 = vunpack.c.l.b16 %v785
    %v3071 = vunpack.c.h.b16 %v785
    %v3072 = vunpack.c.l.b16 %v786
    %v3073 = vunpack.c.l.b16 %v787
    %v3074 = vunpack.c.h.b16 %v787
    %v3075 = vunpack.c.l.b16 %v788
    %v3076 = vunpack.c.h.b16 %v788
    %v3077 = vunpack.c.l.b16 %v789
    %v3078 = vunpack.c.l.b16 %v790
    %v3079 = vunpack.c.h.b16 %v790
    %v3080 = vunpack.c.l.b16 %v791
    %v3081 = vunpack.c.h.b16 %v791
    %v3082 = vunpack.c.l.b16 %v792
    %v3083 = vunpack.c.l.b16 %v793
    %v3084 = vunpack.c.h.b16 %v793
    %v3085 = vunpack.c.l.b16 %v794
    %v3086 = vunpack.c.h.b16 %v794
    %v3087 = vunpack.c.l.b16 %v795
    %v3088 = vunpack.c.l.b16 %v796
    %v3089 = vunpack.c.h.b16 %v796
    %v3090 = vunpack.c.l.b16 %v797
    %v3091 = vunpack.c.h.b16 %v797
    %v3092 = vunpack.c.l.b16 %v798
    %v3093 = vunpack.c.l.b16 %v799
    %v3094 = vunpack.c.h.b16 %v799
    %v3095 = vunpack.c.l.b16 %v800
    %v3096 = vunpack.c.h.b16 %v800
    %v3097 = vunpack.c.l.b16 %v801
    %v3098 = vunpack.c.l.b16 %v802
    %v3099 = vunpack.c.h.b16 %v802
    %v3100 = vunpack.c.l.b16 %v803
    %v3101 = vunpack.c.h.b16 %v803
    %v3102 = vunpack.c.l.b16 %v804
    %v3103 = vunpack.c.l.b16 %v805
    %v3104 = vunpack.c.h.b16 %v805
    %v3105 = vunpack.c.l.b16 %v806
    %v3106 = vunpack.c.h.b16 %v806
    %v3107 = vunpack.c.l.b16 %v807
    %v3108 = vunpack.c.l.b16 %v808
    %v3109 = vunpack.c.h.b16 %v808
    %v3110 = vunpack.c.l.b16 %v809
    %v3111 = vunpack.c.h.b16 %v809
    %v3112 = vunpack.c.l.b16 %v810
    %v3113 = vunpack.c.l.b16 %v811
    %v3114 = vunpack.c.h.b16 %v811
    %v3115 = vunpack.c.l.b16 %v812
    %v3116 = vunpack.c.h.b16 %v812
    %v3117 = vunpack.c.l.b16 %v813
    %v3118 = vunpack.c.l.b16 %v814
    %v3119 = vunpack.c.h.b16 %v814
    %v3120 = vunpack.c.l.b16 %v815
    %v3121 = vunpack.c.h.b16 %v815
    %v3122 = vunpack.c.l.b16 %v816
    %v3123 = vunpack.c.l.b16 %v817
    %v3124 = vunpack.c.h.b16 %v817
    %v3125 = vunpack.c.l.b16 %v818
    %v3126 = vunpack.c.h.b16 %v818
    %v3127 = vunpack.c.l.b16 %v819
    %v3128 = vunpack.c.l.b16 %v820
    %v3129 = vunpack.c.h.b16 %v820
    %v3130 = vunpack.c.l.b16 %v821
    %v3131 = vunpack.c.h.b16 %v821
    %v3132 = vunpack.c.l.b16 %v822
    %v3133 = vunpack.c.l.b16 %v823
    %v3134 = vunpack.c.h.b16 %v823
    %v3135 = vunpack.c.l.b16 %v824
    %v3136 = vunpack.c.h.b16 %v824
    %v3137 = vunpack.c.l.b16 %v825
    %v3138 = vunpack.c.l.b16 %v826
    %v3139 = vunpack.c.h.b16 %v826
    %v3140 = vunpack.c.l.b16 %v827
    %v3141 = vunpack.c.h.b16 %v827
    %v3142 = vunpack.c.l.b16 %v828
    %v3143 = vunpack.c.l.b16 %v829
    %v3144 = vunpack.c.h.b16 %v829
    %v3145 = vunpack.c.l.b16 %v830
    %v3146 = vunpack.c.h.b16 %v830
    %v3147 = vunpack.c.l.b16 %v831
    %v3148 = vunpack.c.l.b16 %v832
    %v3149 = vunpack.c.h.b16 %v832
    %v3150 = vunpack.c.l.b16 %v833
    %v3151 = vunpack.c.h.b16 %v833
    %v3152 = vunpack.c.l.b16 %v834
    %v3153 = vunpack.c.l.b16 %v835
    %v3154 = vunpack.c.h.b16 %v835
    %v3155 = vunpack.c.l.b16 %v836
    %v3156 = vunpack.c.h.b16 %v836
    %v3157 = vunpack.c.l.b16 %v837
    %v3158 = vunpack.c.l.b16 %v838
    %v3159 = vunpack.c.h.b16 %v838
    %v3160 = vunpack.c.l.b16 %v839
    %v3161 = vunpack.c.h.b16 %v839
    %v3162 = vunpack.c.l.b16 %v840
    %v3163 = vunpack.c.l.b16 %v841
    %v3164 = vunpack.c.h.b16 %v841
    %v3165 = vunpack.c.l.b16 %v842
    %v3166 = vunpack.c.h.b16 %v842
    %v3167 = vunpack.c.l.b16 %v843
    %v3168 = vunpack.c.l.b16 %v844
    %v3169 = vunpack.c.h.b16 %v844
    %v3170 = vunpack.c.l.b16 %v845
    %v3171 = vunpack.c.h.b16 %v845
    %v3172 = vunpack.c.l.b16 %v846
    %v3173 = vunpack.c.l.b16 %v847
    %v3174 = vunpack.c.h.b16 %v847
    %v3175 = vunpack.c.l.b16 %v848
    %v3176 = vunpack.c.h.b16 %v848
    %v3177 = vunpack.c.l.b16 %v849
    %v3178 = vunpack.c.l.b16 %v850
    %v3179 = vunpack.c.h.b16 %v850
    %v3180 = vunpack.c.l.b16 %v851
    %v3181 = vunpack.c.h.b16 %v851
    %v3182 = vunpack.c.l.b16 %v852
    %v3183 = vunpack.c.l.b16 %v853
    %v3184 = vunpack.c.h.b16 %v853
    %v3185 = vunpack.c.l.b16 %v854
    %v3186 = vunpack.c.h.b16 %v854
    %v3187 = vunpack.c.l.b16 %v855
    %v3188 = vunpack.c.l.b16 %v856
    %v3189 = vunpack.c.h.b16 %v856
    %v3190 = vunpack.c.l.b16 %v857
    %v3191 = vunpack.c.h.b16 %v857
    %v3192 = vunpack.c.l.b16 %v858
    %v3193 = vunpack.c.l.b16 %v859
    %v3194 = vunpack.c.h.b16 %v859
    %v3195 = vunpack.c.l.b16 %v860
    %v3196 = vunpack.c.h.b16 %v860
    %v3197 = vunpack.c.l.b16 %v861
    %v3198 = vunpack.c.l.b16 %v862
    %v3199 = vunpack.c.h.b16 %v862
    %v3200 = vunpack.c.l.b16 %v863
    %v3201 = vunpack.c.h.b16 %v863
    %v3202 = vunpack.c.l.b16 %v864
    %v3203 = vunpack.c.l.b16 %v865
    %v3204 = vunpack.c.h.b16 %v865
    %v3205 = vunpack.c.l.b16 %v866
    %v3206 = vunpack.c.h.b16 %v866
    %v3207 = vunpack.c.l.b16 %v867
    %v3208 = vunpack.c.l.b16 %v868
    %v3209 = vunpack.c.h.b16 %v868
    %v3210 = vunpack.c.l.b16 %v869
    %v3211 = vunpack.c.h.b16 %v869
    %v3212 = vunpack.c.l.b16 %v870
    %v3213 = vunpack.c.l.b16 %v871
    %v3214 = vunpack.c.h.b16 %v871
    %v3215 = vunpack.c.l.b16 %v872
    %v3216 = vunpack.c.h.b16 %v872
    %v3217 = vunpack.c.l.b16 %v873
    %v3218 = vunpack.c.l.b16 %v874
    %v3219 = vunpack.c.h.b16 %v874
    %v3220 = vunpack.c.l.b16 %v875
    %v3221 = vunpack.c.h.b16 %v875
    %v3222 = vunpack.c.l.b16 %v876
    %v3223 = vunpack.c.l.b16 %v877
    %v3224 = vunpack.c.h.b16 %v877
    %v3225 = vunpack.c.l.b16 %v878
    %v3226 = vunpack.c.h.b16 %v878
    %v3227 = vunpack.c.l.b16 %v879
    %v3228 = vunpack.c.l.b16 %v880
    %v3229 = vunpack.c.h.b16 %v880
    %v3230 = vunpack.c.l.b16 %v881
    %v3231 = vunpack.c.h.b16 %v881
    %v3232 = vunpack.c.l.b16 %v882
    %v3233 = vunpack.c.l.b16 %v883
    %v3234 = vunpack.c.h.b16 %v883
    %v3235 = vunpack.c.l.b16 %v884
    %v3236 = vunpack.c.h.b16 %v884
    %v3237 = vunpack.c.l.b16 %v885
    %v3238 = vunpack.c.l.b16 %v886
    %v3239 = vunpack.c.h.b16 %v886
    %v3240 = vunpack.c.l.b16 %v887
    %v3241 = vunpack.c.h.b16 %v887
    %v3242 = vunpack.c.l.b16 %v888
    %v3243 = vunpack.c.l.b16 %v889
    %v3244 = vunpack.c.h.b16 %v889
    %v3245 = vunpack.c.l.b16 %v890
    %v3246 = vunpack.c.h.b16 %v890
    %v3247 = vunpack.c.l.b16 %v891
    %v3248 = vunpack.c.l.b16 %v892
    %v3249 = vunpack.c.h.b16 %v892
    %v3250 = vunpack.c.l.b16 %v893
    %v3251 = vunpack.c.h.b16 %v893
    %v3252 = vunpack.c.l.b16 %v894
    %v3253 = vpack.c.b16 %v1818, %v1813
    %v3254 = vpack.c.b16 %v1819, %v1814
    %v3255 = vpack.c.b16 %v1820, %v1815
    %v3256 = vpack.c.b16 %v1821, %v1816
    %v3257 = vpack.c.b16 %v1822, %v1817
    %v3258 = vpack.c.b16 %v1828, %v1823
    %v3259 = vpack.c.b16 %v1829, %v1824
    %v3260 = vpack.c.b16 %v1830, %v1825
    %v3261 = vpack.c.b16 %v1831, %v1826
    %v3262 = vpack.c.b16 %v1832, %v1827
    %v3263 = vpack.c.b16 %v1838, %v1833
    %v3264 = vpack.c.b16 %v1839, %v1834
    %v3265 = vpack.c.b16 %v1840, %v1835
    %v3266 = vpack.c.b16 %v1841, %v1836
    %v3267 = vpack.c.b16 %v1842, %v1837
    %v3268 = vpack.c.b16 %v1848, %v1843
    %v3269 = vpack.c.b16 %v1849, %v1844
    %v3270 = vpack.c.b16 %v1850, %v1845
    %v3271 = vpack.c.b16 %v1851, %v1846
    %v3272 = vpack.c.b16 %v1852, %v1847
    %v3273 = vpack.c.b16 %v1858, %v1853
    %v3274 = vpack.c.b16 %v1859, %v1854
    %v3275 = vpack.c.b16 %v1860, %v1855
    %v3276 = vpack.c.b16 %v1861, %v1856
    %v3277 = vpack.c.b16 %v1862, %v1857
    %v3278 = vpack.c.b16 %v1868, %v1863
    %v3279 = vpack.c.b16 %v1869, %v1864
    %v3280 = vpack.c.b16 %v1870, %v1865
    %v3281 = vpack.c.b16 %v1871, %v1866
    %v3282 = vpack.c.b16 %v1872, %v1867
    %v3283 = vpack.c.b16 %v1878, %v1873
    %v3284 = vpack.c.b16 %v1879, %v1874
    %v3285 = vpack.c.b16 %v1880, %v1875
    %v3286 = vpack.c.b16 %v1881, %v1876
    %v3287 = vpack.c.b16 %v1882, %v1877
    %v3288 = vpack.c.b16 %v1888, %v1883
    %v3289 = vpack.c.b16 %v1889, %v1884
    %v3290 = vpack.c.b16 %v1890, %v1885
    %v3291 = vpack.c.b16 %v1891, %v1886
    %v3292 = vpack.c.b16 %v1892, %v1887
    %v3293 = vpack.c.b16 %v1898, %v1893
    %v3294 = vpack.c.b16 %v1899, %v1894
    %v3295 = vpack.c.b16 %v1900, %v1895
    %v3296 = vpack.c.b16 %v1901, %v1896
    %v3297 = vpack.c.b16 %v1902, %v1897
    %v3298 = vpack.c.b16 %v1908, %v1903
    %v3299 = vpack.c.b16 %v1909, %v1904
    %v3300 = vpack.c.b16 %v1910, %v1905
    %v3301 = vpack.c.b16 %v1911, %v1906
    %v3302 = vpack.c.b16 %v1912, %v1907
    %v3303 = vpack.c.b16 %v1918, %v1913
    %v3304 = vpack.c.b16 %v1919, %v1914
    %v3305 = vpack.c.b16 %v1920, %v1915
    %v3306 = vpack.c.b16 %v1921, %v1916
    %v3307 = vpack.c.b16 %v1922, %v1917
    %v3308 = vpack.c.b16 %v1928, %v1923
    %v3309 = vpack.c.b16 %v1929, %v1924
    %v3310 = vpack.c.b16 %v1930, %v1925
    %v3311 = vpack.c.b16 %v1931, %v1926
    %v3312 = vpack.c.b16 %v1932, %v1927
    %v3313 = vpack.c.b16 %v1938, %v1933
    %v3314 = vpack.c.b16 %v1939, %v1934
    %v3315 = vpack.c.b16 %v1940, %v1935
    %v3316 = vpack.c.b16 %v1941, %v1936
    %v3317 = vpack.c.b16 %v1942, %v1937
    %v3318 = vpack.c.b16 %v1948, %v1943
    %v3319 = vpack.c.b16 %v1949, %v1944
    %v3320 = vpack.c.b16 %v1950, %v1945
    %v3321 = vpack.c.b16 %v1951, %v1946
    %v3322 = vpack.c.b16 %v1952, %v1947
    %v3323 = vpack.c.b16 %v1958, %v1953
    %v3324 = vpack.c.b16 %v1959, %v1954
    %v3325 = vpack.c.b16 %v1960, %v1955
    %v3326 = vpack.c.b16 %v1961, %v1956
    %v3327 = vpack.c.b16 %v1962, %v1957
    %v3328 = vpack.c.b16 %v1968, %v1963
    %v3329 = vpack.c.b16 %v1969, %v1964
    %v3330 = vpack.c.b16 %v1970, %v1965
    %v3331 = vpack.c.b16 %v1971, %v1966
    %v3332 = vpack.c.b16 %v1972, %v1967
    %v3333 = vpack.c.b16 %v1978, %v1973
    %v3334 = vpack.c.b16 %v1979, %v1974
    %v3335 = vpack.c.b16 %v1980, %v1975
    %v3336 = vpack.c.b16 %v1981, %v1976
    %v3337 = vpack.c.b16 %v1982, %v1977
    %v3338 = vpack.c.b16 %v1988, %v1983
    %v3339 = vpack.c.b16 %v1989, %v1984
    %v3340 = vpack.c.b16 %v1990, %v1985
    %v3341 = vpack.c.b16 %v1991, %v1986
    %v3342 = vpack.c.b16 %v1992, %v1987
    %v3343 = vpack.c.b16 %v1998, %v1993
    %v3344 = vpack.c.b16 %v1999, %v1994
    %v3345 = vpack.c.b16 %v2000, %v1995
    %v3346 = vpack.c.b16 %v2001, %v1996
    %v3347 = vpack.c.b16 %v2002, %v1997
    %v3348 = vpack.c.b16 %v2008, %v2003
    %v3349 = vpack.c.b16 %v2009, %v2004
    %v3350 = vpack.c.b16 %v2010, %v2005
    %v3351 = vpack.c.b16 %v2011, %v2006
    %v3352 = vpack.c.b16 %v2012, %v2007
    %v3353 = vpack.c.b16 %v2018, %v2013
    %v3354 = vpack.c.b16 %v2019, %v2014
    %v3355 = vpack.c.b16 %v2020, %v2015
    %v3356 = vpack.c.b16 %v2021, %v2016
    %v3357 = vpack.c.b16 %v2022, %v2017
    %v3358 = vpack.c.b16 %v2028, %v2023
    %v3359 = vpack.c.b16 %v2029, %v2024
    %v3360 = vpack.c.b16 %v2030, %v2025
    %v3361 = vpack.c.b16 %v2031, %v2026
    %v3362 = vpack.c.b16 %v2032, %v2027
    %v3363 = vpack.c.b16 %v2038, %v2033
    %v3364 = vpack.c.b16 %v2039, %v2034
    %v3365 = vpack.c.b16 %v2040, %v2035
    %v3366 = vpack.c.b16 %v2041, %v2036
    %v3367 = vpack.c.b16 %v2042, %v2037
    %v3368 = vpack.c.b16 %v2048, %v2043
    %v3369 = vpack.c.b16 %v2049, %v2044
    %v3370 = vpack.c.b16 %v2050, %v2045
    %v3371 = vpack.c.b16 %v2051, %v2046
    %v3372 = vpack.c.b16 %v2052, %v2047
    %v3373 = vpack.c.b16 %v2058, %v2053
    %v3374 = vpack.c.b16 %v2059, %v2054
    %v3375 = vpack.c.b16 %v2060, %v2055
    %v3376 = vpack.c.b16 %v2061, %v2056
    %v3377 = vpack.c.b16 %v2062, %v2057
    %v3378 = vpack.c.b16 %v2068, %v2063
    %v3379 = vpack.c.b16 %v2069, %v2064
    %v3380 = vpack.c.b16 %v2070, %v2065
    %v3381 = vpack.c.b16 %v2071, %v2066
    %v3382 = vpack.c.b16 %v2072, %v2067
    %v3383 = vpack.c.b16 %v2078, %v2073
    %v3384 = vpack.c.b16 %v2079, %v2074
    %v3385 = vpack.c.b16 %v2080, %v2075
    %v3386 = vpack.c.b16 %v2081, %v2076
    %v3387 = vpack.c.b16 %v2082, %v2077
    %v3388 = vpack.c.b16 %v2088, %v2083
    %v3389 = vpack.c.b16 %v2089, %v2084
    %v3390 = vpack.c.b16 %v2090, %v2085
    %v3391 = vpack.c.b16 %v2091, %v2086
    %v3392 = vpack.c.b16 %v2092, %v2087
    %v3393 = vpack.c.b16 %v2098, %v2093
    %v3394 = vpack.c.b16 %v2099, %v2094
    %v3395 = vpack.c.b16 %v2100, %v2095
    %v3396 = vpack.c.b16 %v2101, %v2096
    %v3397 = vpack.c.b16 %v2102, %v2097
    %v3398 = vpack.c.b16 %v2108, %v2103
    %v3399 = vpack.c.b16 %v2109, %v2104
    %v3400 = vpack.c.b16 %v2110, %v2105
    %v3401 = vpack.c.b16 %v2111, %v2106
    %v3402 = vpack.c.b16 %v2112, %v2107
    %v3403 = vpack.c.b16 %v2118, %v2113
    %v3404 = vpack.c.b16 %v2119, %v2114
    %v3405 = vpack.c.b16 %v2120, %v2115
    %v3406 = vpack.c.b16 %v2121, %v2116
    %v3407 = vpack.c.b16 %v2122, %v2117
    %v3408 = vpack.c.b16 %v2128, %v2123
    %v3409 = vpack.c.b16 %v2129, %v2124
    %v3410 = vpack.c.b16 %v2130, %v2125
    %v3411 = vpack.c.b16 %v2131, %v2126
    %v3412 = vpack.c.b16 %v2132, %v2127
    %v3413 = vpack.c.b16 %v2138, %v2133
    %v3414 = vpack.c.b16 %v2139, %v2134
    %v3415 = vpack.c.b16 %v2140, %v2135
    %v3416 = vpack.c.b16 %v2141, %v2136
    %v3417 = vpack.c.b16 %v2142, %v2137
    %v3418 = vpack.c.b16 %v2148, %v2143
    %v3419 = vpack.c.b16 %v2149, %v2144
    %v3420 = vpack.c.b16 %v2150, %v2145
    %v3421 = vpack.c.b16 %v2151, %v2146
    %v3422 = vpack.c.b16 %v2152, %v2147
    %v3423 = vpack.c.b16 %v2158, %v2153
    %v3424 = vpack.c.b16 %v2159, %v2154
    %v3425 = vpack.c.b16 %v2160, %v2155
    %v3426 = vpack.c.b16 %v2161, %v2156
    %v3427 = vpack.c.b16 %v2162, %v2157
    %v3428 = vpack.c.b16 %v2168, %v2163
    %v3429 = vpack.c.b16 %v2169, %v2164
    %v3430 = vpack.c.b16 %v2170, %v2165
    %v3431 = vpack.c.b16 %v2171, %v2166
    %v3432 = vpack.c.b16 %v2172, %v2167
    %v3433 = vpack.c.b16 %v2178, %v2173
    %v3434 = vpack.c.b16 %v2179, %v2174
    %v3435 = vpack.c.b16 %v2180, %v2175
    %v3436 = vpack.c.b16 %v2181, %v2176
    %v3437 = vpack.c.b16 %v2182, %v2177
    %v3438 = vpack.c.b16 %v2188, %v2183
    %v3439 = vpack.c.b16 %v2189, %v2184
    %v3440 = vpack.c.b16 %v2190, %v2185
    %v3441 = vpack.c.b16 %v2191, %v2186
    %v3442 = vpack.c.b16 %v2192, %v2187
    %v3443 = vpack.c.b16 %v2198, %v2193
    %v3444 = vpack.c.b16 %v2199, %v2194
    %v3445 = vpack.c.b16 %v2200, %v2195
    %v3446 = vpack.c.b16 %v2201, %v2196
    %v3447 = vpack.c.b16 %v2202, %v2197
    %v3448 = vpack.c.b16 %v2208, %v2203
    %v3449 = vpack.c.b16 %v2209, %v2204
    %v3450 = vpack.c.b16 %v2210, %v2205
    %v3451 = vpack.c.b16 %v2211, %v2206
    %v3452 = vpack.c.b16 %v2212, %v2207
    %v3453 = vpack.c.b16 %v2218, %v2213
    %v3454 = vpack.c.b16 %v2219, %v2214
    %v3455 = vpack.c.b16 %v2220, %v2215
    %v3456 = vpack.c.b16 %v2221, %v2216
    %v3457 = vpack.c.b16 %v2222, %v2217
    %v3458 = vpack.c.b16 %v2228, %v2223
    %v3459 = vpack.c.b16 %v2229, %v2224
    %v3460 = vpack.c.b16 %v2230, %v2225
    %v3461 = vpack.c.b16 %v2231, %v2226
    %v3462 = vpack.c.b16 %v2232, %v2227
    %v3463 = vpack.c.b16 %v2238, %v2233
    %v3464 = vpack.c.b16 %v2239, %v2234
    %v3465 = vpack.c.b16 %v2240, %v2235
    %v3466 = vpack.c.b16 %v2241, %v2236
    %v3467 = vpack.c.b16 %v2242, %v2237
    %v3468 = vpack.c.b16 %v2248, %v2243
    %v3469 = vpack.c.b16 %v2249, %v2244
    %v3470 = vpack.c.b16 %v2250, %v2245
    %v3471 = vpack.c.b16 %v2251, %v2246
    %v3472 = vpack.c.b16 %v2252, %v2247
    %v3473 = vpack.c.b16 %v2258, %v2253
    %v3474 = vpack.c.b16 %v2259, %v2254
    %v3475 = vpack.c.b16 %v2260, %v2255
    %v3476 = vpack.c.b16 %v2261, %v2256
    %v3477 = vpack.c.b16 %v2262, %v2257
    %v3478 = vpack.c.b16 %v2268, %v2263
    %v3479 = vpack.c.b16 %v2269, %v2264
    %v3480 = vpack.c.b16 %v2270, %v2265
    %v3481 = vpack.c.b16 %v2271, %v2266
    %v3482 = vpack.c.b16 %v2272, %v2267
    %v3483 = vpack.c.b16 %v2278, %v2273
    %v3484 = vpack.c.b16 %v2279, %v2274
    %v3485 = vpack.c.b16 %v2280, %v2275
    %v3486 = vpack.c.b16 %v2281, %v2276
    %v3487 = vpack.c.b16 %v2282, %v2277
    %v3488 = vpack.c.b16 %v2288, %v2283
    %v3489 = vpack.c.b16 %v2289, %v2284
    %v3490 = vpack.c.b16 %v2290, %v2285
    %v3491 = vpack.c.b16 %v2291, %v2286
    %v3492 = vpack.c.b16 %v2292, %v2287
    %v3493 = vpack.c.b16 %v2298, %v2293
    %v3494 = vpack.c.b16 %v2299, %v2294
    %v3495 = vpack.c.b16 %v2300, %v2295
    %v3496 = vpack.c.b16 %v2301, %v2296
    %v3497 = vpack.c.b16 %v2302, %v2297
    %v3498 = vpack.c.b16 %v2308, %v2303
    %v3499 = vpack.c.b16 %v2309, %v2304
    %v3500 = vpack.c.b16 %v2310, %v2305
    %v3501 = vpack.c.b16 %v2311, %v2306
    %v3502 = vpack.c.b16 %v2312, %v2307
    %v3503 = vpack.c.b16 %v2318, %v2313
    %v3504 = vpack.c.b16 %v2319, %v2314
    %v3505 = vpack.c.b16 %v2320, %v2315
    %v3506 = vpack.c.b16 %v2321, %v2316
    %v3507 = vpack.c.b16 %v2322, %v2317
    %v3508 = vpack.c.b16 %v2328, %v2323
    %v3509 = vpack.c.b16 %v2329, %v2324
    %v3510 = vpack.c.b16 %v2330, %v2325
    %v3511 = vpack.c.b16 %v2331, %v2326
    %v3512 = vpack.c.b16 %v2332, %v2327
    %v3513 = vpack.c.b16 %v2338, %v2333
    %v3514 = vpack.c.b16 %v2339, %v2334
    %v3515 = vpack.c.b16 %v2340, %v2335
    %v3516 = vpack.c.b16 %v2341, %v2336
    %v3517 = vpack.c.b16 %v2342, %v2337
    %v3518 = vpack.c.b16 %v2348, %v2343
    %v3519 = vpack.c.b16 %v2349, %v2344
    %v3520 = vpack.c.b16 %v2350, %v2345
    %v3521 = vpack.c.b16 %v2351, %v2346
    %v3522 = vpack.c.b16 %v2352, %v2347
    %v3523 = vpack.c.b16 %v2358, %v2353
    %v3524 = vpack.c.b16 %v2359, %v2354
    %v3525 = vpack.c.b16 %v2360, %v2355
    %v3526 = vpack.c.b16 %v2361, %v2356
    %v3527 = vpack.c.b16 %v2362, %v2357
    %v3528 = vpack.c.b16 %v2368, %v2363
    %v3529 = vpack.c.b16 %v2369, %v2364
    %v3530 = vpack.c.b16 %v2370, %v2365
    %v3531 = vpack.c.b16 %v2371, %v2366
    %v3532 = vpack.c.b16 %v2372, %v2367
    %v3533 = vpack.c.b16 %v2378, %v2373
    %v3534 = vpack.c.b16 %v2379, %v2374
    %v3535 = vpack.c.b16 %v2380, %v2375
    %v3536 = vpack.c.b16 %v2381, %v2376
    %v3537 = vpack.c.b16 %v2382, %v2377
    %v3538 = vpack.c.b16 %v2388, %v2383
    %v3539 = vpack.c.b16 %v2389, %v2384
    %v3540 = vpack.c.b16 %v2390, %v2385
    %v3541 = vpack.c.b16 %v2391, %v2386
    %v3542 = vpack.c.b16 %v2392, %v2387
    %v3543 = vpack.c.b16 %v2398, %v2393
    %v3544 = vpack.c.b16 %v2399, %v2394
    %v3545 = vpack.c.b16 %v2400, %v2395
    %v3546 = vpack.c.b16 %v2401, %v2396
    %v3547 = vpack.c.b16 %v2402, %v2397
    %v3548 = vpack.c.b16 %v2408, %v2403
    %v3549 = vpack.c.b16 %v2409, %v2404
    %v3550 = vpack.c.b16 %v2410, %v2405
    %v3551 = vpack.c.b16 %v2411, %v2406
    %v3552 = vpack.c.b16 %v2412, %v2407
    %v3553 = vpack.c.b16 %v2418, %v2413
    %v3554 = vpack.c.b16 %v2419, %v2414
    %v3555 = vpack.c.b16 %v2420, %v2415
    %v3556 = vpack.c.b16 %v2421, %v2416
    %v3557 = vpack.c.b16 %v2422, %v2417
    %v3558 = vpack.c.b16 %v2428, %v2423
    %v3559 = vpack.c.b16 %v2429, %v2424
    %v3560 = vpack.c.b16 %v2430, %v2425
    %v3561 = vpack.c.b16 %v2431, %v2426
    %v3562 = vpack.c.b16 %v2432, %v2427
    %v3563 = vpack.c.b16 %v2438, %v2433
    %v3564 = vpack.c.b16 %v2439, %v2434
    %v3565 = vpack.c.b16 %v2440, %v2435
    %v3566 = vpack.c.b16 %v2441, %v2436
    %v3567 = vpack.c.b16 %v2442, %v2437
    %v3568 = vpack.c.b16 %v2448, %v2443
    %v3569 = vpack.c.b16 %v2449, %v2444
    %v3570 = vpack.c.b16 %v2450, %v2445
    %v3571 = vpack.c.b16 %v2451, %v2446
    %v3572 = vpack.c.b16 %v2452, %v2447
    %v3573 = vpack.c.b16 %v2458, %v2453
    %v3574 = vpack.c.b16 %v2459, %v2454
    %v3575 = vpack.c.b16 %v2460, %v2455
    %v3576 = vpack.c.b16 %v2461, %v2456
    %v3577 = vpack.c.b16 %v2462, %v2457
    %v3578 = vpack.c.b16 %v2468, %v2463
    %v3579 = vpack.c.b16 %v2469, %v2464
    %v3580 = vpack.c.b16 %v2470, %v2465
    %v3581 = vpack.c.b16 %v2471, %v2466
    %v3582 = vpack.c.b16 %v2472, %v2467
    %v3583 = vpack.c.b16 %v2478, %v2473
    %v3584 = vpack.c.b16 %v2479, %v2474
    %v3585 = vpack.c.b16 %v2480, %v2475
    %v3586 = vpack.c.b16 %v2481, %v2476
    %v3587 = vpack.c.b16 %v2482, %v2477
    %v3588 = vpack.c.b16 %v2488, %v2483
    %v3589 = vpack.c.b16 %v2489, %v2484
    %v3590 = vpack.c.b16 %v2490, %v2485
    %v3591 = vpack.c.b16 %v2491, %v2486
    %v3592 = vpack.c.b16 %v2492, %v2487
    %v3593 = vpack.c.b16 %v2498, %v2493
    %v3594 = vpack.c.b16 %v2499, %v2494
    %v3595 = vpack.c.b16 %v2500, %v2495
    %v3596 = vpack.c.b16 %v2501, %v2496
    %v3597 = vpack.c.b16 %v2502, %v2497
    %v3598 = vpack.c.b16 %v2508, %v2503
    %v3599 = vpack.c.b16 %v2509, %v2504
    %v3600 = vpack.c.b16 %v2510, %v2505
    %v3601 = vpack.c.b16 %v2511, %v2506
    %v3602 = vpack.c.b16 %v2512, %v2507
    %v3603 = vpack.c.b16 %v2518, %v2513
    %v3604 = vpack.c.b16 %v2519, %v2514
    %v3605 = vpack.c.b16 %v2520, %v2515
    %v3606 = vpack.c.b16 %v2521, %v2516
    %v3607 = vpack.c.b16 %v2522, %v2517
    %v3608 = vpack.c.b16 %v2528, %v2523
    %v3609 = vpack.c.b16 %v2529, %v2524
    %v3610 = vpack.c.b16 %v2530, %v2525
    %v3611 = vpack.c.b16 %v2531, %v2526
    %v3612 = vpack.c.b16 %v2532, %v2527
    %v3613 = vpack.c.b16 %v2538, %v2533
    %v3614 = vpack.c.b16 %v2539, %v2534
    %v3615 = vpack.c.b16 %v2540, %v2535
    %v3616 = vpack.c.b16 %v2541, %v2536
    %v3617 = vpack.c.b16 %v2542, %v2537
    %v3618 = vpack.c.b16 %v2548, %v2543
    %v3619 = vpack.c.b16 %v2549, %v2544
    %v3620 = vpack.c.b16 %v2550, %v2545
    %v3621 = vpack.c.b16 %v2551, %v2546
    %v3622 = vpack.c.b16 %v2552, %v2547
    %v3623 = vpack.c.b16 %v2558, %v2553
    %v3624 = vpack.c.b16 %v2559, %v2554
    %v3625 = vpack.c.b16 %v2560, %v2555
    %v3626 = vpack.c.b16 %v2561, %v2556
    %v3627 = vpack.c.b16 %v2562, %v2557
    %v3628 = vpack.c.b16 %v2568, %v2563
    %v3629 = vpack.c.b16 %v2569, %v2564
    %v3630 = vpack.c.b16 %v2570, %v2565
    %v3631 = vpack.c.b16 %v2571, %v2566
    %v3632 = vpack.c.b16 %v2572, %v2567
    %v3633 = vpack.c.b16 %v2578, %v2573
    %v3634 = vpack.c.b16 %v2579, %v2574
    %v3635 = vpack.c.b16 %v2580, %v2575
    %v3636 = vpack.c.b16 %v2581, %v2576
    %v3637 = vpack.c.b16 %v2582, %v2577
    %v3638 = vpack.c.b16 %v2588, %v2583
    %v3639 = vpack.c.b16 %v2589, %v2584
    %v3640 = vpack.c.b16 %v2590, %v2585
    %v3641 = vpack.c.b16 %v2591, %v2586
    %v3642 = vpack.c.b16 %v2592, %v2587
    %v3643 = vpack.c.b16 %v2598, %v2593
    %v3644 = vpack.c.b16 %v2599, %v2594
    %v3645 = vpack.c.b16 %v2600, %v2595
    %v3646 = vpack.c.b16 %v2601, %v2596
    %v3647 = vpack.c.b16 %v2602, %v2597
    %v3648 = vpack.c.b16 %v2608, %v2603
    %v3649 = vpack.c.b16 %v2609, %v2604
    %v3650 = vpack.c.b16 %v2610, %v2605
    %v3651 = vpack.c.b16 %v2611, %v2606
    %v3652 = vpack.c.b16 %v2612, %v2607
    %v3653 = vpack.c.b16 %v2618, %v2613
    %v3654 = vpack.c.b16 %v2619, %v2614
    %v3655 = vpack.c.b16 %v2620, %v2615
    %v3656 = vpack.c.b16 %v2621, %v2616
    %v3657 = vpack.c.b16 %v2622, %v2617
    %v3658 = vpack.c.b16 %v2628, %v2623
    %v3659 = vpack.c.b16 %v2629, %v2624
    %v3660 = vpack.c.b16 %v2630, %v2625
    %v3661 = vpack.c.b16 %v2631, %v2626
    %v3662 = vpack.c.b16 %v2632, %v2627
    %v3663 = vpack.c.b16 %v2638, %v2633
    %v3664 = vpack.c.b16 %v2639, %v2634
    %v3665 = vpack.c.b16 %v2640, %v2635
    %v3666 = vpack.c.b16 %v2641, %v2636
    %v3667 = vpack.c.b16 %v2642, %v2637
    %v3668 = vpack.c.b16 %v2648, %v2643
    %v3669 = vpack.c.b16 %v2649, %v2644
    %v3670 = vpack.c.b16 %v2650, %v2645
    %v3671 = vpack.c.b16 %v2651, %v2646
    %v3672 = vpack.c.b16 %v2652, %v2647
    %v3673 = vpack.c.b16 %v2658, %v2653
    %v3674 = vpack.c.b16 %v2659, %v2654
    %v3675 = vpack.c.b16 %v2660, %v2655
    %v3676 = vpack.c.b16 %v2661, %v2656
    %v3677 = vpack.c.b16 %v2662, %v2657
    %v3678 = vpack.c.b16 %v2668, %v2663
    %v3679 = vpack.c.b16 %v2669, %v2664
    %v3680 = vpack.c.b16 %v2670, %v2665
    %v3681 = vpack.c.b16 %v2671, %v2666
    %v3682 = vpack.c.b16 %v2672, %v2667
    %v3683 = vpack.c.b16 %v2678, %v2673
    %v3684 = vpack.c.b16 %v2679, %v2674
    %v3685 = vpack.c.b16 %v2680, %v2675
    %v3686 = vpack.c.b16 %v2681, %v2676
    %v3687 = vpack.c.b16 %v2682, %v2677
    %v3688 = vpack.c.b16 %v2688, %v2683
    %v3689 = vpack.c.b16 %v2689, %v2684
    %v3690 = vpack.c.b16 %v2690, %v2685
    %v3691 = vpack.c.b16 %v2691, %v2686
    %v3692 = vpack.c.b16 %v2692, %v2687
    %v3693 = vpack.c.b16 %v2698, %v2693
    %v3694 = vpack.c.b16 %v2699, %v2694
    %v3695 = vpack.c.b16 %v2700, %v2695
    %v3696 = vpack.c.b16 %v2701, %v2696
    %v3697 = vpack.c.b16 %v2702, %v2697
    %v3698 = vpack.c.b16 %v2708, %v2703
    %v3699 = vpack.c.b16 %v2709, %v2704
    %v3700 = vpack.c.b16 %v2710, %v2705
    %v3701 = vpack.c.b16 %v2711, %v2706
    %v3702 = vpack.c.b16 %v2712, %v2707
    %v3703 = vpack.c.b16 %v2718, %v2713
    %v3704 = vpack.c.b16 %v2719, %v2714
    %v3705 = vpack.c.b16 %v2720, %v2715
    %v3706 = vpack.c.b16 %v2721, %v2716
    %v3707 = vpack.c.b16 %v2722, %v2717
    %v3708 = vpack.c.b16 %v2728, %v2723
    %v3709 = vpack.c.b16 %v2729, %v2724
    %v3710 = vpack.c.b16 %v2730, %v2725
    %v3711 = vpack.c.b16 %v2731, %v2726
    %v3712 = vpack.c.b16 %v2732, %v2727
    %v3713 = vpack.c.b16 %v2738, %v2733
    %v3714 = vpack.c.b16 %v2739, %v2734
    %v3715 = vpack.c.b16 %v2740, %v2735
    %v3716 = vpack.c.b16 %v2741, %v2736
    %v3717 = vpack.c.b16 %v2742, %v2737
    %v3718 = vpack.c.b16 %v2748, %v2743
    %v3719 = vpack.c.b16 %v2749, %v2744
    %v3720 = vpack.c.b16 %v2750, %v2745
    %v3721 = vpack.c.b16 %v2751, %v2746
    %v3722 = vpack.c.b16 %v2752, %v2747
    %v3723 = vpack.c.b16 %v2758, %v2753
    %v3724 = vpack.c.b16 %v2759, %v2754
    %v3725 = vpack.c.b16 %v2760, %v2755
    %v3726 = vpack.c.b16 %v2761, %v2756
    %v3727 = vpack.c.b16 %v2762, %v2757
    %v3728 = vpack.c.b16 %v2768, %v2763
    %v3729 = vpack.c.b16 %v2769, %v2764
    %v3730 = vpack.c.b16 %v2770, %v2765
    %v3731 = vpack.c.b16 %v2771, %v2766
    %v3732 = vpack.c.b16 %v2772, %v2767
    %v3733 = vpack.c.b16 %v2778, %v2773
    %v3734 = vpack.c.b16 %v2779, %v2774
    %v3735 = vpack.c.b16 %v2780, %v2775
    %v3736 = vpack.c.b16 %v2781, %v2776
    %v3737 = vpack.c.b16 %v2782, %v2777
    %v3738 = vpack.c.b16 %v2788, %v2783
    %v3739 = vpack.c.b16 %v2789, %v2784
    %v3740 = vpack.c.b16 %v2790, %v2785
    %v3741 = vpack.c.b16 %v2791, %v2786
    %v3742 = vpack.c.b16 %v2792, %v2787
    %v3743 = vpack.c.b16 %v2798, %v2793
    %v3744 = vpack.c.b16 %v2799, %v2794
    %v3745 = vpack.c.b16 %v2800, %v2795
    %v3746 = vpack.c.b16 %v2801, %v2796
    %v3747 = vpack.c.b16 %v2802, %v2797
    %v3748 = vpack.c.b16 %v2808, %v2803
    %v3749 = vpack.c.b16 %v2809, %v2804
    %v3750 = vpack.c.b16 %v2810, %v2805
    %v3751 = vpack.c.b16 %v2811, %v2806
    %v3752 = vpack.c.b16 %v2812, %v2807
    %v3753 = vpack.c.b16 %v2818, %v2813
    %v3754 = vpack.c.b16 %v2819, %v2814
    %v3755 = vpack.c.b16 %v2820, %v2815
    %v3756 = vpack.c.b16 %v2821, %v2816
    %v3757 = vpack.c.b16 %v2822, %v2817
    %v3758 = vpack.c.b16 %v2828, %v2823
    %v3759 = vpack.c.b16 %v2829, %v2824
    %v3760 = vpack.c.b16 %v2830, %v2825
    %v3761 = vpack.c.b16 %v2831, %v2826
    %v3762 = vpack.c.b16 %v2832, %v2827
    %v3763 = vpack.c.b16 %v2838, %v2833
    %v3764 = vpack.c.b16 %v2839, %v2834
    %v3765 = vpack.c.b16 %v2840, %v2835
    %v3766 = vpack.c.b16 %v2841, %v2836
    %v3767 = vpack.c.b16 %v2842, %v2837
    %v3768 = vpack.c.b16 %v2848, %v2843
    %v3769 = vpack.c.b16 %v2849, %v2844
    %v3770 = vpack.c.b16 %v2850, %v2845
    %v3771 = vpack.c.b16 %v2851, %v2846
    %v3772 = vpack.c.b16 %v2852, %v2847
    %v3773 = vpack.c.b16 %v2858, %v2853
    %v3774 = vpack.c.b16 %v2859, %v2854
    %v3775 = vpack.c.b16 %v2860, %v2855
    %v3776 = vpack.c.b16 %v2861, %v2856
    %v3777 = vpack.c.b16 %v2862, %v2857
    %v3778 = vpack.c.b16 %v2868, %v2863
    %v3779 = vpack.c.b16 %v2869, %v2864
    %v3780 = vpack.c.b16 %v2870, %v2865
    %v3781 = vpack.c.b16 %v2871, %v2866
    %v3782 = vpack.c.b16 %v2872, %v2867
    %v3783 = vpack.c.b16 %v2878, %v2873
    %v3784 = vpack.c.b16 %v2879, %v2874
    %v3785 = vpack.c.b16 %v2880, %v2875
    %v3786 = vpack.c.b16 %v2881, %v2876
    %v3787 = vpack.c.b16 %v2882, %v2877
    %v3788 = vpack.c.b16 %v2888, %v2883
    %v3789 = vpack.c.b16 %v2889, %v2884
    %v3790 = vpack.c.b16 %v2890, %v2885
    %v3791 = vpack.c.b16 %v2891, %v2886
    %v3792 = vpack.c.b16 %v2892, %v2887
    %v3793 = vpack.c.b16 %v2898, %v2893
    %v3794 = vpack.c.b16 %v2899, %v2894
    %v3795 = vpack.c.b16 %v2900, %v2895
    %v3796 = vpack.c.b16 %v2901, %v2896
    %v3797 = vpack.c.b16 %v2902, %v2897
    %v3798 = vpack.c.b16 %v2908, %v2903
    %v3799 = vpack.c.b16 %v2909, %v2904
    %v3800 = vpack.c.b16 %v2910, %v2905
    %v3801 = vpack.c.b16 %v2911, %v2906
    %v3802 = vpack.c.b16 %v2912, %v2907
    %v3803 = vpack.c.b16 %v2918, %v2913
    %v3804 = vpack.c.b16 %v2919, %v2914
    %v3805 = vpack.c.b16 %v2920, %v2915
    %v3806 = vpack.c.b16 %v2921, %v2916
    %v3807 = vpack.c.b16 %v2922, %v2917
    %v3808 = vpack.c.b16 %v2928, %v2923
    %v3809 = vpack.c.b16 %v2929, %v2924
    %v3810 = vpack.c.b16 %v2930, %v2925
    %v3811 = vpack.c.b16 %v2931, %v2926
    %v3812 = vpack.c.b16 %v2932, %v2927
    %v3813 = vpack.c.b16 %v2938, %v2933
    %v3814 = vpack.c.b16 %v2939, %v2934
    %v3815 = vpack.c.b16 %v2940, %v2935
    %v3816 = vpack.c.b16 %v2941, %v2936
    %v3817 = vpack.c.b16 %v2942, %v2937
    %v3818 = vpack.c.b16 %v2948, %v2943
    %v3819 = vpack.c.b16 %v2949, %v2944
    %v3820 = vpack.c.b16 %v2950, %v2945
    %v3821 = vpack.c.b16 %v2951, %v2946
    %v3822 = vpack.c.b16 %v2952, %v2947
    %v3823 = vpack.c.b16 %v2958, %v2953
    %v3824 = vpack.c.b16 %v2959, %v2954
    %v3825 = vpack.c.b16 %v2960, %v2955
    %v3826 = vpack.c.b16 %v2961, %v2956
    %v3827 = vpack.c.b16 %v2962, %v2957
    %v3828 = vpack.c.b16 %v2968, %v2963
    %v3829 = vpack.c.b16 %v2969, %v2964
    %v3830 = vpack.c.b16 %v2970, %v2965
    %v3831 = vpack.c.b16 %v2971, %v2966
    %v3832 = vpack.c.b16 %v2972, %v2967
    %v3833 = vpack.c.b16 %v2978, %v2973
    %v3834 = vpack.c.b16 %v2979, %v2974
    %v3835 = vpack.c.b16 %v2980, %v2975
    %v3836 = vpack.c.b16 %v2981, %v2976
    %v3837 = vpack.c.b16 %v2982, %v2977
    %v3838 = vpack.c.b16 %v2988, %v2983
    %v3839 = vpack.c.b16 %v2989, %v2984
    %v3840 = vpack.c.b16 %v2990, %v2985
    %v3841 = vpack.c.b16 %v2991, %v2986
    %v3842 = vpack.c.b16 %v2992, %v2987
    %v3843 = vpack.c.b16 %v2998, %v2993
    %v3844 = vpack.c.b16 %v2999, %v2994
    %v3845 = vpack.c.b16 %v3000, %v2995
    %v3846 = vpack.c.b16 %v3001, %v2996
    %v3847 = vpack.c.b16 %v3002, %v2997
    %v3848 = vpack.c.b16 %v3008, %v3003
    %v3849 = vpack.c.b16 %v3009, %v3004
    %v3850 = vpack.c.b16 %v3010, %v3005
    %v3851 = vpack.c.b16 %v3011, %v3006
    %v3852 = vpack.c.b16 %v3012, %v3007
    %v3853 = vpack.c.b16 %v3018, %v3013
    %v3854 = vpack.c.b16 %v3019, %v3014
    %v3855 = vpack.c.b16 %v3020, %v3015
    %v3856 = vpack.c.b16 %v3021, %v3016
    %v3857 = vpack.c.b16 %v3022, %v3017
    %v3858 = vpack.c.b16 %v3028, %v3023
    %v3859 = vpack.c.b16 %v3029, %v3024
    %v3860 = vpack.c.b16 %v3030, %v3025
    %v3861 = vpack.c.b16 %v3031, %v3026
    %v3862 = vpack.c.b16 %v3032, %v3027
    %v3863 = vpack.c.b16 %v3038, %v3033
    %v3864 = vpack.c.b16 %v3039, %v3034
    %v3865 = vpack.c.b16 %v3040, %v3035
    %v3866 = vpack.c.b16 %v3041, %v3036
    %v3867 = vpack.c.b16 %v3042, %v3037
    %v3868 = vpack.c.b16 %v3048, %v3043
    %v3869 = vpack.c.b16 %v3049, %v3044
    %v3870 = vpack.c.b16 %v3050, %v3045
    %v3871 = vpack.c.b16 %v3051, %v3046
    %v3872 = vpack.c.b16 %v3052, %v3047
    %v3873 = vpack.c.b16 %v3058, %v3053
    %v3874 = vpack.c.b16 %v3059, %v3054
    %v3875 = vpack.c.b16 %v3060, %v3055
    %v3876 = vpack.c.b16 %v3061, %v3056
    %v3877 = vpack.c.b16 %v3062, %v3057
    %v3878 = vpack.c.b16 %v3068, %v3063
    %v3879 = vpack.c.b16 %v3069, %v3064
    %v3880 = vpack.c.b16 %v3070, %v3065
    %v3881 = vpack.c.b16 %v3071, %v3066
    %v3882 = vpack.c.b16 %v3072, %v3067
    %v3883 = vpack.c.b16 %v3078, %v3073
    %v3884 = vpack.c.b16 %v3079, %v3074
    %v3885 = vpack.c.b16 %v3080, %v3075
    %v3886 = vpack.c.b16 %v3081, %v3076
    %v3887 = vpack.c.b16 %v3082, %v3077
    %v3888 = vpack.c.b16 %v3088, %v3083
    %v3889 = vpack.c.b16 %v3089, %v3084
    %v3890 = vpack.c.b16 %v3090, %v3085
    %v3891 = vpack.c.b16 %v3091, %v3086
    %v3892 = vpack.c.b16 %v3092, %v3087
    %v3893 = vpack.c.b16 %v3098, %v3093
    %v3894 = vpack.c.b16 %v3099, %v3094
    %v3895 = vpack.c.b16 %v3100, %v3095
    %v3896 = vpack.c.b16 %v3101, %v3096
    %v3897 = vpack.c.b16 %v3102, %v3097
    %v3898 = vpack.c.b16 %v3108, %v3103
    %v3899 = vpack.c.b16 %v3109, %v3104
    %v3900 = vpack.c.b16 %v3110, %v3105
    %v3901 = vpack.c.b16 %v3111, %v3106
    %v3902 = vpack.c.b16 %v3112, %v3107
    %v3903 = vpack.c.b16 %v3118, %v3113
    %v3904 = vpack.c.b16 %v3119, %v3114
    %v3905 = vpack.c.b16 %v3120, %v3115
    %v3906 = vpack.c.b16 %v3121, %v3116
    %v3907 = vpack.c.b16 %v3122, %v3117
    %v3908 = vpack.c.b16 %v3128, %v3123
    %v3909 = vpack.c.b16 %v3129, %v3124
    %v3910 = vpack.c.b16 %v3130, %v3125
    %v3911 = vpack.c.b16 %v3131, %v3126
    %v3912 = vpack.c.b16 %v3132, %v3127
    %v3913 = vpack.c.b16 %v3138, %v3133
    %v3914 = vpack.c.b16 %v3139, %v3134
    %v3915 = vpack.c.b16 %v3140, %v3135
    %v3916 = vpack.c.b16 %v3141, %v3136
    %v3917 = vpack.c.b16 %v3142, %v3137
    %v3918 = vpack.c.b16 %v3148, %v3143
    %v3919 = vpack.c.b16 %v3149, %v3144
    %v3920 = vpack.c.b16 %v3150, %v3145
    %v3921 = vpack.c.b16 %v3151, %v3146
    %v3922 = vpack.c.b16 %v3152, %v3147
    %v3923 = vpack.c.b16 %v3158, %v3153
    %v3924 = vpack.c.b16 %v3159, %v3154
    %v3925 = vpack.c.b16 %v3160, %v3155
    %v3926 = vpack.c.b16 %v3161, %v3156
    %v3927 = vpack.c.b16 %v3162, %v3157
    %v3928 = vpack.c.b16 %v3168, %v3163
    %v3929 = vpack.c.b16 %v3169, %v3164
    %v3930 = vpack.c.b16 %v3170, %v3165
    %v3931 = vpack.c.b16 %v3171, %v3166
    %v3932 = vpack.c.b16 %v3172, %v3167
    %v3933 = vpack.c.b16 %v3178, %v3173
    %v3934 = vpack.c.b16 %v3179, %v3174
    %v3935 = vpack.c.b16 %v3180, %v3175
    %v3936 = vpack.c.b16 %v3181, %v3176
    %v3937 = vpack.c.b16 %v3182, %v3177
    %v3938 = vpack.c.b16 %v3188, %v3183
    %v3939 = vpack.c.b16 %v3189, %v3184
    %v3940 = vpack.c.b16 %v3190, %v3185
    %v3941 = vpack.c.b16 %v3191, %v3186
    %v3942 = vpack.c.b16 %v3192, %v3187
    %v3943 = vpack.c.b16 %v3198, %v3193
    %v3944 = vpack.c.b16 %v3199, %v3194
    %v3945 = vpack.c.b16 %v3200, %v3195
    %v3946 = vpack.c.b16 %v3201, %v3196
    %v3947 = vpack.c.b16 %v3202, %v3197
    %v3948 = vpack.c.b16 %v3208, %v3203
    %v3949 = vpack.c.b16 %v3209, %v3204
    %v3950 = vpack.c.b16 %v3210, %v3205
    %v3951 = vpack.c.b16 %v3211, %v3206
    %v3952 = vpack.c.b16 %v3212, %v3207
    %v3953 = vpack.c.b16 %v3218, %v3213
    %v3954 = vpack.c.b16 %v3219, %v3214
    %v3955 = vpack.c.b16 %v3220, %v3215
    %v3956 = vpack.c.b16 %v3221, %v3216
    %v3957 = vpack.c.b16 %v3222, %v3217
    %v3958 = vpack.c.b16 %v3228, %v3223
    %v3959 = vpack.c.b16 %v3229, %v3224
    %v3960 = vpack.c.b16 %v3230, %v3225
    %v3961 = vpack.c.b16 %v3231, %v3226
    %v3962 = vpack.c.b16 %v3232, %v3227
    %v3963 = vpack.c.b16 %v3238, %v3233
    %v3964 = vpack.c.b16 %v3239, %v3234
    %v3965 = vpack.c.b16 %v3240, %v3235
    %v3966 = vpack.c.b16 %v3241, %v3236
    %v3967 = vpack.c.b16 %v3242, %v3237
    %v3968 = vpack.c.b16 %v3248, %v3243
    %v3969 = vpack.c.b16 %v3249, %v3244
    %v3970 = vpack.c.b16 %v3250, %v3245
    %v3971 = vpack.c.b16 %v3251, %v3246
    %v3972 = vpack.c.b16 %v3252, %v3247
    %4693 = vmatpush.bf16.msra.mxu0 %v3288
    %4694 = vmatpush.bf16.msra.mxu0 %v3283
    %4695 = vmatpush.bf16.msra.mxu0 %v3278
    %4696 = vmatpush.bf16.msra.mxu0 %v3273
    %4697 = vmatpush.bf16.msra.mxu0 %v3268
    %4698 = vmatpush.bf16.msra.mxu0 %v3263
    %4699 = vmatpush.bf16.msra.mxu0 %v3258
    %4700 = vmatpush.bf16.msra.mxu0 %v3253
    %4701 = vmatmul.bf16.gmra.mxu0 %v909
    %v4702 = vpop.f32.mrf.mxu0
    %v4703 = vadd.f32 %v897, %v4702
    %v4704 = vpop.f32.mrf.mxu0
    %4705 = vdwg.mxu0
    %4706 = vmatpush.bf16.msra.mxu0 %v3328
    %4707 = vmatpush.bf16.msra.mxu0 %v3323
    %4708 = vmatpush.bf16.msra.mxu0 %v3318
    %4709 = vmatpush.bf16.msra.mxu0 %v3313
    %4710 = vmatpush.bf16.msra.mxu0 %v3308
    %4711 = vmatpush.bf16.msra.mxu0 %v3303
    %4712 = vmatpush.bf16.msra.mxu0 %v3298
    %4713 = vmatpush.bf16.msra.mxu0 %v3293
    %4714 = vmatmul.bf16.gmra.mxu0 %v910
    %v4715 = vpop.f32.mrf.mxu0
    %v4716 = vadd.f32 %v4703, %v4715
    %v4717 = vpop.f32.mrf.mxu0
    %4718 = vdwg.mxu0
    %4719 = vmatpush.bf16.msra.mxu0 %v3368
    %4720 = vmatpush.bf16.msra.mxu0 %v3363
    %4721 = vmatpush.bf16.msra.mxu0 %v3358
    %4722 = vmatpush.bf16.msra.mxu0 %v3353
    %4723 = vmatpush.bf16.msra.mxu0 %v3348
    %4724 = vmatpush.bf16.msra.mxu0 %v3343
    %4725 = vmatpush.bf16.msra.mxu0 %v3338
    %4726 = vmatpush.bf16.msra.mxu0 %v3333
    %4727 = vmatmul.bf16.gmra.mxu0 %v911
    %v4728 = vpop.f32.mrf.mxu0
    %v4729 = vadd.f32 %v4716, %v4728
    %v4730 = vpop.f32.mrf.mxu0
    %4731 = vdwg.mxu0
    %4732 = vmatpush.bf16.msra.mxu0 %v3408
    %4733 = vmatpush.bf16.msra.mxu0 %v3403
    %4734 = vmatpush.bf16.msra.mxu0 %v3398
    %4735 = vmatpush.bf16.msra.mxu0 %v3393
    %4736 = vmatpush.bf16.msra.mxu0 %v3388
    %4737 = vmatpush.bf16.msra.mxu0 %v3383
    %4738 = vmatpush.bf16.msra.mxu0 %v3378
    %4739 = vmatpush.bf16.msra.mxu0 %v3373
    %4740 = vmatmul.bf16.gmra.mxu0 %v912
    %v4741 = vpop.f32.mrf.mxu0
    %v4742 = vadd.f32 %v4729, %v4741
    %v4743 = vpop.f32.mrf.mxu0
    %4744 = vdwg.mxu0
    %4745 = vmatpush.bf16.msra.mxu0 %v3448
    %4746 = vmatpush.bf16.msra.mxu0 %v3443
    %4747 = vmatpush.bf16.msra.mxu0 %v3438
    %4748 = vmatpush.bf16.msra.mxu0 %v3433
    %4749 = vmatpush.bf16.msra.mxu0 %v3428
    %4750 = vmatpush.bf16.msra.mxu0 %v3423
    %4751 = vmatpush.bf16.msra.mxu0 %v3418
    %4752 = vmatpush.bf16.msra.mxu0 %v3413
    %4753 = vmatmul.bf16.gmra.mxu0 %v913
    %v4754 = vpop.f32.mrf.mxu0
    %v4755 = vadd.f32 %v4742, %v4754
    %v4756 = vpop.f32.mrf.mxu0
    %4757 = vdwg.mxu0
    %4758 = vmatpush.bf16.msra.mxu0 %v3488
    %4759 = vmatpush.bf16.msra.mxu0 %v3483
    %4760 = vmatpush.bf16.msra.mxu0 %v3478
    %4761 = vmatpush.bf16.msra.mxu0 %v3473
    %4762 = vmatpush.bf16.msra.mxu0 %v3468
    %4763 = vmatpush.bf16.msra.mxu0 %v3463
    %4764 = vmatpush.bf16.msra.mxu0 %v3458
    %4765 = vmatpush.bf16.msra.mxu0 %v3453
    %4766 = vmatmul.bf16.gmra.mxu0 %v914
    %v4767 = vpop.f32.mrf.mxu0
    %v4768 = vadd.f32 %v4755, %v4767
    %v4769 = vpop.f32.mrf.mxu0
    %4770 = vdwg.mxu0
    %4771 = vmatpush.bf16.msra.mxu0 %v3528
    %4772 = vmatpush.bf16.msra.mxu0 %v3523
    %4773 = vmatpush.bf16.msra.mxu0 %v3518
    %4774 = vmatpush.bf16.msra.mxu0 %v3513
    %4775 = vmatpush.bf16.msra.mxu0 %v3508
    %4776 = vmatpush.bf16.msra.mxu0 %v3503
    %4777 = vmatpush.bf16.msra.mxu0 %v3498
    %4778 = vmatpush.bf16.msra.mxu0 %v3493
    %4779 = vmatmul.bf16.gmra.mxu0 %v915
    %v4780 = vpop.f32.mrf.mxu0
    %v4781 = vadd.f32 %v4768, %v4780
    %v4782 = vpop.f32.mrf.mxu0
    %4783 = vdwg.mxu0
    %4784 = vmatpush.bf16.msra.mxu0 %v3568
    %4785 = vmatpush.bf16.msra.mxu0 %v3563
    %4786 = vmatpush.bf16.msra.mxu0 %v3558
    %4787 = vmatpush.bf16.msra.mxu0 %v3553
    %4788 = vmatpush.bf16.msra.mxu0 %v3548
    %4789 = vmatpush.bf16.msra.mxu0 %v3543
    %4790 = vmatpush.bf16.msra.mxu0 %v3538
    %4791 = vmatpush.bf16.msra.mxu0 %v3533
    %4792 = vmatmul.bf16.gmra.mxu0 %v916
    %v4793 = vpop.f32.mrf.mxu0
    %v4794 = vadd.f32 %v4781, %v4793
    %v4795 = vpop.f32.mrf.mxu0
    %4796 = vdwg.mxu0
    %4797 = vmatpush.bf16.msra.mxu0 %v3608
    %4798 = vmatpush.bf16.msra.mxu0 %v3603
    %4799 = vmatpush.bf16.msra.mxu0 %v3598
    %4800 = vmatpush.bf16.msra.mxu0 %v3593
    %4801 = vmatpush.bf16.msra.mxu0 %v3588
    %4802 = vmatpush.bf16.msra.mxu0 %v3583
    %4803 = vmatpush.bf16.msra.mxu0 %v3578
    %4804 = vmatpush.bf16.msra.mxu0 %v3573
    %4805 = vmatmul.bf16.gmra.mxu0 %v919
    %v4806 = vpop.f32.mrf.mxu0
    %v4807 = vadd.f32 %v4794, %v4806
    %v4808 = vpop.f32.mrf.mxu0
    %4809 = vdwg.mxu0
    %4810 = vmatpush.bf16.msra.mxu0 %v3648
    %4811 = vmatpush.bf16.msra.mxu0 %v3643
    %4812 = vmatpush.bf16.msra.mxu0 %v3638
    %4813 = vmatpush.bf16.msra.mxu0 %v3633
    %4814 = vmatpush.bf16.msra.mxu0 %v3628
    %4815 = vmatpush.bf16.msra.mxu0 %v3623
    %4816 = vmatpush.bf16.msra.mxu0 %v3618
    %4817 = vmatpush.bf16.msra.mxu0 %v3613
    %4818 = vmatmul.bf16.gmra.mxu0 %v920
    %v4819 = vpop.f32.mrf.mxu0
    %v4820 = vadd.f32 %v4807, %v4819
    %v4821 = vpop.f32.mrf.mxu0
    %4822 = vdwg.mxu0
    %4823 = vmatpush.bf16.msra.mxu0 %v3688
    %4824 = vmatpush.bf16.msra.mxu0 %v3683
    %4825 = vmatpush.bf16.msra.mxu0 %v3678
    %4826 = vmatpush.bf16.msra.mxu0 %v3673
    %4827 = vmatpush.bf16.msra.mxu0 %v3668
    %4828 = vmatpush.bf16.msra.mxu0 %v3663
    %4829 = vmatpush.bf16.msra.mxu0 %v3658
    %4830 = vmatpush.bf16.msra.mxu0 %v3653
    %4831 = vmatmul.bf16.gmra.mxu0 %v921
    %v4832 = vpop.f32.mrf.mxu0
    %v4833 = vadd.f32 %v4820, %v4832
    %v4834 = vpop.f32.mrf.mxu0
    %4835 = vdwg.mxu0
    %4836 = vmatpush.bf16.msra.mxu0 %v3728
    %4837 = vmatpush.bf16.msra.mxu0 %v3723
    %4838 = vmatpush.bf16.msra.mxu0 %v3718
    %4839 = vmatpush.bf16.msra.mxu0 %v3713
    %4840 = vmatpush.bf16.msra.mxu0 %v3708
    %4841 = vmatpush.bf16.msra.mxu0 %v3703
    %4842 = vmatpush.bf16.msra.mxu0 %v3698
    %4843 = vmatpush.bf16.msra.mxu0 %v3693
    %4844 = vmatmul.bf16.gmra.mxu0 %v922
    %v4845 = vpop.f32.mrf.mxu0
    %v4846 = vadd.f32 %v4833, %v4845
    %v4847 = vpop.f32.mrf.mxu0
    %4848 = vdwg.mxu0
    %4849 = vmatpush.bf16.msra.mxu0 %v3768
    %4850 = vmatpush.bf16.msra.mxu0 %v3763
    %4851 = vmatpush.bf16.msra.mxu0 %v3758
    %4852 = vmatpush.bf16.msra.mxu0 %v3753
    %4853 = vmatpush.bf16.msra.mxu0 %v3748
    %4854 = vmatpush.bf16.msra.mxu0 %v3743
    %4855 = vmatpush.bf16.msra.mxu0 %v3738
    %4856 = vmatpush.bf16.msra.mxu0 %v3733
    %4857 = vmatmul.bf16.gmra.mxu0 %v923
    %v4858 = vpop.f32.mrf.mxu0
    %v4859 = vadd.f32 %v4846, %v4858
    %v4860 = vpop.f32.mrf.mxu0
    %4861 = vdwg.mxu0
    %4862 = vmatpush.bf16.msra.mxu0 %v3808
    %4863 = vmatpush.bf16.msra.mxu0 %v3803
    %4864 = vmatpush.bf16.msra.mxu0 %v3798
    %4865 = vmatpush.bf16.msra.mxu0 %v3793
    %4866 = vmatpush.bf16.msra.mxu0 %v3788
    %4867 = vmatpush.bf16.msra.mxu0 %v3783
    %4868 = vmatpush.bf16.msra.mxu0 %v3778
    %4869 = vmatpush.bf16.msra.mxu0 %v3773
    %4870 = vmatmul.bf16.gmra.mxu0 %v924
    %v4871 = vpop.f32.mrf.mxu0
    %v4872 = vadd.f32 %v4859, %v4871
    %v4873 = vpop.f32.mrf.mxu0
    %4874 = vdwg.mxu0
    %4875 = vmatpush.bf16.msra.mxu0 %v3848
    %4876 = vmatpush.bf16.msra.mxu0 %v3843
    %4877 = vmatpush.bf16.msra.mxu0 %v3838
    %4878 = vmatpush.bf16.msra.mxu0 %v3833
    %4879 = vmatpush.bf16.msra.mxu0 %v3828
    %4880 = vmatpush.bf16.msra.mxu0 %v3823
    %4881 = vmatpush.bf16.msra.mxu0 %v3818
    %4882 = vmatpush.bf16.msra.mxu0 %v3813
    %4883 = vmatmul.bf16.gmra.mxu0 %v925
    %v4884 = vpop.f32.mrf.mxu0
    %v4885 = vadd.f32 %v4872, %v4884
    %v4886 = vpop.f32.mrf.mxu0
    %4887 = vdwg.mxu0
    %4888 = vmatpush.bf16.msra.mxu0 %v3888
    %4889 = vmatpush.bf16.msra.mxu0 %v3883
    %4890 = vmatpush.bf16.msra.mxu0 %v3878
    %4891 = vmatpush.bf16.msra.mxu0 %v3873
    %4892 = vmatpush.bf16.msra.mxu0 %v3868
    %4893 = vmatpush.bf16.msra.mxu0 %v3863
    %4894 = vmatpush.bf16.msra.mxu0 %v3858
    %4895 = vmatpush.bf16.msra.mxu0 %v3853
    %4896 = vmatmul.bf16.gmra.mxu0 %v926
    %v4897 = vpop.f32.mrf.mxu0
    %v4898 = vadd.f32 %v4885, %v4897
    %v4899 = vpop.f32.mrf.mxu0
    %4900 = vdwg.mxu0
    %4901 = vmatpush.bf16.msra.mxu0 %v3928
    %4902 = vmatpush.bf16.msra.mxu0 %v3923
    %4903 = vmatpush.bf16.msra.mxu0 %v3918
    %4904 = vmatpush.bf16.msra.mxu0 %v3913
    %4905 = vmatpush.bf16.msra.mxu0 %v3908
    %4906 = vmatpush.bf16.msra.mxu0 %v3903
    %4907 = vmatpush.bf16.msra.mxu0 %v3898
    %4908 = vmatpush.bf16.msra.mxu0 %v3893
    %4909 = vmatmul.bf16.gmra.mxu0 %v929
    %v4910 = vpop.f32.mrf.mxu0
    %v4911 = vadd.f32 %v4898, %v4910
    %v4912 = vpop.f32.mrf.mxu0
    %4913 = vdwg.mxu0
    %4914 = vmatpush.bf16.msra.mxu0 %v3968
    %4915 = vmatpush.bf16.msra.mxu0 %v3963
    %4916 = vmatpush.bf16.msra.mxu0 %v3958
    %4917 = vmatpush.bf16.msra.mxu0 %v3953
    %4918 = vmatpush.bf16.msra.mxu0 %v3948
    %4919 = vmatpush.bf16.msra.mxu0 %v3943
    %4920 = vmatpush.bf16.msra.mxu0 %v3938
    %4921 = vmatpush.bf16.msra.mxu0 %v3933
    %4922 = vmatmul.bf16.gmra.mxu0 %v930
    %v4923 = vpop.f32.mrf.mxu0
    %v4924 = vadd.f32 %v4911, %v4923
    %v4925 = vpop.f32.mrf.mxu0
    %4926 = vdwg.mxu0
    %4927 = vmatpush.bf16.msra.mxu0 %v3289
    %4928 = vmatpush.bf16.msra.mxu0 %v3284
    %4929 = vmatpush.bf16.msra.mxu0 %v3279
    %4930 = vmatpush.bf16.msra.mxu0 %v3274
    %4931 = vmatpush.bf16.msra.mxu0 %v3269
    %4932 = vmatpush.bf16.msra.mxu0 %v3264
    %4933 = vmatpush.bf16.msra.mxu0 %v3259
    %4934 = vmatpush.bf16.msra.mxu0 %v3254
    %4935 = vmatmul.bf16.gmra.mxu0 %v909
    %v4936 = vpop.f32.mrf.mxu0
    %v4937 = vadd.f32 %v898, %v4936
    %v4938 = vpop.f32.mrf.mxu0
    %4939 = vdwg.mxu0
    %4940 = vmatpush.bf16.msra.mxu0 %v3329
    %4941 = vmatpush.bf16.msra.mxu0 %v3324
    %4942 = vmatpush.bf16.msra.mxu0 %v3319
    %4943 = vmatpush.bf16.msra.mxu0 %v3314
    %4944 = vmatpush.bf16.msra.mxu0 %v3309
    %4945 = vmatpush.bf16.msra.mxu0 %v3304
    %4946 = vmatpush.bf16.msra.mxu0 %v3299
    %4947 = vmatpush.bf16.msra.mxu0 %v3294
    %4948 = vmatmul.bf16.gmra.mxu0 %v910
    %v4949 = vpop.f32.mrf.mxu0
    %v4950 = vadd.f32 %v4937, %v4949
    %v4951 = vpop.f32.mrf.mxu0
    %4952 = vdwg.mxu0
    %4953 = vmatpush.bf16.msra.mxu0 %v3369
    %4954 = vmatpush.bf16.msra.mxu0 %v3364
    %4955 = vmatpush.bf16.msra.mxu0 %v3359
    %4956 = vmatpush.bf16.msra.mxu0 %v3354
    %4957 = vmatpush.bf16.msra.mxu0 %v3349
    %4958 = vmatpush.bf16.msra.mxu0 %v3344
    %4959 = vmatpush.bf16.msra.mxu0 %v3339
    %4960 = vmatpush.bf16.msra.mxu0 %v3334
    %4961 = vmatmul.bf16.gmra.mxu0 %v911
    %v4962 = vpop.f32.mrf.mxu0
    %v4963 = vadd.f32 %v4950, %v4962
    %v4964 = vpop.f32.mrf.mxu0
    %4965 = vdwg.mxu0
    %4966 = vmatpush.bf16.msra.mxu0 %v3409
    %4967 = vmatpush.bf16.msra.mxu0 %v3404
    %4968 = vmatpush.bf16.msra.mxu0 %v3399
    %4969 = vmatpush.bf16.msra.mxu0 %v3394
    %4970 = vmatpush.bf16.msra.mxu0 %v3389
    %4971 = vmatpush.bf16.msra.mxu0 %v3384
    %4972 = vmatpush.bf16.msra.mxu0 %v3379
    %4973 = vmatpush.bf16.msra.mxu0 %v3374
    %4974 = vmatmul.bf16.gmra.mxu0 %v912
    %v4975 = vpop.f32.mrf.mxu0
    %v4976 = vadd.f32 %v4963, %v4975
    %v4977 = vpop.f32.mrf.mxu0
    %4978 = vdwg.mxu0
    %4979 = vmatpush.bf16.msra.mxu0 %v3449
    %4980 = vmatpush.bf16.msra.mxu0 %v3444
    %4981 = vmatpush.bf16.msra.mxu0 %v3439
    %4982 = vmatpush.bf16.msra.mxu0 %v3434
    %4983 = vmatpush.bf16.msra.mxu0 %v3429
    %4984 = vmatpush.bf16.msra.mxu0 %v3424
    %4985 = vmatpush.bf16.msra.mxu0 %v3419
    %4986 = vmatpush.bf16.msra.mxu0 %v3414
    %4987 = vmatmul.bf16.gmra.mxu0 %v913
    %v4988 = vpop.f32.mrf.mxu0
    %v4989 = vadd.f32 %v4976, %v4988
    %v4990 = vpop.f32.mrf.mxu0
    %4991 = vdwg.mxu0
    %4992 = vmatpush.bf16.msra.mxu0 %v3489
    %4993 = vmatpush.bf16.msra.mxu0 %v3484
    %4994 = vmatpush.bf16.msra.mxu0 %v3479
    %4995 = vmatpush.bf16.msra.mxu0 %v3474
    %4996 = vmatpush.bf16.msra.mxu0 %v3469
    %4997 = vmatpush.bf16.msra.mxu0 %v3464
    %4998 = vmatpush.bf16.msra.mxu0 %v3459
    %4999 = vmatpush.bf16.msra.mxu0 %v3454
    %5000 = vmatmul.bf16.gmra.mxu0 %v914
    %v5001 = vpop.f32.mrf.mxu0
    %v5002 = vadd.f32 %v4989, %v5001
    %v5003 = vpop.f32.mrf.mxu0
    %5004 = vdwg.mxu0
    %5005 = vmatpush.bf16.msra.mxu0 %v3529
    %5006 = vmatpush.bf16.msra.mxu0 %v3524
    %5007 = vmatpush.bf16.msra.mxu0 %v3519
    %5008 = vmatpush.bf16.msra.mxu0 %v3514
    %5009 = vmatpush.bf16.msra.mxu0 %v3509
    %5010 = vmatpush.bf16.msra.mxu0 %v3504
    %5011 = vmatpush.bf16.msra.mxu0 %v3499
    %5012 = vmatpush.bf16.msra.mxu0 %v3494
    %5013 = vmatmul.bf16.gmra.mxu0 %v915
    %v5014 = vpop.f32.mrf.mxu0
    %v5015 = vadd.f32 %v5002, %v5014
    %v5016 = vpop.f32.mrf.mxu0
    %5017 = vdwg.mxu0
    %5018 = vmatpush.bf16.msra.mxu0 %v3569
    %5019 = vmatpush.bf16.msra.mxu0 %v3564
    %5020 = vmatpush.bf16.msra.mxu0 %v3559
    %5021 = vmatpush.bf16.msra.mxu0 %v3554
    %5022 = vmatpush.bf16.msra.mxu0 %v3549
    %5023 = vmatpush.bf16.msra.mxu0 %v3544
    %5024 = vmatpush.bf16.msra.mxu0 %v3539
    %5025 = vmatpush.bf16.msra.mxu0 %v3534
    %5026 = vmatmul.bf16.gmra.mxu0 %v916
    %v5027 = vpop.f32.mrf.mxu0
    %v5028 = vadd.f32 %v5015, %v5027
    %v5029 = vpop.f32.mrf.mxu0
    %5030 = vdwg.mxu0
    %5031 = vmatpush.bf16.msra.mxu0 %v3609
    %5032 = vmatpush.bf16.msra.mxu0 %v3604
    %5033 = vmatpush.bf16.msra.mxu0 %v3599
    %5034 = vmatpush.bf16.msra.mxu0 %v3594
    %5035 = vmatpush.bf16.msra.mxu0 %v3589
    %5036 = vmatpush.bf16.msra.mxu0 %v3584
    %5037 = vmatpush.bf16.msra.mxu0 %v3579
    %5038 = vmatpush.bf16.msra.mxu0 %v3574
    %5039 = vmatmul.bf16.gmra.mxu0 %v919
    %v5040 = vpop.f32.mrf.mxu0
    %v5041 = vadd.f32 %v5028, %v5040
    %v5042 = vpop.f32.mrf.mxu0
    %5043 = vdwg.mxu0
    %5044 = vmatpush.bf16.msra.mxu0 %v3649
    %5045 = vmatpush.bf16.msra.mxu0 %v3644
    %5046 = vmatpush.bf16.msra.mxu0 %v3639
    %5047 = vmatpush.bf16.msra.mxu0 %v3634
    %5048 = vmatpush.bf16.msra.mxu0 %v3629
    %5049 = vmatpush.bf16.msra.mxu0 %v3624
    %5050 = vmatpush.bf16.msra.mxu0 %v3619
    %5051 = vmatpush.bf16.msra.mxu0 %v3614
    %5052 = vmatmul.bf16.gmra.mxu0 %v920
    %v5053 = vpop.f32.mrf.mxu0
    %v5054 = vadd.f32 %v5041, %v5053
    %v5055 = vpop.f32.mrf.mxu0
    %5056 = vdwg.mxu0
    %5057 = vmatpush.bf16.msra.mxu0 %v3689
    %5058 = vmatpush.bf16.msra.mxu0 %v3684
    %5059 = vmatpush.bf16.msra.mxu0 %v3679
    %5060 = vmatpush.bf16.msra.mxu0 %v3674
    %5061 = vmatpush.bf16.msra.mxu0 %v3669
    %5062 = vmatpush.bf16.msra.mxu0 %v3664
    %5063 = vmatpush.bf16.msra.mxu0 %v3659
    %5064 = vmatpush.bf16.msra.mxu0 %v3654
    %5065 = vmatmul.bf16.gmra.mxu0 %v921
    %v5066 = vpop.f32.mrf.mxu0
    %v5067 = vadd.f32 %v5054, %v5066
    %v5068 = vpop.f32.mrf.mxu0
    %5069 = vdwg.mxu0
    %5070 = vmatpush.bf16.msra.mxu0 %v3729
    %5071 = vmatpush.bf16.msra.mxu0 %v3724
    %5072 = vmatpush.bf16.msra.mxu0 %v3719
    %5073 = vmatpush.bf16.msra.mxu0 %v3714
    %5074 = vmatpush.bf16.msra.mxu0 %v3709
    %5075 = vmatpush.bf16.msra.mxu0 %v3704
    %5076 = vmatpush.bf16.msra.mxu0 %v3699
    %5077 = vmatpush.bf16.msra.mxu0 %v3694
    %5078 = vmatmul.bf16.gmra.mxu0 %v922
    %v5079 = vpop.f32.mrf.mxu0
    %v5080 = vadd.f32 %v5067, %v5079
    %v5081 = vpop.f32.mrf.mxu0
    %5082 = vdwg.mxu0
    %5083 = vmatpush.bf16.msra.mxu0 %v3769
    %5084 = vmatpush.bf16.msra.mxu0 %v3764
    %5085 = vmatpush.bf16.msra.mxu0 %v3759
    %5086 = vmatpush.bf16.msra.mxu0 %v3754
    %5087 = vmatpush.bf16.msra.mxu0 %v3749
    %5088 = vmatpush.bf16.msra.mxu0 %v3744
    %5089 = vmatpush.bf16.msra.mxu0 %v3739
    %5090 = vmatpush.bf16.msra.mxu0 %v3734
    %5091 = vmatmul.bf16.gmra.mxu0 %v923
    %v5092 = vpop.f32.mrf.mxu0
    %v5093 = vadd.f32 %v5080, %v5092
    %v5094 = vpop.f32.mrf.mxu0
    %5095 = vdwg.mxu0
    %5096 = vmatpush.bf16.msra.mxu0 %v3809
    %5097 = vmatpush.bf16.msra.mxu0 %v3804
    %5098 = vmatpush.bf16.msra.mxu0 %v3799
    %5099 = vmatpush.bf16.msra.mxu0 %v3794
    %5100 = vmatpush.bf16.msra.mxu0 %v3789
    %5101 = vmatpush.bf16.msra.mxu0 %v3784
    %5102 = vmatpush.bf16.msra.mxu0 %v3779
    %5103 = vmatpush.bf16.msra.mxu0 %v3774
    %5104 = vmatmul.bf16.gmra.mxu0 %v924
    %v5105 = vpop.f32.mrf.mxu0
    %v5106 = vadd.f32 %v5093, %v5105
    %v5107 = vpop.f32.mrf.mxu0
    %5108 = vdwg.mxu0
    %5109 = vmatpush.bf16.msra.mxu0 %v3849
    %5110 = vmatpush.bf16.msra.mxu0 %v3844
    %5111 = vmatpush.bf16.msra.mxu0 %v3839
    %5112 = vmatpush.bf16.msra.mxu0 %v3834
    %5113 = vmatpush.bf16.msra.mxu0 %v3829
    %5114 = vmatpush.bf16.msra.mxu0 %v3824
    %5115 = vmatpush.bf16.msra.mxu0 %v3819
    %5116 = vmatpush.bf16.msra.mxu0 %v3814
    %5117 = vmatmul.bf16.gmra.mxu0 %v925
    %v5118 = vpop.f32.mrf.mxu0
    %v5119 = vadd.f32 %v5106, %v5118
    %v5120 = vpop.f32.mrf.mxu0
    %5121 = vdwg.mxu0
    %5122 = vmatpush.bf16.msra.mxu0 %v3889
    %5123 = vmatpush.bf16.msra.mxu0 %v3884
    %5124 = vmatpush.bf16.msra.mxu0 %v3879
    %5125 = vmatpush.bf16.msra.mxu0 %v3874
    %5126 = vmatpush.bf16.msra.mxu0 %v3869
    %5127 = vmatpush.bf16.msra.mxu0 %v3864
    %5128 = vmatpush.bf16.msra.mxu0 %v3859
    %5129 = vmatpush.bf16.msra.mxu0 %v3854
    %5130 = vmatmul.bf16.gmra.mxu0 %v926
    %v5131 = vpop.f32.mrf.mxu0
    %v5132 = vadd.f32 %v5119, %v5131
    %v5133 = vpop.f32.mrf.mxu0
    %5134 = vdwg.mxu0
    %5135 = vmatpush.bf16.msra.mxu0 %v3929
    %5136 = vmatpush.bf16.msra.mxu0 %v3924
    %5137 = vmatpush.bf16.msra.mxu0 %v3919
    %5138 = vmatpush.bf16.msra.mxu0 %v3914
    %5139 = vmatpush.bf16.msra.mxu0 %v3909
    %5140 = vmatpush.bf16.msra.mxu0 %v3904
    %5141 = vmatpush.bf16.msra.mxu0 %v3899
    %5142 = vmatpush.bf16.msra.mxu0 %v3894
    %5143 = vmatmul.bf16.gmra.mxu0 %v929
    %v5144 = vpop.f32.mrf.mxu0
    %v5145 = vadd.f32 %v5132, %v5144
    %v5146 = vpop.f32.mrf.mxu0
    %5147 = vdwg.mxu0
    %5148 = vmatpush.bf16.msra.mxu0 %v3969
    %5149 = vmatpush.bf16.msra.mxu0 %v3964
    %5150 = vmatpush.bf16.msra.mxu0 %v3959
    %5151 = vmatpush.bf16.msra.mxu0 %v3954
    %5152 = vmatpush.bf16.msra.mxu0 %v3949
    %5153 = vmatpush.bf16.msra.mxu0 %v3944
    %5154 = vmatpush.bf16.msra.mxu0 %v3939
    %5155 = vmatpush.bf16.msra.mxu0 %v3934
    %5156 = vmatmul.bf16.gmra.mxu0 %v930
    %v5157 = vpop.f32.mrf.mxu0
    %v5158 = vadd.f32 %v5145, %v5157
    %v5159 = vpop.f32.mrf.mxu0
    %5160 = vdwg.mxu0
    %5161 = vmatpush.bf16.msra.mxu0 %v3290
    %5162 = vmatpush.bf16.msra.mxu0 %v3285
    %5163 = vmatpush.bf16.msra.mxu0 %v3280
    %5164 = vmatpush.bf16.msra.mxu0 %v3275
    %5165 = vmatpush.bf16.msra.mxu0 %v3270
    %5166 = vmatpush.bf16.msra.mxu0 %v3265
    %5167 = vmatpush.bf16.msra.mxu0 %v3260
    %5168 = vmatpush.bf16.msra.mxu0 %v3255
    %5169 = vmatmul.bf16.gmra.mxu0 %v909
    %v5170 = vpop.f32.mrf.mxu0
    %v5171 = vadd.f32 %v899, %v5170
    %v5172 = vpop.f32.mrf.mxu0
    %5173 = vdwg.mxu0
    %5174 = vmatpush.bf16.msra.mxu0 %v3330
    %5175 = vmatpush.bf16.msra.mxu0 %v3325
    %5176 = vmatpush.bf16.msra.mxu0 %v3320
    %5177 = vmatpush.bf16.msra.mxu0 %v3315
    %5178 = vmatpush.bf16.msra.mxu0 %v3310
    %5179 = vmatpush.bf16.msra.mxu0 %v3305
    %5180 = vmatpush.bf16.msra.mxu0 %v3300
    %5181 = vmatpush.bf16.msra.mxu0 %v3295
    %5182 = vmatmul.bf16.gmra.mxu0 %v910
    %v5183 = vpop.f32.mrf.mxu0
    %v5184 = vadd.f32 %v5171, %v5183
    %v5185 = vpop.f32.mrf.mxu0
    %5186 = vdwg.mxu0
    %5187 = vmatpush.bf16.msra.mxu0 %v3370
    %5188 = vmatpush.bf16.msra.mxu0 %v3365
    %5189 = vmatpush.bf16.msra.mxu0 %v3360
    %5190 = vmatpush.bf16.msra.mxu0 %v3355
    %5191 = vmatpush.bf16.msra.mxu0 %v3350
    %5192 = vmatpush.bf16.msra.mxu0 %v3345
    %5193 = vmatpush.bf16.msra.mxu0 %v3340
    %5194 = vmatpush.bf16.msra.mxu0 %v3335
    %5195 = vmatmul.bf16.gmra.mxu0 %v911
    %v5196 = vpop.f32.mrf.mxu0
    %v5197 = vadd.f32 %v5184, %v5196
    %v5198 = vpop.f32.mrf.mxu0
    %5199 = vdwg.mxu0
    %5200 = vmatpush.bf16.msra.mxu0 %v3410
    %5201 = vmatpush.bf16.msra.mxu0 %v3405
    %5202 = vmatpush.bf16.msra.mxu0 %v3400
    %5203 = vmatpush.bf16.msra.mxu0 %v3395
    %5204 = vmatpush.bf16.msra.mxu0 %v3390
    %5205 = vmatpush.bf16.msra.mxu0 %v3385
    %5206 = vmatpush.bf16.msra.mxu0 %v3380
    %5207 = vmatpush.bf16.msra.mxu0 %v3375
    %5208 = vmatmul.bf16.gmra.mxu0 %v912
    %v5209 = vpop.f32.mrf.mxu0
    %v5210 = vadd.f32 %v5197, %v5209
    %v5211 = vpop.f32.mrf.mxu0
    %5212 = vdwg.mxu0
    %5213 = vmatpush.bf16.msra.mxu0 %v3450
    %5214 = vmatpush.bf16.msra.mxu0 %v3445
    %5215 = vmatpush.bf16.msra.mxu0 %v3440
    %5216 = vmatpush.bf16.msra.mxu0 %v3435
    %5217 = vmatpush.bf16.msra.mxu0 %v3430
    %5218 = vmatpush.bf16.msra.mxu0 %v3425
    %5219 = vmatpush.bf16.msra.mxu0 %v3420
    %5220 = vmatpush.bf16.msra.mxu0 %v3415
    %5221 = vmatmul.bf16.gmra.mxu0 %v913
    %v5222 = vpop.f32.mrf.mxu0
    %v5223 = vadd.f32 %v5210, %v5222
    %v5224 = vpop.f32.mrf.mxu0
    %5225 = vdwg.mxu0
    %5226 = vmatpush.bf16.msra.mxu0 %v3490
    %5227 = vmatpush.bf16.msra.mxu0 %v3485
    %5228 = vmatpush.bf16.msra.mxu0 %v3480
    %5229 = vmatpush.bf16.msra.mxu0 %v3475
    %5230 = vmatpush.bf16.msra.mxu0 %v3470
    %5231 = vmatpush.bf16.msra.mxu0 %v3465
    %5232 = vmatpush.bf16.msra.mxu0 %v3460
    %5233 = vmatpush.bf16.msra.mxu0 %v3455
    %5234 = vmatmul.bf16.gmra.mxu0 %v914
    %v5235 = vpop.f32.mrf.mxu0
    %v5236 = vadd.f32 %v5223, %v5235
    %v5237 = vpop.f32.mrf.mxu0
    %5238 = vdwg.mxu0
    %5239 = vmatpush.bf16.msra.mxu0 %v3530
    %5240 = vmatpush.bf16.msra.mxu0 %v3525
    %5241 = vmatpush.bf16.msra.mxu0 %v3520
    %5242 = vmatpush.bf16.msra.mxu0 %v3515
    %5243 = vmatpush.bf16.msra.mxu0 %v3510
    %5244 = vmatpush.bf16.msra.mxu0 %v3505
    %5245 = vmatpush.bf16.msra.mxu0 %v3500
    %5246 = vmatpush.bf16.msra.mxu0 %v3495
    %5247 = vmatmul.bf16.gmra.mxu0 %v915
    %v5248 = vpop.f32.mrf.mxu0
    %v5249 = vadd.f32 %v5236, %v5248
    %v5250 = vpop.f32.mrf.mxu0
    %5251 = vdwg.mxu0
    %5252 = vmatpush.bf16.msra.mxu0 %v3570
    %5253 = vmatpush.bf16.msra.mxu0 %v3565
    %5254 = vmatpush.bf16.msra.mxu0 %v3560
    %5255 = vmatpush.bf16.msra.mxu0 %v3555
    %5256 = vmatpush.bf16.msra.mxu0 %v3550
    %5257 = vmatpush.bf16.msra.mxu0 %v3545
    %5258 = vmatpush.bf16.msra.mxu0 %v3540
    %5259 = vmatpush.bf16.msra.mxu0 %v3535
    %5260 = vmatmul.bf16.gmra.mxu0 %v916
    %v5261 = vpop.f32.mrf.mxu0
    %v5262 = vadd.f32 %v5249, %v5261
    %v5263 = vpop.f32.mrf.mxu0
    %5264 = vdwg.mxu0
    %5265 = vmatpush.bf16.msra.mxu0 %v3610
    %5266 = vmatpush.bf16.msra.mxu0 %v3605
    %5267 = vmatpush.bf16.msra.mxu0 %v3600
    %5268 = vmatpush.bf16.msra.mxu0 %v3595
    %5269 = vmatpush.bf16.msra.mxu0 %v3590
    %5270 = vmatpush.bf16.msra.mxu0 %v3585
    %5271 = vmatpush.bf16.msra.mxu0 %v3580
    %5272 = vmatpush.bf16.msra.mxu0 %v3575
    %5273 = vmatmul.bf16.gmra.mxu0 %v919
    %v5274 = vpop.f32.mrf.mxu0
    %v5275 = vadd.f32 %v5262, %v5274
    %v5276 = vpop.f32.mrf.mxu0
    %5277 = vdwg.mxu0
    %5278 = vmatpush.bf16.msra.mxu0 %v3650
    %5279 = vmatpush.bf16.msra.mxu0 %v3645
    %5280 = vmatpush.bf16.msra.mxu0 %v3640
    %5281 = vmatpush.bf16.msra.mxu0 %v3635
    %5282 = vmatpush.bf16.msra.mxu0 %v3630
    %5283 = vmatpush.bf16.msra.mxu0 %v3625
    %5284 = vmatpush.bf16.msra.mxu0 %v3620
    %5285 = vmatpush.bf16.msra.mxu0 %v3615
    %5286 = vmatmul.bf16.gmra.mxu0 %v920
    %v5287 = vpop.f32.mrf.mxu0
    %v5288 = vadd.f32 %v5275, %v5287
    %v5289 = vpop.f32.mrf.mxu0
    %5290 = vdwg.mxu0
    %5291 = vmatpush.bf16.msra.mxu0 %v3690
    %5292 = vmatpush.bf16.msra.mxu0 %v3685
    %5293 = vmatpush.bf16.msra.mxu0 %v3680
    %5294 = vmatpush.bf16.msra.mxu0 %v3675
    %5295 = vmatpush.bf16.msra.mxu0 %v3670
    %5296 = vmatpush.bf16.msra.mxu0 %v3665
    %5297 = vmatpush.bf16.msra.mxu0 %v3660
    %5298 = vmatpush.bf16.msra.mxu0 %v3655
    %5299 = vmatmul.bf16.gmra.mxu0 %v921
    %v5300 = vpop.f32.mrf.mxu0
    %v5301 = vadd.f32 %v5288, %v5300
    %v5302 = vpop.f32.mrf.mxu0
    %5303 = vdwg.mxu0
    %5304 = vmatpush.bf16.msra.mxu0 %v3730
    %5305 = vmatpush.bf16.msra.mxu0 %v3725
    %5306 = vmatpush.bf16.msra.mxu0 %v3720
    %5307 = vmatpush.bf16.msra.mxu0 %v3715
    %5308 = vmatpush.bf16.msra.mxu0 %v3710
    %5309 = vmatpush.bf16.msra.mxu0 %v3705
    %5310 = vmatpush.bf16.msra.mxu0 %v3700
    %5311 = vmatpush.bf16.msra.mxu0 %v3695
    %5312 = vmatmul.bf16.gmra.mxu0 %v922
    %v5313 = vpop.f32.mrf.mxu0
    %v5314 = vadd.f32 %v5301, %v5313
    %v5315 = vpop.f32.mrf.mxu0
    %5316 = vdwg.mxu0
    %5317 = vmatpush.bf16.msra.mxu0 %v3770
    %5318 = vmatpush.bf16.msra.mxu0 %v3765
    %5319 = vmatpush.bf16.msra.mxu0 %v3760
    %5320 = vmatpush.bf16.msra.mxu0 %v3755
    %5321 = vmatpush.bf16.msra.mxu0 %v3750
    %5322 = vmatpush.bf16.msra.mxu0 %v3745
    %5323 = vmatpush.bf16.msra.mxu0 %v3740
    %5324 = vmatpush.bf16.msra.mxu0 %v3735
    %5325 = vmatmul.bf16.gmra.mxu0 %v923
    %v5326 = vpop.f32.mrf.mxu0
    %v5327 = vadd.f32 %v5314, %v5326
    %v5328 = vpop.f32.mrf.mxu0
    %5329 = vdwg.mxu0
    %5330 = vmatpush.bf16.msra.mxu0 %v3810
    %5331 = vmatpush.bf16.msra.mxu0 %v3805
    %5332 = vmatpush.bf16.msra.mxu0 %v3800
    %5333 = vmatpush.bf16.msra.mxu0 %v3795
    %5334 = vmatpush.bf16.msra.mxu0 %v3790
    %5335 = vmatpush.bf16.msra.mxu0 %v3785
    %5336 = vmatpush.bf16.msra.mxu0 %v3780
    %5337 = vmatpush.bf16.msra.mxu0 %v3775
    %5338 = vmatmul.bf16.gmra.mxu0 %v924
    %v5339 = vpop.f32.mrf.mxu0
    %v5340 = vadd.f32 %v5327, %v5339
    %v5341 = vpop.f32.mrf.mxu0
    %5342 = vdwg.mxu0
    %5343 = vmatpush.bf16.msra.mxu0 %v3850
    %5344 = vmatpush.bf16.msra.mxu0 %v3845
    %5345 = vmatpush.bf16.msra.mxu0 %v3840
    %5346 = vmatpush.bf16.msra.mxu0 %v3835
    %5347 = vmatpush.bf16.msra.mxu0 %v3830
    %5348 = vmatpush.bf16.msra.mxu0 %v3825
    %5349 = vmatpush.bf16.msra.mxu0 %v3820
    %5350 = vmatpush.bf16.msra.mxu0 %v3815
    %5351 = vmatmul.bf16.gmra.mxu0 %v925
    %v5352 = vpop.f32.mrf.mxu0
    %v5353 = vadd.f32 %v5340, %v5352
    %v5354 = vpop.f32.mrf.mxu0
    %5355 = vdwg.mxu0
    %5356 = vmatpush.bf16.msra.mxu0 %v3890
    %5357 = vmatpush.bf16.msra.mxu0 %v3885
    %5358 = vmatpush.bf16.msra.mxu0 %v3880
    %5359 = vmatpush.bf16.msra.mxu0 %v3875
    %5360 = vmatpush.bf16.msra.mxu0 %v3870
    %5361 = vmatpush.bf16.msra.mxu0 %v3865
    %5362 = vmatpush.bf16.msra.mxu0 %v3860
    %5363 = vmatpush.bf16.msra.mxu0 %v3855
    %5364 = vmatmul.bf16.gmra.mxu0 %v926
    %v5365 = vpop.f32.mrf.mxu0
    %v5366 = vadd.f32 %v5353, %v5365
    %v5367 = vpop.f32.mrf.mxu0
    %5368 = vdwg.mxu0
    %5369 = vmatpush.bf16.msra.mxu0 %v3930
    %5370 = vmatpush.bf16.msra.mxu0 %v3925
    %5371 = vmatpush.bf16.msra.mxu0 %v3920
    %5372 = vmatpush.bf16.msra.mxu0 %v3915
    %5373 = vmatpush.bf16.msra.mxu0 %v3910
    %5374 = vmatpush.bf16.msra.mxu0 %v3905
    %5375 = vmatpush.bf16.msra.mxu0 %v3900
    %5376 = vmatpush.bf16.msra.mxu0 %v3895
    %5377 = vmatmul.bf16.gmra.mxu0 %v929
    %v5378 = vpop.f32.mrf.mxu0
    %v5379 = vadd.f32 %v5366, %v5378
    %v5380 = vpop.f32.mrf.mxu0
    %5381 = vdwg.mxu0
    %5382 = vmatpush.bf16.msra.mxu0 %v3970
    %5383 = vmatpush.bf16.msra.mxu0 %v3965
    %5384 = vmatpush.bf16.msra.mxu0 %v3960
    %5385 = vmatpush.bf16.msra.mxu0 %v3955
    %5386 = vmatpush.bf16.msra.mxu0 %v3950
    %5387 = vmatpush.bf16.msra.mxu0 %v3945
    %5388 = vmatpush.bf16.msra.mxu0 %v3940
    %5389 = vmatpush.bf16.msra.mxu0 %v3935
    %5390 = vmatmul.bf16.gmra.mxu0 %v930
    %v5391 = vpop.f32.mrf.mxu0
    %v5392 = vadd.f32 %v5379, %v5391
    %v5393 = vpop.f32.mrf.mxu0
    %5394 = vdwg.mxu0
    %5395 = vmatpush.bf16.msra.mxu0 %v3291
    %5396 = vmatpush.bf16.msra.mxu0 %v3286
    %5397 = vmatpush.bf16.msra.mxu0 %v3281
    %5398 = vmatpush.bf16.msra.mxu0 %v3276
    %5399 = vmatpush.bf16.msra.mxu0 %v3271
    %5400 = vmatpush.bf16.msra.mxu0 %v3266
    %5401 = vmatpush.bf16.msra.mxu0 %v3261
    %5402 = vmatpush.bf16.msra.mxu0 %v3256
    %5403 = vmatmul.bf16.gmra.mxu0 %v909
    %v5404 = vpop.f32.mrf.mxu0
    %v5405 = vadd.f32 %v900, %v5404
    %v5406 = vpop.f32.mrf.mxu0
    %5407 = vdwg.mxu0
    %5408 = vmatpush.bf16.msra.mxu0 %v3331
    %5409 = vmatpush.bf16.msra.mxu0 %v3326
    %5410 = vmatpush.bf16.msra.mxu0 %v3321
    %5411 = vmatpush.bf16.msra.mxu0 %v3316
    %5412 = vmatpush.bf16.msra.mxu0 %v3311
    %5413 = vmatpush.bf16.msra.mxu0 %v3306
    %5414 = vmatpush.bf16.msra.mxu0 %v3301
    %5415 = vmatpush.bf16.msra.mxu0 %v3296
    %5416 = vmatmul.bf16.gmra.mxu0 %v910
    %v5417 = vpop.f32.mrf.mxu0
    %v5418 = vadd.f32 %v5405, %v5417
    %v5419 = vpop.f32.mrf.mxu0
    %5420 = vdwg.mxu0
    %5421 = vmatpush.bf16.msra.mxu0 %v3371
    %5422 = vmatpush.bf16.msra.mxu0 %v3366
    %5423 = vmatpush.bf16.msra.mxu0 %v3361
    %5424 = vmatpush.bf16.msra.mxu0 %v3356
    %5425 = vmatpush.bf16.msra.mxu0 %v3351
    %5426 = vmatpush.bf16.msra.mxu0 %v3346
    %5427 = vmatpush.bf16.msra.mxu0 %v3341
    %5428 = vmatpush.bf16.msra.mxu0 %v3336
    %5429 = vmatmul.bf16.gmra.mxu0 %v911
    %v5430 = vpop.f32.mrf.mxu0
    %v5431 = vadd.f32 %v5418, %v5430
    %v5432 = vpop.f32.mrf.mxu0
    %5433 = vdwg.mxu0
    %5434 = vmatpush.bf16.msra.mxu0 %v3411
    %5435 = vmatpush.bf16.msra.mxu0 %v3406
    %5436 = vmatpush.bf16.msra.mxu0 %v3401
    %5437 = vmatpush.bf16.msra.mxu0 %v3396
    %5438 = vmatpush.bf16.msra.mxu0 %v3391
    %5439 = vmatpush.bf16.msra.mxu0 %v3386
    %5440 = vmatpush.bf16.msra.mxu0 %v3381
    %5441 = vmatpush.bf16.msra.mxu0 %v3376
    %5442 = vmatmul.bf16.gmra.mxu0 %v912
    %v5443 = vpop.f32.mrf.mxu0
    %v5444 = vadd.f32 %v5431, %v5443
    %v5445 = vpop.f32.mrf.mxu0
    %5446 = vdwg.mxu0
    %5447 = vmatpush.bf16.msra.mxu0 %v3451
    %5448 = vmatpush.bf16.msra.mxu0 %v3446
    %5449 = vmatpush.bf16.msra.mxu0 %v3441
    %5450 = vmatpush.bf16.msra.mxu0 %v3436
    %5451 = vmatpush.bf16.msra.mxu0 %v3431
    %5452 = vmatpush.bf16.msra.mxu0 %v3426
    %5453 = vmatpush.bf16.msra.mxu0 %v3421
    %5454 = vmatpush.bf16.msra.mxu0 %v3416
    %5455 = vmatmul.bf16.gmra.mxu0 %v913
    %v5456 = vpop.f32.mrf.mxu0
    %v5457 = vadd.f32 %v5444, %v5456
    %v5458 = vpop.f32.mrf.mxu0
    %5459 = vdwg.mxu0
    %5460 = vmatpush.bf16.msra.mxu0 %v3491
    %5461 = vmatpush.bf16.msra.mxu0 %v3486
    %5462 = vmatpush.bf16.msra.mxu0 %v3481
    %5463 = vmatpush.bf16.msra.mxu0 %v3476
    %5464 = vmatpush.bf16.msra.mxu0 %v3471
    %5465 = vmatpush.bf16.msra.mxu0 %v3466
    %5466 = vmatpush.bf16.msra.mxu0 %v3461
    %5467 = vmatpush.bf16.msra.mxu0 %v3456
    %5468 = vmatmul.bf16.gmra.mxu0 %v914
    %v5469 = vpop.f32.mrf.mxu0
    %v5470 = vadd.f32 %v5457, %v5469
    %v5471 = vpop.f32.mrf.mxu0
    %5472 = vdwg.mxu0
    %5473 = vmatpush.bf16.msra.mxu0 %v3531
    %5474 = vmatpush.bf16.msra.mxu0 %v3526
    %5475 = vmatpush.bf16.msra.mxu0 %v3521
    %5476 = vmatpush.bf16.msra.mxu0 %v3516
    %5477 = vmatpush.bf16.msra.mxu0 %v3511
    %5478 = vmatpush.bf16.msra.mxu0 %v3506
    %5479 = vmatpush.bf16.msra.mxu0 %v3501
    %5480 = vmatpush.bf16.msra.mxu0 %v3496
    %5481 = vmatmul.bf16.gmra.mxu0 %v915
    %v5482 = vpop.f32.mrf.mxu0
    %v5483 = vadd.f32 %v5470, %v5482
    %v5484 = vpop.f32.mrf.mxu0
    %5485 = vdwg.mxu0
    %5486 = vmatpush.bf16.msra.mxu0 %v3571
    %5487 = vmatpush.bf16.msra.mxu0 %v3566
    %5488 = vmatpush.bf16.msra.mxu0 %v3561
    %5489 = vmatpush.bf16.msra.mxu0 %v3556
    %5490 = vmatpush.bf16.msra.mxu0 %v3551
    %5491 = vmatpush.bf16.msra.mxu0 %v3546
    %5492 = vmatpush.bf16.msra.mxu0 %v3541
    %5493 = vmatpush.bf16.msra.mxu0 %v3536
    %5494 = vmatmul.bf16.gmra.mxu0 %v916
    %v5495 = vpop.f32.mrf.mxu0
    %v5496 = vadd.f32 %v5483, %v5495
    %v5497 = vpop.f32.mrf.mxu0
    %5498 = vdwg.mxu0
    %5499 = vmatpush.bf16.msra.mxu0 %v3611
    %5500 = vmatpush.bf16.msra.mxu0 %v3606
    %5501 = vmatpush.bf16.msra.mxu0 %v3601
    %5502 = vmatpush.bf16.msra.mxu0 %v3596
    %5503 = vmatpush.bf16.msra.mxu0 %v3591
    %5504 = vmatpush.bf16.msra.mxu0 %v3586
    %5505 = vmatpush.bf16.msra.mxu0 %v3581
    %5506 = vmatpush.bf16.msra.mxu0 %v3576
    %5507 = vmatmul.bf16.gmra.mxu0 %v919
    %v5508 = vpop.f32.mrf.mxu0
    %v5509 = vadd.f32 %v5496, %v5508
    %v5510 = vpop.f32.mrf.mxu0
    %5511 = vdwg.mxu0
    %5512 = vmatpush.bf16.msra.mxu0 %v3651
    %5513 = vmatpush.bf16.msra.mxu0 %v3646
    %5514 = vmatpush.bf16.msra.mxu0 %v3641
    %5515 = vmatpush.bf16.msra.mxu0 %v3636
    %5516 = vmatpush.bf16.msra.mxu0 %v3631
    %5517 = vmatpush.bf16.msra.mxu0 %v3626
    %5518 = vmatpush.bf16.msra.mxu0 %v3621
    %5519 = vmatpush.bf16.msra.mxu0 %v3616
    %5520 = vmatmul.bf16.gmra.mxu0 %v920
    %v5521 = vpop.f32.mrf.mxu0
    %v5522 = vadd.f32 %v5509, %v5521
    %v5523 = vpop.f32.mrf.mxu0
    %5524 = vdwg.mxu0
    %5525 = vmatpush.bf16.msra.mxu0 %v3691
    %5526 = vmatpush.bf16.msra.mxu0 %v3686
    %5527 = vmatpush.bf16.msra.mxu0 %v3681
    %5528 = vmatpush.bf16.msra.mxu0 %v3676
    %5529 = vmatpush.bf16.msra.mxu0 %v3671
    %5530 = vmatpush.bf16.msra.mxu0 %v3666
    %5531 = vmatpush.bf16.msra.mxu0 %v3661
    %5532 = vmatpush.bf16.msra.mxu0 %v3656
    %5533 = vmatmul.bf16.gmra.mxu0 %v921
    %v5534 = vpop.f32.mrf.mxu0
    %v5535 = vadd.f32 %v5522, %v5534
    %v5536 = vpop.f32.mrf.mxu0
    %5537 = vdwg.mxu0
    %5538 = vmatpush.bf16.msra.mxu0 %v3731
    %5539 = vmatpush.bf16.msra.mxu0 %v3726
    %5540 = vmatpush.bf16.msra.mxu0 %v3721
    %5541 = vmatpush.bf16.msra.mxu0 %v3716
    %5542 = vmatpush.bf16.msra.mxu0 %v3711
    %5543 = vmatpush.bf16.msra.mxu0 %v3706
    %5544 = vmatpush.bf16.msra.mxu0 %v3701
    %5545 = vmatpush.bf16.msra.mxu0 %v3696
    %5546 = vmatmul.bf16.gmra.mxu0 %v922
    %v5547 = vpop.f32.mrf.mxu0
    %v5548 = vadd.f32 %v5535, %v5547
    %v5549 = vpop.f32.mrf.mxu0
    %5550 = vdwg.mxu0
    %5551 = vmatpush.bf16.msra.mxu0 %v3771
    %5552 = vmatpush.bf16.msra.mxu0 %v3766
    %5553 = vmatpush.bf16.msra.mxu0 %v3761
    %5554 = vmatpush.bf16.msra.mxu0 %v3756
    %5555 = vmatpush.bf16.msra.mxu0 %v3751
    %5556 = vmatpush.bf16.msra.mxu0 %v3746
    %5557 = vmatpush.bf16.msra.mxu0 %v3741
    %5558 = vmatpush.bf16.msra.mxu0 %v3736
    %5559 = vmatmul.bf16.gmra.mxu0 %v923
    %v5560 = vpop.f32.mrf.mxu0
    %v5561 = vadd.f32 %v5548, %v5560
    %v5562 = vpop.f32.mrf.mxu0
    %5563 = vdwg.mxu0
    %5564 = vmatpush.bf16.msra.mxu0 %v3811
    %5565 = vmatpush.bf16.msra.mxu0 %v3806
    %5566 = vmatpush.bf16.msra.mxu0 %v3801
    %5567 = vmatpush.bf16.msra.mxu0 %v3796
    %5568 = vmatpush.bf16.msra.mxu0 %v3791
    %5569 = vmatpush.bf16.msra.mxu0 %v3786
    %5570 = vmatpush.bf16.msra.mxu0 %v3781
    %5571 = vmatpush.bf16.msra.mxu0 %v3776
    %5572 = vmatmul.bf16.gmra.mxu0 %v924
    %v5573 = vpop.f32.mrf.mxu0
    %v5574 = vadd.f32 %v5561, %v5573
    %v5575 = vpop.f32.mrf.mxu0
    %5576 = vdwg.mxu0
    %5577 = vmatpush.bf16.msra.mxu0 %v3851
    %5578 = vmatpush.bf16.msra.mxu0 %v3846
    %5579 = vmatpush.bf16.msra.mxu0 %v3841
    %5580 = vmatpush.bf16.msra.mxu0 %v3836
    %5581 = vmatpush.bf16.msra.mxu0 %v3831
    %5582 = vmatpush.bf16.msra.mxu0 %v3826
    %5583 = vmatpush.bf16.msra.mxu0 %v3821
    %5584 = vmatpush.bf16.msra.mxu0 %v3816
    %5585 = vmatmul.bf16.gmra.mxu0 %v925
    %v5586 = vpop.f32.mrf.mxu0
    %v5587 = vadd.f32 %v5574, %v5586
    %v5588 = vpop.f32.mrf.mxu0
    %5589 = vdwg.mxu0
    %5590 = vmatpush.bf16.msra.mxu0 %v3891
    %5591 = vmatpush.bf16.msra.mxu0 %v3886
    %5592 = vmatpush.bf16.msra.mxu0 %v3881
    %5593 = vmatpush.bf16.msra.mxu0 %v3876
    %5594 = vmatpush.bf16.msra.mxu0 %v3871
    %5595 = vmatpush.bf16.msra.mxu0 %v3866
    %5596 = vmatpush.bf16.msra.mxu0 %v3861
    %5597 = vmatpush.bf16.msra.mxu0 %v3856
    %5598 = vmatmul.bf16.gmra.mxu0 %v926
    %v5599 = vpop.f32.mrf.mxu0
    %v5600 = vadd.f32 %v5587, %v5599
    %v5601 = vpop.f32.mrf.mxu0
    %5602 = vdwg.mxu0
    %5603 = vmatpush.bf16.msra.mxu0 %v3931
    %5604 = vmatpush.bf16.msra.mxu0 %v3926
    %5605 = vmatpush.bf16.msra.mxu0 %v3921
    %5606 = vmatpush.bf16.msra.mxu0 %v3916
    %5607 = vmatpush.bf16.msra.mxu0 %v3911
    %5608 = vmatpush.bf16.msra.mxu0 %v3906
    %5609 = vmatpush.bf16.msra.mxu0 %v3901
    %5610 = vmatpush.bf16.msra.mxu0 %v3896
    %5611 = vmatmul.bf16.gmra.mxu0 %v929
    %v5612 = vpop.f32.mrf.mxu0
    %v5613 = vadd.f32 %v5600, %v5612
    %v5614 = vpop.f32.mrf.mxu0
    %5615 = vdwg.mxu0
    %5616 = vmatpush.bf16.msra.mxu0 %v3971
    %5617 = vmatpush.bf16.msra.mxu0 %v3966
    %5618 = vmatpush.bf16.msra.mxu0 %v3961
    %5619 = vmatpush.bf16.msra.mxu0 %v3956
    %5620 = vmatpush.bf16.msra.mxu0 %v3951
    %5621 = vmatpush.bf16.msra.mxu0 %v3946
    %5622 = vmatpush.bf16.msra.mxu0 %v3941
    %5623 = vmatpush.bf16.msra.mxu0 %v3936
    %5624 = vmatmul.bf16.gmra.mxu0 %v930
    %v5625 = vpop.f32.mrf.mxu0
    %v5626 = vadd.f32 %v5613, %v5625
    %v5627 = vpop.f32.mrf.mxu0
    %5628 = vdwg.mxu0
    %5629 = vmatpush.bf16.msra.mxu0 %v3292
    %5630 = vmatpush.bf16.msra.mxu0 %v3287
    %5631 = vmatpush.bf16.msra.mxu0 %v3282
    %5632 = vmatpush.bf16.msra.mxu0 %v3277
    %5633 = vmatpush.bf16.msra.mxu0 %v3272
    %5634 = vmatpush.bf16.msra.mxu0 %v3267
    %5635 = vmatpush.bf16.msra.mxu0 %v3262
    %5636 = vmatpush.bf16.msra.mxu0 %v3257
    %5637 = vmatmul.bf16.gmra.mxu0 %v909
    %v5638 = vpop.f32.mrf.mxu0
    %v5639 = vadd.f32 %v901, %v5638
    %v5640 = vpop.f32.mrf.mxu0
    %5641 = vdwg.mxu0
    %5642 = vmatpush.bf16.msra.mxu0 %v3332
    %5643 = vmatpush.bf16.msra.mxu0 %v3327
    %5644 = vmatpush.bf16.msra.mxu0 %v3322
    %5645 = vmatpush.bf16.msra.mxu0 %v3317
    %5646 = vmatpush.bf16.msra.mxu0 %v3312
    %5647 = vmatpush.bf16.msra.mxu0 %v3307
    %5648 = vmatpush.bf16.msra.mxu0 %v3302
    %5649 = vmatpush.bf16.msra.mxu0 %v3297
    %5650 = vmatmul.bf16.gmra.mxu0 %v910
    %v5651 = vpop.f32.mrf.mxu0
    %v5652 = vadd.f32 %v5639, %v5651
    %v5653 = vpop.f32.mrf.mxu0
    %5654 = vdwg.mxu0
    %5655 = vmatpush.bf16.msra.mxu0 %v3372
    %5656 = vmatpush.bf16.msra.mxu0 %v3367
    %5657 = vmatpush.bf16.msra.mxu0 %v3362
    %5658 = vmatpush.bf16.msra.mxu0 %v3357
    %5659 = vmatpush.bf16.msra.mxu0 %v3352
    %5660 = vmatpush.bf16.msra.mxu0 %v3347
    %5661 = vmatpush.bf16.msra.mxu0 %v3342
    %5662 = vmatpush.bf16.msra.mxu0 %v3337
    %5663 = vmatmul.bf16.gmra.mxu0 %v911
    %v5664 = vpop.f32.mrf.mxu0
    %v5665 = vadd.f32 %v5652, %v5664
    %v5666 = vpop.f32.mrf.mxu0
    %5667 = vdwg.mxu0
    %5668 = vmatpush.bf16.msra.mxu0 %v3412
    %5669 = vmatpush.bf16.msra.mxu0 %v3407
    %5670 = vmatpush.bf16.msra.mxu0 %v3402
    %5671 = vmatpush.bf16.msra.mxu0 %v3397
    %5672 = vmatpush.bf16.msra.mxu0 %v3392
    %5673 = vmatpush.bf16.msra.mxu0 %v3387
    %5674 = vmatpush.bf16.msra.mxu0 %v3382
    %5675 = vmatpush.bf16.msra.mxu0 %v3377
    %5676 = vmatmul.bf16.gmra.mxu0 %v912
    %v5677 = vpop.f32.mrf.mxu0
    %v5678 = vadd.f32 %v5665, %v5677
    %v5679 = vpop.f32.mrf.mxu0
    %5680 = vdwg.mxu0
    %5681 = vmatpush.bf16.msra.mxu0 %v3452
    %5682 = vmatpush.bf16.msra.mxu0 %v3447
    %5683 = vmatpush.bf16.msra.mxu0 %v3442
    %5684 = vmatpush.bf16.msra.mxu0 %v3437
    %5685 = vmatpush.bf16.msra.mxu0 %v3432
    %5686 = vmatpush.bf16.msra.mxu0 %v3427
    %5687 = vmatpush.bf16.msra.mxu0 %v3422
    %5688 = vmatpush.bf16.msra.mxu0 %v3417
    %5689 = vmatmul.bf16.gmra.mxu0 %v913
    %v5690 = vpop.f32.mrf.mxu0
    %v5691 = vadd.f32 %v5678, %v5690
    %v5692 = vpop.f32.mrf.mxu0
    %5693 = vdwg.mxu0
    %5694 = vmatpush.bf16.msra.mxu0 %v3492
    %5695 = vmatpush.bf16.msra.mxu0 %v3487
    %5696 = vmatpush.bf16.msra.mxu0 %v3482
    %5697 = vmatpush.bf16.msra.mxu0 %v3477
    %5698 = vmatpush.bf16.msra.mxu0 %v3472
    %5699 = vmatpush.bf16.msra.mxu0 %v3467
    %5700 = vmatpush.bf16.msra.mxu0 %v3462
    %5701 = vmatpush.bf16.msra.mxu0 %v3457
    %5702 = vmatmul.bf16.gmra.mxu0 %v914
    %v5703 = vpop.f32.mrf.mxu0
    %v5704 = vadd.f32 %v5691, %v5703
    %v5705 = vpop.f32.mrf.mxu0
    %5706 = vdwg.mxu0
    %5707 = vmatpush.bf16.msra.mxu0 %v3532
    %5708 = vmatpush.bf16.msra.mxu0 %v3527
    %5709 = vmatpush.bf16.msra.mxu0 %v3522
    %5710 = vmatpush.bf16.msra.mxu0 %v3517
    %5711 = vmatpush.bf16.msra.mxu0 %v3512
    %5712 = vmatpush.bf16.msra.mxu0 %v3507
    %5713 = vmatpush.bf16.msra.mxu0 %v3502
    %5714 = vmatpush.bf16.msra.mxu0 %v3497
    %5715 = vmatmul.bf16.gmra.mxu0 %v915
    %v5716 = vpop.f32.mrf.mxu0
    %v5717 = vadd.f32 %v5704, %v5716
    %v5718 = vpop.f32.mrf.mxu0
    %5719 = vdwg.mxu0
    %5720 = vmatpush.bf16.msra.mxu0 %v3572
    %5721 = vmatpush.bf16.msra.mxu0 %v3567
    %5722 = vmatpush.bf16.msra.mxu0 %v3562
    %5723 = vmatpush.bf16.msra.mxu0 %v3557
    %5724 = vmatpush.bf16.msra.mxu0 %v3552
    %5725 = vmatpush.bf16.msra.mxu0 %v3547
    %5726 = vmatpush.bf16.msra.mxu0 %v3542
    %5727 = vmatpush.bf16.msra.mxu0 %v3537
    %5728 = vmatmul.bf16.gmra.mxu0 %v916
    %v5729 = vpop.f32.mrf.mxu0
    %v5730 = vadd.f32 %v5717, %v5729
    %v5731 = vpop.f32.mrf.mxu0
    %5732 = vdwg.mxu0
    %5733 = vmatpush.bf16.msra.mxu0 %v3612
    %5734 = vmatpush.bf16.msra.mxu0 %v3607
    %5735 = vmatpush.bf16.msra.mxu0 %v3602
    %5736 = vmatpush.bf16.msra.mxu0 %v3597
    %5737 = vmatpush.bf16.msra.mxu0 %v3592
    %5738 = vmatpush.bf16.msra.mxu0 %v3587
    %5739 = vmatpush.bf16.msra.mxu0 %v3582
    %5740 = vmatpush.bf16.msra.mxu0 %v3577
    %5741 = vmatmul.bf16.gmra.mxu0 %v919
    %v5742 = vpop.f32.mrf.mxu0
    %v5743 = vadd.f32 %v5730, %v5742
    %v5744 = vpop.f32.mrf.mxu0
    %5745 = vdwg.mxu0
    %5746 = vmatpush.bf16.msra.mxu0 %v3652
    %5747 = vmatpush.bf16.msra.mxu0 %v3647
    %5748 = vmatpush.bf16.msra.mxu0 %v3642
    %5749 = vmatpush.bf16.msra.mxu0 %v3637
    %5750 = vmatpush.bf16.msra.mxu0 %v3632
    %5751 = vmatpush.bf16.msra.mxu0 %v3627
    %5752 = vmatpush.bf16.msra.mxu0 %v3622
    %5753 = vmatpush.bf16.msra.mxu0 %v3617
    %5754 = vmatmul.bf16.gmra.mxu0 %v920
    %v5755 = vpop.f32.mrf.mxu0
    %v5756 = vadd.f32 %v5743, %v5755
    %v5757 = vpop.f32.mrf.mxu0
    %5758 = vdwg.mxu0
    %5759 = vmatpush.bf16.msra.mxu0 %v3692
    %5760 = vmatpush.bf16.msra.mxu0 %v3687
    %5761 = vmatpush.bf16.msra.mxu0 %v3682
    %5762 = vmatpush.bf16.msra.mxu0 %v3677
    %5763 = vmatpush.bf16.msra.mxu0 %v3672
    %5764 = vmatpush.bf16.msra.mxu0 %v3667
    %5765 = vmatpush.bf16.msra.mxu0 %v3662
    %5766 = vmatpush.bf16.msra.mxu0 %v3657
    %5767 = vmatmul.bf16.gmra.mxu0 %v921
    %v5768 = vpop.f32.mrf.mxu0
    %v5769 = vadd.f32 %v5756, %v5768
    %v5770 = vpop.f32.mrf.mxu0
    %5771 = vdwg.mxu0
    %5772 = vmatpush.bf16.msra.mxu0 %v3732
    %5773 = vmatpush.bf16.msra.mxu0 %v3727
    %5774 = vmatpush.bf16.msra.mxu0 %v3722
    %5775 = vmatpush.bf16.msra.mxu0 %v3717
    %5776 = vmatpush.bf16.msra.mxu0 %v3712
    %5777 = vmatpush.bf16.msra.mxu0 %v3707
    %5778 = vmatpush.bf16.msra.mxu0 %v3702
    %5779 = vmatpush.bf16.msra.mxu0 %v3697
    %5780 = vmatmul.bf16.gmra.mxu0 %v922
    %v5781 = vpop.f32.mrf.mxu0
    %v5782 = vadd.f32 %v5769, %v5781
    %v5783 = vpop.f32.mrf.mxu0
    %5784 = vdwg.mxu0
    %5785 = vmatpush.bf16.msra.mxu0 %v3772
    %5786 = vmatpush.bf16.msra.mxu0 %v3767
    %5787 = vmatpush.bf16.msra.mxu0 %v3762
    %5788 = vmatpush.bf16.msra.mxu0 %v3757
    %5789 = vmatpush.bf16.msra.mxu0 %v3752
    %5790 = vmatpush.bf16.msra.mxu0 %v3747
    %5791 = vmatpush.bf16.msra.mxu0 %v3742
    %5792 = vmatpush.bf16.msra.mxu0 %v3737
    %5793 = vmatmul.bf16.gmra.mxu0 %v923
    %v5794 = vpop.f32.mrf.mxu0
    %v5795 = vadd.f32 %v5782, %v5794
    %v5796 = vpop.f32.mrf.mxu0
    %5797 = vdwg.mxu0
    %5798 = vmatpush.bf16.msra.mxu0 %v3812
    %5799 = vmatpush.bf16.msra.mxu0 %v3807
    %5800 = vmatpush.bf16.msra.mxu0 %v3802
    %5801 = vmatpush.bf16.msra.mxu0 %v3797
    %5802 = vmatpush.bf16.msra.mxu0 %v3792
    %5803 = vmatpush.bf16.msra.mxu0 %v3787
    %5804 = vmatpush.bf16.msra.mxu0 %v3782
    %5805 = vmatpush.bf16.msra.mxu0 %v3777
    %5806 = vmatmul.bf16.gmra.mxu0 %v924
    %v5807 = vpop.f32.mrf.mxu0
    %v5808 = vadd.f32 %v5795, %v5807
    %v5809 = vpop.f32.mrf.mxu0
    %5810 = vdwg.mxu0
    %5811 = vmatpush.bf16.msra.mxu0 %v3852
    %5812 = vmatpush.bf16.msra.mxu0 %v3847
    %5813 = vmatpush.bf16.msra.mxu0 %v3842
    %5814 = vmatpush.bf16.msra.mxu0 %v3837
    %5815 = vmatpush.bf16.msra.mxu0 %v3832
    %5816 = vmatpush.bf16.msra.mxu0 %v3827
    %5817 = vmatpush.bf16.msra.mxu0 %v3822
    %5818 = vmatpush.bf16.msra.mxu0 %v3817
    %5819 = vmatmul.bf16.gmra.mxu0 %v925
    %v5820 = vpop.f32.mrf.mxu0
    %v5821 = vadd.f32 %v5808, %v5820
    %v5822 = vpop.f32.mrf.mxu0
    %5823 = vdwg.mxu0
    %5824 = vmatpush.bf16.msra.mxu0 %v3892
    %5825 = vmatpush.bf16.msra.mxu0 %v3887
    %5826 = vmatpush.bf16.msra.mxu0 %v3882
    %5827 = vmatpush.bf16.msra.mxu0 %v3877
    %5828 = vmatpush.bf16.msra.mxu0 %v3872
    %5829 = vmatpush.bf16.msra.mxu0 %v3867
    %5830 = vmatpush.bf16.msra.mxu0 %v3862
    %5831 = vmatpush.bf16.msra.mxu0 %v3857
    %5832 = vmatmul.bf16.gmra.mxu0 %v926
    %v5833 = vpop.f32.mrf.mxu0
    %v5834 = vadd.f32 %v5821, %v5833
    %v5835 = vpop.f32.mrf.mxu0
    %5836 = vdwg.mxu0
    %5837 = vmatpush.bf16.msra.mxu0 %v3932
    %5838 = vmatpush.bf16.msra.mxu0 %v3927
    %5839 = vmatpush.bf16.msra.mxu0 %v3922
    %5840 = vmatpush.bf16.msra.mxu0 %v3917
    %5841 = vmatpush.bf16.msra.mxu0 %v3912
    %5842 = vmatpush.bf16.msra.mxu0 %v3907
    %5843 = vmatpush.bf16.msra.mxu0 %v3902
    %5844 = vmatpush.bf16.msra.mxu0 %v3897
    %5845 = vmatmul.bf16.gmra.mxu0 %v929
    %v5846 = vpop.f32.mrf.mxu0
    %v5847 = vadd.f32 %v5834, %v5846
    %v5848 = vpop.f32.mrf.mxu0
    %5849 = vdwg.mxu0
    %5850 = vmatpush.bf16.msra.mxu0 %v3972
    %5851 = vmatpush.bf16.msra.mxu0 %v3967
    %5852 = vmatpush.bf16.msra.mxu0 %v3962
    %5853 = vmatpush.bf16.msra.mxu0 %v3957
    %5854 = vmatpush.bf16.msra.mxu0 %v3952
    %5855 = vmatpush.bf16.msra.mxu0 %v3947
    %5856 = vmatpush.bf16.msra.mxu0 %v3942
    %5857 = vmatpush.bf16.msra.mxu0 %v3937
    %5858 = vmatmul.bf16.gmra.mxu0 %v930
    %v5859 = vpop.f32.mrf.mxu0
    %v5860 = vadd.f32 %v5847, %v5859
    %v5861 = vpop.f32.mrf.mxu0
    %5862 = vdwg.mxu0
    %v5863 = vpack.c.bf16 %v4924, %v4924
    %v5864 = vpack.c.bf16 %v5158, %v5158
    %v5865 = vpack.c.bf16 %v5392, %v5392
    %v5866 = vpack.c.bf16 %v5626, %v5626
    %v5867 = vpack.c.bf16 %v5860, %v5860
    %v5868 = vld [vmem:[%s3] sm:$0xf]
    %v5869 = vld [vmem:[%s3 + $0x4] sm:$0xf]
    %v5870 = vld [vmem:[%s3 + $0x8] sm:$0xf]
    %v5871 = vld [vmem:[%s3 + $0xc] sm:$0xf]
    %v5872 = vld [vmem:[%s3 + $0x10] sm:$0xf]
    %v5873 = vld [vmem:[%s3 + $0x14] sm:$0xf]
    %v5874 = vld [vmem:[%s3 + $0x18] sm:$0xf]
    %v5875 = vld [vmem:[%s3 + $0x1c] sm:$0xf]
    %v5876 = vld [vmem:[%s3 + $0x20] sm:$0xf]
    %v5877 = vld [vmem:[%s3 + $0x24] sm:$0xf]
    %v5878 = vld [vmem:[%s3 + $0x28] sm:$0xf]
    %v5879 = vld [vmem:[%s3 + $0x2c] sm:$0xf]
    %v5880 = vld [vmem:[%s3 + $0x30] sm:$0xf]
    %v5881 = vld [vmem:[%s3 + $0x34] sm:$0xf]
    %v5882 = vld [vmem:[%s3 + $0x38] sm:$0xf]
    %v5883 = vld [vmem:[%s3 + $0x3c] sm:$0xf]
    %v5884 = vld [vmem:[%s3 + $0x40] sm:$0xf]
    %v5885 = vld [vmem:[%s3 + $0x44] sm:$0xf]
    %v5886 = vld [vmem:[%s3 + $0x48] sm:$0xf]
    %v5887 = vld [vmem:[%s3 + $0x4c] sm:$0xf]
    %v5888 = vld [vmem:[%s3 + $0x50] sm:$0xf]
    %v5889 = vld [vmem:[%s3 + $0x54] sm:$0xf]
    %v5890 = vld [vmem:[%s3 + $0x58] sm:$0xf]
    %v5891 = vld [vmem:[%s3 + $0x5c] sm:$0xf]
    %v5892 = vld [vmem:[%s3 + $0x60] sm:$0xf]
    %v5893 = vld [vmem:[%s3 + $0x64] sm:$0xf]
    %v5894 = vld [vmem:[%s3 + $0x68] sm:$0xf]
    %v5895 = vld [vmem:[%s3 + $0x6c] sm:$0xf]
    %v5896 = vld [vmem:[%s3 + $0x70] sm:$0xf]
    %v5897 = vld [vmem:[%s3 + $0x74] sm:$0xf]
    %v5898 = vld [vmem:[%s3 + $0x78] sm:$0xf]
    %v5899 = vld [vmem:[%s3 + $0x7c] sm:$0xf]
    %v5900 = vld [vmem:[%s3 + $0x80] sm:$0xf]
    %v5901 = vld [vmem:[%s3 + $0x84] sm:$0xf]
    %v5902 = vld [vmem:[%s3 + $0x88] sm:$0xf]
    %v5903 = vld [vmem:[%s3 + $0x8c] sm:$0xf]
    %v5904 = vld [vmem:[%s3 + $0x90] sm:$0xf]
    %v5905 = vld [vmem:[%s3 + $0x94] sm:$0xf]
    %v5906 = vld [vmem:[%s3 + $0x98] sm:$0xf]
    %v5907 = vld [vmem:[%s3 + $0x9c] sm:$0xf]
    %v5908 = vld [vmem:[%s3 + $0xa0] sm:$0xf]
    %v5909 = vld [vmem:[%s3 + $0xa4] sm:$0xf]
    %v5910 = vld [vmem:[%s3 + $0xa8] sm:$0xf]
    %v5911 = vld [vmem:[%s3 + $0xac] sm:$0xf]
    %v5912 = vld [vmem:[%s3 + $0xb0] sm:$0xf]
    %v5913 = vld [vmem:[%s3 + $0xb4] sm:$0xf]
    %v5914 = vld [vmem:[%s3 + $0xb8] sm:$0xf]
    %v5915 = vld [vmem:[%s3 + $0xbc] sm:$0xf]
    %v5916 = vld [vmem:[%s3 + $0xc0] sm:$0xf]
    %v5917 = vld [vmem:[%s3 + $0xc4] sm:$0xf]
    %v5918 = vld [vmem:[%s3 + $0xc8] sm:$0xf]
    %v5919 = vld [vmem:[%s3 + $0xcc] sm:$0xf]
    %v5920 = vld [vmem:[%s3 + $0xd0] sm:$0xf]
    %v5921 = vld [vmem:[%s3 + $0xd4] sm:$0xf]
    %v5922 = vld [vmem:[%s3 + $0xd8] sm:$0xf]
    %v5923 = vld [vmem:[%s3 + $0xdc] sm:$0xf]
    %v5924 = vld [vmem:[%s3 + $0xe0] sm:$0xf]
    %v5925 = vld [vmem:[%s3 + $0xe4] sm:$0xf]
    %v5926 = vld [vmem:[%s3 + $0xe8] sm:$0xf]
    %v5927 = vld [vmem:[%s3 + $0xec] sm:$0xf]
    %v5928 = vld [vmem:[%s3 + $0xf0] sm:$0xf]
    %v5929 = vld [vmem:[%s3 + $0xf4] sm:$0xf]
    %v5930 = vld [vmem:[%s3 + $0xf8] sm:$0xf]
    %v5931 = vld [vmem:[%s3 + $0xfc] sm:$0xf]
    %v5932 = vld [vmem:[%s3 + $0x100] sm:$0xf]
    %v5933 = vld [vmem:[%s3 + $0x104] sm:$0xf]
    %v5934 = vld [vmem:[%s3 + $0x108] sm:$0xf]
    %v5935 = vld [vmem:[%s3 + $0x10c] sm:$0xf]
    %v5936 = vld [vmem:[%s3 + $0x110] sm:$0xf]
    %v5937 = vld [vmem:[%s3 + $0x114] sm:$0xf]
    %v5938 = vld [vmem:[%s3 + $0x118] sm:$0xf]
    %v5939 = vld [vmem:[%s3 + $0x11c] sm:$0xf]
    %v5940 = vld [vmem:[%s3 + $0x120] sm:$0xf]
    %v5941 = vld [vmem:[%s3 + $0x124] sm:$0xf]
    %v5942 = vld [vmem:[%s3 + $0x128] sm:$0xf]
    %v5943 = vld [vmem:[%s4] sm:$0x1]
    %v5945 = vperm.slane %v5943, 0
    %v6022 = vunpack.c.l.b16 %v5868
    %v6023 = vunpack.c.l.b16 %v5869
    %v6024 = vunpack.c.l.b16 %v5870
    %v6025 = vunpack.c.l.b16 %v5871
    %v6026 = vunpack.c.l.b16 %v5872
    %v6027 = vunpack.c.l.b16 %v5873
    %v6028 = vunpack.c.l.b16 %v5874
    %v6029 = vunpack.c.l.b16 %v5875
    %v6030 = vunpack.c.l.b16 %v5876
    %v6031 = vunpack.c.l.b16 %v5877
    %v6032 = vunpack.c.l.b16 %v5878
    %v6033 = vunpack.c.l.b16 %v5879
    %v6034 = vunpack.c.l.b16 %v5880
    %v6035 = vunpack.c.l.b16 %v5881
    %v6036 = vunpack.c.l.b16 %v5882
    %v6037 = vunpack.c.l.b16 %v5883
    %v6038 = vunpack.c.l.b16 %v5884
    %v6039 = vunpack.c.l.b16 %v5885
    %v6040 = vunpack.c.l.b16 %v5886
    %v6041 = vunpack.c.l.b16 %v5887
    %v6042 = vunpack.c.l.b16 %v5888
    %v6043 = vunpack.c.l.b16 %v5889
    %v6044 = vunpack.c.l.b16 %v5890
    %v6045 = vunpack.c.l.b16 %v5891
    %v6046 = vunpack.c.l.b16 %v5892
    %v6047 = vunpack.c.l.b16 %v5893
    %v6048 = vunpack.c.l.b16 %v5894
    %v6049 = vunpack.c.l.b16 %v5895
    %v6050 = vunpack.c.l.b16 %v5896
    %v6051 = vunpack.c.l.b16 %v5897
    %v6052 = vunpack.c.l.b16 %v5898
    %v6053 = vunpack.c.l.b16 %v5899
    %v6054 = vunpack.c.l.b16 %v5900
    %v6055 = vunpack.c.l.b16 %v5901
    %v6056 = vunpack.c.l.b16 %v5902
    %v6057 = vunpack.c.l.b16 %v5903
    %v6058 = vunpack.c.l.b16 %v5904
    %v6059 = vunpack.c.l.b16 %v5905
    %v6060 = vunpack.c.l.b16 %v5906
    %v6061 = vunpack.c.l.b16 %v5907
    %v6062 = vunpack.c.l.b16 %v5908
    %v6063 = vunpack.c.l.b16 %v5909
    %v6064 = vunpack.c.l.b16 %v5910
    %v6065 = vunpack.c.l.b16 %v5911
    %v6066 = vunpack.c.l.b16 %v5912
    %v6067 = vunpack.c.l.b16 %v5913
    %v6068 = vunpack.c.l.b16 %v5914
    %v6069 = vunpack.c.l.b16 %v5915
    %v6070 = vunpack.c.l.b16 %v5916
    %v6071 = vunpack.c.l.b16 %v5917
    %v6072 = vunpack.c.l.b16 %v5918
    %v6073 = vunpack.c.l.b16 %v5919
    %v6074 = vunpack.c.l.b16 %v5920
    %v6075 = vunpack.c.l.b16 %v5921
    %v6076 = vunpack.c.l.b16 %v5922
    %v6077 = vunpack.c.l.b16 %v5923
    %v6078 = vunpack.c.l.b16 %v5924
    %v6079 = vunpack.c.l.b16 %v5925
    %v6080 = vunpack.c.l.b16 %v5926
    %v6081 = vunpack.c.l.b16 %v5927
    %v6082 = vunpack.c.l.b16 %v5928
    %v6083 = vunpack.c.l.b16 %v5929
    %v6084 = vunpack.c.l.b16 %v5930
    %v6085 = vunpack.c.l.b16 %v5931
    %v6086 = vunpack.c.l.b16 %v5932
    %v6087 = vunpack.c.l.b16 %v5933
    %v6088 = vunpack.c.l.b16 %v5934
    %v6089 = vunpack.c.l.b16 %v5935
    %v6090 = vunpack.c.l.b16 %v5936
    %v6091 = vunpack.c.l.b16 %v5937
    %v6092 = vunpack.c.l.b16 %v5938
    %v6093 = vunpack.c.l.b16 %v5939
    %v6094 = vunpack.c.l.b16 %v5940
    %v6095 = vunpack.c.l.b16 %v5941
    %v6096 = vunpack.c.l.b16 %v5942
    %v6097 = vpack.c.b16 %v6023, %v6022
    %v6098 = vpack.c.b16 %v6025, %v6024
    %v6099 = vpack.c.b16 %v6027, %v6026
    %v6100 = vpack.c.b16 %v6029, %v6028
    %v6101 = vpack.c.b16 %v6031, %v6030
    %v6102 = vpack.c.b16 %v6033, %v6032
    %v6103 = vpack.c.b16 %v6035, %v6034
    %v6104 = vpack.c.b16 %v6037, %v6036
    %v6105 = vpack.c.b16 %v6039, %v6038
    %v6106 = vpack.c.b16 %v6041, %v6040
    %v6107 = vpack.c.b16 %v6043, %v6042
    %v6108 = vpack.c.b16 %v6045, %v6044
    %v6109 = vpack.c.b16 %v6047, %v6046
    %v6110 = vpack.c.b16 %v6049, %v6048
    %v6111 = vpack.c.b16 %v6051, %v6050
    %v6112 = vpack.c.b16 %v6053, %v6052
    %v6113 = vpack.c.b16 %v6055, %v6054
    %v6114 = vpack.c.b16 %v6057, %v6056
    %v6115 = vpack.c.b16 %v6059, %v6058
    %v6116 = vpack.c.b16 %v6061, %v6060
    %v6117 = vpack.c.b16 %v6063, %v6062
    %v6118 = vpack.c.b16 %v6065, %v6064
    %v6119 = vpack.c.b16 %v6067, %v6066
    %v6120 = vpack.c.b16 %v6069, %v6068
    %v6121 = vpack.c.b16 %v6071, %v6070
    %v6122 = vpack.c.b16 %v6073, %v6072
    %v6123 = vpack.c.b16 %v6075, %v6074
    %v6124 = vpack.c.b16 %v6077, %v6076
    %v6125 = vpack.c.b16 %v6079, %v6078
    %v6126 = vpack.c.b16 %v6081, %v6080
    %v6127 = vpack.c.b16 %v6083, %v6082
    %v6128 = vpack.c.b16 %v6085, %v6084
    %v6129 = vpack.c.b16 %v6087, %v6086
    %v6130 = vpack.c.b16 %v6089, %v6088
    %v6131 = vpack.c.b16 %v6091, %v6090
    %v6132 = vpack.c.b16 %v6093, %v6092
    %v6133 = vpack.c.b16 %v6095, %v6094
    %v6134 = vpack.c.b16 %v6096, %v6096
    %vm6172 = vcmask 719872
    %v6174 = vsel %vm6172, %v5867, 0
    %vm6176 = vcmask 1043456
    %v6178 = vsel %vm6176, %v6134, 0
    %6180 = vmatpush.bf16.msra.mxu0 %v6104
    %6181 = vmatpush.bf16.msra.mxu0 %v6103
    %6182 = vmatpush.bf16.msra.mxu0 %v6102
    %6183 = vmatpush.bf16.msra.mxu0 %v6101
    %6184 = vmatpush.bf16.msra.mxu0 %v6100
    %6185 = vmatpush.bf16.msra.mxu0 %v6099
    %6186 = vmatpush.bf16.msra.mxu0 %v6098
    %6187 = vmatpush.bf16.msra.mxu0 %v6097
    %6188 = vmatmul.bf16.gmra.mxu0 %v5863
    %v6189 = vpop.f32.mrf.mxu0
    %v6190 = vadd.f32 %v5945, %v6189
    %v6191 = vpop.f32.mrf.mxu0
    %6192 = vdwg.mxu0
    %6193 = vmatpush.bf16.msra.mxu0 %v6112
    %6194 = vmatpush.bf16.msra.mxu0 %v6111
    %6195 = vmatpush.bf16.msra.mxu0 %v6110
    %6196 = vmatpush.bf16.msra.mxu0 %v6109
    %6197 = vmatpush.bf16.msra.mxu0 %v6108
    %6198 = vmatpush.bf16.msra.mxu0 %v6107
    %6199 = vmatpush.bf16.msra.mxu0 %v6106
    %6200 = vmatpush.bf16.msra.mxu0 %v6105
    %6201 = vmatmul.bf16.gmra.mxu0 %v5864
    %v6202 = vpop.f32.mrf.mxu0
    %v6203 = vadd.f32 %v6190, %v6202
    %v6204 = vpop.f32.mrf.mxu0
    %6205 = vdwg.mxu0
    %6206 = vmatpush.bf16.msra.mxu0 %v6120
    %6207 = vmatpush.bf16.msra.mxu0 %v6119
    %6208 = vmatpush.bf16.msra.mxu0 %v6118
    %6209 = vmatpush.bf16.msra.mxu0 %v6117
    %6210 = vmatpush.bf16.msra.mxu0 %v6116
    %6211 = vmatpush.bf16.msra.mxu0 %v6115
    %6212 = vmatpush.bf16.msra.mxu0 %v6114
    %6213 = vmatpush.bf16.msra.mxu0 %v6113
    %6214 = vmatmul.bf16.gmra.mxu0 %v5865
    %v6215 = vpop.f32.mrf.mxu0
    %v6216 = vadd.f32 %v6203, %v6215
    %v6217 = vpop.f32.mrf.mxu0
    %6218 = vdwg.mxu0
    %6219 = vmatpush.bf16.msra.mxu0 %v6128
    %6220 = vmatpush.bf16.msra.mxu0 %v6127
    %6221 = vmatpush.bf16.msra.mxu0 %v6126
    %6222 = vmatpush.bf16.msra.mxu0 %v6125
    %6223 = vmatpush.bf16.msra.mxu0 %v6124
    %6224 = vmatpush.bf16.msra.mxu0 %v6123
    %6225 = vmatpush.bf16.msra.mxu0 %v6122
    %6226 = vmatpush.bf16.msra.mxu0 %v6121
    %6227 = vmatmul.bf16.gmra.mxu0 %v5866
    %v6228 = vpop.f32.mrf.mxu0
    %v6229 = vadd.f32 %v6216, %v6228
    %v6230 = vpop.f32.mrf.mxu0
    %6231 = vdwg.mxu0
    %6232 = vmatpush.bf16.msra.mxu0 0
    %6233 = vmatpush.bf16.msra.mxu0 0
    %6234 = vmatpush.bf16.msra.mxu0 %v6178
    %6235 = vmatpush.bf16.msra.mxu0 %v6133
    %6236 = vmatpush.bf16.msra.mxu0 %v6132
    %6237 = vmatpush.bf16.msra.mxu0 %v6131
    %6238 = vmatpush.bf16.msra.mxu0 %v6130
    %6239 = vmatpush.bf16.msra.mxu0 %v6129
    %6240 = vmatmul.bf16.gmra.mxu0 %v6174
    %v6241 = vpop.f32.mrf.mxu0
    %v6242 = vadd.f32 %v6229, %v6241
    %v6243 = vpop.f32.mrf.mxu0
    %6244 = vdwg.mxu0
    %v6245 = vpack.c.bf16 %v6242, %v6242
    %v6246 = vld [vmem:[%s5] sm:$0xf]
    %v6247 = vld [vmem:[%s5 + $0x4] sm:$0xf]
    %v6248 = vld [vmem:[%s5 + $0x8] sm:$0xf]
    %v6249 = vld [vmem:[%s5 + $0xc] sm:$0xf]
    %v6250 = vld [vmem:[%s5 + $0x10] sm:$0xf]
    %v6251 = vld [vmem:[%s5 + $0x14] sm:$0xf]
    %v6252 = vld [vmem:[%s5 + $0x18] sm:$0xf]
    %v6253 = vld [vmem:[%s5 + $0x1c] sm:$0xf]
    %v6254 = vld [vmem:[%s5 + $0x20] sm:$0xf]
    %v6255 = vld [vmem:[%s5 + $0x24] sm:$0xf]
    %v6256 = vld [vmem:[%s5 + $0x28] sm:$0xf]
    %v6257 = vld [vmem:[%s5 + $0x2c] sm:$0xf]
    %v6258 = vld [vmem:[%s5 + $0x30] sm:$0xf]
    %v6259 = vld [vmem:[%s5 + $0x34] sm:$0xf]
    %v6260 = vld [vmem:[%s5 + $0x38] sm:$0xf]
    %v6261 = vld [vmem:[%s6] sm:$0x1]
    %v6263 = vperm.slane %v6261, 0
    %v6280 = vunpack.c.l.b16 %v6246
    %v6281 = vunpack.c.l.b16 %v6247
    %v6282 = vunpack.c.l.b16 %v6248
    %v6283 = vunpack.c.l.b16 %v6249
    %v6284 = vunpack.c.l.b16 %v6250
    %v6285 = vunpack.c.l.b16 %v6251
    %v6286 = vunpack.c.l.b16 %v6252
    %v6287 = vunpack.c.l.b16 %v6253
    %v6288 = vunpack.c.l.b16 %v6254
    %v6289 = vunpack.c.l.b16 %v6255
    %v6290 = vunpack.c.l.b16 %v6256
    %v6291 = vunpack.c.l.b16 %v6257
    %v6292 = vunpack.c.l.b16 %v6258
    %v6293 = vunpack.c.l.b16 %v6259
    %v6294 = vunpack.c.l.b16 %v6260
    %v6295 = vpack.c.b16 %v6281, %v6280
    %v6296 = vpack.c.b16 %v6283, %v6282
    %v6297 = vpack.c.b16 %v6285, %v6284
    %v6298 = vpack.c.b16 %v6287, %v6286
    %v6299 = vpack.c.b16 %v6289, %v6288
    %v6300 = vpack.c.b16 %v6291, %v6290
    %v6301 = vpack.c.b16 %v6293, %v6292
    %v6302 = vpack.c.b16 %v6294, %v6294
    %vm6310 = vcmask 982016
    %v6312 = vsel %vm6310, %v6245, 0
    %v6315 = vsel %vm6176, %v6302, 0
    %6317 = vmatpush.bf16.msra.mxu0 %v6315
    %6318 = vmatpush.bf16.msra.mxu0 %v6301
    %6319 = vmatpush.bf16.msra.mxu0 %v6300
    %6320 = vmatpush.bf16.msra.mxu0 %v6299
    %6321 = vmatpush.bf16.msra.mxu0 %v6298
    %6322 = vmatpush.bf16.msra.mxu0 %v6297
    %6323 = vmatpush.bf16.msra.mxu0 %v6296
    %6324 = vmatpush.bf16.msra.mxu0 %v6295
    %6325 = vmatmul.bf16.gmra.mxu0 %v6312
    %v6326 = vpop.f32.mrf.mxu0
    %v6327 = vadd.f32 %v6263, %v6326
    %v6328 = vpop.f32.mrf.mxu0
    %6329 = vdwg.mxu0
    %vm6330 = vcmask 74752
    %6331 = vst.msk [vmem:[#allocation2] sm:$0x3] %vm6330, %v6327
    // Predicated region
    $region30: #{forward.5} parent=1 // pred_check
      _
    $region31: #{forward.5} parent=1 // pred_check_branch
      %6333 = sbr.rel (0) target = $region33
    $region32: #{forward.5} parent=1 // pred_region
      %6335 = vsyncadd [#allocation3], 0
      %s6337 = sshll.u32 [#allocation2], 4
      %s6338 = int_to_ptr.vmem [resolvable:$true] %s6337
      %s6339 = sshll.u32 %s7, 4
      %s6340 = int_to_ptr.hbm [resolvable:$true] %s6339
      %6342 = dma.vmem_to_hbm [thread:$0]  %s6338, 32, %s6340, [#allocation3]
    $region33: #{forward.5} parent=1 // pred_fallthru
      _
    // Predicated region
    $region34: #{forward.5} parent=1 // pred_check
      _
    $region35: #{forward.5} parent=1 // pred_check_branch
      %6344 = sbr.rel (0) target = $region37
    $region36: #{forward.5} parent=1 // pred_region
      %6346 = dma.done [#allocation3], 32
    $region37: #{forward.5} parent=1 // pred_fallthru
      _
    %6347 = vsyncpa [#allocation3], 1

</llo_original>
